<compile_context>
chip_gen: v7x
topology: tpu7x:2x2x1
jax: 0.10.0
libtpu: 0.0.40
codegen_flags: <defaults>
</compile_context>

<pallas_src>
import functools
import math

import jax
import jax.numpy as jnp
from jax.experimental import pallas as pl
from jax.experimental.pallas import tpu as pltpu


# Raised scoped-VMEM budget (<= physical VMEM on v5e/v6e/v7x).
_VMEM_LIMIT_BYTES = 64 * 1024 * 1024


# --------------------------------------------------------------------------- #
# Capability probe: single-buffered resident weights (pipeline_mode=Buffered(1))
# --------------------------------------------------------------------------- #

_BUFFERED_WEIGHTS_OK = None


def _probe_buffered_weights():
    """True iff pl.BlockSpec(..., pipeline_mode=pl.Buffered(1)) lowers+compiles."""
    try:
        wspec = pl.BlockSpec((8, 128), lambda i: (0, 0),
                             pipeline_mode=pl.Buffered(1))

        def _k(x_ref, w_ref, o_ref):
            o_ref[...] = x_ref[...] + w_ref[...]

        fn = pl.pallas_call(
            _k,
            out_shape=jax.ShapeDtypeStruct((16, 128), jnp.float32),
            grid=(2,),
            in_specs=[pl.BlockSpec((8, 128), lambda i: (i, 0)), wspec],
            out_specs=pl.BlockSpec((8, 128), lambda i: (i, 0)),
        )
        jax.jit(fn).lower(jnp.zeros((16, 128), jnp.float32),
                          jnp.zeros((8, 128), jnp.float32)).compile()
        return True
    except Exception:  # conservative: fall back to default double-buffering
        return False


def _buffered_weights_supported():
    global _BUFFERED_WEIGHTS_OK
    if _BUFFERED_WEIGHTS_OK is None:
        _BUFFERED_WEIGHTS_OK = _probe_buffered_weights()
    return _BUFFERED_WEIGHTS_OK


def _resident_spec(shape):
    """Constant-index BlockSpec (1-D grid): operand stays resident in VMEM.

    Single-buffered when supported -- halves weight VMEM at zero cost since
    the block index never changes across grid steps."""
    index_map = lambda i: (0,) * len(shape)
    if _buffered_weights_supported():
        return pl.BlockSpec(shape, index_map, pipeline_mode=pl.Buffered(1))
    return pl.BlockSpec(shape, index_map)


# --------------------------------------------------------------------------- #
# Kernel helpers
# --------------------------------------------------------------------------- #

def _layernorm(x, g, b, eps):
    """f32 LayerNorm over the last axis.  g, b broadcast as (1, H)."""
    mean = jnp.mean(x, axis=-1, keepdims=True)
    xc = x - mean
    var = jnp.mean(xc * xc, axis=-1, keepdims=True)
    return xc * jax.lax.rsqrt(var + eps) * g + b


# --------------------------------------------------------------------------- #
# Embedding / fc kernels
# --------------------------------------------------------------------------- #

def _linear_kernel(x_ref, w_ref, b_ref, o_ref):
    """Row-tiled dense: bf16 MXU matmul, f32 accumulate + bias."""
    y = jnp.dot(x_ref[...].astype(jnp.bfloat16), w_ref[...],
                preferred_element_type=jnp.float32)
    o_ref[...] = y + b_ref[...]


def linear_rows(x, w, b):
    """x: (M, K) f32, w: (K, N) bf16, b: (1, N) f32 -> (M, N) f32."""
    M, K = x.shape
    N = w.shape[1]
    tm = min(M, 512)
    return pl.pallas_call(
        _linear_kernel,
        out_shape=jax.ShapeDtypeStruct((M, N), jnp.float32),
        grid=(pl.cdiv(M, tm),),
        in_specs=[
            pl.BlockSpec((tm, K), lambda i: (i, 0)),
            _resident_spec((K, N)),
            _resident_spec((1, N)),
        ],
        out_specs=pl.BlockSpec((tm, N), lambda i: (i, 0)),
        compiler_params=pltpu.CompilerParams(
            dimension_semantics=("parallel",),
            vmem_limit_bytes=_VMEM_LIMIT_BYTES),
    )(x, w, b)


def _fc_logsoftmax_kernel(x_ref, w_ref, b_ref, o_ref):
    """Fused final projection + log-softmax (f32 softmax math)."""
    y = jnp.dot(x_ref[...].astype(jnp.bfloat16), w_ref[...],
                preferred_element_type=jnp.float32) + b_ref[...]
    m = jnp.max(y, axis=-1, keepdims=True)
    z = y - m
    lse = jnp.log(jnp.sum(jnp.exp(z), axis=-1, keepdims=True))
    o_ref[...] = z - lse
    # TODO(synk): tile N with an online log-sum-exp for vocab-sized output_dim.


def fc_logsoftmax(x, w, b):
    M, K = x.shape
    N = w.shape[1]
    tm = min(M, 512)
    return pl.pallas_call(
        _fc_logsoftmax_kernel,
        out_shape=jax.ShapeDtypeStruct((M, N), jnp.float32),
        grid=(pl.cdiv(M, tm),),
        in_specs=[
            pl.BlockSpec((tm, K), lambda i: (i, 0)),
            _resident_spec((K, N)),
            _resident_spec((1, N)),
        ],
        out_specs=pl.BlockSpec((tm, N), lambda i: (i, 0)),
        compiler_params=pltpu.CompilerParams(
            dimension_semantics=("parallel",),
            vmem_limit_bytes=_VMEM_LIMIT_BYTES),
    )(x, w, b)


# --------------------------------------------------------------------------- #
# Fused encoder layer
# --------------------------------------------------------------------------- #

def _encoder_layer_kernel(h_ref, wqkv_ref, bqkv_ref, wo_ref, bo_ref,
                          g1_ref, b1_ref, wf1_ref, bf1_ref,
                          wf2_ref, bf2_ref, g2_ref, b2_ref,
                          o_ref, *, num_heads, head_dim, eps):
    """One post-norm TransformerEncoderLayer for a (Ts, Bs, H) row tile.

    All dense matmuls run on the row-batched (Ts*Bs, H) operand so the MXU M
    dimension is Ts*Bs instead of the tiny original batch.  Attention is
    computed per original-sequence row (Ts stays a batch axis of the small
    (Bs, Bs) attention) and per head; head outputs are concatenated in
    registers (no scratch round trip, no masked lane-slice stores).
    """
    ts, bs, H = h_ref.shape
    x = h_ref[...].reshape(ts * bs, H)                          # (Ts*Bs, H) f32

    # Fused QKV projection (bf16 operands, f32 accumulation).  The
    # 1/sqrt(head_dim) attention scale is pre-folded into the Q columns.
    qkv = jnp.dot(x.astype(jnp.bfloat16), wqkv_ref[...],
                  preferred_element_type=jnp.float32) + bqkv_ref[...]
    qkv3 = qkv.reshape(ts, bs, 3 * H)

    # Per-head attention over the Bs axis, batched over the Ts rows.
    # TODO(synk): tile the key axis (online softmax) if Bs grows beyond ~128.
    head_outs = []
    for h_i in range(num_heads):
        lo = h_i * head_dim
        qh = qkv3[:, :, lo:lo + head_dim].astype(jnp.bfloat16)            # (Ts,Bs,dh)
        kh = qkv3[:, :, H + lo:H + lo + head_dim].astype(jnp.bfloat16)
        vh = qkv3[:, :, 2 * H + lo:2 * H + lo + head_dim].astype(jnp.bfloat16)
        s = jnp.einsum("tqd,tkd->tqk", qh, kh,
                       preferred_element_type=jnp.float32)                # (Ts,Bs,Bs)
        m = jnp.max(s, axis=-1, keepdims=True)
        p = jnp.exp(s - m)
        p = p * pl.reciprocal(jnp.sum(p, axis=-1, keepdims=True), approx=True)
        head_outs.append(
            jnp.einsum("tqk,tkd->tqd", p.astype(jnp.bfloat16), vh,
                       preferred_element_type=jnp.float32))               # (Ts,Bs,dh)
    attn = jnp.concatenate(head_outs, axis=-1).reshape(ts * bs, H)        # in-vreg merge

    # Output projection, residual add, LayerNorm1.
    o = jnp.dot(attn.astype(jnp.bfloat16), wo_ref[...],
                preferred_element_type=jnp.float32) + bo_ref[...]
    h1 = _layernorm(x + o, g1_ref[...], b1_ref[...], eps)

    # Feed-forward: the (Ts*Bs, 4H) intermediate never leaves vregs/VMEM.
    f = jnp.dot(h1.astype(jnp.bfloat16), wf1_ref[...],
                preferred_element_type=jnp.float32) + bf1_ref[...]
    f = jnp.maximum(f, 0.0)
    f2 = jnp.dot(f.astype(jnp.bfloat16), wf2_ref[...],
                 preferred_element_type=jnp.float32) + bf2_ref[...]
    out = _layernorm(h1 + f2, g2_ref[...], b2_ref[...], eps)
    o_ref[...] = out.reshape(ts, bs, H)


def _choose_row_tile(seq_rows, batch, target_rows=256):
    """Pick Ts (a divisor of seq_rows) so Ts*batch ~ target MXU rows while
    keeping >= 2 grid steps so both v7x TensorCores get work."""
    divisors = [d for d in range(1, seq_rows + 1) if seq_rows % d == 0]
    target_ts = max(1, target_rows // max(batch, 1))
    ts = max([d for d in divisors if d <= target_ts] or [1])
    if seq_rows // ts < 2:
        smaller = [d for d in divisors if d < ts and seq_rows // d >= 2]
        if smaller:
            ts = max(smaller)
    return ts


def encoder_layer(h, lp, num_heads, head_dim, ts, eps=1e-5):
    """h: (Sb, Bs, H) f32.  One fused pallas_call per layer, grid over Sb/Ts."""
    Sb, Bs, H = h.shape
    kern = functools.partial(_encoder_layer_kernel, num_heads=num_heads,
                             head_dim=head_dim, eps=eps)
    return pl.pallas_call(
        kern,
        out_shape=jax.ShapeDtypeStruct((Sb, Bs, H), jnp.float32),
        grid=(Sb // ts,),
        in_specs=[
            pl.BlockSpec((ts, Bs, H), lambda i: (i, 0, 0)),
            _resident_spec(lp["in_proj_w"].shape),
            _resident_spec(lp["in_proj_b"].shape),
            _resident_spec(lp["out_proj_w"].shape),
            _resident_spec(lp["out_proj_b"].shape),
            _resident_spec(lp["ln1_g"].shape),
            _resident_spec(lp["ln1_b"].shape),
            _resident_spec(lp["ff1_w"].shape),
            _resident_spec(lp["ff1_b"].shape),
            _resident_spec(lp["ff2_w"].shape),
            _resident_spec(lp["ff2_b"].shape),
            _resident_spec(lp["ln2_g"].shape),
            _resident_spec(lp["ln2_b"].shape),
        ],
        out_specs=pl.BlockSpec((ts, Bs, H), lambda i: (i, 0, 0)),
        compiler_params=pltpu.CompilerParams(
            dimension_semantics=("parallel",),
            vmem_limit_bytes=_VMEM_LIMIT_BYTES),
    )(h, lp["in_proj_w"], lp["in_proj_b"], lp["out_proj_w"], lp["out_proj_b"],
      lp["ln1_g"], lp["ln1_b"], lp["ff1_w"], lp["ff1_b"],
      lp["ff2_w"], lp["ff2_b"], lp["ln2_g"], lp["ln2_b"])


# --------------------------------------------------------------------------- #
# Model glue
# --------------------------------------------------------------------------- #

def transformer_forward(x, params, num_heads):
    B, S, Din = x.shape
    H = params["emb_w"].shape[1]
    head_dim = H // num_heads
    ts = _choose_row_tile(S, B)

    # embedding Linear (fused matmul + bias)
    h = linear_rows(x.reshape(B * S, Din), params["emb_w"], params["emb_b"])
    # x.permute(1, 0, 2) -> (S, B, H); encoder (batch_first) attends over B.
    h = jnp.transpose(h.reshape(B, S, H), (1, 0, 2))

    for layer in params["layers"]:
        h = encoder_layer(h, layer, num_heads, head_dim, ts)

    h = jnp.transpose(h, (1, 0, 2)).reshape(B * S, H)          # (B*S, H)
    out = fc_logsoftmax(h, params["fc_w"], params["fc_b"])
    return out.reshape(B, S, -1)


def init_params(key, input_dim, hidden_dim, output_dim, num_heads, num_layers):
    head_dim = hidden_dim // num_heads
    scale = 1.0 / math.sqrt(head_dim)

    def dense(k, fan_in, fan_out):
        # PyTorch nn.Linear stores (out, in); we keep (in, out) for x @ W.
        return jax.random.normal(k, (fan_in, fan_out), jnp.float32) * 0.05

    keys = jax.random.split(key, 2 + num_layers)
    ff = hidden_dim * 4
    params = {
        "emb_w": dense(keys[0], input_dim, hidden_dim).astype(jnp.bfloat16),
        "emb_b": jnp.zeros((1, hidden_dim), jnp.float32),
        "fc_w": dense(keys[1], hidden_dim, output_dim).astype(jnp.bfloat16),
        "fc_b": jnp.zeros((1, output_dim), jnp.float32),
        "layers": [],
    }
    for l in range(num_layers):
        k = jax.random.split(keys[2 + l], 4)
        in_proj_w = dense(k[0], hidden_dim, 3 * hidden_dim)
        in_proj_b = jnp.zeros((3 * hidden_dim,), jnp.float32)
        # Fold the 1/sqrt(head_dim) attention scale into the Q projection
        # (one-time parameter-prep transform; removes a per-element mul).
        in_proj_w = in_proj_w.at[:, :hidden_dim].multiply(scale)
        in_proj_b = in_proj_b.at[:hidden_dim].multiply(scale)
        params["layers"].append(dict(
            in_proj_w=in_proj_w.astype(jnp.bfloat16),
            in_proj_b=in_proj_b.reshape(1, -1),
            out_proj_w=dense(k[1], hidden_dim, hidden_dim).astype(jnp.bfloat16),
            out_proj_b=jnp.zeros((1, hidden_dim), jnp.float32),
            ff1_w=dense(k[2], hidden_dim, ff).astype(jnp.bfloat16),
            ff1_b=jnp.zeros((1, ff), jnp.float32),
            ff2_w=dense(k[3], ff, hidden_dim).astype(jnp.bfloat16),
            ff2_b=jnp.zeros((1, hidden_dim), jnp.float32),
            ln1_g=jnp.ones((1, hidden_dim), jnp.float32),
            ln1_b=jnp.zeros((1, hidden_dim), jnp.float32),
            ln2_g=jnp.ones((1, hidden_dim), jnp.float32),
            ln2_b=jnp.zeros((1, hidden_dim), jnp.float32),
        ))
    return params


if __name__ == "__main__":
    # Small but lane-friendly demo config: H is a multiple of 128 so every
    # encoder matmul / LN / store is lane-dense (review item on lane padding).
    B, S = 2, 8
    input_dim, hidden_dim, output_dim = 16, 128, 256
    num_heads, num_layers = 8, 2

    # Run the single-buffered-weights capability probe once, eagerly (outside
    # the jit trace), so the cached result is used while tracing.
    _buffered_weights_supported()

    key = jax.random.PRNGKey(0)
    kx, kp = jax.random.split(key)
    x = jax.random.normal(kx, (B, S, input_dim), jnp.float32)
    params = init_params(kp, input_dim, hidden_dim, output_dim,
                         num_heads, num_layers)

    fwd = jax.jit(functools.partial(transformer_forward, num_heads=num_heads))
    out = fwd(x, params)
    jax.block_until_ready(out)
    assert out.shape == (B, S, output_dim)
    # rows of log-softmax should exp-sum to 1
    assert bool(jnp.allclose(jnp.sum(jnp.exp(out), axis=-1), 1.0, atol=1e-3))
    print("KERNEL_OK")
</pallas_src>

<mosaic_0001>
module attributes {stable_mosaic.version = 11 : i64} {
  func.func @_linear_kernel(%arg0: i32, %arg1: memref<16x16xf32, #tpu.memory_space<vmem>>, %arg2: memref<16x128xbf16, #tpu.memory_space<vmem>>, %arg3: memref<1x128xf32, #tpu.memory_space<vmem>>, %arg4: memref<16x128xf32, #tpu.memory_space<vmem>>) attributes {dimension_semantics = [#tpu.dimension_semantics<parallel>], iteration_bounds = array<i64: 1>, scalar_prefetch = 0 : i64, scratch_operands = 0 : i64, tpu.core_type = #tpu.core_type<tc>, window_params = [{transform_indices = @transform_0, window_bounds = array<i64: 16, 16>}, {pipeline_mode = #tpu.pipeline_mode<synchronous>, transform_indices = @transform_1, window_bounds = array<i64: 16, 128>}, {pipeline_mode = #tpu.pipeline_mode<synchronous>, transform_indices = @transform_2, window_bounds = array<i64: 1, 128>}, {transform_indices = @transform_3, window_bounds = array<i64: 16, 128>}]} {
    %c0 = arith.constant 0 : index
    %c0_0 = arith.constant 0 : index
    %0 = vector.load %arg1[%c0, %c0_0] : memref<16x16xf32, #tpu.memory_space<vmem>>, vector<16x16xf32>
    %1 = arith.truncf %0 : vector<16x16xf32> to vector<16x16xbf16>
    %c0_1 = arith.constant 0 : index
    %c0_2 = arith.constant 0 : index
    %2 = vector.load %arg2[%c0_1, %c0_2] : memref<16x128xbf16, #tpu.memory_space<vmem>>, vector<16x128xbf16>
    %cst = arith.constant dense<0.000000e+00> : vector<16x128xf32>
    %3 = tpu.matmul %1, %2, %cst {dimension_numbers = #tpu.dot_dimension_numbers<[1], [0], [0], [1], [0, 0, 1, 1], [], []>} : vector<16x16xbf16>, vector<16x128xbf16>, vector<16x128xf32> -> vector<16x128xf32>
    %c0_3 = arith.constant 0 : index
    %c0_4 = arith.constant 0 : index
    %4 = vector.load %arg3[%c0_3, %c0_4] : memref<1x128xf32, #tpu.memory_space<vmem>>, vector<1x128xf32>
    %5 = vector.broadcast %4 : vector<1x128xf32> to vector<16x128xf32>
    %6 = arith.addf %3, %5 : vector<16x128xf32>
    %c0_5 = arith.constant 0 : index
    %c0_6 = arith.constant 0 : index
    %7 = vector.load %arg4[%c0_5, %c0_6] : memref<16x128xf32, #tpu.memory_space<vmem>>, vector<16x128xf32>
    tpu.vector_store %arg4[%c0_5, %c0_6], %6 {strides = array<i32>} : memref<16x128xf32, #tpu.memory_space<vmem>>, vector<16x128xf32>,
    return
  }
  func.func @transform_0(%arg0: i32) -> (i32, i32) {
    %c0_i32 = arith.constant 0 : i32
    %c0_i32_0 = arith.constant 0 : i32
    return %arg0, %c0_i32 : i32, i32
  }
  func.func @transform_1(%arg0: i32) -> (i32, i32) {
    %c0_i32 = arith.constant 0 : i32
    %c0_i32_0 = arith.constant 0 : i32
    %c0_i32_1 = arith.constant 0 : i32
    return %c0_i32, %c0_i32_0 : i32, i32
  }
  func.func @transform_2(%arg0: i32) -> (i32, i32) {
    %c0_i32 = arith.constant 0 : i32
    %c0_i32_0 = arith.constant 0 : i32
    %c0_i32_1 = arith.constant 0 : i32
    return %c0_i32, %c0_i32_0 : i32, i32
  }
  func.func @transform_3(%arg0: i32) -> (i32, i32) {
    %c0_i32 = arith.constant 0 : i32
    %c0_i32_0 = arith.constant 0 : i32
    return %arg0, %c0_i32 : i32, i32
  }
}

module attributes {stable_mosaic.version = 11 : i64} {
  func.func @_encoder_layer_kernel(%arg0: i32, %arg1: memref<4x2x128xf32, #tpu.memory_space<vmem>>, %arg2: memref<128x384xbf16, #tpu.memory_space<vmem>>, %arg3: memref<1x384xf32, #tpu.memory_space<vmem>>, %arg4: memref<128x128xbf16, #tpu.memory_space<vmem>>, %arg5: memref<1x128xf32, #tpu.memory_space<vmem>>, %arg6: memref<1x128xf32, #tpu.memory_space<vmem>>, %arg7: memref<1x128xf32, #tpu.memory_space<vmem>>, %arg8: memref<128x512xbf16, #tpu.memory_space<vmem>>, %arg9: memref<1x512xf32, #tpu.memory_space<vmem>>, %arg10: memref<512x128xbf16, #tpu.memory_space<vmem>>, %arg11: memref<1x128xf32, #tpu.memory_space<vmem>>, %arg12: memref<1x128xf32, #tpu.memory_space<vmem>>, %arg13: memref<1x128xf32, #tpu.memory_space<vmem>>, %arg14: memref<4x2x128xf32, #tpu.memory_space<vmem>>) attributes {dimension_semantics = [#tpu.dimension_semantics<parallel>], iteration_bounds = array<i64: 2>, scalar_prefetch = 0 : i64, scratch_operands = 0 : i64, tpu.core_type = #tpu.core_type<tc>, window_params = [{transform_indices = @transform_0, window_bounds = array<i64: 4, 2, 128>}, {pipeline_mode = #tpu.pipeline_mode<synchronous>, transform_indices = @transform_1, window_bounds = array<i64: 128, 384>}, {pipeline_mode = #tpu.pipeline_mode<synchronous>, transform_indices = @transform_2, window_bounds = array<i64: 1, 384>}, {pipeline_mode = #tpu.pipeline_mode<synchronous>, transform_indices = @transform_3, window_bounds = array<i64: 128, 128>}, {pipeline_mode = #tpu.pipeline_mode<synchronous>, transform_indices = @transform_4, window_bounds = array<i64: 1, 128>}, {pipeline_mode = #tpu.pipeline_mode<synchronous>, transform_indices = @transform_5, window_bounds = array<i64: 1, 128>}, {pipeline_mode = #tpu.pipeline_mode<synchronous>, transform_indices = @transform_6, window_bounds = array<i64: 1, 128>}, {pipeline_mode = #tpu.pipeline_mode<synchronous>, transform_indices = @transform_7, window_bounds = array<i64: 128, 512>}, {pipeline_mode = #tpu.pipeline_mode<synchronous>, transform_indices = @transform_8, window_bounds = array<i64: 1, 512>}, {pipeline_mode = #tpu.pipeline_mode<synchronous>, transform_indices = @transform_9, window_bounds = array<i64: 512, 128>}, {pipeline_mode = #tpu.pipeline_mode<synchronous>, transform_indices = @transform_10, window_bounds = array<i64: 1, 128>}, {pipeline_mode = #tpu.pipeline_mode<synchronous>, transform_indices = @transform_11, window_bounds = array<i64: 1, 128>}, {pipeline_mode = #tpu.pipeline_mode<synchronous>, transform_indices = @transform_12, window_bounds = array<i64: 1, 128>}, {transform_indices = @transform_13, window_bounds = array<i64: 4, 2, 128>}]} {
    %c0 = arith.constant 0 : index
    %c0_0 = arith.constant 0 : index
    %c0_1 = arith.constant 0 : index
    %0 = vector.load %arg1[%c0, %c0_0, %c0_1] : memref<4x2x128xf32, #tpu.memory_space<vmem>>, vector<4x2x128xf32>
    %1 = vector.shape_cast %0 : vector<4x2x128xf32> to vector<8x128xf32>
    %2 = arith.truncf %1 : vector<8x128xf32> to vector<8x128xbf16>
    %c0_2 = arith.constant 0 : index
    %c0_3 = arith.constant 0 : index
    %3 = vector.load %arg2[%c0_2, %c0_3] : memref<128x384xbf16, #tpu.memory_space<vmem>>, vector<128x384xbf16>
    %cst = arith.constant dense<0.000000e+00> : vector<8x384xf32>
    %4 = tpu.matmul %2, %3, %cst {dimension_numbers = #tpu.dot_dimension_numbers<[1], [0], [0], [1], [0, 0, 1, 1], [], []>} : vector<8x128xbf16>, vector<128x384xbf16>, vector<8x384xf32> -> vector<8x384xf32>
    %c0_4 = arith.constant 0 : index
    %c0_5 = arith.constant 0 : index
    %5 = vector.load %arg3[%c0_4, %c0_5] : memref<1x384xf32, #tpu.memory_space<vmem>>, vector<1x384xf32>
    %6 = vector.broadcast %5 : vector<1x384xf32> to vector<8x384xf32>
    %7 = arith.addf %4, %6 : vector<8x384xf32>
    %8 = vector.shape_cast %7 : vector<8x384xf32> to vector<4x2x384xf32>
    %9 = vector.extract_strided_slice %8 {offsets = [0, 0, 0], sizes = [4, 2, 16], strides = [1, 1, 1]} : vector<4x2x384xf32> to vector<4x2x16xf32>
    %10 = arith.truncf %9 : vector<4x2x16xf32> to vector<4x2x16xbf16>
    %11 = vector.extract_strided_slice %8 {offsets = [0, 0, 128], sizes = [4, 2, 16], strides = [1, 1, 1]} : vector<4x2x384xf32> to vector<4x2x16xf32>
    %12 = arith.truncf %11 : vector<4x2x16xf32> to vector<4x2x16xbf16>
    %13 = vector.extract_strided_slice %8 {offsets = [0, 0, 256], sizes = [4, 2, 16], strides = [1, 1, 1]} : vector<4x2x384xf32> to vector<4x2x16xf32>
    %14 = arith.truncf %13 : vector<4x2x16xf32> to vector<4x2x16xbf16>
    "tpu.trace_start"() <{level = 10 : i32, message = "tqd,tkd->tqk"}> : () -> ()
    %cst_6 = arith.constant dense<0.000000e+00> : vector<4x2x2xf32>
    %15 = tpu.matmul %10, %12, %cst_6 {dimension_numbers = #tpu.dot_dimension_numbers<[2], [2], [1], [1], [0, 0, 0, 1, 1, 1], [0], [0]>} : vector<4x2x16xbf16>, vector<4x2x16xbf16>, vector<4x2x2xf32> -> vector<4x2x2xf32>
    "tpu.trace_stop"() : () -> ()
    %cst_7 = arith.constant dense<0xFF800000> : vector<4x2xf32>
    %16 = vector.multi_reduction <maximumf>, %15, %cst_7 [2] : vector<4x2x2xf32> to vector<4x2xf32>
    %17 = vector.shape_cast %16 : vector<4x2xf32> to vector<4x2x1xf32>
    %18 = vector.broadcast %17 : vector<4x2x1xf32> to vector<4x2x2xf32>
    %19 = arith.subf %15, %18 : vector<4x2x2xf32>
    %20 = math.exp %19 : vector<4x2x2xf32>
    %cst_8 = arith.constant dense<0.000000e+00> : vector<4x2xf32>
    %21 = vector.multi_reduction <add>, %20, %cst_8 [2] : vector<4x2x2xf32> to vector<4x2xf32>
    %22 = vector.shape_cast %21 : vector<4x2xf32> to vector<4x2x1xf32>
    %23 = tpu.reciprocal %22 {approx = true} : vector<4x2x1xf32> -> vector<4x2x1xf32>
    %24 = vector.broadcast %23 : vector<4x2x1xf32> to vector<4x2x2xf32>
    %25 = arith.mulf %20, %24 : vector<4x2x2xf32>
    %26 = arith.truncf %25 : vector<4x2x2xf32> to vector<4x2x2xbf16>
    "tpu.trace_start"() <{level = 10 : i32, message = "tqk,tkd->tqd"}> : () -> ()
    %cst_9 = arith.constant dense<0.000000e+00> : vector<4x2x16xf32>
    %27 = tpu.matmul %26, %14, %cst_9 {dimension_numbers = #tpu.dot_dimension_numbers<[2], [1], [1], [2], [0, 0, 0, 1, 1, 2], [0], [0]>} : vector<4x2x2xbf16>, vector<4x2x16xbf16>, vector<4x2x16xf32> -> vector<4x2x16xf32>
    "tpu.trace_stop"() : () -> ()
    %28 = vector.extract_strided_slice %8 {offsets = [0, 0, 16], sizes = [4, 2, 16], strides = [1, 1, 1]} : vector<4x2x384xf32> to vector<4x2x16xf32>
    %29 = arith.truncf %28 : vector<4x2x16xf32> to vector<4x2x16xbf16>
    %30 = vector.extract_strided_slice %8 {offsets = [0, 0, 144], sizes = [4, 2, 16], strides = [1, 1, 1]} : vector<4x2x384xf32> to vector<4x2x16xf32>
    %31 = arith.truncf %30 : vector<4x2x16xf32> to vector<4x2x16xbf16>
    %32 = vector.extract_strided_slice %8 {offsets = [0, 0, 272], sizes = [4, 2, 16], strides = [1, 1, 1]} : vector<4x2x384xf32> to vector<4x2x16xf32>
    %33 = arith.truncf %32 : vector<4x2x16xf32> to vector<4x2x16xbf16>
    "tpu.trace_start"() <{level = 10 : i32, message = "tqd,tkd->tqk"}> : () -> ()
    %cst_10 = arith.constant dense<0.000000e+00> : vector<4x2x2xf32>
    %34 = tpu.matmul %29, %31, %cst_10 {dimension_numbers = #tpu.dot_dimension_numbers<[2], [2], [1], [1], [0, 0, 0, 1, 1, 1], [0], [0]>} : vector<4x2x16xbf16>, vector<4x2x16xbf16>, vector<4x2x2xf32> -> vector<4x2x2xf32>
    "tpu.trace_stop"() : () -> ()
    %cst_11 = arith.constant dense<0xFF800000> : vector<4x2xf32>
    %35 = vector.multi_reduction <maximumf>, %34, %cst_11 [2] : vector<4x2x2xf32> to vector<4x2xf32>
    %36 = vector.shape_cast %35 : vector<4x2xf32> to vector<4x2x1xf32>
    %37 = vector.broadcast %36 : vector<4x2x1xf32> to vector<4x2x2xf32>
    %38 = arith.subf %34, %37 : vector<4x2x2xf32>
    %39 = math.exp %38 : vector<4x2x2xf32>
    %cst_12 = arith.constant dense<0.000000e+00> : vector<4x2xf32>
    %40 = vector.multi_reduction <add>, %39, %cst_12 [2] : vector<4x2x2xf32> to vector<4x2xf32>
    %41 = vector.shape_cast %40 : vector<4x2xf32> to vector<4x2x1xf32>
    %42 = tpu.reciprocal %41 {approx = true} : vector<4x2x1xf32> -> vector<4x2x1xf32>
    %43 = vector.broadcast %42 : vector<4x2x1xf32> to vector<4x2x2xf32>
    %44 = arith.mulf %39, %43 : vector<4x2x2xf32>
    %45 = arith.truncf %44 : vector<4x2x2xf32> to vector<4x2x2xbf16>
    "tpu.trace_start"() <{level = 10 : i32, message = "tqk,tkd->tqd"}> : () -> ()
    %cst_13 = arith.constant dense<0.000000e+00> : vector<4x2x16xf32>
    %46 = tpu.matmul %45, %33, %cst_13 {dimension_numbers = #tpu.dot_dimension_numbers<[2], [1], [1], [2], [0, 0, 0, 1, 1, 2], [0], [0]>} : vector<4x2x2xbf16>, vector<4x2x16xbf16>, vector<4x2x16xf32> -> vector<4x2x16xf32>
    "tpu.trace_stop"() : () -> ()
    %47 = vector.extract_strided_slice %8 {offsets = [0, 0, 32], sizes = [4, 2, 16], strides = [1, 1, 1]} : vector<4x2x384xf32> to vector<4x2x16xf32>
    %48 = arith.truncf %47 : vector<4x2x16xf32> to vector<4x2x16xbf16>
    %49 = vector.extract_strided_slice %8 {offsets = [0, 0, 160], sizes = [4, 2, 16], strides = [1, 1, 1]} : vector<4x2x384xf32> to vector<4x2x16xf32>
    %50 = arith.truncf %49 : vector<4x2x16xf32> to vector<4x2x16xbf16>
    %51 = vector.extract_strided_slice %8 {offsets = [0, 0, 288], sizes = [4, 2, 16], strides = [1, 1, 1]} : vector<4x2x384xf32> to vector<4x2x16xf32>
    %52 = arith.truncf %51 : vector<4x2x16xf32> to vector<4x2x16xbf16>
    "tpu.trace_start"() <{level = 10 : i32, message = "tqd,tkd->tqk"}> : () -> ()
    %cst_14 = arith.constant dense<0.000000e+00> : vector<4x2x2xf32>
    %53 = tpu.matmul %48, %50, %cst_14 {dimension_numbers = #tpu.dot_dimension_numbers<[2], [2], [1], [1], [0, 0, 0, 1, 1, 1], [0], [0]>} : vector<4x2x16xbf16>, vector<4x2x16xbf16>, vector<4x2x2xf32> -> vector<4x2x2xf32>
    "tpu.trace_stop"() : () -> ()
    %cst_15 = arith.constant dense<0xFF800000> : vector<4x2xf32>
    %54 = vector.multi_reduction <maximumf>, %53, %cst_15 [2] : vector<4x2x2xf32> to vector<4x2xf32>
    %55 = vector.shape_cast %54 : vector<4x2xf32> to vector<4x2x1xf32>
    %56 = vector.broadcast %55 : vector<4x2x1xf32> to vector<4x2x2xf32>
    %57 = arith.subf %53, %56 : vector<4x2x2xf32>
    %58 = math.exp %57 : vector<4x2x2xf32>
    %cst_16 = arith.constant dense<0.000000e+00> : vector<4x2xf32>
    %59 = vector.multi_reduction <add>, %58, %cst_16 [2] : vector<4x2x2xf32> to vector<4x2xf32>
    %60 = vector.shape_cast %59 : vector<4x2xf32> to vector<4x2x1xf32>
    %61 = tpu.reciprocal %60 {approx = true} : vector<4x2x1xf32> -> vector<4x2x1xf32>
    %62 = vector.broadcast %61 : vector<4x2x1xf32> to vector<4x2x2xf32>
    %63 = arith.mulf %58, %62 : vector<4x2x2xf32>
    %64 = arith.truncf %63 : vector<4x2x2xf32> to vector<4x2x2xbf16>
    "tpu.trace_start"() <{level = 10 : i32, message = "tqk,tkd->tqd"}> : () -> ()
    %cst_17 = arith.constant dense<0.000000e+00> : vector<4x2x16xf32>
    %65 = tpu.matmul %64, %52, %cst_17 {dimension_numbers = #tpu.dot_dimension_numbers<[2], [1], [1], [2], [0, 0, 0, 1, 1, 2], [0], [0]>} : vector<4x2x2xbf16>, vector<4x2x16xbf16>, vector<4x2x16xf32> -> vector<4x2x16xf32>
    "tpu.trace_stop"() : () -> ()
    %66 = vector.extract_strided_slice %8 {offsets = [0, 0, 48], sizes = [4, 2, 16], strides = [1, 1, 1]} : vector<4x2x384xf32> to vector<4x2x16xf32>
    %67 = arith.truncf %66 : vector<4x2x16xf32> to vector<4x2x16xbf16>
    %68 = vector.extract_strided_slice %8 {offsets = [0, 0, 176], sizes = [4, 2, 16], strides = [1, 1, 1]} : vector<4x2x384xf32> to vector<4x2x16xf32>
    %69 = arith.truncf %68 : vector<4x2x16xf32> to vector<4x2x16xbf16>
    %70 = vector.extract_strided_slice %8 {offsets = [0, 0, 304], sizes = [4, 2, 16], strides = [1, 1, 1]} : vector<4x2x384xf32> to vector<4x2x16xf32>
    %71 = arith.truncf %70 : vector<4x2x16xf32> to vector<4x2x16xbf16>
    "tpu.trace_start"() <{level = 10 : i32, message = "tqd,tkd->tqk"}> : () -> ()
    %cst_18 = arith.constant dense<0.000000e+00> : vector<4x2x2xf32>
    %72 = tpu.matmul %67, %69, %cst_18 {dimension_numbers = #tpu.dot_dimension_numbers<[2], [2], [1], [1], [0, 0, 0, 1, 1, 1], [0], [0]>} : vector<4x2x16xbf16>, vector<4x2x16xbf16>, vector<4x2x2xf32> -> vector<4x2x2xf32>
    "tpu.trace_stop"() : () -> ()
    %cst_19 = arith.constant dense<0xFF800000> : vector<4x2xf32>
    %73 = vector.multi_reduction <maximumf>, %72, %cst_19 [2] : vector<4x2x2xf32> to vector<4x2xf32>
    %74 = vector.shape_cast %73 : vector<4x2xf32> to vector<4x2x1xf32>
    %75 = vector.broadcast %74 : vector<4x2x1xf32> to vector<4x2x2xf32>
    %76 = arith.subf %72, %75 : vector<4x2x2xf32>
    %77 = math.exp %76 : vector<4x2x2xf32>
    %cst_20 = arith.constant dense<0.000000e+00> : vector<4x2xf32>
    %78 = vector.multi_reduction <add>, %77, %cst_20 [2] : vector<4x2x2xf32> to vector<4x2xf32>
    %79 = vector.shape_cast %78 : vector<4x2xf32> to vector<4x2x1xf32>
    %80 = tpu.reciprocal %79 {approx = true} : vector<4x2x1xf32> -> vector<4x2x1xf32>
    %81 = vector.broadcast %80 : vector<4x2x1xf32> to vector<4x2x2xf32>
    %82 = arith.mulf %77, %81 : vector<4x2x2xf32>
    %83 = arith.truncf %82 : vector<4x2x2xf32> to vector<4x2x2xbf16>
    "tpu.trace_start"() <{level = 10 : i32, message = "tqk,tkd->tqd"}> : () -> ()
    %cst_21 = arith.constant dense<0.000000e+00> : vector<4x2x16xf32>
    %84 = tpu.matmul %83, %71, %cst_21 {dimension_numbers = #tpu.dot_dimension_numbers<[2], [1], [1], [2], [0, 0, 0, 1, 1, 2], [0], [0]>} : vector<4x2x2xbf16>, vector<4x2x16xbf16>, vector<4x2x16xf32> -> vector<4x2x16xf32>
    "tpu.trace_stop"() : () -> ()
    %85 = vector.extract_strided_slice %8 {offsets = [0, 0, 64], sizes = [4, 2, 16], strides = [1, 1, 1]} : vector<4x2x384xf32> to vector<4x2x16xf32>
    %86 = arith.truncf %85 : vector<4x2x16xf32> to vector<4x2x16xbf16>
    %87 = vector.extract_strided_slice %8 {offsets = [0, 0, 192], sizes = [4, 2, 16], strides = [1, 1, 1]} : vector<4x2x384xf32> to vector<4x2x16xf32>
    %88 = arith.truncf %87 : vector<4x2x16xf32> to vector<4x2x16xbf16>
    %89 = vector.extract_strided_slice %8 {offsets = [0, 0, 320], sizes = [4, 2, 16], strides = [1, 1, 1]} : vector<4x2x384xf32> to vector<4x2x16xf32>
    %90 = arith.truncf %89 : vector<4x2x16xf32> to vector<4x2x16xbf16>
    "tpu.trace_start"() <{level = 10 : i32, message = "tqd,tkd->tqk"}> : () -> ()
    %cst_22 = arith.constant dense<0.000000e+00> : vector<4x2x2xf32>
    %91 = tpu.matmul %86, %88, %cst_22 {dimension_numbers = #tpu.dot_dimension_numbers<[2], [2], [1], [1], [0, 0, 0, 1, 1, 1], [0], [0]>} : vector<4x2x16xbf16>, vector<4x2x16xbf16>, vector<4x2x2xf32> -> vector<4x2x2xf32>
    "tpu.trace_stop"() : () -> ()
    %cst_23 = arith.constant dense<0xFF800000> : vector<4x2xf32>
    %92 = vector.multi_reduction <maximumf>, %91, %cst_23 [2] : vector<4x2x2xf32> to vector<4x2xf32>
    %93 = vector.shape_cast %92 : vector<4x2xf32> to vector<4x2x1xf32>
    %94 = vector.broadcast %93 : vector<4x2x1xf32> to vector<4x2x2xf32>
    %95 = arith.subf %91, %94 : vector<4x2x2xf32>
    %96 = math.exp %95 : vector<4x2x2xf32>
    %cst_24 = arith.constant dense<0.000000e+00> : vector<4x2xf32>
    %97 = vector.multi_reduction <add>, %96, %cst_24 [2] : vector<4x2x2xf32> to vector<4x2xf32>
    %98 = vector.shape_cast %97 : vector<4x2xf32> to vector<4x2x1xf32>
    %99 = tpu.reciprocal %98 {approx = true} : vector<4x2x1xf32> -> vector<4x2x1xf32>
    %100 = vector.broadcast %99 : vector<4x2x1xf32> to vector<4x2x2xf32>
    %101 = arith.mulf %96, %100 : vector<4x2x2xf32>
    %102 = arith.truncf %101 : vector<4x2x2xf32> to vector<4x2x2xbf16>
    "tpu.trace_start"() <{level = 10 : i32, message = "tqk,tkd->tqd"}> : () -> ()
    %cst_25 = arith.constant dense<0.000000e+00> : vector<4x2x16xf32>
    %103 = tpu.matmul %102, %90, %cst_25 {dimension_numbers = #tpu.dot_dimension_numbers<[2], [1], [1], [2], [0, 0, 0, 1, 1, 2], [0], [0]>} : vector<4x2x2xbf16>, vector<4x2x16xbf16>, vector<4x2x16xf32> -> vector<4x2x16xf32>
    "tpu.trace_stop"() : () -> ()
    %104 = vector.extract_strided_slice %8 {offsets = [0, 0, 80], sizes = [4, 2, 16], strides = [1, 1, 1]} : vector<4x2x384xf32> to vector<4x2x16xf32>
    %105 = arith.truncf %104 : vector<4x2x16xf32> to vector<4x2x16xbf16>
    %106 = vector.extract_strided_slice %8 {offsets = [0, 0, 208], sizes = [4, 2, 16], strides = [1, 1, 1]} : vector<4x2x384xf32> to vector<4x2x16xf32>
    %107 = arith.truncf %106 : vector<4x2x16xf32> to vector<4x2x16xbf16>
    %108 = vector.extract_strided_slice %8 {offsets = [0, 0, 336], sizes = [4, 2, 16], strides = [1, 1, 1]} : vector<4x2x384xf32> to vector<4x2x16xf32>
    %109 = arith.truncf %108 : vector<4x2x16xf32> to vector<4x2x16xbf16>
    "tpu.trace_start"() <{level = 10 : i32, message = "tqd,tkd->tqk"}> : () -> ()
    %cst_26 = arith.constant dense<0.000000e+00> : vector<4x2x2xf32>
    %110 = tpu.matmul %105, %107, %cst_26 {dimension_numbers = #tpu.dot_dimension_numbers<[2], [2], [1], [1], [0, 0, 0, 1, 1, 1], [0], [0]>} : vector<4x2x16xbf16>, vector<4x2x16xbf16>, vector<4x2x2xf32> -> vector<4x2x2xf32>
    "tpu.trace_stop"() : () -> ()
    %cst_27 = arith.constant dense<0xFF800000> : vector<4x2xf32>
    %111 = vector.multi_reduction <maximumf>, %110, %cst_27 [2] : vector<4x2x2xf32> to vector<4x2xf32>
    %112 = vector.shape_cast %111 : vector<4x2xf32> to vector<4x2x1xf32>
    %113 = vector.broadcast %112 : vector<4x2x1xf32> to vector<4x2x2xf32>
    %114 = arith.subf %110, %113 : vector<4x2x2xf32>
    %115 = math.exp %114 : vector<4x2x2xf32>
    %cst_28 = arith.constant dense<0.000000e+00> : vector<4x2xf32>
    %116 = vector.multi_reduction <add>, %115, %cst_28 [2] : vector<4x2x2xf32> to vector<4x2xf32>
    %117 = vector.shape_cast %116 : vector<4x2xf32> to vector<4x2x1xf32>
    %118 = tpu.reciprocal %117 {approx = true} : vector<4x2x1xf32> -> vector<4x2x1xf32>
    %119 = vector.broadcast %118 : vector<4x2x1xf32> to vector<4x2x2xf32>
    %120 = arith.mulf %115, %119 : vector<4x2x2xf32>
    %121 = arith.truncf %120 : vector<4x2x2xf32> to vector<4x2x2xbf16>
    "tpu.trace_start"() <{level = 10 : i32, message = "tqk,tkd->tqd"}> : () -> ()
    %cst_29 = arith.constant dense<0.000000e+00> : vector<4x2x16xf32>
    %122 = tpu.matmul %121, %109, %cst_29 {dimension_numbers = #tpu.dot_dimension_numbers<[2], [1], [1], [2], [0, 0, 0, 1, 1, 2], [0], [0]>} : vector<4x2x2xbf16>, vector<4x2x16xbf16>, vector<4x2x16xf32> -> vector<4x2x16xf32>
    "tpu.trace_stop"() : () -> ()
    %123 = vector.extract_strided_slice %8 {offsets = [0, 0, 96], sizes = [4, 2, 16], strides = [1, 1, 1]} : vector<4x2x384xf32> to vector<4x2x16xf32>
    %124 = arith.truncf %123 : vector<4x2x16xf32> to vector<4x2x16xbf16>
    %125 = vector.extract_strided_slice %8 {offsets = [0, 0, 224], sizes = [4, 2, 16], strides = [1, 1, 1]} : vector<4x2x384xf32> to vector<4x2x16xf32>
    %126 = arith.truncf %125 : vector<4x2x16xf32> to vector<4x2x16xbf16>
    %127 = vector.extract_strided_slice %8 {offsets = [0, 0, 352], sizes = [4, 2, 16], strides = [1, 1, 1]} : vector<4x2x384xf32> to vector<4x2x16xf32>
    %128 = arith.truncf %127 : vector<4x2x16xf32> to vector<4x2x16xbf16>
    "tpu.trace_start"() <{level = 10 : i32, message = "tqd,tkd->tqk"}> : () -> ()
    %cst_30 = arith.constant dense<0.000000e+00> : vector<4x2x2xf32>
    %129 = tpu.matmul %124, %126, %cst_30 {dimension_numbers = #tpu.dot_dimension_numbers<[2], [2], [1], [1], [0, 0, 0, 1, 1, 1], [0], [0]>} : vector<4x2x16xbf16>, vector<4x2x16xbf16>, vector<4x2x2xf32> -> vector<4x2x2xf32>
    "tpu.trace_stop"() : () -> ()
    %cst_31 = arith.constant dense<0xFF800000> : vector<4x2xf32>
    %130 = vector.multi_reduction <maximumf>, %129, %cst_31 [2] : vector<4x2x2xf32> to vector<4x2xf32>
    %131 = vector.shape_cast %130 : vector<4x2xf32> to vector<4x2x1xf32>
    %132 = vector.broadcast %131 : vector<4x2x1xf32> to vector<4x2x2xf32>
    %133 = arith.subf %129, %132 : vector<4x2x2xf32>
    %134 = math.exp %133 : vector<4x2x2xf32>
    %cst_32 = arith.constant dense<0.000000e+00> : vector<4x2xf32>
    %135 = vector.multi_reduction <add>, %134, %cst_32 [2] : vector<4x2x2xf32> to vector<4x2xf32>
    %136 = vector.shape_cast %135 : vector<4x2xf32> to vector<4x2x1xf32>
    %137 = tpu.reciprocal %136 {approx = true} : vector<4x2x1xf32> -> vector<4x2x1xf32>
    %138 = vector.broadcast %137 : vector<4x2x1xf32> to vector<4x2x2xf32>
    %139 = arith.mulf %134, %138 : vector<4x2x2xf32>
    %140 = arith.truncf %139 : vector<4x2x2xf32> to vector<4x2x2xbf16>
    "tpu.trace_start"() <{level = 10 : i32, message = "tqk,tkd->tqd"}> : () -> ()
    %cst_33 = arith.constant dense<0.000000e+00> : vector<4x2x16xf32>
    %141 = tpu.matmul %140, %128, %cst_33 {dimension_numbers = #tpu.dot_dimension_numbers<[2], [1], [1], [2], [0, 0, 0, 1, 1, 2], [0], [0]>} : vector<4x2x2xbf16>, vector<4x2x16xbf16>, vector<4x2x16xf32> -> vector<4x2x16xf32>
    "tpu.trace_stop"() : () -> ()
    %142 = vector.extract_strided_slice %8 {offsets = [0, 0, 112], sizes = [4, 2, 16], strides = [1, 1, 1]} : vector<4x2x384xf32> to vector<4x2x16xf32>
    %143 = arith.truncf %142 : vector<4x2x16xf32> to vector<4x2x16xbf16>
    %144 = vector.extract_strided_slice %8 {offsets = [0, 0, 240], sizes = [4, 2, 16], strides = [1, 1, 1]} : vector<4x2x384xf32> to vector<4x2x16xf32>
    %145 = arith.truncf %144 : vector<4x2x16xf32> to vector<4x2x16xbf16>
    %146 = vector.extract_strided_slice %8 {offsets = [0, 0, 368], sizes = [4, 2, 16], strides = [1, 1, 1]} : vector<4x2x384xf32> to vector<4x2x16xf32>
    %147 = arith.truncf %146 : vector<4x2x16xf32> to vector<4x2x16xbf16>
    "tpu.trace_start"() <{level = 10 : i32, message = "tqd,tkd->tqk"}> : () -> ()
    %cst_34 = arith.constant dense<0.000000e+00> : vector<4x2x2xf32>
    %148 = tpu.matmul %143, %145, %cst_34 {dimension_numbers = #tpu.dot_dimension_numbers<[2], [2], [1], [1], [0, 0, 0, 1, 1, 1], [0], [0]>} : vector<4x2x16xbf16>, vector<4x2x16xbf16>, vector<4x2x2xf32> -> vector<4x2x2xf32>
    "tpu.trace_stop"() : () -> ()
    %cst_35 = arith.constant dense<0xFF800000> : vector<4x2xf32>
    %149 = vector.multi_reduction <maximumf>, %148, %cst_35 [2] : vector<4x2x2xf32> to vector<4x2xf32>
    %150 = vector.shape_cast %149 : vector<4x2xf32> to vector<4x2x1xf32>
    %151 = vector.broadcast %150 : vector<4x2x1xf32> to vector<4x2x2xf32>
    %152 = arith.subf %148, %151 : vector<4x2x2xf32>
    %153 = math.exp %152 : vector<4x2x2xf32>
    %cst_36 = arith.constant dense<0.000000e+00> : vector<4x2xf32>
    %154 = vector.multi_reduction <add>, %153, %cst_36 [2] : vector<4x2x2xf32> to vector<4x2xf32>
    %155 = vector.shape_cast %154 : vector<4x2xf32> to vector<4x2x1xf32>
    %156 = tpu.reciprocal %155 {approx = true} : vector<4x2x1xf32> -> vector<4x2x1xf32>
    %157 = vector.broadcast %156 : vector<4x2x1xf32> to vector<4x2x2xf32>
    %158 = arith.mulf %153, %157 : vector<4x2x2xf32>
    %159 = arith.truncf %158 : vector<4x2x2xf32> to vector<4x2x2xbf16>
    "tpu.trace_start"() <{level = 10 : i32, message = "tqk,tkd->tqd"}> : () -> ()
    %cst_37 = arith.constant dense<0.000000e+00> : vector<4x2x16xf32>
    %160 = tpu.matmul %159, %147, %cst_37 {dimension_numbers = #tpu.dot_dimension_numbers<[2], [1], [1], [2], [0, 0, 0, 1, 1, 2], [0], [0]>} : vector<4x2x2xbf16>, vector<4x2x16xbf16>, vector<4x2x16xf32> -> vector<4x2x16xf32>
    "tpu.trace_stop"() : () -> ()
    %161 = tpu.concatenate %27, %46, %65, %84, %103, %122, %141, %160 in 2 : vector<4x2x16xf32>, vector<4x2x16xf32>, vector<4x2x16xf32>, vector<4x2x16xf32>, vector<4x2x16xf32>, vector<4x2x16xf32>, vector<4x2x16xf32>, vector<4x2x16xf32> -> vector<4x2x128xf32>
    %162 = vector.shape_cast %161 : vector<4x2x128xf32> to vector<8x128xf32>
    %163 = arith.truncf %162 : vector<8x128xf32> to vector<8x128xbf16>
    %c0_38 = arith.constant 0 : index
    %c0_39 = arith.constant 0 : index
    %164 = vector.load %arg4[%c0_38, %c0_39] : memref<128x128xbf16, #tpu.memory_space<vmem>>, vector<128x128xbf16>
    %cst_40 = arith.constant dense<0.000000e+00> : vector<8x128xf32>
    %165 = tpu.matmul %163, %164, %cst_40 {dimension_numbers = #tpu.dot_dimension_numbers<[1], [0], [0], [1], [0, 0, 1, 1], [], []>} : vector<8x128xbf16>, vector<128x128xbf16>, vector<8x128xf32> -> vector<8x128xf32>
    %c0_41 = arith.constant 0 : index
    %c0_42 = arith.constant 0 : index
    %166 = vector.load %arg5[%c0_41, %c0_42] : memref<1x128xf32, #tpu.memory_space<vmem>>, vector<1x128xf32>
    %167 = vector.broadcast %166 : vector<1x128xf32> to vector<8x128xf32>
    %168 = arith.addf %165, %167 : vector<8x128xf32>
    %169 = arith.addf %1, %168 : vector<8x128xf32>
    %c0_43 = arith.constant 0 : index
    %c0_44 = arith.constant 0 : index
    %170 = vector.load %arg6[%c0_43, %c0_44] : memref<1x128xf32, #tpu.memory_space<vmem>>, vector<1x128xf32>
    %c0_45 = arith.constant 0 : index
    %c0_46 = arith.constant 0 : index
    %171 = vector.load %arg7[%c0_45, %c0_46] : memref<1x128xf32, #tpu.memory_space<vmem>>, vector<1x128xf32>
    %cst_47 = arith.constant dense<0.000000e+00> : vector<8xf32>
    %172 = vector.multi_reduction <add>, %169, %cst_47 [1] : vector<8x128xf32> to vector<8xf32>
    %173 = vector.shape_cast %172 : vector<8xf32> to vector<8x1xf32>
    %cst_48 = arith.constant 1.280000e+02 : f32
    %174 = vector.broadcast %cst_48 : f32 to vector<8x1xf32>
    %175 = arith.divf %173, %174 : vector<8x1xf32>
    %176 = vector.broadcast %175 : vector<8x1xf32> to vector<8x128xf32>
    %177 = arith.subf %169, %176 : vector<8x128xf32>
    %178 = arith.mulf %177, %177 : vector<8x128xf32>
    %cst_49 = arith.constant dense<0.000000e+00> : vector<8xf32>
    %179 = vector.multi_reduction <add>, %178, %cst_49 [1] : vector<8x128xf32> to vector<8xf32>
    %180 = vector.shape_cast %179 : vector<8xf32> to vector<8x1xf32>
    %cst_50 = arith.constant 1.280000e+02 : f32
    %181 = vector.broadcast %cst_50 : f32 to vector<8x1xf32>
    %182 = arith.divf %180, %181 : vector<8x1xf32>
    %cst_51 = arith.constant 9.99999974E-6 : f32
    %183 = vector.broadcast %cst_51 : f32 to vector<8x1xf32>
    %184 = arith.addf %182, %183 : vector<8x1xf32>
    %185 = math.rsqrt %184 : vector<8x1xf32>
    %186 = vector.broadcast %185 : vector<8x1xf32> to vector<8x128xf32>
    %187 = arith.mulf %177, %186 : vector<8x128xf32>
    %188 = vector.broadcast %170 : vector<1x128xf32> to vector<8x128xf32>
    %189 = arith.mulf %187, %188 : vector<8x128xf32>
    %190 = vector.broadcast %171 : vector<1x128xf32> to vector<8x128xf32>
    %191 = arith.addf %189, %190 : vector<8x128xf32>
    %192 = arith.truncf %191 : vector<8x128xf32> to vector<8x128xbf16>
    %c0_52 = arith.constant 0 : index
    %c0_53 = arith.constant 0 : index
    %193 = vector.load %arg8[%c0_52, %c0_53] : memref<128x512xbf16, #tpu.memory_space<vmem>>, vector<128x512xbf16>
    %cst_54 = arith.constant dense<0.000000e+00> : vector<8x512xf32>
    %194 = tpu.matmul %192, %193, %cst_54 {dimension_numbers = #tpu.dot_dimension_numbers<[1], [0], [0], [1], [0, 0, 1, 1], [], []>} : vector<8x128xbf16>, vector<128x512xbf16>, vector<8x512xf32> -> vector<8x512xf32>
    %c0_55 = arith.constant 0 : index
    %c0_56 = arith.constant 0 : index
    %195 = vector.load %arg9[%c0_55, %c0_56] : memref<1x512xf32, #tpu.memory_space<vmem>>, vector<1x512xf32>
    %196 = vector.broadcast %195 : vector<1x512xf32> to vector<8x512xf32>
    %197 = arith.addf %194, %196 : vector<8x512xf32>
    %cst_57 = arith.constant 0.000000e+00 : f32
    %198 = vector.broadcast %cst_57 : f32 to vector<8x512xf32>
    %199 = arith.maximumf %197, %198 : vector<8x512xf32>
    %200 = arith.truncf %199 : vector<8x512xf32> to vector<8x512xbf16>
    %c0_58 = arith.constant 0 : index
    %c0_59 = arith.constant 0 : index
    %201 = vector.load %arg10[%c0_58, %c0_59] : memref<512x128xbf16, #tpu.memory_space<vmem>>, vector<512x128xbf16>
    %cst_60 = arith.constant dense<0.000000e+00> : vector<8x128xf32>
    %202 = tpu.matmul %200, %201, %cst_60 {dimension_numbers = #tpu.dot_dimension_numbers<[1], [0], [0], [1], [0, 0, 1, 1], [], []>} : vector<8x512xbf16>, vector<512x128xbf16>, vector<8x128xf32> -> vector<8x128xf32>
    %c0_61 = arith.constant 0 : index
    %c0_62 = arith.constant 0 : index
    %203 = vector.load %arg11[%c0_61, %c0_62] : memref<1x128xf32, #tpu.memory_space<vmem>>, vector<1x128xf32>
    %204 = vector.broadcast %203 : vector<1x128xf32> to vector<8x128xf32>
    %205 = arith.addf %202, %204 : vector<8x128xf32>
    %206 = arith.addf %191, %205 : vector<8x128xf32>
    %c0_63 = arith.constant 0 : index
    %c0_64 = arith.constant 0 : index
    %207 = vector.load %arg12[%c0_63, %c0_64] : memref<1x128xf32, #tpu.memory_space<vmem>>, vector<1x128xf32>
    %c0_65 = arith.constant 0 : index
    %c0_66 = arith.constant 0 : index
    %208 = vector.load %arg13[%c0_65, %c0_66] : memref<1x128xf32, #tpu.memory_space<vmem>>, vector<1x128xf32>
    %cst_67 = arith.constant dense<0.000000e+00> : vector<8xf32>
    %209 = vector.multi_reduction <add>, %206, %cst_67 [1] : vector<8x128xf32> to vector<8xf32>
    %210 = vector.shape_cast %209 : vector<8xf32> to vector<8x1xf32>
    %cst_68 = arith.constant 1.280000e+02 : f32
    %211 = vector.broadcast %cst_68 : f32 to vector<8x1xf32>
    %212 = arith.divf %210, %211 : vector<8x1xf32>
    %213 = vector.broadcast %212 : vector<8x1xf32> to vector<8x128xf32>
    %214 = arith.subf %206, %213 : vector<8x128xf32>
    %215 = arith.mulf %214, %214 : vector<8x128xf32>
    %cst_69 = arith.constant dense<0.000000e+00> : vector<8xf32>
    %216 = vector.multi_reduction <add>, %215, %cst_69 [1] : vector<8x128xf32> to vector<8xf32>
    %217 = vector.shape_cast %216 : vector<8xf32> to vector<8x1xf32>
    %cst_70 = arith.constant 1.280000e+02 : f32
    %218 = vector.broadcast %cst_70 : f32 to vector<8x1xf32>
    %219 = arith.divf %217, %218 : vector<8x1xf32>
    %cst_71 = arith.constant 9.99999974E-6 : f32
    %220 = vector.broadcast %cst_71 : f32 to vector<8x1xf32>
    %221 = arith.addf %219, %220 : vector<8x1xf32>
    %222 = math.rsqrt %221 : vector<8x1xf32>
    %223 = vector.broadcast %222 : vector<8x1xf32> to vector<8x128xf32>
    %224 = arith.mulf %214, %223 : vector<8x128xf32>
    %225 = vector.broadcast %207 : vector<1x128xf32> to vector<8x128xf32>
    %226 = arith.mulf %224, %225 : vector<8x128xf32>
    %227 = vector.broadcast %208 : vector<1x128xf32> to vector<8x128xf32>
    %228 = arith.addf %226, %227 : vector<8x128xf32>
    %229 = vector.shape_cast %228 : vector<8x128xf32> to vector<4x2x128xf32>
    %c0_72 = arith.constant 0 : index
    %c0_73 = arith.constant 0 : index
    %c0_74 = arith.constant 0 : index
    %230 = vector.load %arg14[%c0_72, %c0_73, %c0_74] : memref<4x2x128xf32, #tpu.memory_space<vmem>>, vector<4x2x128xf32>
    tpu.vector_store %arg14[%c0_72, %c0_73, %c0_74], %229 {strides = array<i32>} : memref<4x2x128xf32, #tpu.memory_space<vmem>>, vector<4x2x128xf32>,
    return
  }
  func.func @transform_0(%arg0: i32) -> (i32, i32, i32) {
    %c0_i32 = arith.constant 0 : i32
    %c0_i32_0 = arith.constant 0 : i32
    %c0_i32_1 = arith.constant 0 : i32
    return %arg0, %c0_i32, %c0_i32_0 : i32, i32, i32
  }
  func.func @transform_1(%arg0: i32) -> (i32, i32) {
    %c0_i32 = arith.constant 0 : i32
    %c0_i32_0 = arith.constant 0 : i32
    %c0_i32_1 = arith.constant 0 : i32
    return %c0_i32, %c0_i32_0 : i32, i32
  }
  func.func @transform_2(%arg0: i32) -> (i32, i32) {
    %c0_i32 = arith.constant 0 : i32
    %c0_i32_0 = arith.constant 0 : i32
    %c0_i32_1 = arith.constant 0 : i32
    return %c0_i32, %c0_i32_0 : i32, i32
  }
  func.func @transform_3(%arg0: i32) -> (i32, i32) {
    %c0_i32 = arith.constant 0 : i32
    %c0_i32_0 = arith.constant 0 : i32
    %c0_i32_1 = arith.constant 0 : i32
    return %c0_i32, %c0_i32_0 : i32, i32
  }
  func.func @transform_4(%arg0: i32) -> (i32, i32) {
    %c0_i32 = arith.constant 0 : i32
    %c0_i32_0 = arith.constant 0 : i32
    %c0_i32_1 = arith.constant 0 : i32
    return %c0_i32, %c0_i32_0 : i32, i32
  }
  func.func @transform_5(%arg0: i32) -> (i32, i32) {
    %c0_i32 = arith.constant 0 : i32
    %c0_i32_0 = arith.constant 0 : i32
    %c0_i32_1 = arith.constant 0 : i32
    return %c0_i32, %c0_i32_0 : i32, i32
  }
  func.func @transform_6(%arg0: i32) -> (i32, i32) {
    %c0_i32 = arith.constant 0 : i32
    %c0_i32_0 = arith.constant 0 : i32
    %c0_i32_1 = arith.constant 0 : i32
    return %c0_i32, %c0_i32_0 : i32, i32
  }
  func.func @transform_7(%arg0: i32) -> (i32, i32) {
    %c0_i32 = arith.constant 0 : i32
    %c0_i32_0 = arith.constant 0 : i32
    %c0_i32_1 = arith.constant 0 : i32
    return %c0_i32, %c0_i32_0 : i32, i32
  }
  func.func @transform_8(%arg0: i32) -> (i32, i32) {
    %c0_i32 = arith.constant 0 : i32
    %c0_i32_0 = arith.constant 0 : i32
    %c0_i32_1 = arith.constant 0 : i32
    return %c0_i32, %c0_i32_0 : i32, i32
  }
  func.func @transform_9(%arg0: i32) -> (i32, i32) {
    %c0_i32 = arith.constant 0 : i32
    %c0_i32_0 = arith.constant 0 : i32
    %c0_i32_1 = arith.constant 0 : i32
    return %c0_i32, %c0_i32_0 : i32, i32
  }
  func.func @transform_10(%arg0: i32) -> (i32, i32) {
    %c0_i32 = arith.constant 0 : i32
    %c0_i32_0 = arith.constant 0 : i32
    %c0_i32_1 = arith.constant 0 : i32
    return %c0_i32, %c0_i32_0 : i32, i32
  }
  func.func @transform_11(%arg0: i32) -> (i32, i32) {
    %c0_i32 = arith.constant 0 : i32
    %c0_i32_0 = arith.constant 0 : i32
    %c0_i32_1 = arith.constant 0 : i32
    return %c0_i32, %c0_i32_0 : i32, i32
  }
  func.func @transform_12(%arg0: i32) -> (i32, i32) {
    %c0_i32 = arith.constant 0 : i32
    %c0_i32_0 = arith.constant 0 : i32
    %c0_i32_1 = arith.constant 0 : i32
    return %c0_i32, %c0_i32_0 : i32, i32
  }
  func.func @transform_13(%arg0: i32) -> (i32, i32, i32) {
    %c0_i32 = arith.constant 0 : i32
    %c0_i32_0 = arith.constant 0 : i32
    %c0_i32_1 = arith.constant 0 : i32
    return %arg0, %c0_i32, %c0_i32_0 : i32, i32, i32
  }
}

module attributes {stable_mosaic.version = 11 : i64} {
  func.func @_fc_logsoftmax_kernel(%arg0: i32, %arg1: memref<16x128xf32, #tpu.memory_space<vmem>>, %arg2: memref<128x256xbf16, #tpu.memory_space<vmem>>, %arg3: memref<1x256xf32, #tpu.memory_space<vmem>>, %arg4: memref<16x256xf32, #tpu.memory_space<vmem>>) attributes {dimension_semantics = [#tpu.dimension_semantics<parallel>], iteration_bounds = array<i64: 1>, scalar_prefetch = 0 : i64, scratch_operands = 0 : i64, tpu.core_type = #tpu.core_type<tc>, window_params = [{transform_indices = @transform_0, window_bounds = array<i64: 16, 128>}, {pipeline_mode = #tpu.pipeline_mode<synchronous>, transform_indices = @transform_1, window_bounds = array<i64: 128, 256>}, {pipeline_mode = #tpu.pipeline_mode<synchronous>, transform_indices = @transform_2, window_bounds = array<i64: 1, 256>}, {transform_indices = @transform_3, window_bounds = array<i64: 16, 256>}]} {
    %c0 = arith.constant 0 : index
    %c0_0 = arith.constant 0 : index
    %0 = vector.load %arg1[%c0, %c0_0] : memref<16x128xf32, #tpu.memory_space<vmem>>, vector<16x128xf32>
    %1 = arith.truncf %0 : vector<16x128xf32> to vector<16x128xbf16>
    %c0_1 = arith.constant 0 : index
    %c0_2 = arith.constant 0 : index
    %2 = vector.load %arg2[%c0_1, %c0_2] : memref<128x256xbf16, #tpu.memory_space<vmem>>, vector<128x256xbf16>
    %cst = arith.constant dense<0.000000e+00> : vector<16x256xf32>
    %3 = tpu.matmul %1, %2, %cst {dimension_numbers = #tpu.dot_dimension_numbers<[1], [0], [0], [1], [0, 0, 1, 1], [], []>} : vector<16x128xbf16>, vector<128x256xbf16>, vector<16x256xf32> -> vector<16x256xf32>
    %c0_3 = arith.constant 0 : index
    %c0_4 = arith.constant 0 : index
    %4 = vector.load %arg3[%c0_3, %c0_4] : memref<1x256xf32, #tpu.memory_space<vmem>>, vector<1x256xf32>
    %5 = vector.broadcast %4 : vector<1x256xf32> to vector<16x256xf32>
    %6 = arith.addf %3, %5 : vector<16x256xf32>
    %cst_5 = arith.constant dense<0xFF800000> : vector<16xf32>
    %7 = vector.multi_reduction <maximumf>, %6, %cst_5 [1] : vector<16x256xf32> to vector<16xf32>
    %8 = vector.shape_cast %7 : vector<16xf32> to vector<16x1xf32>
    %9 = vector.broadcast %8 : vector<16x1xf32> to vector<16x256xf32>
    %10 = arith.subf %6, %9 : vector<16x256xf32>
    %11 = math.exp %10 : vector<16x256xf32>
    %cst_6 = arith.constant dense<0.000000e+00> : vector<16xf32>
    %12 = vector.multi_reduction <add>, %11, %cst_6 [1] : vector<16x256xf32> to vector<16xf32>
    %13 = vector.shape_cast %12 : vector<16xf32> to vector<16x1xf32>
    %14 = math.log %13 : vector<16x1xf32>
    %15 = vector.broadcast %14 : vector<16x1xf32> to vector<16x256xf32>
    %16 = arith.subf %10, %15 : vector<16x256xf32>
    %c0_7 = arith.constant 0 : index
    %c0_8 = arith.constant 0 : index
    %17 = vector.load %arg4[%c0_7, %c0_8] : memref<16x256xf32, #tpu.memory_space<vmem>>, vector<16x256xf32>
    tpu.vector_store %arg4[%c0_7, %c0_8], %16 {strides = array<i32>} : memref<16x256xf32, #tpu.memory_space<vmem>>, vector<16x256xf32>,
    return
  }
  func.func @transform_0(%arg0: i32) -> (i32, i32) {
    %c0_i32 = arith.constant 0 : i32
    %c0_i32_0 = arith.constant 0 : i32
    return %arg0, %c0_i32 : i32, i32
  }
  func.func @transform_1(%arg0: i32) -> (i32, i32) {
    %c0_i32 = arith.constant 0 : i32
    %c0_i32_0 = arith.constant 0 : i32
    %c0_i32_1 = arith.constant 0 : i32
    return %c0_i32, %c0_i32_0 : i32, i32
  }
  func.func @transform_2(%arg0: i32) -> (i32, i32) {
    %c0_i32 = arith.constant 0 : i32
    %c0_i32_0 = arith.constant 0 : i32
    %c0_i32_1 = arith.constant 0 : i32
    return %c0_i32, %c0_i32_0 : i32, i32
  }
  func.func @transform_3(%arg0: i32) -> (i32, i32) {
    %c0_i32 = arith.constant 0 : i32
    %c0_i32_0 = arith.constant 0 : i32
    return %arg0, %c0_i32 : i32, i32
  }
}

</mosaic_0001>

<llo_original>
// kernel: transformer_forward.4
$region0: #{transformer_forward.4}
  #allocation0 [shape = 'u32[]', space=smem, size = 0x4, offset = 0x4, fixed_abs, tag = 'smem constant byte address 0x4 - core index']
  #allocation1 [shape = 'u32[144,128]{1,0:T(1,128)}', space=vmem, size = 0x12000, scoped, tag = 'internal scratch']
  %s0 = inlined_call_operand.hbm [shape: f32[16,16], index: 0, kind: input, shape index: {}]
  %s1 = inlined_call_operand.hbm [shape: bf16[16,128], index: 1, kind: input, shape index: {}]
  %s2 = inlined_call_operand.hbm [shape: f32[1,128], index: 2, kind: input, shape index: {}]
  %s3 = inlined_call_operand.hbm [shape: f32[16,128], index: 3, kind: output, shape index: {}]
  %s4 = sld [smem:[#allocation0]]
  $region34: #{transformer_forward.4} parent=0
    _
  %s6 = ssub.s32 1, %s4
  %s7 = scalar_select 0, %s6, %s4
  $region1: #{transformer_forward.4} parent=0
    #allocation2 [shape = 'u8[8192]{0}', space=vmem, size = 0x2000, scoped, tag = 'input window, operand 0, single buffered']
    #allocation3 [shape = 's32[1]{0}', space=sflag, size = 0x4, scoped, tag = 'scoped memory for transformer_forward.4']
    #allocation4 [shape = 's32[1]{0}', space=sflag, size = 0x4, scoped, tag = 'scoped memory for transformer_forward.4']
    #allocation5 [shape = 'u8[4096]{0}', space=vmem, size = 0x1000, scoped, tag = 'input window, operand 1, single buffered']
    #allocation6 [shape = 's32[1]{0}', space=sflag, size = 0x4, scoped, tag = 'scoped memory for transformer_forward.4']
    #allocation7 [shape = 'u8[512]{0}', space=vmem, size = 0x400, scoped, tag = 'input window, operand 2, single buffered']
    #allocation8 [shape = 'u8[8192]{0}', space=vmem, size = 0x2000, scoped, tag = 'output window, operand 0, single buffered']
    %8 = vsyncpa [#allocation3], 0
    %9 = vsyncpa [#allocation6], 0
    %10 = vsyncpa [#allocation4], 0
    // Predicated region
    $region2: #{transformer_forward.4} parent=1 // pred_check
      _
    $region3: #{transformer_forward.4} parent=1 // pred_check_branch
      %12 = sbr.rel (0) target = $region5
    $region4: #{transformer_forward.4} parent=1 // pred_region
      %s14 = ssub.s32 256, 256
      %15 = vsyncadd [#allocation3], %s14
      %s16 = sshll.u32 [#allocation2], 4
      %s17 = int_to_ptr.vmem [resolvable:$true] %s16
      %22 = dma.hbm_to_vmem [thread:$0]  %s0, 256, %s17, [#allocation3], 128, 128, 8
    $region5: #{transformer_forward.4} parent=1 // pred_fallthru
      _
    // Predicated region
    $region6: #{transformer_forward.4} parent=1 // pred_check
      _
    $region7: #{transformer_forward.4} parent=1 // pred_check_branch
      %24 = sbr.rel (0) target = $region9
    $region8: #{transformer_forward.4} parent=1 // pred_region
      %s26 = ssub.s32 128, 128
      %27 = vsyncadd [#allocation6], %s26
      %s28 = sshll.u32 [#allocation5], 4
      %s29 = int_to_ptr.vmem [resolvable:$true] %s28
      %34 = dma.hbm_to_vmem [thread:$0]  %s1, 128, %s29, [#allocation6], 64, 64, 4
    $region9: #{transformer_forward.4} parent=1 // pred_fallthru
      _
    // Predicated region
    $region10: #{transformer_forward.4} parent=1 // pred_check
      _
    $region11: #{transformer_forward.4} parent=1 // pred_check_branch
      %36 = sbr.rel (0) target = $region13
    $region12: #{transformer_forward.4} parent=1 // pred_region
      %s38 = ssub.s32 16, 16
      %39 = vsyncadd [#allocation6], %s38
      %s41 = sshll.u32 [#allocation7], 4
      %s42 = int_to_ptr.vmem [resolvable:$true] %s41
      %44 = dma.hbm_to_vmem [thread:$0]  %s2, 16, %s42, [#allocation6]
    $region13: #{transformer_forward.4} parent=1 // pred_fallthru
      _
    // Predicated region
    $region14: #{transformer_forward.4} parent=1 // pred_check
      _
    $region15: #{transformer_forward.4} parent=1 // pred_check_branch
      %46 = sbr.rel (0) target = $region17
    $region16: #{transformer_forward.4} parent=1 // pred_region
      %47 = dma.done [#allocation3], 256
    $region17: #{transformer_forward.4} parent=1 // pred_fallthru
      _
    // Predicated region
    $region18: #{transformer_forward.4} parent=1 // pred_check
      _
    $region19: #{transformer_forward.4} parent=1 // pred_check_branch
      %49 = sbr.rel (0) target = $region21
    $region20: #{transformer_forward.4} parent=1 // pred_region
      %50 = dma.done [#allocation6], 128
    $region21: #{transformer_forward.4} parent=1 // pred_fallthru
      _
    // Predicated region
    $region22: #{transformer_forward.4} parent=1 // pred_check
      _
    $region23: #{transformer_forward.4} parent=1 // pred_check_branch
      %52 = sbr.rel (0) target = $region25
    $region24: #{transformer_forward.4} parent=1 // pred_region
      %53 = dma.done [#allocation6], 16
    $region25: #{transformer_forward.4} parent=1 // pred_fallthru
      _
    %v55 = vld [vmem:[#allocation2] sm:$0xff]
    %v56 = vld [vmem:[#allocation2 + $0x8] sm:$0xff]
    %v57 = vpack.c.bf16 %v56, %v55
    %v58 = vld [vmem:[#allocation5] sm:$0xf]
    %v59 = vld [vmem:[#allocation5 + $0x4] sm:$0xf]
    %v60 = vld [vmem:[#allocation7] sm:$0x1]
    %v62 = vlaneseq
    %v63 = vshrl.u32 %v62, 7
    %v64 = vsub.s32 0, %v63
    %v65 = vrot.slane %v60, %v64
    %v69 = vunpack.c.l.b16 %v58
    %v70 = vunpack.c.l.b16 %v59
    %v71 = vpack.c.b16 %v70, %v69
    %vm73 = vcmask 130048
    %v75 = vsel %vm73, %v57, 0
    %77 = vmatprep.subr.bf16.mxu0 0
    %78 = vmatpush1.bf16.msra.mxu0 %v71
    %79 = vmatprep.subr.bf16.mxu0 0
    %80 = vmatpush1.bf16.msra.mxu0 0
    %81 = vmatprep.subr.bf16.mxu0 0
    %82 = vmatpush1.bf16.msra.mxu0 0
    %83 = vmatprep.subr.bf16.mxu0 0
    %84 = vmatpush1.bf16.msra.mxu0 0
    %85 = vmatprep.subr.bf16.mxu0 0
    %86 = vmatpush1.bf16.msra.mxu0 0
    %87 = vmatprep.subr.bf16.mxu0 0
    %88 = vmatpush1.bf16.msra.mxu0 0
    %89 = vmatprep.subr.bf16.mxu0 0
    %90 = vmatpush1.bf16.msra.mxu0 0
    %91 = vmatprep.subr.bf16.mxu0 0
    %92 = vmatpush1.bf16.msra.mxu0 0
    %93 = vmatprep.subr.bf16.mxu0 0
    %94 = vmatpush1.bf16.msra.mxu0 0
    %95 = vmatprep.subr.bf16.mxu0 0
    %96 = vmatpush1.bf16.msra.mxu0 0
    %97 = vmatprep.subr.bf16.mxu0 0
    %98 = vmatpush1.bf16.msra.mxu0 0
    %99 = vmatprep.subr.bf16.mxu0 0
    %100 = vmatpush1.bf16.msra.mxu0 0
    %101 = vmatprep.subr.bf16.mxu0 0
    %102 = vmatpush1.bf16.msra.mxu0 0
    %103 = vmatprep.subr.bf16.mxu0 0
    %104 = vmatpush1.bf16.msra.mxu0 0
    %105 = vmatprep.subr.bf16.mxu0 0
    %106 = vmatpush1.bf16.msra.mxu0 0
    %107 = vmatprep.subr.bf16.mxu0 0
    %108 = vmatpush1.bf16.msra.mxu0 0
    %109 = vmatprep.mubr.bf16.mxu0 0
    %110 = vmatmul.mubr.bf16.gmra.mrb[0].mxu0 %v75
    %v111 = vpop.f32.mrb[0].mxu0
    %v112 = vadd.f32 %v65, %v111
    %v113 = vpop.f32.mrb[0].mxu0
    %v114 = vpop.f32.mrb[0].mxu0
    %v115 = vadd.f32 %v65, %v114
    %v116 = vpop.f32.mrb[0].mxu0
    %117 = vdwg.mxu0
    %118 = vst [vmem:[#allocation8] sm:$0xff] %v112
    %119 = vst [vmem:[#allocation8 + $0x8] sm:$0xff] %v115
    // Predicated region
    $region26: #{transformer_forward.4} parent=1 // pred_check
      _
    $region27: #{transformer_forward.4} parent=1 // pred_check_branch
      %121 = sbr.rel (0) target = $region29
    $region28: #{transformer_forward.4} parent=1 // pred_region
      %s123 = ssub.s32 256, 256
      %124 = vsyncadd [#allocation4], %s123
      %s125 = sshll.u32 [#allocation8], 4
      %s126 = int_to_ptr.vmem [resolvable:$true] %s125
      %131 = dma.vmem_to_hbm [thread:$0]  %s126, 256, %s3, [#allocation4], 128, 128, 8
    $region29: #{transformer_forward.4} parent=1 // pred_fallthru
      _
    // Predicated region
    $region30: #{transformer_forward.4} parent=1 // pred_check
      _
    $region31: #{transformer_forward.4} parent=1 // pred_check_branch
      %133 = sbr.rel (0) target = $region33
    $region32: #{transformer_forward.4} parent=1 // pred_region
      %134 = dma.done [#allocation4], 256
    $region33: #{transformer_forward.4} parent=1 // pred_fallthru
      _
    %135 = vsyncpa [#allocation3], 1
    %136 = vsyncpa [#allocation6], 1
    %137 = vsyncpa [#allocation4], 1

// kernel: transformer_forward.7
$region0: #{transformer_forward.7}
  #allocation0 [shape = 'u32[]', space=smem, size = 0x4, offset = 0x4, fixed_abs, tag = 'smem constant byte address 0x4 - core index']
  #allocation1 [shape = 'u32[144,128]{1,0:T(1,128)}', space=vmem, size = 0x12000, scoped, tag = 'internal scratch']
  %s0 = inlined_call_operand.hbm [shape: f32[16,128], index: 0, kind: input, shape index: {}]
  %s1 = inlined_call_operand.hbm [shape: bf16[128,256], index: 1, kind: input, shape index: {}]
  %s2 = inlined_call_operand.hbm [shape: f32[1,256], index: 2, kind: input, shape index: {}]
  %s3 = inlined_call_operand.hbm [shape: f32[16,256], index: 3, kind: output, shape index: {}]
  %s4 = sld [smem:[#allocation0]]
  $region34: #{transformer_forward.7} parent=0
    _
  %s6 = ssub.s32 1, %s4
  %s7 = scalar_select 0, %s6, %s4
  $region1: #{transformer_forward.7} parent=0
    #allocation2 [shape = 'u8[8192]{0}', space=vmem, size = 0x2000, scoped, tag = 'input window, operand 0, single buffered']
    #allocation3 [shape = 's32[1]{0}', space=sflag, size = 0x4, scoped, tag = 'scoped memory for transformer_forward.7']
    #allocation4 [shape = 's32[1]{0}', space=sflag, size = 0x4, scoped, tag = 'scoped memory for transformer_forward.7']
    #allocation5 [shape = 'u8[65536]{0}', space=vmem, size = 0x10000, scoped, tag = 'input window, operand 1, single buffered']
    #allocation6 [shape = 's32[1]{0}', space=sflag, size = 0x4, scoped, tag = 'scoped memory for transformer_forward.7']
    #allocation7 [shape = 'u8[1024]{0}', space=vmem, size = 0x400, scoped, tag = 'input window, operand 2, single buffered']
    #allocation8 [shape = 'u8[16384]{0}', space=vmem, size = 0x4000, scoped, tag = 'output window, operand 0, single buffered']
    %8 = vsyncpa [#allocation3], 0
    %9 = vsyncpa [#allocation6], 0
    %10 = vsyncpa [#allocation4], 0
    // Predicated region
    $region2: #{transformer_forward.7} parent=1 // pred_check
      _
    $region3: #{transformer_forward.7} parent=1 // pred_check_branch
      %12 = sbr.rel (0) target = $region5
    $region4: #{transformer_forward.7} parent=1 // pred_region
      %s14 = ssub.s32 256, 256
      %15 = vsyncadd [#allocation3], %s14
      %s16 = sshll.u32 [#allocation2], 4
      %s17 = int_to_ptr.vmem [resolvable:$true] %s16
      %22 = dma.hbm_to_vmem [thread:$0]  %s0, 256, %s17, [#allocation3], 128, 128, 8
    $region5: #{transformer_forward.7} parent=1 // pred_fallthru
      _
    // Predicated region
    $region6: #{transformer_forward.7} parent=1 // pred_check
      _
    $region7: #{transformer_forward.7} parent=1 // pred_check_branch
      %24 = sbr.rel (0) target = $region9
    $region8: #{transformer_forward.7} parent=1 // pred_region
      %s26 = ssub.s32 2048, 2048
      %27 = vsyncadd [#allocation6], %s26
      %s28 = sshll.u32 [#allocation5], 4
      %s29 = int_to_ptr.vmem [resolvable:$true] %s28
      %34 = dma.hbm_to_vmem [thread:$0]  %s1, 2048, %s29, [#allocation6], 128, 128, 8
    $region9: #{transformer_forward.7} parent=1 // pred_fallthru
      _
    // Predicated region
    $region10: #{transformer_forward.7} parent=1 // pred_check
      _
    $region11: #{transformer_forward.7} parent=1 // pred_check_branch
      %36 = sbr.rel (0) target = $region13
    $region12: #{transformer_forward.7} parent=1 // pred_region
      %s38 = ssub.s32 32, 32
      %39 = vsyncadd [#allocation6], %s38
      %s41 = sshll.u32 [#allocation7], 4
      %s42 = int_to_ptr.vmem [resolvable:$true] %s41
      %44 = dma.hbm_to_vmem [thread:$0]  %s2, 32, %s42, [#allocation6]
    $region13: #{transformer_forward.7} parent=1 // pred_fallthru
      _
    // Predicated region
    $region14: #{transformer_forward.7} parent=1 // pred_check
      _
    $region15: #{transformer_forward.7} parent=1 // pred_check_branch
      %46 = sbr.rel (0) target = $region17
    $region16: #{transformer_forward.7} parent=1 // pred_region
      %47 = dma.done [#allocation3], 256
    $region17: #{transformer_forward.7} parent=1 // pred_fallthru
      _
    // Predicated region
    $region18: #{transformer_forward.7} parent=1 // pred_check
      _
    $region19: #{transformer_forward.7} parent=1 // pred_check_branch
      %49 = sbr.rel (0) target = $region21
    $region20: #{transformer_forward.7} parent=1 // pred_region
      %50 = dma.done [#allocation6], 2048
    $region21: #{transformer_forward.7} parent=1 // pred_fallthru
      _
    // Predicated region
    $region22: #{transformer_forward.7} parent=1 // pred_check
      _
    $region23: #{transformer_forward.7} parent=1 // pred_check_branch
      %52 = sbr.rel (0) target = $region25
    $region24: #{transformer_forward.7} parent=1 // pred_region
      %53 = dma.done [#allocation6], 32
    $region25: #{transformer_forward.7} parent=1 // pred_fallthru
      _
    %v55 = vld [vmem:[#allocation2] sm:$0xff]
    %v56 = vld [vmem:[#allocation2 + $0x8] sm:$0xff]
    %v57 = vpack.c.bf16 %v56, %v55
    %v58 = vld [vmem:[#allocation5] sm:$0xff]
    %v59 = vld [vmem:[#allocation5 + $0x8] sm:$0xff]
    %v60 = vld [vmem:[#allocation5 + $0x10] sm:$0xff]
    %v61 = vld [vmem:[#allocation5 + $0x18] sm:$0xff]
    %v62 = vld [vmem:[#allocation5 + $0x20] sm:$0xff]
    %v63 = vld [vmem:[#allocation5 + $0x28] sm:$0xff]
    %v64 = vld [vmem:[#allocation5 + $0x30] sm:$0xff]
    %v65 = vld [vmem:[#allocation5 + $0x38] sm:$0xff]
    %v66 = vld [vmem:[#allocation5 + $0x40] sm:$0xff]
    %v67 = vld [vmem:[#allocation5 + $0x48] sm:$0xff]
    %v68 = vld [vmem:[#allocation5 + $0x50] sm:$0xff]
    %v69 = vld [vmem:[#allocation5 + $0x58] sm:$0xff]
    %v70 = vld [vmem:[#allocation5 + $0x60] sm:$0xff]
    %v71 = vld [vmem:[#allocation5 + $0x68] sm:$0xff]
    %v72 = vld [vmem:[#allocation5 + $0x70] sm:$0xff]
    %v73 = vld [vmem:[#allocation5 + $0x78] sm:$0xff]
    %v74 = vld [vmem:[#allocation7] sm:$0x3]
    %v76 = vlaneseq
    %v77 = vshrl.u32 %v76, 7
    %v78 = vsub.s32 0, %v77
    %v79 = vrot.slane %v74, %v78
    %v80 = vlaneseq
    %v81 = vshrl.u32 %v80, 7
    %v82 = vsub.s32 1, %v81
    %v83 = vrot.slane %v74, %v82
    %v102 = vunpack.c.l.b16 %v58
    %v103 = vunpack.c.h.b16 %v58
    %v104 = vunpack.c.l.b16 %v59
    %v105 = vunpack.c.h.b16 %v59
    %v106 = vunpack.c.l.b16 %v60
    %v107 = vunpack.c.h.b16 %v60
    %v108 = vunpack.c.l.b16 %v61
    %v109 = vunpack.c.h.b16 %v61
    %v110 = vunpack.c.l.b16 %v62
    %v111 = vunpack.c.h.b16 %v62
    %v112 = vunpack.c.l.b16 %v63
    %v113 = vunpack.c.h.b16 %v63
    %v114 = vunpack.c.l.b16 %v64
    %v115 = vunpack.c.h.b16 %v64
    %v116 = vunpack.c.l.b16 %v65
    %v117 = vunpack.c.h.b16 %v65
    %v118 = vunpack.c.l.b16 %v66
    %v119 = vunpack.c.h.b16 %v66
    %v120 = vunpack.c.l.b16 %v67
    %v121 = vunpack.c.h.b16 %v67
    %v122 = vunpack.c.l.b16 %v68
    %v123 = vunpack.c.h.b16 %v68
    %v124 = vunpack.c.l.b16 %v69
    %v125 = vunpack.c.h.b16 %v69
    %v126 = vunpack.c.l.b16 %v70
    %v127 = vunpack.c.h.b16 %v70
    %v128 = vunpack.c.l.b16 %v71
    %v129 = vunpack.c.h.b16 %v71
    %v130 = vunpack.c.l.b16 %v72
    %v131 = vunpack.c.h.b16 %v72
    %v132 = vunpack.c.l.b16 %v73
    %v133 = vunpack.c.h.b16 %v73
    %v134 = vpack.c.b16 %v104, %v102
    %v135 = vpack.c.b16 %v105, %v103
    %v136 = vpack.c.b16 %v108, %v106
    %v137 = vpack.c.b16 %v109, %v107
    %v138 = vpack.c.b16 %v112, %v110
    %v139 = vpack.c.b16 %v113, %v111
    %v140 = vpack.c.b16 %v116, %v114
    %v141 = vpack.c.b16 %v117, %v115
    %v142 = vpack.c.b16 %v120, %v118
    %v143 = vpack.c.b16 %v121, %v119
    %v144 = vpack.c.b16 %v124, %v122
    %v145 = vpack.c.b16 %v125, %v123
    %v146 = vpack.c.b16 %v128, %v126
    %v147 = vpack.c.b16 %v129, %v127
    %v148 = vpack.c.b16 %v132, %v130
    %v149 = vpack.c.b16 %v133, %v131
    %166 = vmatprep.subr.bf16.mxu0 %v135
    %167 = vmatpush1.bf16.msra.mxu0 %v134
    %168 = vmatprep.subr.bf16.mxu0 %v137
    %169 = vmatpush1.bf16.msra.mxu0 %v136
    %170 = vmatprep.subr.bf16.mxu0 %v139
    %171 = vmatpush1.bf16.msra.mxu0 %v138
    %172 = vmatprep.subr.bf16.mxu0 %v141
    %173 = vmatpush1.bf16.msra.mxu0 %v140
    %174 = vmatprep.subr.bf16.mxu0 %v143
    %175 = vmatpush1.bf16.msra.mxu0 %v142
    %176 = vmatprep.subr.bf16.mxu0 %v145
    %177 = vmatpush1.bf16.msra.mxu0 %v144
    %178 = vmatprep.subr.bf16.mxu0 %v147
    %179 = vmatpush1.bf16.msra.mxu0 %v146
    %180 = vmatprep.subr.bf16.mxu0 %v149
    %181 = vmatpush1.bf16.msra.mxu0 %v148
    %182 = vmatprep.subr.bf16.mxu0 0
    %183 = vmatpush1.bf16.msra.mxu0 0
    %184 = vmatprep.subr.bf16.mxu0 0
    %185 = vmatpush1.bf16.msra.mxu0 0
    %186 = vmatprep.subr.bf16.mxu0 0
    %187 = vmatpush1.bf16.msra.mxu0 0
    %188 = vmatprep.subr.bf16.mxu0 0
    %189 = vmatpush1.bf16.msra.mxu0 0
    %190 = vmatprep.subr.bf16.mxu0 0
    %191 = vmatpush1.bf16.msra.mxu0 0
    %192 = vmatprep.subr.bf16.mxu0 0
    %193 = vmatpush1.bf16.msra.mxu0 0
    %194 = vmatprep.subr.bf16.mxu0 0
    %195 = vmatpush1.bf16.msra.mxu0 0
    %196 = vmatprep.subr.bf16.mxu0 0
    %197 = vmatpush1.bf16.msra.mxu0 0
    %198 = vmatprep.mubr.bf16.mxu0 0
    %199 = vmatmul.mubr.bf16.gmra.mrb[0].mxu0 %v57
    %v200 = vpop.f32.mrb[0].mxu0
    %v201 = vadd.f32 %v79, %v200
    %v202 = vpop.f32.mrb[0].mxu0
    %v203 = vadd.f32 %v83, %v202
    %v204 = vpop.f32.mrb[0].mxu0
    %v205 = vadd.f32 %v79, %v204
    %v206 = vpop.f32.mrb[0].mxu0
    %v207 = vadd.f32 %v83, %v206
    %208 = vdwg.mxu0
    %v209 = vmax.f32 %v201, %v203
    %210 = vmax.xlane.f32.xlu0 %v209
    %v211 = vpop.xlane.xlu0 %210
    %v212 = vmax.f32 %v205, %v207
    %213 = vmax.xlane.f32.xlu0 %v212
    %v214 = vpop.xlane.xlu0 %213
    %v215 = vsub.f32 %v201, %v211
    %v216 = vsub.f32 %v203, %v211
    %v217 = vsub.f32 %v205, %v214
    %v218 = vsub.f32 %v207, %v214
    %v219 = vmul.f32 %v215, 1.442695
    %v220 = vpow.pop %v219
    %v221 = vmul.f32 %v216, 1.442695
    %v222 = vpow.pop %v221
    %v223 = vmul.f32 %v217, 1.442695
    %v224 = vpow.pop %v223
    %v225 = vmul.f32 %v218, 1.442695
    %v226 = vpow.pop %v225
    %v227 = vadd.f32 %v220, %v222
    %228 = vadd.xlane.f32.xlu0 %v227
    %v229 = vpop.xlane.xlu0 %228
    %v230 = vadd.f32 %v224, %v226
    %231 = vadd.xlane.f32.xlu0 %v230
    %v232 = vpop.xlane.xlu0 %231
    %v233 = vlog2.pop %v229
    %v234 = vmul.f32 %v233, 0.6931472
    %v235 = vlog2.pop %v232
    %v236 = vmul.f32 %v235, 0.6931472
    %v237 = vsub.f32 %v215, %v234
    %v238 = vsub.f32 %v216, %v234
    %v239 = vsub.f32 %v217, %v236
    %v240 = vsub.f32 %v218, %v236
    %241 = vst [vmem:[#allocation8] sm:$0xff] %v237
    %242 = vst [vmem:[#allocation8 + $0x8] sm:$0xff] %v238
    %243 = vst [vmem:[#allocation8 + $0x10] sm:$0xff] %v239
    %244 = vst [vmem:[#allocation8 + $0x18] sm:$0xff] %v240
    // Predicated region
    $region26: #{transformer_forward.7} parent=1 // pred_check
      _
    $region27: #{transformer_forward.7} parent=1 // pred_check_branch
      %246 = sbr.rel (0) target = $region29
    $region28: #{transformer_forward.7} parent=1 // pred_region
      %s248 = ssub.s32 512, 512
      %249 = vsyncadd [#allocation4], %s248
      %s250 = sshll.u32 [#allocation8], 4
      %s251 = int_to_ptr.vmem [resolvable:$true] %s250
      %256 = dma.vmem_to_hbm [thread:$0]  %s251, 512, %s3, [#allocation4], 256, 256, 16
    $region29: #{transformer_forward.7} parent=1 // pred_fallthru
      _
    // Predicated region
    $region30: #{transformer_forward.7} parent=1 // pred_check
      _
    $region31: #{transformer_forward.7} parent=1 // pred_check_branch
      %258 = sbr.rel (0) target = $region33
    $region32: #{transformer_forward.7} parent=1 // pred_region
      %259 = dma.done [#allocation4], 512
    $region33: #{transformer_forward.7} parent=1 // pred_fallthru
      _
    %260 = vsyncpa [#allocation3], 1
    %261 = vsyncpa [#allocation6], 1
    %262 = vsyncpa [#allocation4], 1

// kernel: transformer_forward.5
$region0: #{transformer_forward.5}
  #allocation0 [shape = 'u32[]', space=smem, size = 0x4, offset = 0x4, fixed_abs, tag = 'smem constant byte address 0x4 - core index']
  #allocation1 [shape = 'u32[144,128]{1,0:T(1,128)}', space=vmem, size = 0x12000, scoped, tag = 'internal scratch']
  %s0 = inlined_call_operand.hbm [shape: f32[8,2,128], index: 0, kind: input, shape index: {}]
  %s1 = inlined_call_operand.hbm [shape: bf16[128,384], index: 1, kind: input, shape index: {}]
  %s2 = inlined_call_operand.hbm [shape: f32[1,384], index: 2, kind: input, shape index: {}]
  %s3 = inlined_call_operand.hbm [shape: bf16[128,128], index: 3, kind: input, shape index: {}]
  %s4 = inlined_call_operand.hbm [shape: f32[1,128], index: 4, kind: input, shape index: {}]
  %s5 = inlined_call_operand.hbm [shape: f32[1,128], index: 5, kind: input, shape index: {}]
  %s6 = inlined_call_operand.hbm [shape: f32[1,128], index: 6, kind: input, shape index: {}]
  %s7 = inlined_call_operand.hbm [shape: bf16[128,512], index: 7, kind: input, shape index: {}]
  %s8 = inlined_call_operand.hbm [shape: f32[1,512], index: 8, kind: input, shape index: {}]
  %s9 = inlined_call_operand.hbm [shape: bf16[512,128], index: 9, kind: input, shape index: {}]
  %s10 = inlined_call_operand.hbm [shape: f32[1,128], index: 10, kind: input, shape index: {}]
  %s11 = inlined_call_operand.hbm [shape: f32[1,128], index: 11, kind: input, shape index: {}]
  %s12 = inlined_call_operand.hbm [shape: f32[1,128], index: 12, kind: input, shape index: {}]
  %s13 = inlined_call_operand.hbm [shape: f32[8,2,128], index: 13, kind: output, shape index: {}]
  %s14 = sld [smem:[#allocation0]]
  $region137: #{transformer_forward.5} parent=0
    _
  %s16 = ssub.s32 1, %s14
  %s17 = scalar_select 0, %s16, %s14
  $region1: #{transformer_forward.5} parent=0
    #allocation2 [shape = 'u8[8192]{0}', space=vmem, size = 0x2000, scoped, tag = 'input window, operand 0']
    #allocation3 [shape = 's32[2]{0}', space=sflag, size = 0x8, scoped, tag = 'scoped memory for transformer_forward.5']
    #allocation4 [shape = 's32[2]{0}', space=sflag, size = 0x8, scoped, tag = 'scoped memory for transformer_forward.5']
    #allocation5 [shape = 'u8[98304]{0}', space=vmem, size = 0x18000, scoped, tag = 'input window, operand 1, single buffered']
    #allocation6 [shape = 's32[1]{0}', space=sflag, size = 0x4, scoped, tag = 'scoped memory for transformer_forward.5']
    #allocation7 [shape = 'u8[1536]{0}', space=vmem, size = 0x800, scoped, tag = 'input window, operand 2, single buffered']
    #allocation8 [shape = 'u8[32768]{0}', space=vmem, size = 0x8000, scoped, tag = 'input window, operand 3, single buffered']
    #allocation9 [shape = 's32[1]{0}', space=sflag, size = 0x4, scoped, tag = 'scoped memory for transformer_forward.5']
    #allocation10 [shape = 'u8[512]{0}', space=vmem, size = 0x400, scoped, tag = 'input window, operand 4, single buffered']
    #allocation11 [shape = 'u8[512]{0}', space=vmem, size = 0x400, scoped, tag = 'input window, operand 5, single buffered']
    #allocation12 [shape = 's32[1]{0}', space=sflag, size = 0x4, scoped, tag = 'scoped memory for transformer_forward.5']
    #allocation13 [shape = 'u8[512]{0}', space=vmem, size = 0x400, scoped, tag = 'input window, operand 6, single buffered']
    #allocation14 [shape = 'u8[131072]{0}', space=vmem, size = 0x20000, scoped, tag = 'input window, operand 7, single buffered']
    #allocation15 [shape = 's32[1]{0}', space=sflag, size = 0x4, scoped, tag = 'scoped memory for transformer_forward.5']
    #allocation16 [shape = 'u8[2048]{0}', space=vmem, size = 0x800, scoped, tag = 'input window, operand 8, single buffered']
    #allocation17 [shape = 'u8[131072]{0}', space=vmem, size = 0x20000, scoped, tag = 'input window, operand 9, single buffered']
    #allocation18 [shape = 's32[1]{0}', space=sflag, size = 0x4, scoped, tag = 'scoped memory for transformer_forward.5']
    #allocation19 [shape = 'u8[512]{0}', space=vmem, size = 0x400, scoped, tag = 'input window, operand 10, single buffered']
    #allocation20 [shape = 'u8[512]{0}', space=vmem, size = 0x400, scoped, tag = 'input window, operand 11, single buffered']
    #allocation21 [shape = 's32[1]{0}', space=sflag, size = 0x4, scoped, tag = 'scoped memory for transformer_forward.5']
    #allocation22 [shape = 'u8[512]{0}', space=vmem, size = 0x400, scoped, tag = 'input window, operand 12, single buffered']
    #allocation23 [shape = 'u8[8192]{0}', space=vmem, size = 0x2000, scoped, tag = 'output window, operand 0']
    %18 = vsyncpa [#allocation3], 0
    %s19 = scalar_lea.sflag [#allocation3], 1
    %20 = vsyncpa %s19, 0
    %21 = vsyncpa [#allocation6], 0
    %22 = vsyncpa [#allocation9], 0
    %23 = vsyncpa [#allocation12], 0
    %24 = vsyncpa [#allocation15], 0
    %25 = vsyncpa [#allocation18], 0
    %26 = vsyncpa [#allocation21], 0
    %27 = vsyncpa [#allocation4], 0
    %s28 = scalar_lea.sflag [#allocation4], 1
    %29 = vsyncpa %s28, 0
    loop: start=0, step=1, limit=4
    $region2: #{transformer_forward.5} parent=1 // loop_pre_header
      _
    $region3: #{transformer_forward.5} parent=1 // loop_header
      %s31 = sphi 0, %s35
      %p32 = scmp.ge.s32.totalorder %s31, 4
      %s41 = sphi 0, %s43
      %s44 = sphi 0, %s41
      %s45 = sphi 0, %s44
      %s61 = sphi 0, %s45
      %s65 = sphi 0, %s65
      %s67 = sphi 0, %s65
      %s68 = sphi 0, %s67
      %s82 = sphi 0, %s68
      %s86 = sphi 0, %s86
      %s88 = sphi 0, %s86
      %s89 = sphi 0, %s88
      %s103 = sphi 0, %s89
      %s107 = sphi 0, %s107
      %s109 = sphi 0, %s107
      %s110 = sphi 0, %s109
      %s124 = sphi 0, %s110
      %s128 = sphi 0, %s128
      %s130 = sphi 0, %s128
      %s131 = sphi 0, %s130
      %s145 = sphi 0, %s131
      %s149 = sphi 0, %s149
      %s151 = sphi 0, %s149
      %s152 = sphi 0, %s151
      %s166 = sphi 0, %s152
      %s170 = sphi 0, %s170
      %s172 = sphi 0, %s170
      %s173 = sphi 0, %s172
      %s187 = sphi 0, %s173
      %s191 = sphi 0, %s191
      %s193 = sphi 0, %s191
      %s194 = sphi 0, %s193
      %s208 = sphi 0, %s194
      %s212 = sphi 0, %s212
      %s214 = sphi 0, %s212
      %s215 = sphi 0, %s214
      %s229 = sphi 0, %s215
      %s233 = sphi 0, %s233
      %s235 = sphi 0, %s233
      %s236 = sphi 0, %s235
      %s250 = sphi 0, %s236
      %s254 = sphi 0, %s254
      %s256 = sphi 0, %s254
      %s257 = sphi 0, %s256
      %s271 = sphi 0, %s257
      %s275 = sphi 0, %s275
      %s277 = sphi 0, %s275
      %s278 = sphi 0, %s277
      %s292 = sphi 0, %s278
      %s296 = sphi 0, %s296
      %s298 = sphi 0, %s296
      %s299 = sphi 0, %s298
      %s313 = sphi 0, %s299
      %s319 = sphi 0, %s321
      %s322 = sphi 0, %s319
      %s323 = sphi 0, %s322
      %s339 = sphi 0, %s323
    $region4: #{transformer_forward.5} parent=1 // loop_header_branch
      %34 = sbr.rel (%p32) target = $region8
    $region5: #{transformer_forward.5} parent=1 // loop_body
      %s36 = ssub.s32 %s31, 1
      %s37 = ssub.s32 %s31, 2
      %s38 = sadd.s32 %s31, 1
      %s39 = ssub.s32 %s31, %s38
      %p40 = scmp.eq.s32.totalorder %s39, 0
      %s42 = sadd.s32 %s41, 1
      %s43 = scalar_select %p40, %s41, %s42
      %p46 = pneg %p40
      %p47 = scmp.eq.s32.totalorder %s31, 1
      %p48 = por %p46, %p47
      %p49 = scmp.ne.s32.totalorder %s41, %s44
      %p50 = scmp.eq.s32.totalorder %s31, 0
      %p51 = por %p49, %p50
      %p52 = scmp.ne.s32.totalorder %s41, %s44
      %p53 = scmp.eq.s32.totalorder %s36, 1
      %p54 = por %p52, %p53
      %p55 = scmp.ne.s32.totalorder %s44, %s45
      %p56 = scmp.eq.s32.totalorder %s36, 0
      %p57 = por %p55, %p56
      %p58 = scmp.ne.s32.totalorder %s44, %s45
      %p59 = scmp.eq.s32.totalorder %s37, 1
      %p60 = por %p58, %p59
      %p62 = scmp.ne.s32.totalorder %s45, %s61
      %p63 = scmp.eq.s32.totalorder %s37, 0
      %p64 = por %p62, %p63
      %s66 = sadd.s32 %s65, 1
      %p69 = scmp.eq.s32.totalorder %s31, 1
      %p70 = scmp.ne.s32.totalorder %s65, %s67
      %p71 = scmp.eq.s32.totalorder %s31, 0
      %p72 = por %p70, %p71
      %p73 = scmp.ne.s32.totalorder %s65, %s67
      %p74 = scmp.eq.s32.totalorder %s36, 1
      %p75 = por %p73, %p74
      %p76 = scmp.ne.s32.totalorder %s67, %s68
      %p77 = scmp.eq.s32.totalorder %s36, 0
      %p78 = por %p76, %p77
      %p79 = scmp.ne.s32.totalorder %s67, %s68
      %p80 = scmp.eq.s32.totalorder %s37, 1
      %p81 = por %p79, %p80
      %p83 = scmp.ne.s32.totalorder %s68, %s82
      %p84 = scmp.eq.s32.totalorder %s37, 0
      %p85 = por %p83, %p84
      %s87 = sadd.s32 %s86, 1
      %p90 = scmp.eq.s32.totalorder %s31, 1
      %p91 = scmp.ne.s32.totalorder %s86, %s88
      %p92 = scmp.eq.s32.totalorder %s31, 0
      %p93 = por %p91, %p92
      %p94 = scmp.ne.s32.totalorder %s86, %s88
      %p95 = scmp.eq.s32.totalorder %s36, 1
      %p96 = por %p94, %p95
      %p97 = scmp.ne.s32.totalorder %s88, %s89
      %p98 = scmp.eq.s32.totalorder %s36, 0
      %p99 = por %p97, %p98
      %p100 = scmp.ne.s32.totalorder %s88, %s89
      %p101 = scmp.eq.s32.totalorder %s37, 1
      %p102 = por %p100, %p101
      %p104 = scmp.ne.s32.totalorder %s89, %s103
      %p105 = scmp.eq.s32.totalorder %s37, 0
      %p106 = por %p104, %p105
      %s108 = sadd.s32 %s107, 1
      %p111 = scmp.eq.s32.totalorder %s31, 1
      %p112 = scmp.ne.s32.totalorder %s107, %s109
      %p113 = scmp.eq.s32.totalorder %s31, 0
      %p114 = por %p112, %p113
      %p115 = scmp.ne.s32.totalorder %s107, %s109
      %p116 = scmp.eq.s32.totalorder %s36, 1
      %p117 = por %p115, %p116
      %p118 = scmp.ne.s32.totalorder %s109, %s110
      %p119 = scmp.eq.s32.totalorder %s36, 0
      %p120 = por %p118, %p119
      %p121 = scmp.ne.s32.totalorder %s109, %s110
      %p122 = scmp.eq.s32.totalorder %s37, 1
      %p123 = por %p121, %p122
      %p125 = scmp.ne.s32.totalorder %s110, %s124
      %p126 = scmp.eq.s32.totalorder %s37, 0
      %p127 = por %p125, %p126
      %s129 = sadd.s32 %s128, 1
      %p132 = scmp.eq.s32.totalorder %s31, 1
      %p133 = scmp.ne.s32.totalorder %s128, %s130
      %p134 = scmp.eq.s32.totalorder %s31, 0
      %p135 = por %p133, %p134
      %p136 = scmp.ne.s32.totalorder %s128, %s130
      %p137 = scmp.eq.s32.totalorder %s36, 1
      %p138 = por %p136, %p137
      %p139 = scmp.ne.s32.totalorder %s130, %s131
      %p140 = scmp.eq.s32.totalorder %s36, 0
      %p141 = por %p139, %p140
      %p142 = scmp.ne.s32.totalorder %s130, %s131
      %p143 = scmp.eq.s32.totalorder %s37, 1
      %p144 = por %p142, %p143
      %p146 = scmp.ne.s32.totalorder %s131, %s145
      %p147 = scmp.eq.s32.totalorder %s37, 0
      %p148 = por %p146, %p147
      %s150 = sadd.s32 %s149, 1
      %p153 = scmp.eq.s32.totalorder %s31, 1
      %p154 = scmp.ne.s32.totalorder %s149, %s151
      %p155 = scmp.eq.s32.totalorder %s31, 0
      %p156 = por %p154, %p155
      %p157 = scmp.ne.s32.totalorder %s149, %s151
      %p158 = scmp.eq.s32.totalorder %s36, 1
      %p159 = por %p157, %p158
      %p160 = scmp.ne.s32.totalorder %s151, %s152
      %p161 = scmp.eq.s32.totalorder %s36, 0
      %p162 = por %p160, %p161
      %p163 = scmp.ne.s32.totalorder %s151, %s152
      %p164 = scmp.eq.s32.totalorder %s37, 1
      %p165 = por %p163, %p164
      %p167 = scmp.ne.s32.totalorder %s152, %s166
      %p168 = scmp.eq.s32.totalorder %s37, 0
      %p169 = por %p167, %p168
      %s171 = sadd.s32 %s170, 1
      %p174 = scmp.eq.s32.totalorder %s31, 1
      %p175 = scmp.ne.s32.totalorder %s170, %s172
      %p176 = scmp.eq.s32.totalorder %s31, 0
      %p177 = por %p175, %p176
      %p178 = scmp.ne.s32.totalorder %s170, %s172
      %p179 = scmp.eq.s32.totalorder %s36, 1
      %p180 = por %p178, %p179
      %p181 = scmp.ne.s32.totalorder %s172, %s173
      %p182 = scmp.eq.s32.totalorder %s36, 0
      %p183 = por %p181, %p182
      %p184 = scmp.ne.s32.totalorder %s172, %s173
      %p185 = scmp.eq.s32.totalorder %s37, 1
      %p186 = por %p184, %p185
      %p188 = scmp.ne.s32.totalorder %s173, %s187
      %p189 = scmp.eq.s32.totalorder %s37, 0
      %p190 = por %p188, %p189
      %s192 = sadd.s32 %s191, 1
      %p195 = scmp.eq.s32.totalorder %s31, 1
      %p196 = scmp.ne.s32.totalorder %s191, %s193
      %p197 = scmp.eq.s32.totalorder %s31, 0
      %p198 = por %p196, %p197
      %p199 = scmp.ne.s32.totalorder %s191, %s193
      %p200 = scmp.eq.s32.totalorder %s36, 1
      %p201 = por %p199, %p200
      %p202 = scmp.ne.s32.totalorder %s193, %s194
      %p203 = scmp.eq.s32.totalorder %s36, 0
      %p204 = por %p202, %p203
      %p205 = scmp.ne.s32.totalorder %s193, %s194
      %p206 = scmp.eq.s32.totalorder %s37, 1
      %p207 = por %p205, %p206
      %p209 = scmp.ne.s32.totalorder %s194, %s208
      %p210 = scmp.eq.s32.totalorder %s37, 0
      %p211 = por %p209, %p210
      %s213 = sadd.s32 %s212, 1
      %p216 = scmp.eq.s32.totalorder %s31, 1
      %p217 = scmp.ne.s32.totalorder %s212, %s214
      %p218 = scmp.eq.s32.totalorder %s31, 0
      %p219 = por %p217, %p218
      %p220 = scmp.ne.s32.totalorder %s212, %s214
      %p221 = scmp.eq.s32.totalorder %s36, 1
      %p222 = por %p220, %p221
      %p223 = scmp.ne.s32.totalorder %s214, %s215
      %p224 = scmp.eq.s32.totalorder %s36, 0
      %p225 = por %p223, %p224
      %p226 = scmp.ne.s32.totalorder %s214, %s215
      %p227 = scmp.eq.s32.totalorder %s37, 1
      %p228 = por %p226, %p227
      %p230 = scmp.ne.s32.totalorder %s215, %s229
      %p231 = scmp.eq.s32.totalorder %s37, 0
      %p232 = por %p230, %p231
      %s234 = sadd.s32 %s233, 1
      %p237 = scmp.eq.s32.totalorder %s31, 1
      %p238 = scmp.ne.s32.totalorder %s233, %s235
      %p239 = scmp.eq.s32.totalorder %s31, 0
      %p240 = por %p238, %p239
      %p241 = scmp.ne.s32.totalorder %s233, %s235
      %p242 = scmp.eq.s32.totalorder %s36, 1
      %p243 = por %p241, %p242
      %p244 = scmp.ne.s32.totalorder %s235, %s236
      %p245 = scmp.eq.s32.totalorder %s36, 0
      %p246 = por %p244, %p245
      %p247 = scmp.ne.s32.totalorder %s235, %s236
      %p248 = scmp.eq.s32.totalorder %s37, 1
      %p249 = por %p247, %p248
      %p251 = scmp.ne.s32.totalorder %s236, %s250
      %p252 = scmp.eq.s32.totalorder %s37, 0
      %p253 = por %p251, %p252
      %s255 = sadd.s32 %s254, 1
      %p258 = scmp.eq.s32.totalorder %s31, 1
      %p259 = scmp.ne.s32.totalorder %s254, %s256
      %p260 = scmp.eq.s32.totalorder %s31, 0
      %p261 = por %p259, %p260
      %p262 = scmp.ne.s32.totalorder %s254, %s256
      %p263 = scmp.eq.s32.totalorder %s36, 1
      %p264 = por %p262, %p263
      %p265 = scmp.ne.s32.totalorder %s256, %s257
      %p266 = scmp.eq.s32.totalorder %s36, 0
      %p267 = por %p265, %p266
      %p268 = scmp.ne.s32.totalorder %s256, %s257
      %p269 = scmp.eq.s32.totalorder %s37, 1
      %p270 = por %p268, %p269
      %p272 = scmp.ne.s32.totalorder %s257, %s271
      %p273 = scmp.eq.s32.totalorder %s37, 0
      %p274 = por %p272, %p273
      %s276 = sadd.s32 %s275, 1
      %p279 = scmp.eq.s32.totalorder %s31, 1
      %p280 = scmp.ne.s32.totalorder %s275, %s277
      %p281 = scmp.eq.s32.totalorder %s31, 0
      %p282 = por %p280, %p281
      %p283 = scmp.ne.s32.totalorder %s275, %s277
      %p284 = scmp.eq.s32.totalorder %s36, 1
      %p285 = por %p283, %p284
      %p286 = scmp.ne.s32.totalorder %s277, %s278
      %p287 = scmp.eq.s32.totalorder %s36, 0
      %p288 = por %p286, %p287
      %p289 = scmp.ne.s32.totalorder %s277, %s278
      %p290 = scmp.eq.s32.totalorder %s37, 1
      %p291 = por %p289, %p290
      %p293 = scmp.ne.s32.totalorder %s278, %s292
      %p294 = scmp.eq.s32.totalorder %s37, 0
      %p295 = por %p293, %p294
      %s297 = sadd.s32 %s296, 1
      %p300 = scmp.eq.s32.totalorder %s31, 1
      %p301 = scmp.ne.s32.totalorder %s296, %s298
      %p302 = scmp.eq.s32.totalorder %s31, 0
      %p303 = por %p301, %p302
      %p304 = scmp.ne.s32.totalorder %s296, %s298
      %p305 = scmp.eq.s32.totalorder %s36, 1
      %p306 = por %p304, %p305
      %p307 = scmp.ne.s32.totalorder %s298, %s299
      %p308 = scmp.eq.s32.totalorder %s36, 0
      %p309 = por %p307, %p308
      %p310 = scmp.ne.s32.totalorder %s298, %s299
      %p311 = scmp.eq.s32.totalorder %s37, 1
      %p312 = por %p310, %p311
      %p314 = scmp.ne.s32.totalorder %s299, %s313
      %p315 = scmp.eq.s32.totalorder %s37, 0
      %p316 = por %p314, %p315
      %s317 = ssub.s32 %s31, %s38
      %p318 = scmp.eq.s32.totalorder %s317, 0
      %s320 = sadd.s32 %s319, 1
      %s321 = scalar_select %p318, %s319, %s320
      %p324 = pneg %p318
      %p325 = scmp.eq.s32.totalorder %s31, 1
      %p326 = por %p324, %p325
      %p327 = scmp.ne.s32.totalorder %s319, %s322
      %p328 = scmp.eq.s32.totalorder %s31, 0
      %p329 = por %p327, %p328
      %p330 = scmp.ne.s32.totalorder %s319, %s322
      %p331 = scmp.eq.s32.totalorder %s36, 1
      %p332 = por %p330, %p331
      %p333 = scmp.ne.s32.totalorder %s322, %s323
      %p334 = scmp.eq.s32.totalorder %s36, 0
      %p335 = por %p333, %p334
      %p336 = scmp.ne.s32.totalorder %s322, %s323
      %p337 = scmp.eq.s32.totalorder %s37, 1
      %p338 = por %p336, %p337
      %p340 = scmp.ne.s32.totalorder %s323, %s339
      %p341 = scmp.eq.s32.totalorder %s37, 0
      %p342 = por %p340, %p341
      %p343 = scmp.le.s32.totalorder 1, %s31
      %p344 = scmp.lt.s32.totalorder %s31, 3
      %p345 = pnand %p343, %p344
      %p346 = pneg %p345
      // Predicated region
      $region9: #{transformer_forward.5} parent=5 // pred_check
        _
      $region10: #{transformer_forward.5} parent=5 // pred_check_branch
        %348 = sbr.rel (%p345) target = $region12
      $region11: #{transformer_forward.5} parent=5 // pred_region
        %s349 = ssub.s32 %s31, 1
        // Predicated region
        $region13: #{transformer_forward.5} parent=11 // pred_check
          %p350 = pneg %p78
        $region14: #{transformer_forward.5} parent=11 // pred_check_branch
          %352 = sbr.rel (%p350) target = $region16
        $region15: #{transformer_forward.5} parent=11 // pred_region
          %s354 = ssub.s32 3072, 3072
          %355 = vsyncadd [#allocation6], %s354
          %s356 = sshll.u32 [#allocation5], 4
          %s357 = int_to_ptr.vmem [resolvable:$true] %s356
          %362 = dma.hbm_to_vmem [thread:$0]  %s1, 3072, %s357, [#allocation6], 192, 192, 12
        $region16: #{transformer_forward.5} parent=11 // pred_fallthru
          _
        // Predicated region
        $region17: #{transformer_forward.5} parent=11 // pred_check
          %p363 = pneg %p99
        $region18: #{transformer_forward.5} parent=11 // pred_check_branch
          %365 = sbr.rel (%p363) target = $region20
        $region19: #{transformer_forward.5} parent=11 // pred_region
          %s367 = ssub.s32 48, 48
          %368 = vsyncadd [#allocation6], %s367
          %s370 = sshll.u32 [#allocation7], 4
          %s371 = int_to_ptr.vmem [resolvable:$true] %s370
          %373 = dma.hbm_to_vmem [thread:$0]  %s2, 48, %s371, [#allocation6]
        $region20: #{transformer_forward.5} parent=11 // pred_fallthru
          _
        // Predicated region
        $region21: #{transformer_forward.5} parent=11 // pred_check
          %p374 = pneg %p120
        $region22: #{transformer_forward.5} parent=11 // pred_check_branch
          %376 = sbr.rel (%p374) target = $region24
        $region23: #{transformer_forward.5} parent=11 // pred_region
          %s378 = ssub.s32 1024, 1024
          %379 = vsyncadd [#allocation9], %s378
          %s380 = sshll.u32 [#allocation8], 4
          %s381 = int_to_ptr.vmem [resolvable:$true] %s380
          %386 = dma.hbm_to_vmem [thread:$0]  %s3, 1024, %s381, [#allocation9], 64, 64, 4
        $region24: #{transformer_forward.5} parent=11 // pred_fallthru
          _
        // Predicated region
        $region25: #{transformer_forward.5} parent=11 // pred_check
          %p387 = pneg %p141
        $region26: #{transformer_forward.5} parent=11 // pred_check_branch
          %389 = sbr.rel (%p387) target = $region28
        $region27: #{transformer_forward.5} parent=11 // pred_region
          %s391 = ssub.s32 16, 16
          %392 = vsyncadd [#allocation9], %s391
          %s394 = sshll.u32 [#allocation10], 4
          %s395 = int_to_ptr.vmem [resolvable:$true] %s394
          %397 = dma.hbm_to_vmem [thread:$0]  %s4, 16, %s395, [#allocation9]
        $region28: #{transformer_forward.5} parent=11 // pred_fallthru
          _
        // Predicated region
        $region29: #{transformer_forward.5} parent=11 // pred_check
          %p398 = pneg %p162
        $region30: #{transformer_forward.5} parent=11 // pred_check_branch
          %400 = sbr.rel (%p398) target = $region32
        $region31: #{transformer_forward.5} parent=11 // pred_region
          %s402 = ssub.s32 16, 16
          %403 = vsyncadd [#allocation12], %s402
          %s405 = sshll.u32 [#allocation11], 4
          %s406 = int_to_ptr.vmem [resolvable:$true] %s405
          %408 = dma.hbm_to_vmem [thread:$0]  %s5, 16, %s406, [#allocation12]
        $region32: #{transformer_forward.5} parent=11 // pred_fallthru
          _
        // Predicated region
        $region33: #{transformer_forward.5} parent=11 // pred_check
          %p409 = pneg %p183
        $region34: #{transformer_forward.5} parent=11 // pred_check_branch
          %411 = sbr.rel (%p409) target = $region36
        $region35: #{transformer_forward.5} parent=11 // pred_region
          %s413 = ssub.s32 16, 16
          %414 = vsyncadd [#allocation12], %s413
          %s416 = sshll.u32 [#allocation13], 4
          %s417 = int_to_ptr.vmem [resolvable:$true] %s416
          %419 = dma.hbm_to_vmem [thread:$0]  %s6, 16, %s417, [#allocation12]
        $region36: #{transformer_forward.5} parent=11 // pred_fallthru
          _
        // Predicated region
        $region37: #{transformer_forward.5} parent=11 // pred_check
          %p420 = pneg %p204
        $region38: #{transformer_forward.5} parent=11 // pred_check_branch
          %422 = sbr.rel (%p420) target = $region40
        $region39: #{transformer_forward.5} parent=11 // pred_region
          %s424 = ssub.s32 4096, 4096
          %425 = vsyncadd [#allocation15], %s424
          %s426 = sshll.u32 [#allocation14], 4
          %s427 = int_to_ptr.vmem [resolvable:$true] %s426
          %432 = dma.hbm_to_vmem [thread:$0]  %s7, 4096, %s427, [#allocation15], 256, 256, 16
        $region40: #{transformer_forward.5} parent=11 // pred_fallthru
          _
        // Predicated region
        $region41: #{transformer_forward.5} parent=11 // pred_check
          %p433 = pneg %p225
        $region42: #{transformer_forward.5} parent=11 // pred_check_branch
          %435 = sbr.rel (%p433) target = $region44
        $region43: #{transformer_forward.5} parent=11 // pred_region
          %s437 = ssub.s32 64, 64
          %438 = vsyncadd [#allocation15], %s437
          %s440 = sshll.u32 [#allocation16], 4
          %s441 = int_to_ptr.vmem [resolvable:$true] %s440
          %443 = dma.hbm_to_vmem [thread:$0]  %s8, 64, %s441, [#allocation15]
        $region44: #{transformer_forward.5} parent=11 // pred_fallthru
          _
        // Predicated region
        $region45: #{transformer_forward.5} parent=11 // pred_check
          %p444 = pneg %p246
        $region46: #{transformer_forward.5} parent=11 // pred_check_branch
          %446 = sbr.rel (%p444) target = $region48
        $region47: #{transformer_forward.5} parent=11 // pred_region
          %s448 = ssub.s32 4096, 4096
          %449 = vsyncadd [#allocation18], %s448
          %s450 = sshll.u32 [#allocation17], 4
          %s451 = int_to_ptr.vmem [resolvable:$true] %s450
          %456 = dma.hbm_to_vmem [thread:$0]  %s9, 4096, %s451, [#allocation18], 64, 64, 4
        $region48: #{transformer_forward.5} parent=11 // pred_fallthru
          _
        // Predicated region
        $region49: #{transformer_forward.5} parent=11 // pred_check
          %p457 = pneg %p267
        $region50: #{transformer_forward.5} parent=11 // pred_check_branch
          %459 = sbr.rel (%p457) target = $region52
        $region51: #{transformer_forward.5} parent=11 // pred_region
          %s461 = ssub.s32 16, 16
          %462 = vsyncadd [#allocation18], %s461
          %s464 = sshll.u32 [#allocation19], 4
          %s465 = int_to_ptr.vmem [resolvable:$true] %s464
          %467 = dma.hbm_to_vmem [thread:$0]  %s10, 16, %s465, [#allocation18]
        $region52: #{transformer_forward.5} parent=11 // pred_fallthru
          _
        // Predicated region
        $region53: #{transformer_forward.5} parent=11 // pred_check
          %p468 = pneg %p288
        $region54: #{transformer_forward.5} parent=11 // pred_check_branch
          %470 = sbr.rel (%p468) target = $region56
        $region55: #{transformer_forward.5} parent=11 // pred_region
          %s472 = ssub.s32 16, 16
          %473 = vsyncadd [#allocation21], %s472
          %s475 = sshll.u32 [#allocation20], 4
          %s476 = int_to_ptr.vmem [resolvable:$true] %s475
          %478 = dma.hbm_to_vmem [thread:$0]  %s11, 16, %s476, [#allocation21]
        $region56: #{transformer_forward.5} parent=11 // pred_fallthru
          _
        // Predicated region
        $region57: #{transformer_forward.5} parent=11 // pred_check
          %p479 = pneg %p309
        $region58: #{transformer_forward.5} parent=11 // pred_check_branch
          %481 = sbr.rel (%p479) target = $region60
        $region59: #{transformer_forward.5} parent=11 // pred_region
          %s483 = ssub.s32 16, 16
          %484 = vsyncadd [#allocation21], %s483
          %s486 = sshll.u32 [#allocation22], 4
          %s487 = int_to_ptr.vmem [resolvable:$true] %s486
          %489 = dma.hbm_to_vmem [thread:$0]  %s12, 16, %s487, [#allocation21]
        $region60: #{transformer_forward.5} parent=11 // pred_fallthru
          _
      $region12: #{transformer_forward.5} parent=5 // pred_fallthru
        _
      %p490 = scmp.lt.s32.totalorder %s31, 2
      // Predicated region
      $region61: #{transformer_forward.5} parent=5 // pred_check
        %p491 = pneg %p490
      $region62: #{transformer_forward.5} parent=5 // pred_check_branch
        %493 = sbr.rel (%p491) target = $region64
      $region63: #{transformer_forward.5} parent=5 // pred_region
        // Predicated region
        $region65: #{transformer_forward.5} parent=63 // pred_check
          %p494 = pneg %p51
        $region66: #{transformer_forward.5} parent=63 // pred_check_branch
          %496 = sbr.rel (%p494) target = $region68
        $region67: #{transformer_forward.5} parent=63 // pred_region
          %s497 = sand.u32 %s41, 1
          %s498 = scalar_lea.sflag [#allocation3], %s497
          %s499 = sand.u32 %s41, 1
          %s500 = smul.addr %s499, 8
          %s501 = scalar_lea.vmem [#allocation2], %s500
          %s502 = smul.u32 4, %s31
          %s504 = ssub.s32 128, 128
          %505 = vsyncadd %s498, %s504
          %s506 = smul.addr %s502, 32
          %s507 = scalar_lea.hbm %s0, %s506
          %s508 = sshll.u32 %s501, 4
          %s509 = int_to_ptr.vmem [resolvable:$true] %s508
          %514 = dma.hbm_to_vmem [thread:$0]  %s507, 128, %s509, %s498, 32, 32, 2
        $region68: #{transformer_forward.5} parent=63 // pred_fallthru
          _
      $region64: #{transformer_forward.5} parent=5 // pred_fallthru
        _
      %p515 = scmp.le.s32.totalorder 1, %s31
      %p516 = scmp.lt.s32.totalorder %s31, 3
      %p517 = pnand %p515, %p516
      %p518 = pneg %p517
      // Predicated region
      $region69: #{transformer_forward.5} parent=5 // pred_check
        _
      $region70: #{transformer_forward.5} parent=5 // pred_check_branch
        %520 = sbr.rel (%p517) target = $region72
      $region71: #{transformer_forward.5} parent=5 // pred_region
        %s521 = ssub.s32 %s31, 1
        %s522 = sand.u32 %s44, 1
        %s523 = scalar_lea.sflag [#allocation3], %s522
        %s524 = sand.u32 %s44, 1
        %s525 = smul.addr %s524, 8
        %s526 = scalar_lea.vmem [#allocation2], %s525
        // Predicated region
        $region73: #{transformer_forward.5} parent=71 // pred_check
          %p527 = pneg %p57
        $region74: #{transformer_forward.5} parent=71 // pred_check_branch
          %529 = sbr.rel (%p527) target = $region76
        $region75: #{transformer_forward.5} parent=71 // pred_region
          %530 = dma.done %s523, 128
        $region76: #{transformer_forward.5} parent=71 // pred_fallthru
          _
        // Predicated region
        $region77: #{transformer_forward.5} parent=71 // pred_check
          %p531 = pneg %p78
        $region78: #{transformer_forward.5} parent=71 // pred_check_branch
          %533 = sbr.rel (%p531) target = $region80
        $region79: #{transformer_forward.5} parent=71 // pred_region
          %534 = dma.done [#allocation6], 3072
        $region80: #{transformer_forward.5} parent=71 // pred_fallthru
          _
        // Predicated region
        $region81: #{transformer_forward.5} parent=71 // pred_check
          %p535 = pneg %p99
        $region82: #{transformer_forward.5} parent=71 // pred_check_branch
          %537 = sbr.rel (%p535) target = $region84
        $region83: #{transformer_forward.5} parent=71 // pred_region
          %538 = dma.done [#allocation6], 48
        $region84: #{transformer_forward.5} parent=71 // pred_fallthru
          _
        // Predicated region
        $region85: #{transformer_forward.5} parent=71 // pred_check
          %p539 = pneg %p120
        $region86: #{transformer_forward.5} parent=71 // pred_check_branch
          %541 = sbr.rel (%p539) target = $region88
        $region87: #{transformer_forward.5} parent=71 // pred_region
          %542 = dma.done [#allocation9], 1024
        $region88: #{transformer_forward.5} parent=71 // pred_fallthru
          _
        // Predicated region
        $region89: #{transformer_forward.5} parent=71 // pred_check
          %p543 = pneg %p141
        $region90: #{transformer_forward.5} parent=71 // pred_check_branch
          %545 = sbr.rel (%p543) target = $region92
        $region91: #{transformer_forward.5} parent=71 // pred_region
          %546 = dma.done [#allocation9], 16
        $region92: #{transformer_forward.5} parent=71 // pred_fallthru
          _
        // Predicated region
        $region93: #{transformer_forward.5} parent=71 // pred_check
          %p547 = pneg %p162
        $region94: #{transformer_forward.5} parent=71 // pred_check_branch
          %549 = sbr.rel (%p547) target = $region96
        $region95: #{transformer_forward.5} parent=71 // pred_region
          %550 = dma.done [#allocation12], 16
        $region96: #{transformer_forward.5} parent=71 // pred_fallthru
          _
        // Predicated region
        $region97: #{transformer_forward.5} parent=71 // pred_check
          %p551 = pneg %p183
        $region98: #{transformer_forward.5} parent=71 // pred_check_branch
          %553 = sbr.rel (%p551) target = $region100
        $region99: #{transformer_forward.5} parent=71 // pred_region
          %554 = dma.done [#allocation12], 16
        $region100: #{transformer_forward.5} parent=71 // pred_fallthru
          _
        // Predicated region
        $region101: #{transformer_forward.5} parent=71 // pred_check
          %p555 = pneg %p204
        $region102: #{transformer_forward.5} parent=71 // pred_check_branch
          %557 = sbr.rel (%p555) target = $region104
        $region103: #{transformer_forward.5} parent=71 // pred_region
          %558 = dma.done [#allocation15], 4096
        $region104: #{transformer_forward.5} parent=71 // pred_fallthru
          _
        // Predicated region
        $region105: #{transformer_forward.5} parent=71 // pred_check
          %p559 = pneg %p225
        $region106: #{transformer_forward.5} parent=71 // pred_check_branch
          %561 = sbr.rel (%p559) target = $region108
        $region107: #{transformer_forward.5} parent=71 // pred_region
          %562 = dma.done [#allocation15], 64
        $region108: #{transformer_forward.5} parent=71 // pred_fallthru
          _
        // Predicated region
        $region109: #{transformer_forward.5} parent=71 // pred_check
          %p563 = pneg %p246
        $region110: #{transformer_forward.5} parent=71 // pred_check_branch
          %565 = sbr.rel (%p563) target = $region112
        $region111: #{transformer_forward.5} parent=71 // pred_region
          %566 = dma.done [#allocation18], 4096
        $region112: #{transformer_forward.5} parent=71 // pred_fallthru
          _
        // Predicated region
        $region113: #{transformer_forward.5} parent=71 // pred_check
          %p567 = pneg %p267
        $region114: #{transformer_forward.5} parent=71 // pred_check_branch
          %569 = sbr.rel (%p567) target = $region116
        $region115: #{transformer_forward.5} parent=71 // pred_region
          %570 = dma.done [#allocation18], 16
        $region116: #{transformer_forward.5} parent=71 // pred_fallthru
          _
        // Predicated region
        $region117: #{transformer_forward.5} parent=71 // pred_check
          %p571 = pneg %p288
        $region118: #{transformer_forward.5} parent=71 // pred_check_branch
          %573 = sbr.rel (%p571) target = $region120
        $region119: #{transformer_forward.5} parent=71 // pred_region
          %574 = dma.done [#allocation21], 16
        $region120: #{transformer_forward.5} parent=71 // pred_fallthru
          _
        // Predicated region
        $region121: #{transformer_forward.5} parent=71 // pred_check
          %p575 = pneg %p309
        $region122: #{transformer_forward.5} parent=71 // pred_check_branch
          %577 = sbr.rel (%p575) target = $region124
        $region123: #{transformer_forward.5} parent=71 // pred_region
          %578 = dma.done [#allocation21], 16
        $region124: #{transformer_forward.5} parent=71 // pred_fallthru
          _
        %s579 = sand.u32 %s44, 1
        %s580 = scalar_lea.sflag [#allocation3], %s579
        %s581 = sand.u32 %s44, 1
        %s582 = smul.addr %s581, 8
        %s583 = scalar_lea.vmem [#allocation2], %s582
        %p584 = pneg %p57
        %p585 = pneg %p54
        %p586 = pneg %p78
        %p587 = pneg %p75
        %p588 = pneg %p99
        %p589 = pneg %p96
        %p590 = pneg %p120
        %p591 = pneg %p117
        %p592 = pneg %p141
        %p593 = pneg %p138
        %p594 = pneg %p162
        %p595 = pneg %p159
        %p596 = pneg %p183
        %p597 = pneg %p180
        %p598 = pneg %p204
        %p599 = pneg %p201
        %p600 = pneg %p225
        %p601 = pneg %p222
        %p602 = pneg %p246
        %p603 = pneg %p243
        %p604 = pneg %p267
        %p605 = pneg %p264
        %p606 = pneg %p288
        %p607 = pneg %p285
        %p608 = pneg %p309
        %p609 = pneg %p306
        %p610 = pneg %p335
        %p611 = pneg %p332
        %s612 = sand.u32 %s322, 1
        %s613 = scalar_lea.sflag [#allocation4], %s612
        %s614 = sand.u32 %s322, 1
        %s615 = smul.addr %s614, 8
        %s616 = scalar_lea.vmem [#allocation23], %s615
        %s617 = smul.u32 4, %s36
        %s618 = smul.u32 4, %s36
        %v620 = vld [vmem:[%s526] sm:$0x3]
        %v621 = vld [vmem:[%s526 + $0x2] sm:$0x3]
        %v622 = vld [vmem:[%s526 + $0x4] sm:$0x3]
        %v623 = vld [vmem:[%s526 + $0x6] sm:$0x3]
        %v628 = vcombine.low %v620, %v621
        %v629 = vcombine.low %v622, %v623
        %v631 = vunpack.c.l.s4 1983009808
        %v632 = vunpack.c.0.s8 %v631
        %v633 = vlaneseq
        %v634 = vshrl.u32 %v633, 7
        %v635 = vsub.s32 %v632, %v634
        %v636 = vrot.slane %v628, %v635
        %v638 = vunpack.c.l.s4 1983009808
        %v639 = vunpack.c.0.s8 %v638
        %v640 = vlaneseq
        %v641 = vshrl.u32 %v640, 7
        %v642 = vsub.s32 %v639, %v641
        %v643 = vrot.slane %v629, %v642
        %v644 = vcombine.low %v636, %v643
        %v646 = vpack.c.bf16 %v644, %v644
        %v647 = vld [vmem:[#allocation5] sm:$0xff]
        %v648 = vld [vmem:[#allocation5 + $0x8] sm:$0xf]
        %v649 = vld [vmem:[#allocation5 + $0xc] sm:$0xff]
        %v650 = vld [vmem:[#allocation5 + $0x14] sm:$0xf]
        %v651 = vld [vmem:[#allocation5 + $0x18] sm:$0xff]
        %v652 = vld [vmem:[#allocation5 + $0x20] sm:$0xf]
        %v653 = vld [vmem:[#allocation5 + $0x24] sm:$0xff]
        %v654 = vld [vmem:[#allocation5 + $0x2c] sm:$0xf]
        %v655 = vld [vmem:[#allocation5 + $0x30] sm:$0xff]
        %v656 = vld [vmem:[#allocation5 + $0x38] sm:$0xf]
        %v657 = vld [vmem:[#allocation5 + $0x3c] sm:$0xff]
        %v658 = vld [vmem:[#allocation5 + $0x44] sm:$0xf]
        %v659 = vld [vmem:[#allocation5 + $0x48] sm:$0xff]
        %v660 = vld [vmem:[#allocation5 + $0x50] sm:$0xf]
        %v661 = vld [vmem:[#allocation5 + $0x54] sm:$0xff]
        %v662 = vld [vmem:[#allocation5 + $0x5c] sm:$0xf]
        %v663 = vld [vmem:[#allocation5 + $0x60] sm:$0xff]
        %v664 = vld [vmem:[#allocation5 + $0x68] sm:$0xf]
        %v665 = vld [vmem:[#allocation5 + $0x6c] sm:$0xff]
        %v666 = vld [vmem:[#allocation5 + $0x74] sm:$0xf]
        %v667 = vld [vmem:[#allocation5 + $0x78] sm:$0xff]
        %v668 = vld [vmem:[#allocation5 + $0x80] sm:$0xf]
        %v669 = vld [vmem:[#allocation5 + $0x84] sm:$0xff]
        %v670 = vld [vmem:[#allocation5 + $0x8c] sm:$0xf]
        %v671 = vld [vmem:[#allocation5 + $0x90] sm:$0xff]
        %v672 = vld [vmem:[#allocation5 + $0x98] sm:$0xf]
        %v673 = vld [vmem:[#allocation5 + $0x9c] sm:$0xff]
        %v674 = vld [vmem:[#allocation5 + $0xa4] sm:$0xf]
        %v675 = vld [vmem:[#allocation5 + $0xa8] sm:$0xff]
        %v676 = vld [vmem:[#allocation5 + $0xb0] sm:$0xf]
        %v677 = vld [vmem:[#allocation5 + $0xb4] sm:$0xff]
        %v678 = vld [vmem:[#allocation5 + $0xbc] sm:$0xf]
        %v679 = vld [vmem:[#allocation7] sm:$0x7]
        %v681 = vlaneseq
        %v682 = vshrl.u32 %v681, 7
        %v683 = vsub.s32 0, %v682
        %v684 = vrot.slane %v679, %v683
        %v685 = vlaneseq
        %v686 = vshrl.u32 %v685, 7
        %v687 = vsub.s32 1, %v686
        %v688 = vrot.slane %v679, %v687
        %v689 = vlaneseq
        %v690 = vshrl.u32 %v689, 7
        %v691 = vsub.s32 2, %v690
        %v692 = vrot.slane %v679, %v691
        %v728 = vunpack.c.l.b16 %v647
        %v729 = vunpack.c.h.b16 %v647
        %v730 = vunpack.c.l.b16 %v648
        %v731 = vunpack.c.l.b16 %v649
        %v732 = vunpack.c.h.b16 %v649
        %v733 = vunpack.c.l.b16 %v650
        %v734 = vunpack.c.l.b16 %v651
        %v735 = vunpack.c.h.b16 %v651
        %v736 = vunpack.c.l.b16 %v652
        %v737 = vunpack.c.l.b16 %v653
        %v738 = vunpack.c.h.b16 %v653
        %v739 = vunpack.c.l.b16 %v654
        %v740 = vunpack.c.l.b16 %v655
        %v741 = vunpack.c.h.b16 %v655
        %v742 = vunpack.c.l.b16 %v656
        %v743 = vunpack.c.l.b16 %v657
        %v744 = vunpack.c.h.b16 %v657
        %v745 = vunpack.c.l.b16 %v658
        %v746 = vunpack.c.l.b16 %v659
        %v747 = vunpack.c.h.b16 %v659
        %v748 = vunpack.c.l.b16 %v660
        %v749 = vunpack.c.l.b16 %v661
        %v750 = vunpack.c.h.b16 %v661
        %v751 = vunpack.c.l.b16 %v662
        %v752 = vunpack.c.l.b16 %v663
        %v753 = vunpack.c.h.b16 %v663
        %v754 = vunpack.c.l.b16 %v664
        %v755 = vunpack.c.l.b16 %v665
        %v756 = vunpack.c.h.b16 %v665
        %v757 = vunpack.c.l.b16 %v666
        %v758 = vunpack.c.l.b16 %v667
        %v759 = vunpack.c.h.b16 %v667
        %v760 = vunpack.c.l.b16 %v668
        %v761 = vunpack.c.l.b16 %v669
        %v762 = vunpack.c.h.b16 %v669
        %v763 = vunpack.c.l.b16 %v670
        %v764 = vunpack.c.l.b16 %v671
        %v765 = vunpack.c.h.b16 %v671
        %v766 = vunpack.c.l.b16 %v672
        %v767 = vunpack.c.l.b16 %v673
        %v768 = vunpack.c.h.b16 %v673
        %v769 = vunpack.c.l.b16 %v674
        %v770 = vunpack.c.l.b16 %v675
        %v771 = vunpack.c.h.b16 %v675
        %v772 = vunpack.c.l.b16 %v676
        %v773 = vunpack.c.l.b16 %v677
        %v774 = vunpack.c.h.b16 %v677
        %v775 = vunpack.c.l.b16 %v678
        %v776 = vpack.c.b16 %v731, %v728
        %v777 = vpack.c.b16 %v732, %v729
        %v778 = vpack.c.b16 %v733, %v730
        %v779 = vpack.c.b16 %v737, %v734
        %v780 = vpack.c.b16 %v738, %v735
        %v781 = vpack.c.b16 %v739, %v736
        %v782 = vpack.c.b16 %v743, %v740
        %v783 = vpack.c.b16 %v744, %v741
        %v784 = vpack.c.b16 %v745, %v742
        %v785 = vpack.c.b16 %v749, %v746
        %v786 = vpack.c.b16 %v750, %v747
        %v787 = vpack.c.b16 %v751, %v748
        %v788 = vpack.c.b16 %v755, %v752
        %v789 = vpack.c.b16 %v756, %v753
        %v790 = vpack.c.b16 %v757, %v754
        %v791 = vpack.c.b16 %v761, %v758
        %v792 = vpack.c.b16 %v762, %v759
        %v793 = vpack.c.b16 %v763, %v760
        %v794 = vpack.c.b16 %v767, %v764
        %v795 = vpack.c.b16 %v768, %v765
        %v796 = vpack.c.b16 %v769, %v766
        %v797 = vpack.c.b16 %v773, %v770
        %v798 = vpack.c.b16 %v774, %v771
        %v799 = vpack.c.b16 %v775, %v772
        %824 = vmatprep.subr.bf16.mxu0 %v777
        %825 = vmatpush1.bf16.msra.mxu0 %v776
        %826 = vmatprep.subr.bf16.mxu0 %v780
        %827 = vmatpush1.bf16.msra.mxu0 %v779
        %828 = vmatprep.subr.bf16.mxu0 %v783
        %829 = vmatpush1.bf16.msra.mxu0 %v782
        %830 = vmatprep.subr.bf16.mxu0 %v786
        %831 = vmatpush1.bf16.msra.mxu0 %v785
        %832 = vmatprep.subr.bf16.mxu0 %v789
        %833 = vmatpush1.bf16.msra.mxu0 %v788
        %834 = vmatprep.subr.bf16.mxu0 %v792
        %835 = vmatpush1.bf16.msra.mxu0 %v791
        %836 = vmatprep.subr.bf16.mxu0 %v795
        %837 = vmatpush1.bf16.msra.mxu0 %v794
        %838 = vmatprep.subr.bf16.mxu0 %v798
        %839 = vmatpush1.bf16.msra.mxu0 %v797
        %840 = vmatprep.subr.bf16.mxu0 0
        %841 = vmatpush1.bf16.msra.mxu0 0
        %842 = vmatprep.subr.bf16.mxu0 0
        %843 = vmatpush1.bf16.msra.mxu0 0
        %844 = vmatprep.subr.bf16.mxu0 0
        %845 = vmatpush1.bf16.msra.mxu0 0
        %846 = vmatprep.subr.bf16.mxu0 0
        %847 = vmatpush1.bf16.msra.mxu0 0
        %848 = vmatprep.subr.bf16.mxu0 0
        %849 = vmatpush1.bf16.msra.mxu0 0
        %850 = vmatprep.subr.bf16.mxu0 0
        %851 = vmatpush1.bf16.msra.mxu0 0
        %852 = vmatprep.subr.bf16.mxu0 0
        %853 = vmatpush1.bf16.msra.mxu0 0
        %854 = vmatprep.subr.bf16.mxu0 0
        %855 = vmatpush1.bf16.msra.mxu0 0
        %856 = vmatprep.mubr.bf16.mxu0 0
        %857 = vmatmul.mubr.bf16.gmra.mrb[0].mxu0 %v646
        %v858 = vpop.f32.mrb[0].mxu0
        %v859 = vadd.f32 %v684, %v858
        %v860 = vpop.f32.mrb[0].mxu0
        %v861 = vadd.f32 %v688, %v860
        %v862 = vpop.f32.mrb[0].mxu0
        %v863 = vpop.f32.mrb[0].mxu0
        %864 = vdwg.mxu0
        %865 = vmatprep.subr.bf16.mxu0 0
        %866 = vmatpush1.bf16.msra.mxu0 %v778
        %867 = vmatprep.subr.bf16.mxu0 0
        %868 = vmatpush1.bf16.msra.mxu0 %v781
        %869 = vmatprep.subr.bf16.mxu0 0
        %870 = vmatpush1.bf16.msra.mxu0 %v784
        %871 = vmatprep.subr.bf16.mxu0 0
        %872 = vmatpush1.bf16.msra.mxu0 %v787
        %873 = vmatprep.subr.bf16.mxu0 0
        %874 = vmatpush1.bf16.msra.mxu0 %v790
        %875 = vmatprep.subr.bf16.mxu0 0
        %876 = vmatpush1.bf16.msra.mxu0 %v793
        %877 = vmatprep.subr.bf16.mxu0 0
        %878 = vmatpush1.bf16.msra.mxu0 %v796
        %879 = vmatprep.subr.bf16.mxu0 0
        %880 = vmatpush1.bf16.msra.mxu0 %v799
        %881 = vmatprep.subr.bf16.mxu0 0
        %882 = vmatpush1.bf16.msra.mxu0 0
        %883 = vmatprep.subr.bf16.mxu0 0
        %884 = vmatpush1.bf16.msra.mxu0 0
        %885 = vmatprep.subr.bf16.mxu0 0
        %886 = vmatpush1.bf16.msra.mxu0 0
        %887 = vmatprep.subr.bf16.mxu0 0
        %888 = vmatpush1.bf16.msra.mxu0 0
        %889 = vmatprep.subr.bf16.mxu0 0
        %890 = vmatpush1.bf16.msra.mxu0 0
        %891 = vmatprep.subr.bf16.mxu0 0
        %892 = vmatpush1.bf16.msra.mxu0 0
        %893 = vmatprep.subr.bf16.mxu0 0
        %894 = vmatpush1.bf16.msra.mxu0 0
        %895 = vmatprep.subr.bf16.mxu0 0
        %896 = vmatpush1.bf16.msra.mxu0 0
        %897 = vmatprep.mubr.bf16.mxu0 0
        %898 = vmatmul.mubr.bf16.gmra.mrb[0].mxu0 %v646
        %v899 = vpop.f32.mrb[0].mxu0
        %v900 = vadd.f32 %v692, %v899
        %v901 = vpop.f32.mrb[0].mxu0
        %v902 = vpop.f32.mrb[0].mxu0
        %v903 = vpop.f32.mrb[0].mxu0
        %904 = vdwg.mxu0
        %v908 = vcombine.low %v859, %v861
        %v909 = vcombine.high %v859, %v861
        %v910 = vcombine.high %v900, %v900
        %v912 = vunpack.c.l.s4 1983009808
        %v913 = vunpack.c.0.s8 %v912
        %v914 = vlaneseq
        %v915 = vshrl.u32 %v914, 7
        %v916 = vsub.s32 %v913, %v915
        %v917 = vrot.slane %v908, %v916
        %v919 = vunpack.c.l.s4 1983009808
        %v920 = vunpack.c.0.s8 %v919
        %v921 = vlaneseq
        %v922 = vshrl.u32 %v921, 7
        %v923 = vsub.s32 %v920, %v922
        %v924 = vrot.slane %v909, %v923
        %v926 = vunpack.c.l.s4 1983009808
        %v927 = vunpack.c.0.s8 %v926
        %v928 = vlaneseq
        %v929 = vshrl.u32 %v928, 7
        %v930 = vsub.s32 %v927, %v929
        %v931 = vrot.slane %v900, %v930
        %v933 = vunpack.c.l.s4 1983009808
        %v934 = vunpack.c.0.s8 %v933
        %v935 = vlaneseq
        %v936 = vshrl.u32 %v935, 7
        %v937 = vsub.s32 %v934, %v936
        %v938 = vrot.slane %v910, %v937
        %v939 = vcombine.low %v917, %v931
        %v940 = vcombine.high %v917, %v931
        %v941 = vcombine.low %v924, %v938
        %v942 = vcombine.high %v924, %v938
        %v947 = vpack.c.bf16 %v939, %v939
        %v948 = vpack.c.bf16 %v940, %v940
        %v949 = vpack.c.bf16 %v941, %v941
        %v950 = vpack.c.bf16 %v942, %v942
        %v952 = vunpack.c.l.s4 1983009808
        %v953 = vunpack.c.0.s8 %v952
        %v954 = vlaneseq
        %v955 = vshrl.u32 %v954, 7
        %v956 = vsub.s32 %v953, %v955
        %v957 = vrot.slane %v939, %v956
        %v958 = vcombine.high %v957, %v957
        %v960 = vunpack.c.l.s4 1983009808
        %v961 = vunpack.c.0.s8 %v960
        %v962 = vlaneseq
        %v963 = vshrl.u32 %v962, 7
        %v964 = vsub.s32 %v961, %v963
        %v965 = vrot.slane %v940, %v964
        %v966 = vcombine.high %v965, %v965
        %v968 = vunpack.c.l.s4 1983009808
        %v969 = vunpack.c.0.s8 %v968
        %v970 = vlaneseq
        %v971 = vshrl.u32 %v970, 7
        %v972 = vsub.s32 %v969, %v971
        %v973 = vrot.slane %v941, %v972
        %v974 = vcombine.high %v973, %v973
        %v976 = vunpack.c.l.s4 1983009808
        %v977 = vunpack.c.0.s8 %v976
        %v978 = vlaneseq
        %v979 = vshrl.u32 %v978, 7
        %v980 = vsub.s32 %v977, %v979
        %v981 = vrot.slane %v942, %v980
        %v982 = vcombine.high %v981, %v981
        %v987 = vpack.c.bf16 %v958, %v958
        %v988 = vpack.c.bf16 %v966, %v966
        %v989 = vpack.c.bf16 %v974, %v974
        %v990 = vpack.c.bf16 %v982, %v982
        %v991 = vcombine.high %v939, %v939
        %v993 = vunpack.c.l.s4 1983009808
        %v994 = vunpack.c.0.s8 %v993
        %v995 = vlaneseq
        %v996 = vshrl.u32 %v995, 7
        %v997 = vsub.s32 %v994, %v996
        %v998 = vrot.slane %v991, %v997
        %v999 = vcombine.high %v940, %v940
        %v1001 = vunpack.c.l.s4 1983009808
        %v1002 = vunpack.c.0.s8 %v1001
        %v1003 = vlaneseq
        %v1004 = vshrl.u32 %v1003, 7
        %v1005 = vsub.s32 %v1002, %v1004
        %v1006 = vrot.slane %v999, %v1005
        %v1007 = vcombine.high %v941, %v941
        %v1009 = vunpack.c.l.s4 1983009808
        %v1010 = vunpack.c.0.s8 %v1009
        %v1011 = vlaneseq
        %v1012 = vshrl.u32 %v1011, 7
        %v1013 = vsub.s32 %v1010, %v1012
        %v1014 = vrot.slane %v1007, %v1013
        %v1015 = vcombine.high %v942, %v942
        %v1017 = vunpack.c.l.s4 1983009808
        %v1018 = vunpack.c.0.s8 %v1017
        %v1019 = vlaneseq
        %v1020 = vshrl.u32 %v1019, 7
        %v1021 = vsub.s32 %v1018, %v1020
        %v1022 = vrot.slane %v1015, %v1021
        %v1027 = vpack.c.bf16 %v998, %v998
        %v1028 = vpack.c.bf16 %v1006, %v1006
        %v1029 = vpack.c.bf16 %v1014, %v1014
        %v1030 = vpack.c.bf16 %v1022, %v1022
        %vm1031 = vcmask 130048
        %v1033 = vsel %vm1031, %v947, 0
        %v1036 = vsel %vm1031, %v987, 0
        %1038 = vmatprep.subr.bf16.mxu0 0
        %1039 = vmatpush1.bf16.xpose.msra.mxu0 %v1036
        %1040 = vmatprep.subr.bf16.mxu0 0
        %1041 = vmatpush1.bf16.xpose.msra.mxu0 0
        %1042 = vmatprep.subr.bf16.mxu0 0
        %1043 = vmatpush1.bf16.xpose.msra.mxu0 0
        %1044 = vmatprep.subr.bf16.mxu0 0
        %1045 = vmatpush1.bf16.xpose.msra.mxu0 0
        %1046 = vmatprep.subr.bf16.mxu0 0
        %1047 = vmatpush1.bf16.xpose.msra.mxu0 0
        %1048 = vmatprep.subr.bf16.mxu0 0
        %1049 = vmatpush1.bf16.xpose.msra.mxu0 0
        %1050 = vmatprep.subr.bf16.mxu0 0
        %1051 = vmatpush1.bf16.xpose.msra.mxu0 0
        %1052 = vmatprep.subr.bf16.mxu0 0
        %1053 = vmatpush1.bf16.xpose.msra.mxu0 0
        %1054 = vmatprep.subr.bf16.mxu0 0
        %1055 = vmatpush1.bf16.xpose.msra.mxu0 0
        %1056 = vmatprep.subr.bf16.mxu0 0
        %1057 = vmatpush1.bf16.xpose.msra.mxu0 0
        %1058 = vmatprep.subr.bf16.mxu0 0
        %1059 = vmatpush1.bf16.xpose.msra.mxu0 0
        %1060 = vmatprep.subr.bf16.mxu0 0
        %1061 = vmatpush1.bf16.xpose.msra.mxu0 0
        %1062 = vmatprep.subr.bf16.mxu0 0
        %1063 = vmatpush1.bf16.xpose.msra.mxu0 0
        %1064 = vmatprep.subr.bf16.mxu0 0
        %1065 = vmatpush1.bf16.xpose.msra.mxu0 0
        %1066 = vmatprep.subr.bf16.mxu0 0
        %1067 = vmatpush1.bf16.xpose.msra.mxu0 0
        %1068 = vmatprep.subr.bf16.mxu0 0
        %1069 = vmatpush1.bf16.xpose.msra.mxu0 0
        %1070 = vmatprep.mubr.bf16.mxu0 0
        %1071 = vmatmul.mubr.bf16.gmra.mrb[0].mxu0 %v1033
        %v1072 = vpop.f32.mrb[0].mxu0
        %v1073 = vadd.f32 0.0, %v1072
        %v1074 = vpop.f32.mrb[0].mxu0
        %v1075 = vpop.f32.mrb[0].mxu0
        %v1076 = vpop.f32.mrb[0].mxu0
        %1077 = vdwg.mxu0
        %v1079 = vsel %vm1031, %v948, 0
        %v1082 = vsel %vm1031, %v988, 0
        %1084 = vmatprep.subr.bf16.mxu0 0
        %1085 = vmatpush1.bf16.xpose.msra.mxu0 %v1082
        %1086 = vmatprep.subr.bf16.mxu0 0
        %1087 = vmatpush1.bf16.xpose.msra.mxu0 0
        %1088 = vmatprep.subr.bf16.mxu0 0
        %1089 = vmatpush1.bf16.xpose.msra.mxu0 0
        %1090 = vmatprep.subr.bf16.mxu0 0
        %1091 = vmatpush1.bf16.xpose.msra.mxu0 0
        %1092 = vmatprep.subr.bf16.mxu0 0
        %1093 = vmatpush1.bf16.xpose.msra.mxu0 0
        %1094 = vmatprep.subr.bf16.mxu0 0
        %1095 = vmatpush1.bf16.xpose.msra.mxu0 0
        %1096 = vmatprep.subr.bf16.mxu0 0
        %1097 = vmatpush1.bf16.xpose.msra.mxu0 0
        %1098 = vmatprep.subr.bf16.mxu0 0
        %1099 = vmatpush1.bf16.xpose.msra.mxu0 0
        %1100 = vmatprep.subr.bf16.mxu0 0
        %1101 = vmatpush1.bf16.xpose.msra.mxu0 0
        %1102 = vmatprep.subr.bf16.mxu0 0
        %1103 = vmatpush1.bf16.xpose.msra.mxu0 0
        %1104 = vmatprep.subr.bf16.mxu0 0
        %1105 = vmatpush1.bf16.xpose.msra.mxu0 0
        %1106 = vmatprep.subr.bf16.mxu0 0
        %1107 = vmatpush1.bf16.xpose.msra.mxu0 0
        %1108 = vmatprep.subr.bf16.mxu0 0
        %1109 = vmatpush1.bf16.xpose.msra.mxu0 0
        %1110 = vmatprep.subr.bf16.mxu0 0
        %1111 = vmatpush1.bf16.xpose.msra.mxu0 0
        %1112 = vmatprep.subr.bf16.mxu0 0
        %1113 = vmatpush1.bf16.xpose.msra.mxu0 0
        %1114 = vmatprep.subr.bf16.mxu0 0
        %1115 = vmatpush1.bf16.xpose.msra.mxu0 0
        %1116 = vmatprep.mubr.bf16.mxu0 0
        %1117 = vmatmul.mubr.bf16.gmra.mrb[0].mxu0 %v1079
        %v1118 = vpop.f32.mrb[0].mxu0
        %v1119 = vadd.f32 0.0, %v1118
        %v1120 = vpop.f32.mrb[0].mxu0
        %v1121 = vpop.f32.mrb[0].mxu0
        %v1122 = vpop.f32.mrb[0].mxu0
        %1123 = vdwg.mxu0
        %v1125 = vsel %vm1031, %v949, 0
        %v1128 = vsel %vm1031, %v989, 0
        %1130 = vmatprep.subr.bf16.mxu0 0
        %1131 = vmatpush1.bf16.xpose.msra.mxu0 %v1128
        %1132 = vmatprep.subr.bf16.mxu0 0
        %1133 = vmatpush1.bf16.xpose.msra.mxu0 0
        %1134 = vmatprep.subr.bf16.mxu0 0
        %1135 = vmatpush1.bf16.xpose.msra.mxu0 0
        %1136 = vmatprep.subr.bf16.mxu0 0
        %1137 = vmatpush1.bf16.xpose.msra.mxu0 0
        %1138 = vmatprep.subr.bf16.mxu0 0
        %1139 = vmatpush1.bf16.xpose.msra.mxu0 0
        %1140 = vmatprep.subr.bf16.mxu0 0
        %1141 = vmatpush1.bf16.xpose.msra.mxu0 0
        %1142 = vmatprep.subr.bf16.mxu0 0
        %1143 = vmatpush1.bf16.xpose.msra.mxu0 0
        %1144 = vmatprep.subr.bf16.mxu0 0
        %1145 = vmatpush1.bf16.xpose.msra.mxu0 0
        %1146 = vmatprep.subr.bf16.mxu0 0
        %1147 = vmatpush1.bf16.xpose.msra.mxu0 0
        %1148 = vmatprep.subr.bf16.mxu0 0
        %1149 = vmatpush1.bf16.xpose.msra.mxu0 0
        %1150 = vmatprep.subr.bf16.mxu0 0
        %1151 = vmatpush1.bf16.xpose.msra.mxu0 0
        %1152 = vmatprep.subr.bf16.mxu0 0
        %1153 = vmatpush1.bf16.xpose.msra.mxu0 0
        %1154 = vmatprep.subr.bf16.mxu0 0
        %1155 = vmatpush1.bf16.xpose.msra.mxu0 0
        %1156 = vmatprep.subr.bf16.mxu0 0
        %1157 = vmatpush1.bf16.xpose.msra.mxu0 0
        %1158 = vmatprep.subr.bf16.mxu0 0
        %1159 = vmatpush1.bf16.xpose.msra.mxu0 0
        %1160 = vmatprep.subr.bf16.mxu0 0
        %1161 = vmatpush1.bf16.xpose.msra.mxu0 0
        %1162 = vmatprep.mubr.bf16.mxu0 0
        %1163 = vmatmul.mubr.bf16.gmra.mrb[0].mxu0 %v1125
        %v1164 = vpop.f32.mrb[0].mxu0
        %v1165 = vadd.f32 0.0, %v1164
        %v1166 = vpop.f32.mrb[0].mxu0
        %v1167 = vpop.f32.mrb[0].mxu0
        %v1168 = vpop.f32.mrb[0].mxu0
        %1169 = vdwg.mxu0
        %v1171 = vsel %vm1031, %v950, 0
        %v1174 = vsel %vm1031, %v990, 0
        %1176 = vmatprep.subr.bf16.mxu0 0
        %1177 = vmatpush1.bf16.xpose.msra.mxu0 %v1174
        %1178 = vmatprep.subr.bf16.mxu0 0
        %1179 = vmatpush1.bf16.xpose.msra.mxu0 0
        %1180 = vmatprep.subr.bf16.mxu0 0
        %1181 = vmatpush1.bf16.xpose.msra.mxu0 0
        %1182 = vmatprep.subr.bf16.mxu0 0
        %1183 = vmatpush1.bf16.xpose.msra.mxu0 0
        %1184 = vmatprep.subr.bf16.mxu0 0
        %1185 = vmatpush1.bf16.xpose.msra.mxu0 0
        %1186 = vmatprep.subr.bf16.mxu0 0
        %1187 = vmatpush1.bf16.xpose.msra.mxu0 0
        %1188 = vmatprep.subr.bf16.mxu0 0
        %1189 = vmatpush1.bf16.xpose.msra.mxu0 0
        %1190 = vmatprep.subr.bf16.mxu0 0
        %1191 = vmatpush1.bf16.xpose.msra.mxu0 0
        %1192 = vmatprep.subr.bf16.mxu0 0
        %1193 = vmatpush1.bf16.xpose.msra.mxu0 0
        %1194 = vmatprep.subr.bf16.mxu0 0
        %1195 = vmatpush1.bf16.xpose.msra.mxu0 0
        %1196 = vmatprep.subr.bf16.mxu0 0
        %1197 = vmatpush1.bf16.xpose.msra.mxu0 0
        %1198 = vmatprep.subr.bf16.mxu0 0
        %1199 = vmatpush1.bf16.xpose.msra.mxu0 0
        %1200 = vmatprep.subr.bf16.mxu0 0
        %1201 = vmatpush1.bf16.xpose.msra.mxu0 0
        %1202 = vmatprep.subr.bf16.mxu0 0
        %1203 = vmatpush1.bf16.xpose.msra.mxu0 0
        %1204 = vmatprep.subr.bf16.mxu0 0
        %1205 = vmatpush1.bf16.xpose.msra.mxu0 0
        %1206 = vmatprep.subr.bf16.mxu0 0
        %1207 = vmatpush1.bf16.xpose.msra.mxu0 0
        %1208 = vmatprep.mubr.bf16.mxu0 0
        %1209 = vmatmul.mubr.bf16.gmra.mrb[0].mxu0 %v1171
        %v1210 = vpop.f32.mrb[0].mxu0
        %v1211 = vadd.f32 0.0, %v1210
        %v1212 = vpop.f32.mrb[0].mxu0
        %v1213 = vpop.f32.mrb[0].mxu0
        %v1214 = vpop.f32.mrb[0].mxu0
        %1215 = vdwg.mxu0
        %vm1216 = vcmask 9216
        %v1217 = vsel %vm1216, %v1073, -inf
        %1218 = vmax.xlane.f32.xlu0 %v1217
        %v1219 = vpop.xlane.xlu0 %1218
        %v1220 = vsel %vm1216, %v1119, -inf
        %1221 = vmax.xlane.f32.xlu0 %v1220
        %v1222 = vpop.xlane.xlu0 %1221
        %v1223 = vsel %vm1216, %v1165, -inf
        %1224 = vmax.xlane.f32.xlu0 %v1223
        %v1225 = vpop.xlane.xlu0 %1224
        %v1226 = vsel %vm1216, %v1211, -inf
        %1227 = vmax.xlane.f32.xlu0 %v1226
        %v1228 = vpop.xlane.xlu0 %1227
        %v1229 = vsub.f32 %v1073, %v1219
        %v1230 = vsub.f32 %v1119, %v1222
        %v1231 = vsub.f32 %v1165, %v1225
        %v1232 = vsub.f32 %v1211, %v1228
        %v1233 = vmul.f32 %v1229, 1.442695
        %v1234 = vpow.pop %v1233
        %v1235 = vmul.f32 %v1230, 1.442695
        %v1236 = vpow.pop %v1235
        %v1237 = vmul.f32 %v1231, 1.442695
        %v1238 = vpow.pop %v1237
        %v1239 = vmul.f32 %v1232, 1.442695
        %v1240 = vpow.pop %v1239
        %v1241 = vsel %vm1216, %v1234, 0.0
        %1242 = vadd.xlane.f32.xlu0 %v1241
        %v1243 = vpop.xlane.xlu0 %1242
        %v1244 = vsel %vm1216, %v1236, 0.0
        %1245 = vadd.xlane.f32.xlu0 %v1244
        %v1246 = vpop.xlane.xlu0 %1245
        %v1247 = vsel %vm1216, %v1238, 0.0
        %1248 = vadd.xlane.f32.xlu0 %v1247
        %v1249 = vpop.xlane.xlu0 %1248
        %v1250 = vsel %vm1216, %v1240, 0.0
        %1251 = vadd.xlane.f32.xlu0 %v1250
        %v1252 = vpop.xlane.xlu0 %1251
        %v1253 = vrcp.pop %v1243
        %v1254 = vrcp.pop %v1246
        %v1255 = vrcp.pop %v1249
        %v1256 = vrcp.pop %v1252
        %v1257 = vmul.f32 %v1234, %v1253
        %v1258 = vmul.f32 %v1236, %v1254
        %v1259 = vmul.f32 %v1238, %v1255
        %v1260 = vmul.f32 %v1240, %v1256
        %v1261 = vpack.c.bf16 %v1257, %v1257
        %v1262 = vpack.c.bf16 %v1258, %v1258
        %v1263 = vpack.c.bf16 %v1259, %v1259
        %v1264 = vpack.c.bf16 %v1260, %v1260
        %vm1265 = vcmask 15360
        %v1267 = vsel %vm1265, %v1261, 0
        %vm1269 = vcmask 1040384
        %v1271 = vsel %vm1269, %v1027, 0
        %1273 = vmatprep.subr.bf16.mxu0 0
        %1274 = vmatpush1.bf16.msra.mxu0 %v1271
        %1275 = vmatprep.subr.bf16.mxu0 0
        %1276 = vmatpush1.bf16.msra.mxu0 0
        %1277 = vmatprep.subr.bf16.mxu0 0
        %1278 = vmatpush1.bf16.msra.mxu0 0
        %1279 = vmatprep.subr.bf16.mxu0 0
        %1280 = vmatpush1.bf16.msra.mxu0 0
        %1281 = vmatprep.subr.bf16.mxu0 0
        %1282 = vmatpush1.bf16.msra.mxu0 0
        %1283 = vmatprep.subr.bf16.mxu0 0
        %1284 = vmatpush1.bf16.msra.mxu0 0
        %1285 = vmatprep.subr.bf16.mxu0 0
        %1286 = vmatpush1.bf16.msra.mxu0 0
        %1287 = vmatprep.subr.bf16.mxu0 0
        %1288 = vmatpush1.bf16.msra.mxu0 0
        %1289 = vmatprep.subr.bf16.mxu0 0
        %1290 = vmatpush1.bf16.msra.mxu0 0
        %1291 = vmatprep.subr.bf16.mxu0 0
        %1292 = vmatpush1.bf16.msra.mxu0 0
        %1293 = vmatprep.subr.bf16.mxu0 0
        %1294 = vmatpush1.bf16.msra.mxu0 0
        %1295 = vmatprep.subr.bf16.mxu0 0
        %1296 = vmatpush1.bf16.msra.mxu0 0
        %1297 = vmatprep.subr.bf16.mxu0 0
        %1298 = vmatpush1.bf16.msra.mxu0 0
        %1299 = vmatprep.subr.bf16.mxu0 0
        %1300 = vmatpush1.bf16.msra.mxu0 0
        %1301 = vmatprep.subr.bf16.mxu0 0
        %1302 = vmatpush1.bf16.msra.mxu0 0
        %1303 = vmatprep.subr.bf16.mxu0 0
        %1304 = vmatpush1.bf16.msra.mxu0 0
        %1305 = vmatprep.mubr.bf16.mxu0 0
        %1306 = vmatmul.mubr.bf16.gmra.mrb[0].mxu0 %v1267
        %v1307 = vpop.f32.mrb[0].mxu0
        %v1308 = vadd.f32 0.0, %v1307
        %v1309 = vpop.f32.mrb[0].mxu0
        %v1310 = vpop.f32.mrb[0].mxu0
        %v1311 = vpop.f32.mrb[0].mxu0
        %1312 = vdwg.mxu0
        %v1314 = vsel %vm1265, %v1262, 0
        %v1317 = vsel %vm1269, %v1028, 0
        %1319 = vmatprep.subr.bf16.mxu0 0
        %1320 = vmatpush1.bf16.msra.mxu0 %v1317
        %1321 = vmatprep.subr.bf16.mxu0 0
        %1322 = vmatpush1.bf16.msra.mxu0 0
        %1323 = vmatprep.subr.bf16.mxu0 0
        %1324 = vmatpush1.bf16.msra.mxu0 0
        %1325 = vmatprep.subr.bf16.mxu0 0
        %1326 = vmatpush1.bf16.msra.mxu0 0
        %1327 = vmatprep.subr.bf16.mxu0 0
        %1328 = vmatpush1.bf16.msra.mxu0 0
        %1329 = vmatprep.subr.bf16.mxu0 0
        %1330 = vmatpush1.bf16.msra.mxu0 0
        %1331 = vmatprep.subr.bf16.mxu0 0
        %1332 = vmatpush1.bf16.msra.mxu0 0
        %1333 = vmatprep.subr.bf16.mxu0 0
        %1334 = vmatpush1.bf16.msra.mxu0 0
        %1335 = vmatprep.subr.bf16.mxu0 0
        %1336 = vmatpush1.bf16.msra.mxu0 0
        %1337 = vmatprep.subr.bf16.mxu0 0
        %1338 = vmatpush1.bf16.msra.mxu0 0
        %1339 = vmatprep.subr.bf16.mxu0 0
        %1340 = vmatpush1.bf16.msra.mxu0 0
        %1341 = vmatprep.subr.bf16.mxu0 0
        %1342 = vmatpush1.bf16.msra.mxu0 0
        %1343 = vmatprep.subr.bf16.mxu0 0
        %1344 = vmatpush1.bf16.msra.mxu0 0
        %1345 = vmatprep.subr.bf16.mxu0 0
        %1346 = vmatpush1.bf16.msra.mxu0 0
        %1347 = vmatprep.subr.bf16.mxu0 0
        %1348 = vmatpush1.bf16.msra.mxu0 0
        %1349 = vmatprep.subr.bf16.mxu0 0
        %1350 = vmatpush1.bf16.msra.mxu0 0
        %1351 = vmatprep.mubr.bf16.mxu0 0
        %1352 = vmatmul.mubr.bf16.gmra.mrb[0].mxu0 %v1314
        %v1353 = vpop.f32.mrb[0].mxu0
        %v1354 = vadd.f32 0.0, %v1353
        %v1355 = vpop.f32.mrb[0].mxu0
        %v1356 = vpop.f32.mrb[0].mxu0
        %v1357 = vpop.f32.mrb[0].mxu0
        %1358 = vdwg.mxu0
        %v1360 = vsel %vm1265, %v1263, 0
        %v1363 = vsel %vm1269, %v1029, 0
        %1365 = vmatprep.subr.bf16.mxu0 0
        %1366 = vmatpush1.bf16.msra.mxu0 %v1363
        %1367 = vmatprep.subr.bf16.mxu0 0
        %1368 = vmatpush1.bf16.msra.mxu0 0
        %1369 = vmatprep.subr.bf16.mxu0 0
        %1370 = vmatpush1.bf16.msra.mxu0 0
        %1371 = vmatprep.subr.bf16.mxu0 0
        %1372 = vmatpush1.bf16.msra.mxu0 0
        %1373 = vmatprep.subr.bf16.mxu0 0
        %1374 = vmatpush1.bf16.msra.mxu0 0
        %1375 = vmatprep.subr.bf16.mxu0 0
        %1376 = vmatpush1.bf16.msra.mxu0 0
        %1377 = vmatprep.subr.bf16.mxu0 0
        %1378 = vmatpush1.bf16.msra.mxu0 0
        %1379 = vmatprep.subr.bf16.mxu0 0
        %1380 = vmatpush1.bf16.msra.mxu0 0
        %1381 = vmatprep.subr.bf16.mxu0 0
        %1382 = vmatpush1.bf16.msra.mxu0 0
        %1383 = vmatprep.subr.bf16.mxu0 0
        %1384 = vmatpush1.bf16.msra.mxu0 0
        %1385 = vmatprep.subr.bf16.mxu0 0
        %1386 = vmatpush1.bf16.msra.mxu0 0
        %1387 = vmatprep.subr.bf16.mxu0 0
        %1388 = vmatpush1.bf16.msra.mxu0 0
        %1389 = vmatprep.subr.bf16.mxu0 0
        %1390 = vmatpush1.bf16.msra.mxu0 0
        %1391 = vmatprep.subr.bf16.mxu0 0
        %1392 = vmatpush1.bf16.msra.mxu0 0
        %1393 = vmatprep.subr.bf16.mxu0 0
        %1394 = vmatpush1.bf16.msra.mxu0 0
        %1395 = vmatprep.subr.bf16.mxu0 0
        %1396 = vmatpush1.bf16.msra.mxu0 0
        %1397 = vmatprep.mubr.bf16.mxu0 0
        %1398 = vmatmul.mubr.bf16.gmra.mrb[0].mxu0 %v1360
        %v1399 = vpop.f32.mrb[0].mxu0
        %v1400 = vadd.f32 0.0, %v1399
        %v1401 = vpop.f32.mrb[0].mxu0
        %v1402 = vpop.f32.mrb[0].mxu0
        %v1403 = vpop.f32.mrb[0].mxu0
        %1404 = vdwg.mxu0
        %v1406 = vsel %vm1265, %v1264, 0
        %v1409 = vsel %vm1269, %v1030, 0
        %1411 = vmatprep.subr.bf16.mxu0 0
        %1412 = vmatpush1.bf16.msra.mxu0 %v1409
        %1413 = vmatprep.subr.bf16.mxu0 0
        %1414 = vmatpush1.bf16.msra.mxu0 0
        %1415 = vmatprep.subr.bf16.mxu0 0
        %1416 = vmatpush1.bf16.msra.mxu0 0
        %1417 = vmatprep.subr.bf16.mxu0 0
        %1418 = vmatpush1.bf16.msra.mxu0 0
        %1419 = vmatprep.subr.bf16.mxu0 0
        %1420 = vmatpush1.bf16.msra.mxu0 0
        %1421 = vmatprep.subr.bf16.mxu0 0
        %1422 = vmatpush1.bf16.msra.mxu0 0
        %1423 = vmatprep.subr.bf16.mxu0 0
        %1424 = vmatpush1.bf16.msra.mxu0 0
        %1425 = vmatprep.subr.bf16.mxu0 0
        %1426 = vmatpush1.bf16.msra.mxu0 0
        %1427 = vmatprep.subr.bf16.mxu0 0
        %1428 = vmatpush1.bf16.msra.mxu0 0
        %1429 = vmatprep.subr.bf16.mxu0 0
        %1430 = vmatpush1.bf16.msra.mxu0 0
        %1431 = vmatprep.subr.bf16.mxu0 0
        %1432 = vmatpush1.bf16.msra.mxu0 0
        %1433 = vmatprep.subr.bf16.mxu0 0
        %1434 = vmatpush1.bf16.msra.mxu0 0
        %1435 = vmatprep.subr.bf16.mxu0 0
        %1436 = vmatpush1.bf16.msra.mxu0 0
        %1437 = vmatprep.subr.bf16.mxu0 0
        %1438 = vmatpush1.bf16.msra.mxu0 0
        %1439 = vmatprep.subr.bf16.mxu0 0
        %1440 = vmatpush1.bf16.msra.mxu0 0
        %1441 = vmatprep.subr.bf16.mxu0 0
        %1442 = vmatpush1.bf16.msra.mxu0 0
        %1443 = vmatprep.mubr.bf16.mxu0 0
        %1444 = vmatmul.mubr.bf16.gmra.mrb[0].mxu0 %v1406
        %v1445 = vpop.f32.mrb[0].mxu0
        %v1446 = vadd.f32 0.0, %v1445
        %v1447 = vpop.f32.mrb[0].mxu0
        %v1448 = vpop.f32.mrb[0].mxu0
        %v1449 = vpop.f32.mrb[0].mxu0
        %1450 = vdwg.mxu0
        %1451 = vrot.lane.b32.xlu0 %v958, 112
        %v1452 = vpop.permute.xlu0 %1451
        %1453 = vrot.lane.b32.xlu0 %v966, 112
        %v1454 = vpop.permute.xlu0 %1453
        %1455 = vrot.lane.b32.xlu0 %v974, 112
        %v1456 = vpop.permute.xlu0 %1455
        %1457 = vrot.lane.b32.xlu0 %v982, 112
        %v1458 = vpop.permute.xlu0 %1457
        %v1463 = vpack.c.bf16 %v1452, %v1452
        %v1464 = vpack.c.bf16 %v1454, %v1454
        %v1465 = vpack.c.bf16 %v1456, %v1456
        %v1466 = vpack.c.bf16 %v1458, %v1458
        %1467 = vrot.lane.b32.xlu0 %v998, 112
        %v1468 = vpop.permute.xlu0 %1467
        %1469 = vrot.lane.b32.xlu0 %v1006, 112
        %v1470 = vpop.permute.xlu0 %1469
        %1471 = vrot.lane.b32.xlu0 %v1014, 112
        %v1472 = vpop.permute.xlu0 %1471
        %1473 = vrot.lane.b32.xlu0 %v1022, 112
        %v1474 = vpop.permute.xlu0 %1473
        %v1479 = vpack.c.bf16 %v1468, %v1468
        %v1480 = vpack.c.bf16 %v1470, %v1470
        %v1481 = vpack.c.bf16 %v1472, %v1472
        %v1482 = vpack.c.bf16 %v1474, %v1474
        %1484 = vrot.lane.b32.xlu0 %v947, 112
        %v1485 = vpop.permute.xlu0 %1484
        %v1487 = vsel %vm1031, %v1485, 0
        %v1490 = vsel %vm1031, %v1463, 0
        %1492 = vmatprep.subr.bf16.mxu0 0
        %1493 = vmatpush1.bf16.xpose.msra.mxu0 %v1490
        %1494 = vmatprep.subr.bf16.mxu0 0
        %1495 = vmatpush1.bf16.xpose.msra.mxu0 0
        %1496 = vmatprep.subr.bf16.mxu0 0
        %1497 = vmatpush1.bf16.xpose.msra.mxu0 0
        %1498 = vmatprep.subr.bf16.mxu0 0
        %1499 = vmatpush1.bf16.xpose.msra.mxu0 0
        %1500 = vmatprep.subr.bf16.mxu0 0
        %1501 = vmatpush1.bf16.xpose.msra.mxu0 0
        %1502 = vmatprep.subr.bf16.mxu0 0
        %1503 = vmatpush1.bf16.xpose.msra.mxu0 0
        %1504 = vmatprep.subr.bf16.mxu0 0
        %1505 = vmatpush1.bf16.xpose.msra.mxu0 0
        %1506 = vmatprep.subr.bf16.mxu0 0
        %1507 = vmatpush1.bf16.xpose.msra.mxu0 0
        %1508 = vmatprep.subr.bf16.mxu0 0
        %1509 = vmatpush1.bf16.xpose.msra.mxu0 0
        %1510 = vmatprep.subr.bf16.mxu0 0
        %1511 = vmatpush1.bf16.xpose.msra.mxu0 0
        %1512 = vmatprep.subr.bf16.mxu0 0
        %1513 = vmatpush1.bf16.xpose.msra.mxu0 0
        %1514 = vmatprep.subr.bf16.mxu0 0
        %1515 = vmatpush1.bf16.xpose.msra.mxu0 0
        %1516 = vmatprep.subr.bf16.mxu0 0
        %1517 = vmatpush1.bf16.xpose.msra.mxu0 0
        %1518 = vmatprep.subr.bf16.mxu0 0
        %1519 = vmatpush1.bf16.xpose.msra.mxu0 0
        %1520 = vmatprep.subr.bf16.mxu0 0
        %1521 = vmatpush1.bf16.xpose.msra.mxu0 0
        %1522 = vmatprep.subr.bf16.mxu0 0
        %1523 = vmatpush1.bf16.xpose.msra.mxu0 0
        %1524 = vmatprep.mubr.bf16.mxu0 0
        %1525 = vmatmul.mubr.bf16.gmra.mrb[0].mxu0 %v1487
        %v1526 = vpop.f32.mrb[0].mxu0
        %v1527 = vadd.f32 0.0, %v1526
        %v1528 = vpop.f32.mrb[0].mxu0
        %v1529 = vpop.f32.mrb[0].mxu0
        %v1530 = vpop.f32.mrb[0].mxu0
        %1531 = vdwg.mxu0
        %1533 = vrot.lane.b32.xlu0 %v948, 112
        %v1534 = vpop.permute.xlu0 %1533
        %v1536 = vsel %vm1031, %v1534, 0
        %v1539 = vsel %vm1031, %v1464, 0
        %1541 = vmatprep.subr.bf16.mxu0 0
        %1542 = vmatpush1.bf16.xpose.msra.mxu0 %v1539
        %1543 = vmatprep.subr.bf16.mxu0 0
        %1544 = vmatpush1.bf16.xpose.msra.mxu0 0
        %1545 = vmatprep.subr.bf16.mxu0 0
        %1546 = vmatpush1.bf16.xpose.msra.mxu0 0
        %1547 = vmatprep.subr.bf16.mxu0 0
        %1548 = vmatpush1.bf16.xpose.msra.mxu0 0
        %1549 = vmatprep.subr.bf16.mxu0 0
        %1550 = vmatpush1.bf16.xpose.msra.mxu0 0
        %1551 = vmatprep.subr.bf16.mxu0 0
        %1552 = vmatpush1.bf16.xpose.msra.mxu0 0
        %1553 = vmatprep.subr.bf16.mxu0 0
        %1554 = vmatpush1.bf16.xpose.msra.mxu0 0
        %1555 = vmatprep.subr.bf16.mxu0 0
        %1556 = vmatpush1.bf16.xpose.msra.mxu0 0
        %1557 = vmatprep.subr.bf16.mxu0 0
        %1558 = vmatpush1.bf16.xpose.msra.mxu0 0
        %1559 = vmatprep.subr.bf16.mxu0 0
        %1560 = vmatpush1.bf16.xpose.msra.mxu0 0
        %1561 = vmatprep.subr.bf16.mxu0 0
        %1562 = vmatpush1.bf16.xpose.msra.mxu0 0
        %1563 = vmatprep.subr.bf16.mxu0 0
        %1564 = vmatpush1.bf16.xpose.msra.mxu0 0
        %1565 = vmatprep.subr.bf16.mxu0 0
        %1566 = vmatpush1.bf16.xpose.msra.mxu0 0
        %1567 = vmatprep.subr.bf16.mxu0 0
        %1568 = vmatpush1.bf16.xpose.msra.mxu0 0
        %1569 = vmatprep.subr.bf16.mxu0 0
        %1570 = vmatpush1.bf16.xpose.msra.mxu0 0
        %1571 = vmatprep.subr.bf16.mxu0 0
        %1572 = vmatpush1.bf16.xpose.msra.mxu0 0
        %1573 = vmatprep.mubr.bf16.mxu0 0
        %1574 = vmatmul.mubr.bf16.gmra.mrb[0].mxu0 %v1536
        %v1575 = vpop.f32.mrb[0].mxu0
        %v1576 = vadd.f32 0.0, %v1575
        %v1577 = vpop.f32.mrb[0].mxu0
        %v1578 = vpop.f32.mrb[0].mxu0
        %v1579 = vpop.f32.mrb[0].mxu0
        %1580 = vdwg.mxu0
        %1582 = vrot.lane.b32.xlu0 %v949, 112
        %v1583 = vpop.permute.xlu0 %1582
        %v1585 = vsel %vm1031, %v1583, 0
        %v1588 = vsel %vm1031, %v1465, 0
        %1590 = vmatprep.subr.bf16.mxu0 0
        %1591 = vmatpush1.bf16.xpose.msra.mxu0 %v1588
        %1592 = vmatprep.subr.bf16.mxu0 0
        %1593 = vmatpush1.bf16.xpose.msra.mxu0 0
        %1594 = vmatprep.subr.bf16.mxu0 0
        %1595 = vmatpush1.bf16.xpose.msra.mxu0 0
        %1596 = vmatprep.subr.bf16.mxu0 0
        %1597 = vmatpush1.bf16.xpose.msra.mxu0 0
        %1598 = vmatprep.subr.bf16.mxu0 0
        %1599 = vmatpush1.bf16.xpose.msra.mxu0 0
        %1600 = vmatprep.subr.bf16.mxu0 0
        %1601 = vmatpush1.bf16.xpose.msra.mxu0 0
        %1602 = vmatprep.subr.bf16.mxu0 0
        %1603 = vmatpush1.bf16.xpose.msra.mxu0 0
        %1604 = vmatprep.subr.bf16.mxu0 0
        %1605 = vmatpush1.bf16.xpose.msra.mxu0 0
        %1606 = vmatprep.subr.bf16.mxu0 0
        %1607 = vmatpush1.bf16.xpose.msra.mxu0 0
        %1608 = vmatprep.subr.bf16.mxu0 0
        %1609 = vmatpush1.bf16.xpose.msra.mxu0 0
        %1610 = vmatprep.subr.bf16.mxu0 0
        %1611 = vmatpush1.bf16.xpose.msra.mxu0 0
        %1612 = vmatprep.subr.bf16.mxu0 0
        %1613 = vmatpush1.bf16.xpose.msra.mxu0 0
        %1614 = vmatprep.subr.bf16.mxu0 0
        %1615 = vmatpush1.bf16.xpose.msra.mxu0 0
        %1616 = vmatprep.subr.bf16.mxu0 0
        %1617 = vmatpush1.bf16.xpose.msra.mxu0 0
        %1618 = vmatprep.subr.bf16.mxu0 0
        %1619 = vmatpush1.bf16.xpose.msra.mxu0 0
        %1620 = vmatprep.subr.bf16.mxu0 0
        %1621 = vmatpush1.bf16.xpose.msra.mxu0 0
        %1622 = vmatprep.mubr.bf16.mxu0 0
        %1623 = vmatmul.mubr.bf16.gmra.mrb[0].mxu0 %v1585
        %v1624 = vpop.f32.mrb[0].mxu0
        %v1625 = vadd.f32 0.0, %v1624
        %v1626 = vpop.f32.mrb[0].mxu0
        %v1627 = vpop.f32.mrb[0].mxu0
        %v1628 = vpop.f32.mrb[0].mxu0
        %1629 = vdwg.mxu0
        %1631 = vrot.lane.b32.xlu0 %v950, 112
        %v1632 = vpop.permute.xlu0 %1631
        %v1634 = vsel %vm1031, %v1632, 0
        %v1637 = vsel %vm1031, %v1466, 0
        %1639 = vmatprep.subr.bf16.mxu0 0
        %1640 = vmatpush1.bf16.xpose.msra.mxu0 %v1637
        %1641 = vmatprep.subr.bf16.mxu0 0
        %1642 = vmatpush1.bf16.xpose.msra.mxu0 0
        %1643 = vmatprep.subr.bf16.mxu0 0
        %1644 = vmatpush1.bf16.xpose.msra.mxu0 0
        %1645 = vmatprep.subr.bf16.mxu0 0
        %1646 = vmatpush1.bf16.xpose.msra.mxu0 0
        %1647 = vmatprep.subr.bf16.mxu0 0
        %1648 = vmatpush1.bf16.xpose.msra.mxu0 0
        %1649 = vmatprep.subr.bf16.mxu0 0
        %1650 = vmatpush1.bf16.xpose.msra.mxu0 0
        %1651 = vmatprep.subr.bf16.mxu0 0
        %1652 = vmatpush1.bf16.xpose.msra.mxu0 0
        %1653 = vmatprep.subr.bf16.mxu0 0
        %1654 = vmatpush1.bf16.xpose.msra.mxu0 0
        %1655 = vmatprep.subr.bf16.mxu0 0
        %1656 = vmatpush1.bf16.xpose.msra.mxu0 0
        %1657 = vmatprep.subr.bf16.mxu0 0
        %1658 = vmatpush1.bf16.xpose.msra.mxu0 0
        %1659 = vmatprep.subr.bf16.mxu0 0
        %1660 = vmatpush1.bf16.xpose.msra.mxu0 0
        %1661 = vmatprep.subr.bf16.mxu0 0
        %1662 = vmatpush1.bf16.xpose.msra.mxu0 0
        %1663 = vmatprep.subr.bf16.mxu0 0
        %1664 = vmatpush1.bf16.xpose.msra.mxu0 0
        %1665 = vmatprep.subr.bf16.mxu0 0
        %1666 = vmatpush1.bf16.xpose.msra.mxu0 0
        %1667 = vmatprep.subr.bf16.mxu0 0
        %1668 = vmatpush1.bf16.xpose.msra.mxu0 0
        %1669 = vmatprep.subr.bf16.mxu0 0
        %1670 = vmatpush1.bf16.xpose.msra.mxu0 0
        %1671 = vmatprep.mubr.bf16.mxu0 0
        %1672 = vmatmul.mubr.bf16.gmra.mrb[0].mxu0 %v1634
        %v1673 = vpop.f32.mrb[0].mxu0
        %v1674 = vadd.f32 0.0, %v1673
        %v1675 = vpop.f32.mrb[0].mxu0
        %v1676 = vpop.f32.mrb[0].mxu0
        %v1677 = vpop.f32.mrb[0].mxu0
        %1678 = vdwg.mxu0
        %v1679 = vsel %vm1216, %v1527, -inf
        %1680 = vmax.xlane.f32.xlu0 %v1679
        %v1681 = vpop.xlane.xlu0 %1680
        %v1682 = vsel %vm1216, %v1576, -inf
        %1683 = vmax.xlane.f32.xlu0 %v1682
        %v1684 = vpop.xlane.xlu0 %1683
        %v1685 = vsel %vm1216, %v1625, -inf
        %1686 = vmax.xlane.f32.xlu0 %v1685
        %v1687 = vpop.xlane.xlu0 %1686
        %v1688 = vsel %vm1216, %v1674, -inf
        %1689 = vmax.xlane.f32.xlu0 %v1688
        %v1690 = vpop.xlane.xlu0 %1689
        %v1691 = vsub.f32 %v1527, %v1681
        %v1692 = vsub.f32 %v1576, %v1684
        %v1693 = vsub.f32 %v1625, %v1687
        %v1694 = vsub.f32 %v1674, %v1690
        %v1695 = vmul.f32 %v1691, 1.442695
        %v1696 = vpow.pop %v1695
        %v1697 = vmul.f32 %v1692, 1.442695
        %v1698 = vpow.pop %v1697
        %v1699 = vmul.f32 %v1693, 1.442695
        %v1700 = vpow.pop %v1699
        %v1701 = vmul.f32 %v1694, 1.442695
        %v1702 = vpow.pop %v1701
        %v1703 = vsel %vm1216, %v1696, 0.0
        %1704 = vadd.xlane.f32.xlu0 %v1703
        %v1705 = vpop.xlane.xlu0 %1704
        %v1706 = vsel %vm1216, %v1698, 0.0
        %1707 = vadd.xlane.f32.xlu0 %v1706
        %v1708 = vpop.xlane.xlu0 %1707
        %v1709 = vsel %vm1216, %v1700, 0.0
        %1710 = vadd.xlane.f32.xlu0 %v1709
        %v1711 = vpop.xlane.xlu0 %1710
        %v1712 = vsel %vm1216, %v1702, 0.0
        %1713 = vadd.xlane.f32.xlu0 %v1712
        %v1714 = vpop.xlane.xlu0 %1713
        %v1715 = vrcp.pop %v1705
        %v1716 = vrcp.pop %v1708
        %v1717 = vrcp.pop %v1711
        %v1718 = vrcp.pop %v1714
        %v1719 = vmul.f32 %v1696, %v1715
        %v1720 = vmul.f32 %v1698, %v1716
        %v1721 = vmul.f32 %v1700, %v1717
        %v1722 = vmul.f32 %v1702, %v1718
        %v1723 = vpack.c.bf16 %v1719, %v1719
        %v1724 = vpack.c.bf16 %v1720, %v1720
        %v1725 = vpack.c.bf16 %v1721, %v1721
        %v1726 = vpack.c.bf16 %v1722, %v1722
        %v1728 = vsel %vm1265, %v1723, 0
        %v1731 = vsel %vm1269, %v1479, 0
        %1733 = vmatprep.subr.bf16.mxu0 0
        %1734 = vmatpush1.bf16.msra.mxu0 %v1731
        %1735 = vmatprep.subr.bf16.mxu0 0
        %1736 = vmatpush1.bf16.msra.mxu0 0
        %1737 = vmatprep.subr.bf16.mxu0 0
        %1738 = vmatpush1.bf16.msra.mxu0 0
        %1739 = vmatprep.subr.bf16.mxu0 0
        %1740 = vmatpush1.bf16.msra.mxu0 0
        %1741 = vmatprep.subr.bf16.mxu0 0
        %1742 = vmatpush1.bf16.msra.mxu0 0
        %1743 = vmatprep.subr.bf16.mxu0 0
        %1744 = vmatpush1.bf16.msra.mxu0 0
        %1745 = vmatprep.subr.bf16.mxu0 0
        %1746 = vmatpush1.bf16.msra.mxu0 0
        %1747 = vmatprep.subr.bf16.mxu0 0
        %1748 = vmatpush1.bf16.msra.mxu0 0
        %1749 = vmatprep.subr.bf16.mxu0 0
        %1750 = vmatpush1.bf16.msra.mxu0 0
        %1751 = vmatprep.subr.bf16.mxu0 0
        %1752 = vmatpush1.bf16.msra.mxu0 0
        %1753 = vmatprep.subr.bf16.mxu0 0
        %1754 = vmatpush1.bf16.msra.mxu0 0
        %1755 = vmatprep.subr.bf16.mxu0 0
        %1756 = vmatpush1.bf16.msra.mxu0 0
        %1757 = vmatprep.subr.bf16.mxu0 0
        %1758 = vmatpush1.bf16.msra.mxu0 0
        %1759 = vmatprep.subr.bf16.mxu0 0
        %1760 = vmatpush1.bf16.msra.mxu0 0
        %1761 = vmatprep.subr.bf16.mxu0 0
        %1762 = vmatpush1.bf16.msra.mxu0 0
        %1763 = vmatprep.subr.bf16.mxu0 0
        %1764 = vmatpush1.bf16.msra.mxu0 0
        %1765 = vmatprep.mubr.bf16.mxu0 0
        %1766 = vmatmul.mubr.bf16.gmra.mrb[0].mxu0 %v1728
        %v1767 = vpop.f32.mrb[0].mxu0
        %v1768 = vadd.f32 0.0, %v1767
        %v1769 = vpop.f32.mrb[0].mxu0
        %v1770 = vpop.f32.mrb[0].mxu0
        %v1771 = vpop.f32.mrb[0].mxu0
        %1772 = vdwg.mxu0
        %v1774 = vsel %vm1265, %v1724, 0
        %v1777 = vsel %vm1269, %v1480, 0
        %1779 = vmatprep.subr.bf16.mxu0 0
        %1780 = vmatpush1.bf16.msra.mxu0 %v1777
        %1781 = vmatprep.subr.bf16.mxu0 0
        %1782 = vmatpush1.bf16.msra.mxu0 0
        %1783 = vmatprep.subr.bf16.mxu0 0
        %1784 = vmatpush1.bf16.msra.mxu0 0
        %1785 = vmatprep.subr.bf16.mxu0 0
        %1786 = vmatpush1.bf16.msra.mxu0 0
        %1787 = vmatprep.subr.bf16.mxu0 0
        %1788 = vmatpush1.bf16.msra.mxu0 0
        %1789 = vmatprep.subr.bf16.mxu0 0
        %1790 = vmatpush1.bf16.msra.mxu0 0
        %1791 = vmatprep.subr.bf16.mxu0 0
        %1792 = vmatpush1.bf16.msra.mxu0 0
        %1793 = vmatprep.subr.bf16.mxu0 0
        %1794 = vmatpush1.bf16.msra.mxu0 0
        %1795 = vmatprep.subr.bf16.mxu0 0
        %1796 = vmatpush1.bf16.msra.mxu0 0
        %1797 = vmatprep.subr.bf16.mxu0 0
        %1798 = vmatpush1.bf16.msra.mxu0 0
        %1799 = vmatprep.subr.bf16.mxu0 0
        %1800 = vmatpush1.bf16.msra.mxu0 0
        %1801 = vmatprep.subr.bf16.mxu0 0
        %1802 = vmatpush1.bf16.msra.mxu0 0
        %1803 = vmatprep.subr.bf16.mxu0 0
        %1804 = vmatpush1.bf16.msra.mxu0 0
        %1805 = vmatprep.subr.bf16.mxu0 0
        %1806 = vmatpush1.bf16.msra.mxu0 0
        %1807 = vmatprep.subr.bf16.mxu0 0
        %1808 = vmatpush1.bf16.msra.mxu0 0
        %1809 = vmatprep.subr.bf16.mxu0 0
        %1810 = vmatpush1.bf16.msra.mxu0 0
        %1811 = vmatprep.mubr.bf16.mxu0 0
        %1812 = vmatmul.mubr.bf16.gmra.mrb[0].mxu0 %v1774
        %v1813 = vpop.f32.mrb[0].mxu0
        %v1814 = vadd.f32 0.0, %v1813
        %v1815 = vpop.f32.mrb[0].mxu0
        %v1816 = vpop.f32.mrb[0].mxu0
        %v1817 = vpop.f32.mrb[0].mxu0
        %1818 = vdwg.mxu0
        %v1820 = vsel %vm1265, %v1725, 0
        %v1823 = vsel %vm1269, %v1481, 0
        %1825 = vmatprep.subr.bf16.mxu0 0
        %1826 = vmatpush1.bf16.msra.mxu0 %v1823
        %1827 = vmatprep.subr.bf16.mxu0 0
        %1828 = vmatpush1.bf16.msra.mxu0 0
        %1829 = vmatprep.subr.bf16.mxu0 0
        %1830 = vmatpush1.bf16.msra.mxu0 0
        %1831 = vmatprep.subr.bf16.mxu0 0
        %1832 = vmatpush1.bf16.msra.mxu0 0
        %1833 = vmatprep.subr.bf16.mxu0 0
        %1834 = vmatpush1.bf16.msra.mxu0 0
        %1835 = vmatprep.subr.bf16.mxu0 0
        %1836 = vmatpush1.bf16.msra.mxu0 0
        %1837 = vmatprep.subr.bf16.mxu0 0
        %1838 = vmatpush1.bf16.msra.mxu0 0
        %1839 = vmatprep.subr.bf16.mxu0 0
        %1840 = vmatpush1.bf16.msra.mxu0 0
        %1841 = vmatprep.subr.bf16.mxu0 0
        %1842 = vmatpush1.bf16.msra.mxu0 0
        %1843 = vmatprep.subr.bf16.mxu0 0
        %1844 = vmatpush1.bf16.msra.mxu0 0
        %1845 = vmatprep.subr.bf16.mxu0 0
        %1846 = vmatpush1.bf16.msra.mxu0 0
        %1847 = vmatprep.subr.bf16.mxu0 0
        %1848 = vmatpush1.bf16.msra.mxu0 0
        %1849 = vmatprep.subr.bf16.mxu0 0
        %1850 = vmatpush1.bf16.msra.mxu0 0
        %1851 = vmatprep.subr.bf16.mxu0 0
        %1852 = vmatpush1.bf16.msra.mxu0 0
        %1853 = vmatprep.subr.bf16.mxu0 0
        %1854 = vmatpush1.bf16.msra.mxu0 0
        %1855 = vmatprep.subr.bf16.mxu0 0
        %1856 = vmatpush1.bf16.msra.mxu0 0
        %1857 = vmatprep.mubr.bf16.mxu0 0
        %1858 = vmatmul.mubr.bf16.gmra.mrb[0].mxu0 %v1820
        %v1859 = vpop.f32.mrb[0].mxu0
        %v1860 = vadd.f32 0.0, %v1859
        %v1861 = vpop.f32.mrb[0].mxu0
        %v1862 = vpop.f32.mrb[0].mxu0
        %v1863 = vpop.f32.mrb[0].mxu0
        %1864 = vdwg.mxu0
        %v1866 = vsel %vm1265, %v1726, 0
        %v1869 = vsel %vm1269, %v1482, 0
        %1871 = vmatprep.subr.bf16.mxu0 0
        %1872 = vmatpush1.bf16.msra.mxu0 %v1869
        %1873 = vmatprep.subr.bf16.mxu0 0
        %1874 = vmatpush1.bf16.msra.mxu0 0
        %1875 = vmatprep.subr.bf16.mxu0 0
        %1876 = vmatpush1.bf16.msra.mxu0 0
        %1877 = vmatprep.subr.bf16.mxu0 0
        %1878 = vmatpush1.bf16.msra.mxu0 0
        %1879 = vmatprep.subr.bf16.mxu0 0
        %1880 = vmatpush1.bf16.msra.mxu0 0
        %1881 = vmatprep.subr.bf16.mxu0 0
        %1882 = vmatpush1.bf16.msra.mxu0 0
        %1883 = vmatprep.subr.bf16.mxu0 0
        %1884 = vmatpush1.bf16.msra.mxu0 0
        %1885 = vmatprep.subr.bf16.mxu0 0
        %1886 = vmatpush1.bf16.msra.mxu0 0
        %1887 = vmatprep.subr.bf16.mxu0 0
        %1888 = vmatpush1.bf16.msra.mxu0 0
        %1889 = vmatprep.subr.bf16.mxu0 0
        %1890 = vmatpush1.bf16.msra.mxu0 0
        %1891 = vmatprep.subr.bf16.mxu0 0
        %1892 = vmatpush1.bf16.msra.mxu0 0
        %1893 = vmatprep.subr.bf16.mxu0 0
        %1894 = vmatpush1.bf16.msra.mxu0 0
        %1895 = vmatprep.subr.bf16.mxu0 0
        %1896 = vmatpush1.bf16.msra.mxu0 0
        %1897 = vmatprep.subr.bf16.mxu0 0
        %1898 = vmatpush1.bf16.msra.mxu0 0
        %1899 = vmatprep.subr.bf16.mxu0 0
        %1900 = vmatpush1.bf16.msra.mxu0 0
        %1901 = vmatprep.subr.bf16.mxu0 0
        %1902 = vmatpush1.bf16.msra.mxu0 0
        %1903 = vmatprep.mubr.bf16.mxu0 0
        %1904 = vmatmul.mubr.bf16.gmra.mrb[0].mxu0 %v1866
        %v1905 = vpop.f32.mrb[0].mxu0
        %v1906 = vadd.f32 0.0, %v1905
        %v1907 = vpop.f32.mrb[0].mxu0
        %v1908 = vpop.f32.mrb[0].mxu0
        %v1909 = vpop.f32.mrb[0].mxu0
        %1910 = vdwg.mxu0
        %1911 = vrot.lane.b32.xlu0 %v958, 96
        %v1912 = vpop.permute.xlu0 %1911
        %1913 = vrot.lane.b32.xlu0 %v966, 96
        %v1914 = vpop.permute.xlu0 %1913
        %1915 = vrot.lane.b32.xlu0 %v974, 96
        %v1916 = vpop.permute.xlu0 %1915
        %1917 = vrot.lane.b32.xlu0 %v982, 96
        %v1918 = vpop.permute.xlu0 %1917
        %v1923 = vpack.c.bf16 %v1912, %v1912
        %v1924 = vpack.c.bf16 %v1914, %v1914
        %v1925 = vpack.c.bf16 %v1916, %v1916
        %v1926 = vpack.c.bf16 %v1918, %v1918
        %1927 = vrot.lane.b32.xlu0 %v998, 96
        %v1928 = vpop.permute.xlu0 %1927
        %1929 = vrot.lane.b32.xlu0 %v1006, 96
        %v1930 = vpop.permute.xlu0 %1929
        %1931 = vrot.lane.b32.xlu0 %v1014, 96
        %v1932 = vpop.permute.xlu0 %1931
        %1933 = vrot.lane.b32.xlu0 %v1022, 96
        %v1934 = vpop.permute.xlu0 %1933
        %v1939 = vpack.c.bf16 %v1928, %v1928
        %v1940 = vpack.c.bf16 %v1930, %v1930
        %v1941 = vpack.c.bf16 %v1932, %v1932
        %v1942 = vpack.c.bf16 %v1934, %v1934
        %1943 = vrot.lane.b32.xlu0 %v947, 96
        %v1944 = vpop.permute.xlu0 %1943
        %v1946 = vsel %vm1031, %v1944, 0
        %v1949 = vsel %vm1031, %v1923, 0
        %1951 = vmatprep.subr.bf16.mxu0 0
        %1952 = vmatpush1.bf16.xpose.msra.mxu0 %v1949
        %1953 = vmatprep.subr.bf16.mxu0 0
        %1954 = vmatpush1.bf16.xpose.msra.mxu0 0
        %1955 = vmatprep.subr.bf16.mxu0 0
        %1956 = vmatpush1.bf16.xpose.msra.mxu0 0
        %1957 = vmatprep.subr.bf16.mxu0 0
        %1958 = vmatpush1.bf16.xpose.msra.mxu0 0
        %1959 = vmatprep.subr.bf16.mxu0 0
        %1960 = vmatpush1.bf16.xpose.msra.mxu0 0
        %1961 = vmatprep.subr.bf16.mxu0 0
        %1962 = vmatpush1.bf16.xpose.msra.mxu0 0
        %1963 = vmatprep.subr.bf16.mxu0 0
        %1964 = vmatpush1.bf16.xpose.msra.mxu0 0
        %1965 = vmatprep.subr.bf16.mxu0 0
        %1966 = vmatpush1.bf16.xpose.msra.mxu0 0
        %1967 = vmatprep.subr.bf16.mxu0 0
        %1968 = vmatpush1.bf16.xpose.msra.mxu0 0
        %1969 = vmatprep.subr.bf16.mxu0 0
        %1970 = vmatpush1.bf16.xpose.msra.mxu0 0
        %1971 = vmatprep.subr.bf16.mxu0 0
        %1972 = vmatpush1.bf16.xpose.msra.mxu0 0
        %1973 = vmatprep.subr.bf16.mxu0 0
        %1974 = vmatpush1.bf16.xpose.msra.mxu0 0
        %1975 = vmatprep.subr.bf16.mxu0 0
        %1976 = vmatpush1.bf16.xpose.msra.mxu0 0
        %1977 = vmatprep.subr.bf16.mxu0 0
        %1978 = vmatpush1.bf16.xpose.msra.mxu0 0
        %1979 = vmatprep.subr.bf16.mxu0 0
        %1980 = vmatpush1.bf16.xpose.msra.mxu0 0
        %1981 = vmatprep.subr.bf16.mxu0 0
        %1982 = vmatpush1.bf16.xpose.msra.mxu0 0
        %1983 = vmatprep.mubr.bf16.mxu0 0
        %1984 = vmatmul.mubr.bf16.gmra.mrb[0].mxu0 %v1946
        %v1985 = vpop.f32.mrb[0].mxu0
        %v1986 = vadd.f32 0.0, %v1985
        %v1987 = vpop.f32.mrb[0].mxu0
        %v1988 = vpop.f32.mrb[0].mxu0
        %v1989 = vpop.f32.mrb[0].mxu0
        %1990 = vdwg.mxu0
        %1991 = vrot.lane.b32.xlu0 %v948, 96
        %v1992 = vpop.permute.xlu0 %1991
        %v1994 = vsel %vm1031, %v1992, 0
        %v1997 = vsel %vm1031, %v1924, 0
        %1999 = vmatprep.subr.bf16.mxu0 0
        %2000 = vmatpush1.bf16.xpose.msra.mxu0 %v1997
        %2001 = vmatprep.subr.bf16.mxu0 0
        %2002 = vmatpush1.bf16.xpose.msra.mxu0 0
        %2003 = vmatprep.subr.bf16.mxu0 0
        %2004 = vmatpush1.bf16.xpose.msra.mxu0 0
        %2005 = vmatprep.subr.bf16.mxu0 0
        %2006 = vmatpush1.bf16.xpose.msra.mxu0 0
        %2007 = vmatprep.subr.bf16.mxu0 0
        %2008 = vmatpush1.bf16.xpose.msra.mxu0 0
        %2009 = vmatprep.subr.bf16.mxu0 0
        %2010 = vmatpush1.bf16.xpose.msra.mxu0 0
        %2011 = vmatprep.subr.bf16.mxu0 0
        %2012 = vmatpush1.bf16.xpose.msra.mxu0 0
        %2013 = vmatprep.subr.bf16.mxu0 0
        %2014 = vmatpush1.bf16.xpose.msra.mxu0 0
        %2015 = vmatprep.subr.bf16.mxu0 0
        %2016 = vmatpush1.bf16.xpose.msra.mxu0 0
        %2017 = vmatprep.subr.bf16.mxu0 0
        %2018 = vmatpush1.bf16.xpose.msra.mxu0 0
        %2019 = vmatprep.subr.bf16.mxu0 0
        %2020 = vmatpush1.bf16.xpose.msra.mxu0 0
        %2021 = vmatprep.subr.bf16.mxu0 0
        %2022 = vmatpush1.bf16.xpose.msra.mxu0 0
        %2023 = vmatprep.subr.bf16.mxu0 0
        %2024 = vmatpush1.bf16.xpose.msra.mxu0 0
        %2025 = vmatprep.subr.bf16.mxu0 0
        %2026 = vmatpush1.bf16.xpose.msra.mxu0 0
        %2027 = vmatprep.subr.bf16.mxu0 0
        %2028 = vmatpush1.bf16.xpose.msra.mxu0 0
        %2029 = vmatprep.subr.bf16.mxu0 0
        %2030 = vmatpush1.bf16.xpose.msra.mxu0 0
        %2031 = vmatprep.mubr.bf16.mxu0 0
        %2032 = vmatmul.mubr.bf16.gmra.mrb[0].mxu0 %v1994
        %v2033 = vpop.f32.mrb[0].mxu0
        %v2034 = vadd.f32 0.0, %v2033
        %v2035 = vpop.f32.mrb[0].mxu0
        %v2036 = vpop.f32.mrb[0].mxu0
        %v2037 = vpop.f32.mrb[0].mxu0
        %2038 = vdwg.mxu0
        %2039 = vrot.lane.b32.xlu0 %v949, 96
        %v2040 = vpop.permute.xlu0 %2039
        %v2042 = vsel %vm1031, %v2040, 0
        %v2045 = vsel %vm1031, %v1925, 0
        %2047 = vmatprep.subr.bf16.mxu0 0
        %2048 = vmatpush1.bf16.xpose.msra.mxu0 %v2045
        %2049 = vmatprep.subr.bf16.mxu0 0
        %2050 = vmatpush1.bf16.xpose.msra.mxu0 0
        %2051 = vmatprep.subr.bf16.mxu0 0
        %2052 = vmatpush1.bf16.xpose.msra.mxu0 0
        %2053 = vmatprep.subr.bf16.mxu0 0
        %2054 = vmatpush1.bf16.xpose.msra.mxu0 0
        %2055 = vmatprep.subr.bf16.mxu0 0
        %2056 = vmatpush1.bf16.xpose.msra.mxu0 0
        %2057 = vmatprep.subr.bf16.mxu0 0
        %2058 = vmatpush1.bf16.xpose.msra.mxu0 0
        %2059 = vmatprep.subr.bf16.mxu0 0
        %2060 = vmatpush1.bf16.xpose.msra.mxu0 0
        %2061 = vmatprep.subr.bf16.mxu0 0
        %2062 = vmatpush1.bf16.xpose.msra.mxu0 0
        %2063 = vmatprep.subr.bf16.mxu0 0
        %2064 = vmatpush1.bf16.xpose.msra.mxu0 0
        %2065 = vmatprep.subr.bf16.mxu0 0
        %2066 = vmatpush1.bf16.xpose.msra.mxu0 0
        %2067 = vmatprep.subr.bf16.mxu0 0
        %2068 = vmatpush1.bf16.xpose.msra.mxu0 0
        %2069 = vmatprep.subr.bf16.mxu0 0
        %2070 = vmatpush1.bf16.xpose.msra.mxu0 0
        %2071 = vmatprep.subr.bf16.mxu0 0
        %2072 = vmatpush1.bf16.xpose.msra.mxu0 0
        %2073 = vmatprep.subr.bf16.mxu0 0
        %2074 = vmatpush1.bf16.xpose.msra.mxu0 0
        %2075 = vmatprep.subr.bf16.mxu0 0
        %2076 = vmatpush1.bf16.xpose.msra.mxu0 0
        %2077 = vmatprep.subr.bf16.mxu0 0
        %2078 = vmatpush1.bf16.xpose.msra.mxu0 0
        %2079 = vmatprep.mubr.bf16.mxu0 0
        %2080 = vmatmul.mubr.bf16.gmra.mrb[0].mxu0 %v2042
        %v2081 = vpop.f32.mrb[0].mxu0
        %v2082 = vadd.f32 0.0, %v2081
        %v2083 = vpop.f32.mrb[0].mxu0
        %v2084 = vpop.f32.mrb[0].mxu0
        %v2085 = vpop.f32.mrb[0].mxu0
        %2086 = vdwg.mxu0
        %2087 = vrot.lane.b32.xlu0 %v950, 96
        %v2088 = vpop.permute.xlu0 %2087
        %v2090 = vsel %vm1031, %v2088, 0
        %v2093 = vsel %vm1031, %v1926, 0
        %2095 = vmatprep.subr.bf16.mxu0 0
        %2096 = vmatpush1.bf16.xpose.msra.mxu0 %v2093
        %2097 = vmatprep.subr.bf16.mxu0 0
        %2098 = vmatpush1.bf16.xpose.msra.mxu0 0
        %2099 = vmatprep.subr.bf16.mxu0 0
        %2100 = vmatpush1.bf16.xpose.msra.mxu0 0
        %2101 = vmatprep.subr.bf16.mxu0 0
        %2102 = vmatpush1.bf16.xpose.msra.mxu0 0
        %2103 = vmatprep.subr.bf16.mxu0 0
        %2104 = vmatpush1.bf16.xpose.msra.mxu0 0
        %2105 = vmatprep.subr.bf16.mxu0 0
        %2106 = vmatpush1.bf16.xpose.msra.mxu0 0
        %2107 = vmatprep.subr.bf16.mxu0 0
        %2108 = vmatpush1.bf16.xpose.msra.mxu0 0
        %2109 = vmatprep.subr.bf16.mxu0 0
        %2110 = vmatpush1.bf16.xpose.msra.mxu0 0
        %2111 = vmatprep.subr.bf16.mxu0 0
        %2112 = vmatpush1.bf16.xpose.msra.mxu0 0
        %2113 = vmatprep.subr.bf16.mxu0 0
        %2114 = vmatpush1.bf16.xpose.msra.mxu0 0
        %2115 = vmatprep.subr.bf16.mxu0 0
        %2116 = vmatpush1.bf16.xpose.msra.mxu0 0
        %2117 = vmatprep.subr.bf16.mxu0 0
        %2118 = vmatpush1.bf16.xpose.msra.mxu0 0
        %2119 = vmatprep.subr.bf16.mxu0 0
        %2120 = vmatpush1.bf16.xpose.msra.mxu0 0
        %2121 = vmatprep.subr.bf16.mxu0 0
        %2122 = vmatpush1.bf16.xpose.msra.mxu0 0
        %2123 = vmatprep.subr.bf16.mxu0 0
        %2124 = vmatpush1.bf16.xpose.msra.mxu0 0
        %2125 = vmatprep.subr.bf16.mxu0 0
        %2126 = vmatpush1.bf16.xpose.msra.mxu0 0
        %2127 = vmatprep.mubr.bf16.mxu0 0
        %2128 = vmatmul.mubr.bf16.gmra.mrb[0].mxu0 %v2090
        %v2129 = vpop.f32.mrb[0].mxu0
        %v2130 = vadd.f32 0.0, %v2129
        %v2131 = vpop.f32.mrb[0].mxu0
        %v2132 = vpop.f32.mrb[0].mxu0
        %v2133 = vpop.f32.mrb[0].mxu0
        %2134 = vdwg.mxu0
        %v2135 = vsel %vm1216, %v1986, -inf
        %2136 = vmax.xlane.f32.xlu0 %v2135
        %v2137 = vpop.xlane.xlu0 %2136
        %v2138 = vsel %vm1216, %v2034, -inf
        %2139 = vmax.xlane.f32.xlu0 %v2138
        %v2140 = vpop.xlane.xlu0 %2139
        %v2141 = vsel %vm1216, %v2082, -inf
        %2142 = vmax.xlane.f32.xlu0 %v2141
        %v2143 = vpop.xlane.xlu0 %2142
        %v2144 = vsel %vm1216, %v2130, -inf
        %2145 = vmax.xlane.f32.xlu0 %v2144
        %v2146 = vpop.xlane.xlu0 %2145
        %v2147 = vsub.f32 %v1986, %v2137
        %v2148 = vsub.f32 %v2034, %v2140
        %v2149 = vsub.f32 %v2082, %v2143
        %v2150 = vsub.f32 %v2130, %v2146
        %v2151 = vmul.f32 %v2147, 1.442695
        %v2152 = vpow.pop %v2151
        %v2153 = vmul.f32 %v2148, 1.442695
        %v2154 = vpow.pop %v2153
        %v2155 = vmul.f32 %v2149, 1.442695
        %v2156 = vpow.pop %v2155
        %v2157 = vmul.f32 %v2150, 1.442695
        %v2158 = vpow.pop %v2157
        %v2159 = vsel %vm1216, %v2152, 0.0
        %2160 = vadd.xlane.f32.xlu0 %v2159
        %v2161 = vpop.xlane.xlu0 %2160
        %v2162 = vsel %vm1216, %v2154, 0.0
        %2163 = vadd.xlane.f32.xlu0 %v2162
        %v2164 = vpop.xlane.xlu0 %2163
        %v2165 = vsel %vm1216, %v2156, 0.0
        %2166 = vadd.xlane.f32.xlu0 %v2165
        %v2167 = vpop.xlane.xlu0 %2166
        %v2168 = vsel %vm1216, %v2158, 0.0
        %2169 = vadd.xlane.f32.xlu0 %v2168
        %v2170 = vpop.xlane.xlu0 %2169
        %v2171 = vrcp.pop %v2161
        %v2172 = vrcp.pop %v2164
        %v2173 = vrcp.pop %v2167
        %v2174 = vrcp.pop %v2170
        %v2175 = vmul.f32 %v2152, %v2171
        %v2176 = vmul.f32 %v2154, %v2172
        %v2177 = vmul.f32 %v2156, %v2173
        %v2178 = vmul.f32 %v2158, %v2174
        %v2179 = vpack.c.bf16 %v2175, %v2175
        %v2180 = vpack.c.bf16 %v2176, %v2176
        %v2181 = vpack.c.bf16 %v2177, %v2177
        %v2182 = vpack.c.bf16 %v2178, %v2178
        %v2184 = vsel %vm1265, %v2179, 0
        %v2187 = vsel %vm1269, %v1939, 0
        %2189 = vmatprep.subr.bf16.mxu0 0
        %2190 = vmatpush1.bf16.msra.mxu0 %v2187
        %2191 = vmatprep.subr.bf16.mxu0 0
        %2192 = vmatpush1.bf16.msra.mxu0 0
        %2193 = vmatprep.subr.bf16.mxu0 0
        %2194 = vmatpush1.bf16.msra.mxu0 0
        %2195 = vmatprep.subr.bf16.mxu0 0
        %2196 = vmatpush1.bf16.msra.mxu0 0
        %2197 = vmatprep.subr.bf16.mxu0 0
        %2198 = vmatpush1.bf16.msra.mxu0 0
        %2199 = vmatprep.subr.bf16.mxu0 0
        %2200 = vmatpush1.bf16.msra.mxu0 0
        %2201 = vmatprep.subr.bf16.mxu0 0
        %2202 = vmatpush1.bf16.msra.mxu0 0
        %2203 = vmatprep.subr.bf16.mxu0 0
        %2204 = vmatpush1.bf16.msra.mxu0 0
        %2205 = vmatprep.subr.bf16.mxu0 0
        %2206 = vmatpush1.bf16.msra.mxu0 0
        %2207 = vmatprep.subr.bf16.mxu0 0
        %2208 = vmatpush1.bf16.msra.mxu0 0
        %2209 = vmatprep.subr.bf16.mxu0 0
        %2210 = vmatpush1.bf16.msra.mxu0 0
        %2211 = vmatprep.subr.bf16.mxu0 0
        %2212 = vmatpush1.bf16.msra.mxu0 0
        %2213 = vmatprep.subr.bf16.mxu0 0
        %2214 = vmatpush1.bf16.msra.mxu0 0
        %2215 = vmatprep.subr.bf16.mxu0 0
        %2216 = vmatpush1.bf16.msra.mxu0 0
        %2217 = vmatprep.subr.bf16.mxu0 0
        %2218 = vmatpush1.bf16.msra.mxu0 0
        %2219 = vmatprep.subr.bf16.mxu0 0
        %2220 = vmatpush1.bf16.msra.mxu0 0
        %2221 = vmatprep.mubr.bf16.mxu0 0
        %2222 = vmatmul.mubr.bf16.gmra.mrb[0].mxu0 %v2184
        %v2223 = vpop.f32.mrb[0].mxu0
        %v2224 = vadd.f32 0.0, %v2223
        %v2225 = vpop.f32.mrb[0].mxu0
        %v2226 = vpop.f32.mrb[0].mxu0
        %v2227 = vpop.f32.mrb[0].mxu0
        %2228 = vdwg.mxu0
        %v2230 = vsel %vm1265, %v2180, 0
        %v2233 = vsel %vm1269, %v1940, 0
        %2235 = vmatprep.subr.bf16.mxu0 0
        %2236 = vmatpush1.bf16.msra.mxu0 %v2233
        %2237 = vmatprep.subr.bf16.mxu0 0
        %2238 = vmatpush1.bf16.msra.mxu0 0
        %2239 = vmatprep.subr.bf16.mxu0 0
        %2240 = vmatpush1.bf16.msra.mxu0 0
        %2241 = vmatprep.subr.bf16.mxu0 0
        %2242 = vmatpush1.bf16.msra.mxu0 0
        %2243 = vmatprep.subr.bf16.mxu0 0
        %2244 = vmatpush1.bf16.msra.mxu0 0
        %2245 = vmatprep.subr.bf16.mxu0 0
        %2246 = vmatpush1.bf16.msra.mxu0 0
        %2247 = vmatprep.subr.bf16.mxu0 0
        %2248 = vmatpush1.bf16.msra.mxu0 0
        %2249 = vmatprep.subr.bf16.mxu0 0
        %2250 = vmatpush1.bf16.msra.mxu0 0
        %2251 = vmatprep.subr.bf16.mxu0 0
        %2252 = vmatpush1.bf16.msra.mxu0 0
        %2253 = vmatprep.subr.bf16.mxu0 0
        %2254 = vmatpush1.bf16.msra.mxu0 0
        %2255 = vmatprep.subr.bf16.mxu0 0
        %2256 = vmatpush1.bf16.msra.mxu0 0
        %2257 = vmatprep.subr.bf16.mxu0 0
        %2258 = vmatpush1.bf16.msra.mxu0 0
        %2259 = vmatprep.subr.bf16.mxu0 0
        %2260 = vmatpush1.bf16.msra.mxu0 0
        %2261 = vmatprep.subr.bf16.mxu0 0
        %2262 = vmatpush1.bf16.msra.mxu0 0
        %2263 = vmatprep.subr.bf16.mxu0 0
        %2264 = vmatpush1.bf16.msra.mxu0 0
        %2265 = vmatprep.subr.bf16.mxu0 0
        %2266 = vmatpush1.bf16.msra.mxu0 0
        %2267 = vmatprep.mubr.bf16.mxu0 0
        %2268 = vmatmul.mubr.bf16.gmra.mrb[0].mxu0 %v2230
        %v2269 = vpop.f32.mrb[0].mxu0
        %v2270 = vadd.f32 0.0, %v2269
        %v2271 = vpop.f32.mrb[0].mxu0
        %v2272 = vpop.f32.mrb[0].mxu0
        %v2273 = vpop.f32.mrb[0].mxu0
        %2274 = vdwg.mxu0
        %v2276 = vsel %vm1265, %v2181, 0
        %v2279 = vsel %vm1269, %v1941, 0
        %2281 = vmatprep.subr.bf16.mxu0 0
        %2282 = vmatpush1.bf16.msra.mxu0 %v2279
        %2283 = vmatprep.subr.bf16.mxu0 0
        %2284 = vmatpush1.bf16.msra.mxu0 0
        %2285 = vmatprep.subr.bf16.mxu0 0
        %2286 = vmatpush1.bf16.msra.mxu0 0
        %2287 = vmatprep.subr.bf16.mxu0 0
        %2288 = vmatpush1.bf16.msra.mxu0 0
        %2289 = vmatprep.subr.bf16.mxu0 0
        %2290 = vmatpush1.bf16.msra.mxu0 0
        %2291 = vmatprep.subr.bf16.mxu0 0
        %2292 = vmatpush1.bf16.msra.mxu0 0
        %2293 = vmatprep.subr.bf16.mxu0 0
        %2294 = vmatpush1.bf16.msra.mxu0 0
        %2295 = vmatprep.subr.bf16.mxu0 0
        %2296 = vmatpush1.bf16.msra.mxu0 0
        %2297 = vmatprep.subr.bf16.mxu0 0
        %2298 = vmatpush1.bf16.msra.mxu0 0
        %2299 = vmatprep.subr.bf16.mxu0 0
        %2300 = vmatpush1.bf16.msra.mxu0 0
        %2301 = vmatprep.subr.bf16.mxu0 0
        %2302 = vmatpush1.bf16.msra.mxu0 0
        %2303 = vmatprep.subr.bf16.mxu0 0
        %2304 = vmatpush1.bf16.msra.mxu0 0
        %2305 = vmatprep.subr.bf16.mxu0 0
        %2306 = vmatpush1.bf16.msra.mxu0 0
        %2307 = vmatprep.subr.bf16.mxu0 0
        %2308 = vmatpush1.bf16.msra.mxu0 0
        %2309 = vmatprep.subr.bf16.mxu0 0
        %2310 = vmatpush1.bf16.msra.mxu0 0
        %2311 = vmatprep.subr.bf16.mxu0 0
        %2312 = vmatpush1.bf16.msra.mxu0 0
        %2313 = vmatprep.mubr.bf16.mxu0 0
        %2314 = vmatmul.mubr.bf16.gmra.mrb[0].mxu0 %v2276
        %v2315 = vpop.f32.mrb[0].mxu0
        %v2316 = vadd.f32 0.0, %v2315
        %v2317 = vpop.f32.mrb[0].mxu0
        %v2318 = vpop.f32.mrb[0].mxu0
        %v2319 = vpop.f32.mrb[0].mxu0
        %2320 = vdwg.mxu0
        %v2322 = vsel %vm1265, %v2182, 0
        %v2325 = vsel %vm1269, %v1942, 0
        %2327 = vmatprep.subr.bf16.mxu0 0
        %2328 = vmatpush1.bf16.msra.mxu0 %v2325
        %2329 = vmatprep.subr.bf16.mxu0 0
        %2330 = vmatpush1.bf16.msra.mxu0 0
        %2331 = vmatprep.subr.bf16.mxu0 0
        %2332 = vmatpush1.bf16.msra.mxu0 0
        %2333 = vmatprep.subr.bf16.mxu0 0
        %2334 = vmatpush1.bf16.msra.mxu0 0
        %2335 = vmatprep.subr.bf16.mxu0 0
        %2336 = vmatpush1.bf16.msra.mxu0 0
        %2337 = vmatprep.subr.bf16.mxu0 0
        %2338 = vmatpush1.bf16.msra.mxu0 0
        %2339 = vmatprep.subr.bf16.mxu0 0
        %2340 = vmatpush1.bf16.msra.mxu0 0
        %2341 = vmatprep.subr.bf16.mxu0 0
        %2342 = vmatpush1.bf16.msra.mxu0 0
        %2343 = vmatprep.subr.bf16.mxu0 0
        %2344 = vmatpush1.bf16.msra.mxu0 0
        %2345 = vmatprep.subr.bf16.mxu0 0
        %2346 = vmatpush1.bf16.msra.mxu0 0
        %2347 = vmatprep.subr.bf16.mxu0 0
        %2348 = vmatpush1.bf16.msra.mxu0 0
        %2349 = vmatprep.subr.bf16.mxu0 0
        %2350 = vmatpush1.bf16.msra.mxu0 0
        %2351 = vmatprep.subr.bf16.mxu0 0
        %2352 = vmatpush1.bf16.msra.mxu0 0
        %2353 = vmatprep.subr.bf16.mxu0 0
        %2354 = vmatpush1.bf16.msra.mxu0 0
        %2355 = vmatprep.subr.bf16.mxu0 0
        %2356 = vmatpush1.bf16.msra.mxu0 0
        %2357 = vmatprep.subr.bf16.mxu0 0
        %2358 = vmatpush1.bf16.msra.mxu0 0
        %2359 = vmatprep.mubr.bf16.mxu0 0
        %2360 = vmatmul.mubr.bf16.gmra.mrb[0].mxu0 %v2322
        %v2361 = vpop.f32.mrb[0].mxu0
        %v2362 = vadd.f32 0.0, %v2361
        %v2363 = vpop.f32.mrb[0].mxu0
        %v2364 = vpop.f32.mrb[0].mxu0
        %v2365 = vpop.f32.mrb[0].mxu0
        %2366 = vdwg.mxu0
        %2367 = vrot.lane.b32.xlu0 %v958, 80
        %v2368 = vpop.permute.xlu0 %2367
        %2369 = vrot.lane.b32.xlu0 %v966, 80
        %v2370 = vpop.permute.xlu0 %2369
        %2371 = vrot.lane.b32.xlu0 %v974, 80
        %v2372 = vpop.permute.xlu0 %2371
        %2373 = vrot.lane.b32.xlu0 %v982, 80
        %v2374 = vpop.permute.xlu0 %2373
        %v2379 = vpack.c.bf16 %v2368, %v2368
        %v2380 = vpack.c.bf16 %v2370, %v2370
        %v2381 = vpack.c.bf16 %v2372, %v2372
        %v2382 = vpack.c.bf16 %v2374, %v2374
        %2383 = vrot.lane.b32.xlu0 %v998, 80
        %v2384 = vpop.permute.xlu0 %2383
        %2385 = vrot.lane.b32.xlu0 %v1006, 80
        %v2386 = vpop.permute.xlu0 %2385
        %2387 = vrot.lane.b32.xlu0 %v1014, 80
        %v2388 = vpop.permute.xlu0 %2387
        %2389 = vrot.lane.b32.xlu0 %v1022, 80
        %v2390 = vpop.permute.xlu0 %2389
        %v2395 = vpack.c.bf16 %v2384, %v2384
        %v2396 = vpack.c.bf16 %v2386, %v2386
        %v2397 = vpack.c.bf16 %v2388, %v2388
        %v2398 = vpack.c.bf16 %v2390, %v2390
        %2399 = vrot.lane.b32.xlu0 %v947, 80
        %v2400 = vpop.permute.xlu0 %2399
        %v2402 = vsel %vm1031, %v2400, 0
        %v2405 = vsel %vm1031, %v2379, 0
        %2407 = vmatprep.subr.bf16.mxu0 0
        %2408 = vmatpush1.bf16.xpose.msra.mxu0 %v2405
        %2409 = vmatprep.subr.bf16.mxu0 0
        %2410 = vmatpush1.bf16.xpose.msra.mxu0 0
        %2411 = vmatprep.subr.bf16.mxu0 0
        %2412 = vmatpush1.bf16.xpose.msra.mxu0 0
        %2413 = vmatprep.subr.bf16.mxu0 0
        %2414 = vmatpush1.bf16.xpose.msra.mxu0 0
        %2415 = vmatprep.subr.bf16.mxu0 0
        %2416 = vmatpush1.bf16.xpose.msra.mxu0 0
        %2417 = vmatprep.subr.bf16.mxu0 0
        %2418 = vmatpush1.bf16.xpose.msra.mxu0 0
        %2419 = vmatprep.subr.bf16.mxu0 0
        %2420 = vmatpush1.bf16.xpose.msra.mxu0 0
        %2421 = vmatprep.subr.bf16.mxu0 0
        %2422 = vmatpush1.bf16.xpose.msra.mxu0 0
        %2423 = vmatprep.subr.bf16.mxu0 0
        %2424 = vmatpush1.bf16.xpose.msra.mxu0 0
        %2425 = vmatprep.subr.bf16.mxu0 0
        %2426 = vmatpush1.bf16.xpose.msra.mxu0 0
        %2427 = vmatprep.subr.bf16.mxu0 0
        %2428 = vmatpush1.bf16.xpose.msra.mxu0 0
        %2429 = vmatprep.subr.bf16.mxu0 0
        %2430 = vmatpush1.bf16.xpose.msra.mxu0 0
        %2431 = vmatprep.subr.bf16.mxu0 0
        %2432 = vmatpush1.bf16.xpose.msra.mxu0 0
        %2433 = vmatprep.subr.bf16.mxu0 0
        %2434 = vmatpush1.bf16.xpose.msra.mxu0 0
        %2435 = vmatprep.subr.bf16.mxu0 0
        %2436 = vmatpush1.bf16.xpose.msra.mxu0 0
        %2437 = vmatprep.subr.bf16.mxu0 0
        %2438 = vmatpush1.bf16.xpose.msra.mxu0 0
        %2439 = vmatprep.mubr.bf16.mxu0 0
        %2440 = vmatmul.mubr.bf16.gmra.mrb[0].mxu0 %v2402
        %v2441 = vpop.f32.mrb[0].mxu0
        %v2442 = vadd.f32 0.0, %v2441
        %v2443 = vpop.f32.mrb[0].mxu0
        %v2444 = vpop.f32.mrb[0].mxu0
        %v2445 = vpop.f32.mrb[0].mxu0
        %2446 = vdwg.mxu0
        %2447 = vrot.lane.b32.xlu0 %v948, 80
        %v2448 = vpop.permute.xlu0 %2447
        %v2450 = vsel %vm1031, %v2448, 0
        %v2453 = vsel %vm1031, %v2380, 0
        %2455 = vmatprep.subr.bf16.mxu0 0
        %2456 = vmatpush1.bf16.xpose.msra.mxu0 %v2453
        %2457 = vmatprep.subr.bf16.mxu0 0
        %2458 = vmatpush1.bf16.xpose.msra.mxu0 0
        %2459 = vmatprep.subr.bf16.mxu0 0
        %2460 = vmatpush1.bf16.xpose.msra.mxu0 0
        %2461 = vmatprep.subr.bf16.mxu0 0
        %2462 = vmatpush1.bf16.xpose.msra.mxu0 0
        %2463 = vmatprep.subr.bf16.mxu0 0
        %2464 = vmatpush1.bf16.xpose.msra.mxu0 0
        %2465 = vmatprep.subr.bf16.mxu0 0
        %2466 = vmatpush1.bf16.xpose.msra.mxu0 0
        %2467 = vmatprep.subr.bf16.mxu0 0
        %2468 = vmatpush1.bf16.xpose.msra.mxu0 0
        %2469 = vmatprep.subr.bf16.mxu0 0
        %2470 = vmatpush1.bf16.xpose.msra.mxu0 0
        %2471 = vmatprep.subr.bf16.mxu0 0
        %2472 = vmatpush1.bf16.xpose.msra.mxu0 0
        %2473 = vmatprep.subr.bf16.mxu0 0
        %2474 = vmatpush1.bf16.xpose.msra.mxu0 0
        %2475 = vmatprep.subr.bf16.mxu0 0
        %2476 = vmatpush1.bf16.xpose.msra.mxu0 0
        %2477 = vmatprep.subr.bf16.mxu0 0
        %2478 = vmatpush1.bf16.xpose.msra.mxu0 0
        %2479 = vmatprep.subr.bf16.mxu0 0
        %2480 = vmatpush1.bf16.xpose.msra.mxu0 0
        %2481 = vmatprep.subr.bf16.mxu0 0
        %2482 = vmatpush1.bf16.xpose.msra.mxu0 0
        %2483 = vmatprep.subr.bf16.mxu0 0
        %2484 = vmatpush1.bf16.xpose.msra.mxu0 0
        %2485 = vmatprep.subr.bf16.mxu0 0
        %2486 = vmatpush1.bf16.xpose.msra.mxu0 0
        %2487 = vmatprep.mubr.bf16.mxu0 0
        %2488 = vmatmul.mubr.bf16.gmra.mrb[0].mxu0 %v2450
        %v2489 = vpop.f32.mrb[0].mxu0
        %v2490 = vadd.f32 0.0, %v2489
        %v2491 = vpop.f32.mrb[0].mxu0
        %v2492 = vpop.f32.mrb[0].mxu0
        %v2493 = vpop.f32.mrb[0].mxu0
        %2494 = vdwg.mxu0
        %2495 = vrot.lane.b32.xlu0 %v949, 80
        %v2496 = vpop.permute.xlu0 %2495
        %v2498 = vsel %vm1031, %v2496, 0
        %v2501 = vsel %vm1031, %v2381, 0
        %2503 = vmatprep.subr.bf16.mxu0 0
        %2504 = vmatpush1.bf16.xpose.msra.mxu0 %v2501
        %2505 = vmatprep.subr.bf16.mxu0 0
        %2506 = vmatpush1.bf16.xpose.msra.mxu0 0
        %2507 = vmatprep.subr.bf16.mxu0 0
        %2508 = vmatpush1.bf16.xpose.msra.mxu0 0
        %2509 = vmatprep.subr.bf16.mxu0 0
        %2510 = vmatpush1.bf16.xpose.msra.mxu0 0
        %2511 = vmatprep.subr.bf16.mxu0 0
        %2512 = vmatpush1.bf16.xpose.msra.mxu0 0
        %2513 = vmatprep.subr.bf16.mxu0 0
        %2514 = vmatpush1.bf16.xpose.msra.mxu0 0
        %2515 = vmatprep.subr.bf16.mxu0 0
        %2516 = vmatpush1.bf16.xpose.msra.mxu0 0
        %2517 = vmatprep.subr.bf16.mxu0 0
        %2518 = vmatpush1.bf16.xpose.msra.mxu0 0
        %2519 = vmatprep.subr.bf16.mxu0 0
        %2520 = vmatpush1.bf16.xpose.msra.mxu0 0
        %2521 = vmatprep.subr.bf16.mxu0 0
        %2522 = vmatpush1.bf16.xpose.msra.mxu0 0
        %2523 = vmatprep.subr.bf16.mxu0 0
        %2524 = vmatpush1.bf16.xpose.msra.mxu0 0
        %2525 = vmatprep.subr.bf16.mxu0 0
        %2526 = vmatpush1.bf16.xpose.msra.mxu0 0
        %2527 = vmatprep.subr.bf16.mxu0 0
        %2528 = vmatpush1.bf16.xpose.msra.mxu0 0
        %2529 = vmatprep.subr.bf16.mxu0 0
        %2530 = vmatpush1.bf16.xpose.msra.mxu0 0
        %2531 = vmatprep.subr.bf16.mxu0 0
        %2532 = vmatpush1.bf16.xpose.msra.mxu0 0
        %2533 = vmatprep.subr.bf16.mxu0 0
        %2534 = vmatpush1.bf16.xpose.msra.mxu0 0
        %2535 = vmatprep.mubr.bf16.mxu0 0
        %2536 = vmatmul.mubr.bf16.gmra.mrb[0].mxu0 %v2498
        %v2537 = vpop.f32.mrb[0].mxu0
        %v2538 = vadd.f32 0.0, %v2537
        %v2539 = vpop.f32.mrb[0].mxu0
        %v2540 = vpop.f32.mrb[0].mxu0
        %v2541 = vpop.f32.mrb[0].mxu0
        %2542 = vdwg.mxu0
        %2543 = vrot.lane.b32.xlu0 %v950, 80
        %v2544 = vpop.permute.xlu0 %2543
        %v2546 = vsel %vm1031, %v2544, 0
        %v2549 = vsel %vm1031, %v2382, 0
        %2551 = vmatprep.subr.bf16.mxu0 0
        %2552 = vmatpush1.bf16.xpose.msra.mxu0 %v2549
        %2553 = vmatprep.subr.bf16.mxu0 0
        %2554 = vmatpush1.bf16.xpose.msra.mxu0 0
        %2555 = vmatprep.subr.bf16.mxu0 0
        %2556 = vmatpush1.bf16.xpose.msra.mxu0 0
        %2557 = vmatprep.subr.bf16.mxu0 0
        %2558 = vmatpush1.bf16.xpose.msra.mxu0 0
        %2559 = vmatprep.subr.bf16.mxu0 0
        %2560 = vmatpush1.bf16.xpose.msra.mxu0 0
        %2561 = vmatprep.subr.bf16.mxu0 0
        %2562 = vmatpush1.bf16.xpose.msra.mxu0 0
        %2563 = vmatprep.subr.bf16.mxu0 0
        %2564 = vmatpush1.bf16.xpose.msra.mxu0 0
        %2565 = vmatprep.subr.bf16.mxu0 0
        %2566 = vmatpush1.bf16.xpose.msra.mxu0 0
        %2567 = vmatprep.subr.bf16.mxu0 0
        %2568 = vmatpush1.bf16.xpose.msra.mxu0 0
        %2569 = vmatprep.subr.bf16.mxu0 0
        %2570 = vmatpush1.bf16.xpose.msra.mxu0 0
        %2571 = vmatprep.subr.bf16.mxu0 0
        %2572 = vmatpush1.bf16.xpose.msra.mxu0 0
        %2573 = vmatprep.subr.bf16.mxu0 0
        %2574 = vmatpush1.bf16.xpose.msra.mxu0 0
        %2575 = vmatprep.subr.bf16.mxu0 0
        %2576 = vmatpush1.bf16.xpose.msra.mxu0 0
        %2577 = vmatprep.subr.bf16.mxu0 0
        %2578 = vmatpush1.bf16.xpose.msra.mxu0 0
        %2579 = vmatprep.subr.bf16.mxu0 0
        %2580 = vmatpush1.bf16.xpose.msra.mxu0 0
        %2581 = vmatprep.subr.bf16.mxu0 0
        %2582 = vmatpush1.bf16.xpose.msra.mxu0 0
        %2583 = vmatprep.mubr.bf16.mxu0 0
        %2584 = vmatmul.mubr.bf16.gmra.mrb[0].mxu0 %v2546
        %v2585 = vpop.f32.mrb[0].mxu0
        %v2586 = vadd.f32 0.0, %v2585
        %v2587 = vpop.f32.mrb[0].mxu0
        %v2588 = vpop.f32.mrb[0].mxu0
        %v2589 = vpop.f32.mrb[0].mxu0
        %2590 = vdwg.mxu0
        %v2591 = vsel %vm1216, %v2442, -inf
        %2592 = vmax.xlane.f32.xlu0 %v2591
        %v2593 = vpop.xlane.xlu0 %2592
        %v2594 = vsel %vm1216, %v2490, -inf
        %2595 = vmax.xlane.f32.xlu0 %v2594
        %v2596 = vpop.xlane.xlu0 %2595
        %v2597 = vsel %vm1216, %v2538, -inf
        %2598 = vmax.xlane.f32.xlu0 %v2597
        %v2599 = vpop.xlane.xlu0 %2598
        %v2600 = vsel %vm1216, %v2586, -inf
        %2601 = vmax.xlane.f32.xlu0 %v2600
        %v2602 = vpop.xlane.xlu0 %2601
        %v2603 = vsub.f32 %v2442, %v2593
        %v2604 = vsub.f32 %v2490, %v2596
        %v2605 = vsub.f32 %v2538, %v2599
        %v2606 = vsub.f32 %v2586, %v2602
        %v2607 = vmul.f32 %v2603, 1.442695
        %v2608 = vpow.pop %v2607
        %v2609 = vmul.f32 %v2604, 1.442695
        %v2610 = vpow.pop %v2609
        %v2611 = vmul.f32 %v2605, 1.442695
        %v2612 = vpow.pop %v2611
        %v2613 = vmul.f32 %v2606, 1.442695
        %v2614 = vpow.pop %v2613
        %v2615 = vsel %vm1216, %v2608, 0.0
        %2616 = vadd.xlane.f32.xlu0 %v2615
        %v2617 = vpop.xlane.xlu0 %2616
        %v2618 = vsel %vm1216, %v2610, 0.0
        %2619 = vadd.xlane.f32.xlu0 %v2618
        %v2620 = vpop.xlane.xlu0 %2619
        %v2621 = vsel %vm1216, %v2612, 0.0
        %2622 = vadd.xlane.f32.xlu0 %v2621
        %v2623 = vpop.xlane.xlu0 %2622
        %v2624 = vsel %vm1216, %v2614, 0.0
        %2625 = vadd.xlane.f32.xlu0 %v2624
        %v2626 = vpop.xlane.xlu0 %2625
        %v2627 = vrcp.pop %v2617
        %v2628 = vrcp.pop %v2620
        %v2629 = vrcp.pop %v2623
        %v2630 = vrcp.pop %v2626
        %v2631 = vmul.f32 %v2608, %v2627
        %v2632 = vmul.f32 %v2610, %v2628
        %v2633 = vmul.f32 %v2612, %v2629
        %v2634 = vmul.f32 %v2614, %v2630
        %v2635 = vpack.c.bf16 %v2631, %v2631
        %v2636 = vpack.c.bf16 %v2632, %v2632
        %v2637 = vpack.c.bf16 %v2633, %v2633
        %v2638 = vpack.c.bf16 %v2634, %v2634
        %v2640 = vsel %vm1265, %v2635, 0
        %v2643 = vsel %vm1269, %v2395, 0
        %2645 = vmatprep.subr.bf16.mxu0 0
        %2646 = vmatpush1.bf16.msra.mxu0 %v2643
        %2647 = vmatprep.subr.bf16.mxu0 0
        %2648 = vmatpush1.bf16.msra.mxu0 0
        %2649 = vmatprep.subr.bf16.mxu0 0
        %2650 = vmatpush1.bf16.msra.mxu0 0
        %2651 = vmatprep.subr.bf16.mxu0 0
        %2652 = vmatpush1.bf16.msra.mxu0 0
        %2653 = vmatprep.subr.bf16.mxu0 0
        %2654 = vmatpush1.bf16.msra.mxu0 0
        %2655 = vmatprep.subr.bf16.mxu0 0
        %2656 = vmatpush1.bf16.msra.mxu0 0
        %2657 = vmatprep.subr.bf16.mxu0 0
        %2658 = vmatpush1.bf16.msra.mxu0 0
        %2659 = vmatprep.subr.bf16.mxu0 0
        %2660 = vmatpush1.bf16.msra.mxu0 0
        %2661 = vmatprep.subr.bf16.mxu0 0
        %2662 = vmatpush1.bf16.msra.mxu0 0
        %2663 = vmatprep.subr.bf16.mxu0 0
        %2664 = vmatpush1.bf16.msra.mxu0 0
        %2665 = vmatprep.subr.bf16.mxu0 0
        %2666 = vmatpush1.bf16.msra.mxu0 0
        %2667 = vmatprep.subr.bf16.mxu0 0
        %2668 = vmatpush1.bf16.msra.mxu0 0
        %2669 = vmatprep.subr.bf16.mxu0 0
        %2670 = vmatpush1.bf16.msra.mxu0 0
        %2671 = vmatprep.subr.bf16.mxu0 0
        %2672 = vmatpush1.bf16.msra.mxu0 0
        %2673 = vmatprep.subr.bf16.mxu0 0
        %2674 = vmatpush1.bf16.msra.mxu0 0
        %2675 = vmatprep.subr.bf16.mxu0 0
        %2676 = vmatpush1.bf16.msra.mxu0 0
        %2677 = vmatprep.mubr.bf16.mxu0 0
        %2678 = vmatmul.mubr.bf16.gmra.mrb[0].mxu0 %v2640
        %v2679 = vpop.f32.mrb[0].mxu0
        %v2680 = vadd.f32 0.0, %v2679
        %v2681 = vpop.f32.mrb[0].mxu0
        %v2682 = vpop.f32.mrb[0].mxu0
        %v2683 = vpop.f32.mrb[0].mxu0
        %2684 = vdwg.mxu0
        %v2686 = vsel %vm1265, %v2636, 0
        %v2689 = vsel %vm1269, %v2396, 0
        %2691 = vmatprep.subr.bf16.mxu0 0
        %2692 = vmatpush1.bf16.msra.mxu0 %v2689
        %2693 = vmatprep.subr.bf16.mxu0 0
        %2694 = vmatpush1.bf16.msra.mxu0 0
        %2695 = vmatprep.subr.bf16.mxu0 0
        %2696 = vmatpush1.bf16.msra.mxu0 0
        %2697 = vmatprep.subr.bf16.mxu0 0
        %2698 = vmatpush1.bf16.msra.mxu0 0
        %2699 = vmatprep.subr.bf16.mxu0 0
        %2700 = vmatpush1.bf16.msra.mxu0 0
        %2701 = vmatprep.subr.bf16.mxu0 0
        %2702 = vmatpush1.bf16.msra.mxu0 0
        %2703 = vmatprep.subr.bf16.mxu0 0
        %2704 = vmatpush1.bf16.msra.mxu0 0
        %2705 = vmatprep.subr.bf16.mxu0 0
        %2706 = vmatpush1.bf16.msra.mxu0 0
        %2707 = vmatprep.subr.bf16.mxu0 0
        %2708 = vmatpush1.bf16.msra.mxu0 0
        %2709 = vmatprep.subr.bf16.mxu0 0
        %2710 = vmatpush1.bf16.msra.mxu0 0
        %2711 = vmatprep.subr.bf16.mxu0 0
        %2712 = vmatpush1.bf16.msra.mxu0 0
        %2713 = vmatprep.subr.bf16.mxu0 0
        %2714 = vmatpush1.bf16.msra.mxu0 0
        %2715 = vmatprep.subr.bf16.mxu0 0
        %2716 = vmatpush1.bf16.msra.mxu0 0
        %2717 = vmatprep.subr.bf16.mxu0 0
        %2718 = vmatpush1.bf16.msra.mxu0 0
        %2719 = vmatprep.subr.bf16.mxu0 0
        %2720 = vmatpush1.bf16.msra.mxu0 0
        %2721 = vmatprep.subr.bf16.mxu0 0
        %2722 = vmatpush1.bf16.msra.mxu0 0
        %2723 = vmatprep.mubr.bf16.mxu0 0
        %2724 = vmatmul.mubr.bf16.gmra.mrb[0].mxu0 %v2686
        %v2725 = vpop.f32.mrb[0].mxu0
        %v2726 = vadd.f32 0.0, %v2725
        %v2727 = vpop.f32.mrb[0].mxu0
        %v2728 = vpop.f32.mrb[0].mxu0
        %v2729 = vpop.f32.mrb[0].mxu0
        %2730 = vdwg.mxu0
        %v2732 = vsel %vm1265, %v2637, 0
        %v2735 = vsel %vm1269, %v2397, 0
        %2737 = vmatprep.subr.bf16.mxu0 0
        %2738 = vmatpush1.bf16.msra.mxu0 %v2735
        %2739 = vmatprep.subr.bf16.mxu0 0
        %2740 = vmatpush1.bf16.msra.mxu0 0
        %2741 = vmatprep.subr.bf16.mxu0 0
        %2742 = vmatpush1.bf16.msra.mxu0 0
        %2743 = vmatprep.subr.bf16.mxu0 0
        %2744 = vmatpush1.bf16.msra.mxu0 0
        %2745 = vmatprep.subr.bf16.mxu0 0
        %2746 = vmatpush1.bf16.msra.mxu0 0
        %2747 = vmatprep.subr.bf16.mxu0 0
        %2748 = vmatpush1.bf16.msra.mxu0 0
        %2749 = vmatprep.subr.bf16.mxu0 0
        %2750 = vmatpush1.bf16.msra.mxu0 0
        %2751 = vmatprep.subr.bf16.mxu0 0
        %2752 = vmatpush1.bf16.msra.mxu0 0
        %2753 = vmatprep.subr.bf16.mxu0 0
        %2754 = vmatpush1.bf16.msra.mxu0 0
        %2755 = vmatprep.subr.bf16.mxu0 0
        %2756 = vmatpush1.bf16.msra.mxu0 0
        %2757 = vmatprep.subr.bf16.mxu0 0
        %2758 = vmatpush1.bf16.msra.mxu0 0
        %2759 = vmatprep.subr.bf16.mxu0 0
        %2760 = vmatpush1.bf16.msra.mxu0 0
        %2761 = vmatprep.subr.bf16.mxu0 0
        %2762 = vmatpush1.bf16.msra.mxu0 0
        %2763 = vmatprep.subr.bf16.mxu0 0
        %2764 = vmatpush1.bf16.msra.mxu0 0
        %2765 = vmatprep.subr.bf16.mxu0 0
        %2766 = vmatpush1.bf16.msra.mxu0 0
        %2767 = vmatprep.subr.bf16.mxu0 0
        %2768 = vmatpush1.bf16.msra.mxu0 0
        %2769 = vmatprep.mubr.bf16.mxu0 0
        %2770 = vmatmul.mubr.bf16.gmra.mrb[0].mxu0 %v2732
        %v2771 = vpop.f32.mrb[0].mxu0
        %v2772 = vadd.f32 0.0, %v2771
        %v2773 = vpop.f32.mrb[0].mxu0
        %v2774 = vpop.f32.mrb[0].mxu0
        %v2775 = vpop.f32.mrb[0].mxu0
        %2776 = vdwg.mxu0
        %v2778 = vsel %vm1265, %v2638, 0
        %v2781 = vsel %vm1269, %v2398, 0
        %2783 = vmatprep.subr.bf16.mxu0 0
        %2784 = vmatpush1.bf16.msra.mxu0 %v2781
        %2785 = vmatprep.subr.bf16.mxu0 0
        %2786 = vmatpush1.bf16.msra.mxu0 0
        %2787 = vmatprep.subr.bf16.mxu0 0
        %2788 = vmatpush1.bf16.msra.mxu0 0
        %2789 = vmatprep.subr.bf16.mxu0 0
        %2790 = vmatpush1.bf16.msra.mxu0 0
        %2791 = vmatprep.subr.bf16.mxu0 0
        %2792 = vmatpush1.bf16.msra.mxu0 0
        %2793 = vmatprep.subr.bf16.mxu0 0
        %2794 = vmatpush1.bf16.msra.mxu0 0
        %2795 = vmatprep.subr.bf16.mxu0 0
        %2796 = vmatpush1.bf16.msra.mxu0 0
        %2797 = vmatprep.subr.bf16.mxu0 0
        %2798 = vmatpush1.bf16.msra.mxu0 0
        %2799 = vmatprep.subr.bf16.mxu0 0
        %2800 = vmatpush1.bf16.msra.mxu0 0
        %2801 = vmatprep.subr.bf16.mxu0 0
        %2802 = vmatpush1.bf16.msra.mxu0 0
        %2803 = vmatprep.subr.bf16.mxu0 0
        %2804 = vmatpush1.bf16.msra.mxu0 0
        %2805 = vmatprep.subr.bf16.mxu0 0
        %2806 = vmatpush1.bf16.msra.mxu0 0
        %2807 = vmatprep.subr.bf16.mxu0 0
        %2808 = vmatpush1.bf16.msra.mxu0 0
        %2809 = vmatprep.subr.bf16.mxu0 0
        %2810 = vmatpush1.bf16.msra.mxu0 0
        %2811 = vmatprep.subr.bf16.mxu0 0
        %2812 = vmatpush1.bf16.msra.mxu0 0
        %2813 = vmatprep.subr.bf16.mxu0 0
        %2814 = vmatpush1.bf16.msra.mxu0 0
        %2815 = vmatprep.mubr.bf16.mxu0 0
        %2816 = vmatmul.mubr.bf16.gmra.mrb[0].mxu0 %v2778
        %v2817 = vpop.f32.mrb[0].mxu0
        %v2818 = vadd.f32 0.0, %v2817
        %v2819 = vpop.f32.mrb[0].mxu0
        %v2820 = vpop.f32.mrb[0].mxu0
        %v2821 = vpop.f32.mrb[0].mxu0
        %2822 = vdwg.mxu0
        %2823 = vrot.lane.b32.xlu0 %v958, 64
        %v2824 = vpop.permute.xlu0 %2823
        %2825 = vrot.lane.b32.xlu0 %v966, 64
        %v2826 = vpop.permute.xlu0 %2825
        %2827 = vrot.lane.b32.xlu0 %v974, 64
        %v2828 = vpop.permute.xlu0 %2827
        %2829 = vrot.lane.b32.xlu0 %v982, 64
        %v2830 = vpop.permute.xlu0 %2829
        %v2835 = vpack.c.bf16 %v2824, %v2824
        %v2836 = vpack.c.bf16 %v2826, %v2826
        %v2837 = vpack.c.bf16 %v2828, %v2828
        %v2838 = vpack.c.bf16 %v2830, %v2830
        %2839 = vrot.lane.b32.xlu0 %v998, 64
        %v2840 = vpop.permute.xlu0 %2839
        %2841 = vrot.lane.b32.xlu0 %v1006, 64
        %v2842 = vpop.permute.xlu0 %2841
        %2843 = vrot.lane.b32.xlu0 %v1014, 64
        %v2844 = vpop.permute.xlu0 %2843
        %2845 = vrot.lane.b32.xlu0 %v1022, 64
        %v2846 = vpop.permute.xlu0 %2845
        %v2851 = vpack.c.bf16 %v2840, %v2840
        %v2852 = vpack.c.bf16 %v2842, %v2842
        %v2853 = vpack.c.bf16 %v2844, %v2844
        %v2854 = vpack.c.bf16 %v2846, %v2846
        %2855 = vrot.lane.b32.xlu0 %v947, 64
        %v2856 = vpop.permute.xlu0 %2855
        %v2858 = vsel %vm1031, %v2856, 0
        %v2861 = vsel %vm1031, %v2835, 0
        %2863 = vmatprep.subr.bf16.mxu0 0
        %2864 = vmatpush1.bf16.xpose.msra.mxu0 %v2861
        %2865 = vmatprep.subr.bf16.mxu0 0
        %2866 = vmatpush1.bf16.xpose.msra.mxu0 0
        %2867 = vmatprep.subr.bf16.mxu0 0
        %2868 = vmatpush1.bf16.xpose.msra.mxu0 0
        %2869 = vmatprep.subr.bf16.mxu0 0
        %2870 = vmatpush1.bf16.xpose.msra.mxu0 0
        %2871 = vmatprep.subr.bf16.mxu0 0
        %2872 = vmatpush1.bf16.xpose.msra.mxu0 0
        %2873 = vmatprep.subr.bf16.mxu0 0
        %2874 = vmatpush1.bf16.xpose.msra.mxu0 0
        %2875 = vmatprep.subr.bf16.mxu0 0
        %2876 = vmatpush1.bf16.xpose.msra.mxu0 0
        %2877 = vmatprep.subr.bf16.mxu0 0
        %2878 = vmatpush1.bf16.xpose.msra.mxu0 0
        %2879 = vmatprep.subr.bf16.mxu0 0
        %2880 = vmatpush1.bf16.xpose.msra.mxu0 0
        %2881 = vmatprep.subr.bf16.mxu0 0
        %2882 = vmatpush1.bf16.xpose.msra.mxu0 0
        %2883 = vmatprep.subr.bf16.mxu0 0
        %2884 = vmatpush1.bf16.xpose.msra.mxu0 0
        %2885 = vmatprep.subr.bf16.mxu0 0
        %2886 = vmatpush1.bf16.xpose.msra.mxu0 0
        %2887 = vmatprep.subr.bf16.mxu0 0
        %2888 = vmatpush1.bf16.xpose.msra.mxu0 0
        %2889 = vmatprep.subr.bf16.mxu0 0
        %2890 = vmatpush1.bf16.xpose.msra.mxu0 0
        %2891 = vmatprep.subr.bf16.mxu0 0
        %2892 = vmatpush1.bf16.xpose.msra.mxu0 0
        %2893 = vmatprep.subr.bf16.mxu0 0
        %2894 = vmatpush1.bf16.xpose.msra.mxu0 0
        %2895 = vmatprep.mubr.bf16.mxu0 0
        %2896 = vmatmul.mubr.bf16.gmra.mrb[0].mxu0 %v2858
        %v2897 = vpop.f32.mrb[0].mxu0
        %v2898 = vadd.f32 0.0, %v2897
        %v2899 = vpop.f32.mrb[0].mxu0
        %v2900 = vpop.f32.mrb[0].mxu0
        %v2901 = vpop.f32.mrb[0].mxu0
        %2902 = vdwg.mxu0
        %2903 = vrot.lane.b32.xlu0 %v948, 64
        %v2904 = vpop.permute.xlu0 %2903
        %v2906 = vsel %vm1031, %v2904, 0
        %v2909 = vsel %vm1031, %v2836, 0
        %2911 = vmatprep.subr.bf16.mxu0 0
        %2912 = vmatpush1.bf16.xpose.msra.mxu0 %v2909
        %2913 = vmatprep.subr.bf16.mxu0 0
        %2914 = vmatpush1.bf16.xpose.msra.mxu0 0
        %2915 = vmatprep.subr.bf16.mxu0 0
        %2916 = vmatpush1.bf16.xpose.msra.mxu0 0
        %2917 = vmatprep.subr.bf16.mxu0 0
        %2918 = vmatpush1.bf16.xpose.msra.mxu0 0
        %2919 = vmatprep.subr.bf16.mxu0 0
        %2920 = vmatpush1.bf16.xpose.msra.mxu0 0
        %2921 = vmatprep.subr.bf16.mxu0 0
        %2922 = vmatpush1.bf16.xpose.msra.mxu0 0
        %2923 = vmatprep.subr.bf16.mxu0 0
        %2924 = vmatpush1.bf16.xpose.msra.mxu0 0
        %2925 = vmatprep.subr.bf16.mxu0 0
        %2926 = vmatpush1.bf16.xpose.msra.mxu0 0
        %2927 = vmatprep.subr.bf16.mxu0 0
        %2928 = vmatpush1.bf16.xpose.msra.mxu0 0
        %2929 = vmatprep.subr.bf16.mxu0 0
        %2930 = vmatpush1.bf16.xpose.msra.mxu0 0
        %2931 = vmatprep.subr.bf16.mxu0 0
        %2932 = vmatpush1.bf16.xpose.msra.mxu0 0
        %2933 = vmatprep.subr.bf16.mxu0 0
        %2934 = vmatpush1.bf16.xpose.msra.mxu0 0
        %2935 = vmatprep.subr.bf16.mxu0 0
        %2936 = vmatpush1.bf16.xpose.msra.mxu0 0
        %2937 = vmatprep.subr.bf16.mxu0 0
        %2938 = vmatpush1.bf16.xpose.msra.mxu0 0
        %2939 = vmatprep.subr.bf16.mxu0 0
        %2940 = vmatpush1.bf16.xpose.msra.mxu0 0
        %2941 = vmatprep.subr.bf16.mxu0 0
        %2942 = vmatpush1.bf16.xpose.msra.mxu0 0
        %2943 = vmatprep.mubr.bf16.mxu0 0
        %2944 = vmatmul.mubr.bf16.gmra.mrb[0].mxu0 %v2906
        %v2945 = vpop.f32.mrb[0].mxu0
        %v2946 = vadd.f32 0.0, %v2945
        %v2947 = vpop.f32.mrb[0].mxu0
        %v2948 = vpop.f32.mrb[0].mxu0
        %v2949 = vpop.f32.mrb[0].mxu0
        %2950 = vdwg.mxu0
        %2951 = vrot.lane.b32.xlu0 %v949, 64
        %v2952 = vpop.permute.xlu0 %2951
        %v2954 = vsel %vm1031, %v2952, 0
        %v2957 = vsel %vm1031, %v2837, 0
        %2959 = vmatprep.subr.bf16.mxu0 0
        %2960 = vmatpush1.bf16.xpose.msra.mxu0 %v2957
        %2961 = vmatprep.subr.bf16.mxu0 0
        %2962 = vmatpush1.bf16.xpose.msra.mxu0 0
        %2963 = vmatprep.subr.bf16.mxu0 0
        %2964 = vmatpush1.bf16.xpose.msra.mxu0 0
        %2965 = vmatprep.subr.bf16.mxu0 0
        %2966 = vmatpush1.bf16.xpose.msra.mxu0 0
        %2967 = vmatprep.subr.bf16.mxu0 0
        %2968 = vmatpush1.bf16.xpose.msra.mxu0 0
        %2969 = vmatprep.subr.bf16.mxu0 0
        %2970 = vmatpush1.bf16.xpose.msra.mxu0 0
        %2971 = vmatprep.subr.bf16.mxu0 0
        %2972 = vmatpush1.bf16.xpose.msra.mxu0 0
        %2973 = vmatprep.subr.bf16.mxu0 0
        %2974 = vmatpush1.bf16.xpose.msra.mxu0 0
        %2975 = vmatprep.subr.bf16.mxu0 0
        %2976 = vmatpush1.bf16.xpose.msra.mxu0 0
        %2977 = vmatprep.subr.bf16.mxu0 0
        %2978 = vmatpush1.bf16.xpose.msra.mxu0 0
        %2979 = vmatprep.subr.bf16.mxu0 0
        %2980 = vmatpush1.bf16.xpose.msra.mxu0 0
        %2981 = vmatprep.subr.bf16.mxu0 0
        %2982 = vmatpush1.bf16.xpose.msra.mxu0 0
        %2983 = vmatprep.subr.bf16.mxu0 0
        %2984 = vmatpush1.bf16.xpose.msra.mxu0 0
        %2985 = vmatprep.subr.bf16.mxu0 0
        %2986 = vmatpush1.bf16.xpose.msra.mxu0 0
        %2987 = vmatprep.subr.bf16.mxu0 0
        %2988 = vmatpush1.bf16.xpose.msra.mxu0 0
        %2989 = vmatprep.subr.bf16.mxu0 0
        %2990 = vmatpush1.bf16.xpose.msra.mxu0 0
        %2991 = vmatprep.mubr.bf16.mxu0 0
        %2992 = vmatmul.mubr.bf16.gmra.mrb[0].mxu0 %v2954
        %v2993 = vpop.f32.mrb[0].mxu0
        %v2994 = vadd.f32 0.0, %v2993
        %v2995 = vpop.f32.mrb[0].mxu0
        %v2996 = vpop.f32.mrb[0].mxu0
        %v2997 = vpop.f32.mrb[0].mxu0
        %2998 = vdwg.mxu0
        %2999 = vrot.lane.b32.xlu0 %v950, 64
        %v3000 = vpop.permute.xlu0 %2999
        %v3002 = vsel %vm1031, %v3000, 0
        %v3005 = vsel %vm1031, %v2838, 0
        %3007 = vmatprep.subr.bf16.mxu0 0
        %3008 = vmatpush1.bf16.xpose.msra.mxu0 %v3005
        %3009 = vmatprep.subr.bf16.mxu0 0
        %3010 = vmatpush1.bf16.xpose.msra.mxu0 0
        %3011 = vmatprep.subr.bf16.mxu0 0
        %3012 = vmatpush1.bf16.xpose.msra.mxu0 0
        %3013 = vmatprep.subr.bf16.mxu0 0
        %3014 = vmatpush1.bf16.xpose.msra.mxu0 0
        %3015 = vmatprep.subr.bf16.mxu0 0
        %3016 = vmatpush1.bf16.xpose.msra.mxu0 0
        %3017 = vmatprep.subr.bf16.mxu0 0
        %3018 = vmatpush1.bf16.xpose.msra.mxu0 0
        %3019 = vmatprep.subr.bf16.mxu0 0
        %3020 = vmatpush1.bf16.xpose.msra.mxu0 0
        %3021 = vmatprep.subr.bf16.mxu0 0
        %3022 = vmatpush1.bf16.xpose.msra.mxu0 0
        %3023 = vmatprep.subr.bf16.mxu0 0
        %3024 = vmatpush1.bf16.xpose.msra.mxu0 0
        %3025 = vmatprep.subr.bf16.mxu0 0
        %3026 = vmatpush1.bf16.xpose.msra.mxu0 0
        %3027 = vmatprep.subr.bf16.mxu0 0
        %3028 = vmatpush1.bf16.xpose.msra.mxu0 0
        %3029 = vmatprep.subr.bf16.mxu0 0
        %3030 = vmatpush1.bf16.xpose.msra.mxu0 0
        %3031 = vmatprep.subr.bf16.mxu0 0
        %3032 = vmatpush1.bf16.xpose.msra.mxu0 0
        %3033 = vmatprep.subr.bf16.mxu0 0
        %3034 = vmatpush1.bf16.xpose.msra.mxu0 0
        %3035 = vmatprep.subr.bf16.mxu0 0
        %3036 = vmatpush1.bf16.xpose.msra.mxu0 0
        %3037 = vmatprep.subr.bf16.mxu0 0
        %3038 = vmatpush1.bf16.xpose.msra.mxu0 0
        %3039 = vmatprep.mubr.bf16.mxu0 0
        %3040 = vmatmul.mubr.bf16.gmra.mrb[0].mxu0 %v3002
        %v3041 = vpop.f32.mrb[0].mxu0
        %v3042 = vadd.f32 0.0, %v3041
        %v3043 = vpop.f32.mrb[0].mxu0
        %v3044 = vpop.f32.mrb[0].mxu0
        %v3045 = vpop.f32.mrb[0].mxu0
        %3046 = vdwg.mxu0
        %v3047 = vsel %vm1216, %v2898, -inf
        %3048 = vmax.xlane.f32.xlu0 %v3047
        %v3049 = vpop.xlane.xlu0 %3048
        %v3050 = vsel %vm1216, %v2946, -inf
        %3051 = vmax.xlane.f32.xlu0 %v3050
        %v3052 = vpop.xlane.xlu0 %3051
        %v3053 = vsel %vm1216, %v2994, -inf
        %3054 = vmax.xlane.f32.xlu0 %v3053
        %v3055 = vpop.xlane.xlu0 %3054
        %v3056 = vsel %vm1216, %v3042, -inf
        %3057 = vmax.xlane.f32.xlu0 %v3056
        %v3058 = vpop.xlane.xlu0 %3057
        %v3059 = vsub.f32 %v2898, %v3049
        %v3060 = vsub.f32 %v2946, %v3052
        %v3061 = vsub.f32 %v2994, %v3055
        %v3062 = vsub.f32 %v3042, %v3058
        %v3063 = vmul.f32 %v3059, 1.442695
        %v3064 = vpow.pop %v3063
        %v3065 = vmul.f32 %v3060, 1.442695
        %v3066 = vpow.pop %v3065
        %v3067 = vmul.f32 %v3061, 1.442695
        %v3068 = vpow.pop %v3067
        %v3069 = vmul.f32 %v3062, 1.442695
        %v3070 = vpow.pop %v3069
        %v3071 = vsel %vm1216, %v3064, 0.0
        %3072 = vadd.xlane.f32.xlu0 %v3071
        %v3073 = vpop.xlane.xlu0 %3072
        %v3074 = vsel %vm1216, %v3066, 0.0
        %3075 = vadd.xlane.f32.xlu0 %v3074
        %v3076 = vpop.xlane.xlu0 %3075
        %v3077 = vsel %vm1216, %v3068, 0.0
        %3078 = vadd.xlane.f32.xlu0 %v3077
        %v3079 = vpop.xlane.xlu0 %3078
        %v3080 = vsel %vm1216, %v3070, 0.0
        %3081 = vadd.xlane.f32.xlu0 %v3080
        %v3082 = vpop.xlane.xlu0 %3081
        %v3083 = vrcp.pop %v3073
        %v3084 = vrcp.pop %v3076
        %v3085 = vrcp.pop %v3079
        %v3086 = vrcp.pop %v3082
        %v3087 = vmul.f32 %v3064, %v3083
        %v3088 = vmul.f32 %v3066, %v3084
        %v3089 = vmul.f32 %v3068, %v3085
        %v3090 = vmul.f32 %v3070, %v3086
        %v3091 = vpack.c.bf16 %v3087, %v3087
        %v3092 = vpack.c.bf16 %v3088, %v3088
        %v3093 = vpack.c.bf16 %v3089, %v3089
        %v3094 = vpack.c.bf16 %v3090, %v3090
        %v3096 = vsel %vm1265, %v3091, 0
        %v3099 = vsel %vm1269, %v2851, 0
        %3101 = vmatprep.subr.bf16.mxu0 0
        %3102 = vmatpush1.bf16.msra.mxu0 %v3099
        %3103 = vmatprep.subr.bf16.mxu0 0
        %3104 = vmatpush1.bf16.msra.mxu0 0
        %3105 = vmatprep.subr.bf16.mxu0 0
        %3106 = vmatpush1.bf16.msra.mxu0 0
        %3107 = vmatprep.subr.bf16.mxu0 0
        %3108 = vmatpush1.bf16.msra.mxu0 0
        %3109 = vmatprep.subr.bf16.mxu0 0
        %3110 = vmatpush1.bf16.msra.mxu0 0
        %3111 = vmatprep.subr.bf16.mxu0 0
        %3112 = vmatpush1.bf16.msra.mxu0 0
        %3113 = vmatprep.subr.bf16.mxu0 0
        %3114 = vmatpush1.bf16.msra.mxu0 0
        %3115 = vmatprep.subr.bf16.mxu0 0
        %3116 = vmatpush1.bf16.msra.mxu0 0
        %3117 = vmatprep.subr.bf16.mxu0 0
        %3118 = vmatpush1.bf16.msra.mxu0 0
        %3119 = vmatprep.subr.bf16.mxu0 0
        %3120 = vmatpush1.bf16.msra.mxu0 0
        %3121 = vmatprep.subr.bf16.mxu0 0
        %3122 = vmatpush1.bf16.msra.mxu0 0
        %3123 = vmatprep.subr.bf16.mxu0 0
        %3124 = vmatpush1.bf16.msra.mxu0 0
        %3125 = vmatprep.subr.bf16.mxu0 0
        %3126 = vmatpush1.bf16.msra.mxu0 0
        %3127 = vmatprep.subr.bf16.mxu0 0
        %3128 = vmatpush1.bf16.msra.mxu0 0
        %3129 = vmatprep.subr.bf16.mxu0 0
        %3130 = vmatpush1.bf16.msra.mxu0 0
        %3131 = vmatprep.subr.bf16.mxu0 0
        %3132 = vmatpush1.bf16.msra.mxu0 0
        %3133 = vmatprep.mubr.bf16.mxu0 0
        %3134 = vmatmul.mubr.bf16.gmra.mrb[0].mxu0 %v3096
        %v3135 = vpop.f32.mrb[0].mxu0
        %v3136 = vadd.f32 0.0, %v3135
        %v3137 = vpop.f32.mrb[0].mxu0
        %v3138 = vpop.f32.mrb[0].mxu0
        %v3139 = vpop.f32.mrb[0].mxu0
        %3140 = vdwg.mxu0
        %v3142 = vsel %vm1265, %v3092, 0
        %v3145 = vsel %vm1269, %v2852, 0
        %3147 = vmatprep.subr.bf16.mxu0 0
        %3148 = vmatpush1.bf16.msra.mxu0 %v3145
        %3149 = vmatprep.subr.bf16.mxu0 0
        %3150 = vmatpush1.bf16.msra.mxu0 0
        %3151 = vmatprep.subr.bf16.mxu0 0
        %3152 = vmatpush1.bf16.msra.mxu0 0
        %3153 = vmatprep.subr.bf16.mxu0 0
        %3154 = vmatpush1.bf16.msra.mxu0 0
        %3155 = vmatprep.subr.bf16.mxu0 0
        %3156 = vmatpush1.bf16.msra.mxu0 0
        %3157 = vmatprep.subr.bf16.mxu0 0
        %3158 = vmatpush1.bf16.msra.mxu0 0
        %3159 = vmatprep.subr.bf16.mxu0 0
        %3160 = vmatpush1.bf16.msra.mxu0 0
        %3161 = vmatprep.subr.bf16.mxu0 0
        %3162 = vmatpush1.bf16.msra.mxu0 0
        %3163 = vmatprep.subr.bf16.mxu0 0
        %3164 = vmatpush1.bf16.msra.mxu0 0
        %3165 = vmatprep.subr.bf16.mxu0 0
        %3166 = vmatpush1.bf16.msra.mxu0 0
        %3167 = vmatprep.subr.bf16.mxu0 0
        %3168 = vmatpush1.bf16.msra.mxu0 0
        %3169 = vmatprep.subr.bf16.mxu0 0
        %3170 = vmatpush1.bf16.msra.mxu0 0
        %3171 = vmatprep.subr.bf16.mxu0 0
        %3172 = vmatpush1.bf16.msra.mxu0 0
        %3173 = vmatprep.subr.bf16.mxu0 0
        %3174 = vmatpush1.bf16.msra.mxu0 0
        %3175 = vmatprep.subr.bf16.mxu0 0
        %3176 = vmatpush1.bf16.msra.mxu0 0
        %3177 = vmatprep.subr.bf16.mxu0 0
        %3178 = vmatpush1.bf16.msra.mxu0 0
        %3179 = vmatprep.mubr.bf16.mxu0 0
        %3180 = vmatmul.mubr.bf16.gmra.mrb[0].mxu0 %v3142
        %v3181 = vpop.f32.mrb[0].mxu0
        %v3182 = vadd.f32 0.0, %v3181
        %v3183 = vpop.f32.mrb[0].mxu0
        %v3184 = vpop.f32.mrb[0].mxu0
        %v3185 = vpop.f32.mrb[0].mxu0
        %3186 = vdwg.mxu0
        %v3188 = vsel %vm1265, %v3093, 0
        %v3191 = vsel %vm1269, %v2853, 0
        %3193 = vmatprep.subr.bf16.mxu0 0
        %3194 = vmatpush1.bf16.msra.mxu0 %v3191
        %3195 = vmatprep.subr.bf16.mxu0 0
        %3196 = vmatpush1.bf16.msra.mxu0 0
        %3197 = vmatprep.subr.bf16.mxu0 0
        %3198 = vmatpush1.bf16.msra.mxu0 0
        %3199 = vmatprep.subr.bf16.mxu0 0
        %3200 = vmatpush1.bf16.msra.mxu0 0
        %3201 = vmatprep.subr.bf16.mxu0 0
        %3202 = vmatpush1.bf16.msra.mxu0 0
        %3203 = vmatprep.subr.bf16.mxu0 0
        %3204 = vmatpush1.bf16.msra.mxu0 0
        %3205 = vmatprep.subr.bf16.mxu0 0
        %3206 = vmatpush1.bf16.msra.mxu0 0
        %3207 = vmatprep.subr.bf16.mxu0 0
        %3208 = vmatpush1.bf16.msra.mxu0 0
        %3209 = vmatprep.subr.bf16.mxu0 0
        %3210 = vmatpush1.bf16.msra.mxu0 0
        %3211 = vmatprep.subr.bf16.mxu0 0
        %3212 = vmatpush1.bf16.msra.mxu0 0
        %3213 = vmatprep.subr.bf16.mxu0 0
        %3214 = vmatpush1.bf16.msra.mxu0 0
        %3215 = vmatprep.subr.bf16.mxu0 0
        %3216 = vmatpush1.bf16.msra.mxu0 0
        %3217 = vmatprep.subr.bf16.mxu0 0
        %3218 = vmatpush1.bf16.msra.mxu0 0
        %3219 = vmatprep.subr.bf16.mxu0 0
        %3220 = vmatpush1.bf16.msra.mxu0 0
        %3221 = vmatprep.subr.bf16.mxu0 0
        %3222 = vmatpush1.bf16.msra.mxu0 0
        %3223 = vmatprep.subr.bf16.mxu0 0
        %3224 = vmatpush1.bf16.msra.mxu0 0
        %3225 = vmatprep.mubr.bf16.mxu0 0
        %3226 = vmatmul.mubr.bf16.gmra.mrb[0].mxu0 %v3188
        %v3227 = vpop.f32.mrb[0].mxu0
        %v3228 = vadd.f32 0.0, %v3227
        %v3229 = vpop.f32.mrb[0].mxu0
        %v3230 = vpop.f32.mrb[0].mxu0
        %v3231 = vpop.f32.mrb[0].mxu0
        %3232 = vdwg.mxu0
        %v3234 = vsel %vm1265, %v3094, 0
        %v3237 = vsel %vm1269, %v2854, 0
        %3239 = vmatprep.subr.bf16.mxu0 0
        %3240 = vmatpush1.bf16.msra.mxu0 %v3237
        %3241 = vmatprep.subr.bf16.mxu0 0
        %3242 = vmatpush1.bf16.msra.mxu0 0
        %3243 = vmatprep.subr.bf16.mxu0 0
        %3244 = vmatpush1.bf16.msra.mxu0 0
        %3245 = vmatprep.subr.bf16.mxu0 0
        %3246 = vmatpush1.bf16.msra.mxu0 0
        %3247 = vmatprep.subr.bf16.mxu0 0
        %3248 = vmatpush1.bf16.msra.mxu0 0
        %3249 = vmatprep.subr.bf16.mxu0 0
        %3250 = vmatpush1.bf16.msra.mxu0 0
        %3251 = vmatprep.subr.bf16.mxu0 0
        %3252 = vmatpush1.bf16.msra.mxu0 0
        %3253 = vmatprep.subr.bf16.mxu0 0
        %3254 = vmatpush1.bf16.msra.mxu0 0
        %3255 = vmatprep.subr.bf16.mxu0 0
        %3256 = vmatpush1.bf16.msra.mxu0 0
        %3257 = vmatprep.subr.bf16.mxu0 0
        %3258 = vmatpush1.bf16.msra.mxu0 0
        %3259 = vmatprep.subr.bf16.mxu0 0
        %3260 = vmatpush1.bf16.msra.mxu0 0
        %3261 = vmatprep.subr.bf16.mxu0 0
        %3262 = vmatpush1.bf16.msra.mxu0 0
        %3263 = vmatprep.subr.bf16.mxu0 0
        %3264 = vmatpush1.bf16.msra.mxu0 0
        %3265 = vmatprep.subr.bf16.mxu0 0
        %3266 = vmatpush1.bf16.msra.mxu0 0
        %3267 = vmatprep.subr.bf16.mxu0 0
        %3268 = vmatpush1.bf16.msra.mxu0 0
        %3269 = vmatprep.subr.bf16.mxu0 0
        %3270 = vmatpush1.bf16.msra.mxu0 0
        %3271 = vmatprep.mubr.bf16.mxu0 0
        %3272 = vmatmul.mubr.bf16.gmra.mrb[0].mxu0 %v3234
        %v3273 = vpop.f32.mrb[0].mxu0
        %v3274 = vadd.f32 0.0, %v3273
        %v3275 = vpop.f32.mrb[0].mxu0
        %v3276 = vpop.f32.mrb[0].mxu0
        %v3277 = vpop.f32.mrb[0].mxu0
        %3278 = vdwg.mxu0
        %3279 = vrot.lane.b32.xlu0 %v958, 48
        %v3280 = vpop.permute.xlu0 %3279
        %3281 = vrot.lane.b32.xlu0 %v966, 48
        %v3282 = vpop.permute.xlu0 %3281
        %3283 = vrot.lane.b32.xlu0 %v974, 48
        %v3284 = vpop.permute.xlu0 %3283
        %3285 = vrot.lane.b32.xlu0 %v982, 48
        %v3286 = vpop.permute.xlu0 %3285
        %v3291 = vpack.c.bf16 %v3280, %v3280
        %v3292 = vpack.c.bf16 %v3282, %v3282
        %v3293 = vpack.c.bf16 %v3284, %v3284
        %v3294 = vpack.c.bf16 %v3286, %v3286
        %3295 = vrot.lane.b32.xlu0 %v998, 48
        %v3296 = vpop.permute.xlu0 %3295
        %3297 = vrot.lane.b32.xlu0 %v1006, 48
        %v3298 = vpop.permute.xlu0 %3297
        %3299 = vrot.lane.b32.xlu0 %v1014, 48
        %v3300 = vpop.permute.xlu0 %3299
        %3301 = vrot.lane.b32.xlu0 %v1022, 48
        %v3302 = vpop.permute.xlu0 %3301
        %v3307 = vpack.c.bf16 %v3296, %v3296
        %v3308 = vpack.c.bf16 %v3298, %v3298
        %v3309 = vpack.c.bf16 %v3300, %v3300
        %v3310 = vpack.c.bf16 %v3302, %v3302
        %3311 = vrot.lane.b32.xlu0 %v947, 48
        %v3312 = vpop.permute.xlu0 %3311
        %v3314 = vsel %vm1031, %v3312, 0
        %v3317 = vsel %vm1031, %v3291, 0
        %3319 = vmatprep.subr.bf16.mxu0 0
        %3320 = vmatpush1.bf16.xpose.msra.mxu0 %v3317
        %3321 = vmatprep.subr.bf16.mxu0 0
        %3322 = vmatpush1.bf16.xpose.msra.mxu0 0
        %3323 = vmatprep.subr.bf16.mxu0 0
        %3324 = vmatpush1.bf16.xpose.msra.mxu0 0
        %3325 = vmatprep.subr.bf16.mxu0 0
        %3326 = vmatpush1.bf16.xpose.msra.mxu0 0
        %3327 = vmatprep.subr.bf16.mxu0 0
        %3328 = vmatpush1.bf16.xpose.msra.mxu0 0
        %3329 = vmatprep.subr.bf16.mxu0 0
        %3330 = vmatpush1.bf16.xpose.msra.mxu0 0
        %3331 = vmatprep.subr.bf16.mxu0 0
        %3332 = vmatpush1.bf16.xpose.msra.mxu0 0
        %3333 = vmatprep.subr.bf16.mxu0 0
        %3334 = vmatpush1.bf16.xpose.msra.mxu0 0
        %3335 = vmatprep.subr.bf16.mxu0 0
        %3336 = vmatpush1.bf16.xpose.msra.mxu0 0
        %3337 = vmatprep.subr.bf16.mxu0 0
        %3338 = vmatpush1.bf16.xpose.msra.mxu0 0
        %3339 = vmatprep.subr.bf16.mxu0 0
        %3340 = vmatpush1.bf16.xpose.msra.mxu0 0
        %3341 = vmatprep.subr.bf16.mxu0 0
        %3342 = vmatpush1.bf16.xpose.msra.mxu0 0
        %3343 = vmatprep.subr.bf16.mxu0 0
        %3344 = vmatpush1.bf16.xpose.msra.mxu0 0
        %3345 = vmatprep.subr.bf16.mxu0 0
        %3346 = vmatpush1.bf16.xpose.msra.mxu0 0
        %3347 = vmatprep.subr.bf16.mxu0 0
        %3348 = vmatpush1.bf16.xpose.msra.mxu0 0
        %3349 = vmatprep.subr.bf16.mxu0 0
        %3350 = vmatpush1.bf16.xpose.msra.mxu0 0
        %3351 = vmatprep.mubr.bf16.mxu0 0
        %3352 = vmatmul.mubr.bf16.gmra.mrb[0].mxu0 %v3314
        %v3353 = vpop.f32.mrb[0].mxu0
        %v3354 = vadd.f32 0.0, %v3353
        %v3355 = vpop.f32.mrb[0].mxu0
        %v3356 = vpop.f32.mrb[0].mxu0
        %v3357 = vpop.f32.mrb[0].mxu0
        %3358 = vdwg.mxu0
        %3359 = vrot.lane.b32.xlu0 %v948, 48
        %v3360 = vpop.permute.xlu0 %3359
        %v3362 = vsel %vm1031, %v3360, 0
        %v3365 = vsel %vm1031, %v3292, 0
        %3367 = vmatprep.subr.bf16.mxu0 0
        %3368 = vmatpush1.bf16.xpose.msra.mxu0 %v3365
        %3369 = vmatprep.subr.bf16.mxu0 0
        %3370 = vmatpush1.bf16.xpose.msra.mxu0 0
        %3371 = vmatprep.subr.bf16.mxu0 0
        %3372 = vmatpush1.bf16.xpose.msra.mxu0 0
        %3373 = vmatprep.subr.bf16.mxu0 0
        %3374 = vmatpush1.bf16.xpose.msra.mxu0 0
        %3375 = vmatprep.subr.bf16.mxu0 0
        %3376 = vmatpush1.bf16.xpose.msra.mxu0 0
        %3377 = vmatprep.subr.bf16.mxu0 0
        %3378 = vmatpush1.bf16.xpose.msra.mxu0 0
        %3379 = vmatprep.subr.bf16.mxu0 0
        %3380 = vmatpush1.bf16.xpose.msra.mxu0 0
        %3381 = vmatprep.subr.bf16.mxu0 0
        %3382 = vmatpush1.bf16.xpose.msra.mxu0 0
        %3383 = vmatprep.subr.bf16.mxu0 0
        %3384 = vmatpush1.bf16.xpose.msra.mxu0 0
        %3385 = vmatprep.subr.bf16.mxu0 0
        %3386 = vmatpush1.bf16.xpose.msra.mxu0 0
        %3387 = vmatprep.subr.bf16.mxu0 0
        %3388 = vmatpush1.bf16.xpose.msra.mxu0 0
        %3389 = vmatprep.subr.bf16.mxu0 0
        %3390 = vmatpush1.bf16.xpose.msra.mxu0 0
        %3391 = vmatprep.subr.bf16.mxu0 0
        %3392 = vmatpush1.bf16.xpose.msra.mxu0 0
        %3393 = vmatprep.subr.bf16.mxu0 0
        %3394 = vmatpush1.bf16.xpose.msra.mxu0 0
        %3395 = vmatprep.subr.bf16.mxu0 0
        %3396 = vmatpush1.bf16.xpose.msra.mxu0 0
        %3397 = vmatprep.subr.bf16.mxu0 0
        %3398 = vmatpush1.bf16.xpose.msra.mxu0 0
        %3399 = vmatprep.mubr.bf16.mxu0 0
        %3400 = vmatmul.mubr.bf16.gmra.mrb[0].mxu0 %v3362
        %v3401 = vpop.f32.mrb[0].mxu0
        %v3402 = vadd.f32 0.0, %v3401
        %v3403 = vpop.f32.mrb[0].mxu0
        %v3404 = vpop.f32.mrb[0].mxu0
        %v3405 = vpop.f32.mrb[0].mxu0
        %3406 = vdwg.mxu0
        %3407 = vrot.lane.b32.xlu0 %v949, 48
        %v3408 = vpop.permute.xlu0 %3407
        %v3410 = vsel %vm1031, %v3408, 0
        %v3413 = vsel %vm1031, %v3293, 0
        %3415 = vmatprep.subr.bf16.mxu0 0
        %3416 = vmatpush1.bf16.xpose.msra.mxu0 %v3413
        %3417 = vmatprep.subr.bf16.mxu0 0
        %3418 = vmatpush1.bf16.xpose.msra.mxu0 0
        %3419 = vmatprep.subr.bf16.mxu0 0
        %3420 = vmatpush1.bf16.xpose.msra.mxu0 0
        %3421 = vmatprep.subr.bf16.mxu0 0
        %3422 = vmatpush1.bf16.xpose.msra.mxu0 0
        %3423 = vmatprep.subr.bf16.mxu0 0
        %3424 = vmatpush1.bf16.xpose.msra.mxu0 0
        %3425 = vmatprep.subr.bf16.mxu0 0
        %3426 = vmatpush1.bf16.xpose.msra.mxu0 0
        %3427 = vmatprep.subr.bf16.mxu0 0
        %3428 = vmatpush1.bf16.xpose.msra.mxu0 0
        %3429 = vmatprep.subr.bf16.mxu0 0
        %3430 = vmatpush1.bf16.xpose.msra.mxu0 0
        %3431 = vmatprep.subr.bf16.mxu0 0
        %3432 = vmatpush1.bf16.xpose.msra.mxu0 0
        %3433 = vmatprep.subr.bf16.mxu0 0
        %3434 = vmatpush1.bf16.xpose.msra.mxu0 0
        %3435 = vmatprep.subr.bf16.mxu0 0
        %3436 = vmatpush1.bf16.xpose.msra.mxu0 0
        %3437 = vmatprep.subr.bf16.mxu0 0
        %3438 = vmatpush1.bf16.xpose.msra.mxu0 0
        %3439 = vmatprep.subr.bf16.mxu0 0
        %3440 = vmatpush1.bf16.xpose.msra.mxu0 0
        %3441 = vmatprep.subr.bf16.mxu0 0
        %3442 = vmatpush1.bf16.xpose.msra.mxu0 0
        %3443 = vmatprep.subr.bf16.mxu0 0
        %3444 = vmatpush1.bf16.xpose.msra.mxu0 0
        %3445 = vmatprep.subr.bf16.mxu0 0
        %3446 = vmatpush1.bf16.xpose.msra.mxu0 0
        %3447 = vmatprep.mubr.bf16.mxu0 0
        %3448 = vmatmul.mubr.bf16.gmra.mrb[0].mxu0 %v3410
        %v3449 = vpop.f32.mrb[0].mxu0
        %v3450 = vadd.f32 0.0, %v3449
        %v3451 = vpop.f32.mrb[0].mxu0
        %v3452 = vpop.f32.mrb[0].mxu0
        %v3453 = vpop.f32.mrb[0].mxu0
        %3454 = vdwg.mxu0
        %3455 = vrot.lane.b32.xlu0 %v950, 48
        %v3456 = vpop.permute.xlu0 %3455
        %v3458 = vsel %vm1031, %v3456, 0
        %v3461 = vsel %vm1031, %v3294, 0
        %3463 = vmatprep.subr.bf16.mxu0 0
        %3464 = vmatpush1.bf16.xpose.msra.mxu0 %v3461
        %3465 = vmatprep.subr.bf16.mxu0 0
        %3466 = vmatpush1.bf16.xpose.msra.mxu0 0
        %3467 = vmatprep.subr.bf16.mxu0 0
        %3468 = vmatpush1.bf16.xpose.msra.mxu0 0
        %3469 = vmatprep.subr.bf16.mxu0 0
        %3470 = vmatpush1.bf16.xpose.msra.mxu0 0
        %3471 = vmatprep.subr.bf16.mxu0 0
        %3472 = vmatpush1.bf16.xpose.msra.mxu0 0
        %3473 = vmatprep.subr.bf16.mxu0 0
        %3474 = vmatpush1.bf16.xpose.msra.mxu0 0
        %3475 = vmatprep.subr.bf16.mxu0 0
        %3476 = vmatpush1.bf16.xpose.msra.mxu0 0
        %3477 = vmatprep.subr.bf16.mxu0 0
        %3478 = vmatpush1.bf16.xpose.msra.mxu0 0
        %3479 = vmatprep.subr.bf16.mxu0 0
        %3480 = vmatpush1.bf16.xpose.msra.mxu0 0
        %3481 = vmatprep.subr.bf16.mxu0 0
        %3482 = vmatpush1.bf16.xpose.msra.mxu0 0
        %3483 = vmatprep.subr.bf16.mxu0 0
        %3484 = vmatpush1.bf16.xpose.msra.mxu0 0
        %3485 = vmatprep.subr.bf16.mxu0 0
        %3486 = vmatpush1.bf16.xpose.msra.mxu0 0
        %3487 = vmatprep.subr.bf16.mxu0 0
        %3488 = vmatpush1.bf16.xpose.msra.mxu0 0
        %3489 = vmatprep.subr.bf16.mxu0 0
        %3490 = vmatpush1.bf16.xpose.msra.mxu0 0
        %3491 = vmatprep.subr.bf16.mxu0 0
        %3492 = vmatpush1.bf16.xpose.msra.mxu0 0
        %3493 = vmatprep.subr.bf16.mxu0 0
        %3494 = vmatpush1.bf16.xpose.msra.mxu0 0
        %3495 = vmatprep.mubr.bf16.mxu0 0
        %3496 = vmatmul.mubr.bf16.gmra.mrb[0].mxu0 %v3458
        %v3497 = vpop.f32.mrb[0].mxu0
        %v3498 = vadd.f32 0.0, %v3497
        %v3499 = vpop.f32.mrb[0].mxu0
        %v3500 = vpop.f32.mrb[0].mxu0
        %v3501 = vpop.f32.mrb[0].mxu0
        %3502 = vdwg.mxu0
        %v3503 = vsel %vm1216, %v3354, -inf
        %3504 = vmax.xlane.f32.xlu0 %v3503
        %v3505 = vpop.xlane.xlu0 %3504
        %v3506 = vsel %vm1216, %v3402, -inf
        %3507 = vmax.xlane.f32.xlu0 %v3506
        %v3508 = vpop.xlane.xlu0 %3507
        %v3509 = vsel %vm1216, %v3450, -inf
        %3510 = vmax.xlane.f32.xlu0 %v3509
        %v3511 = vpop.xlane.xlu0 %3510
        %v3512 = vsel %vm1216, %v3498, -inf
        %3513 = vmax.xlane.f32.xlu0 %v3512
        %v3514 = vpop.xlane.xlu0 %3513
        %v3515 = vsub.f32 %v3354, %v3505
        %v3516 = vsub.f32 %v3402, %v3508
        %v3517 = vsub.f32 %v3450, %v3511
        %v3518 = vsub.f32 %v3498, %v3514
        %v3519 = vmul.f32 %v3515, 1.442695
        %v3520 = vpow.pop %v3519
        %v3521 = vmul.f32 %v3516, 1.442695
        %v3522 = vpow.pop %v3521
        %v3523 = vmul.f32 %v3517, 1.442695
        %v3524 = vpow.pop %v3523
        %v3525 = vmul.f32 %v3518, 1.442695
        %v3526 = vpow.pop %v3525
        %v3527 = vsel %vm1216, %v3520, 0.0
        %3528 = vadd.xlane.f32.xlu0 %v3527
        %v3529 = vpop.xlane.xlu0 %3528
        %v3530 = vsel %vm1216, %v3522, 0.0
        %3531 = vadd.xlane.f32.xlu0 %v3530
        %v3532 = vpop.xlane.xlu0 %3531
        %v3533 = vsel %vm1216, %v3524, 0.0
        %3534 = vadd.xlane.f32.xlu0 %v3533
        %v3535 = vpop.xlane.xlu0 %3534
        %v3536 = vsel %vm1216, %v3526, 0.0
        %3537 = vadd.xlane.f32.xlu0 %v3536
        %v3538 = vpop.xlane.xlu0 %3537
        %v3539 = vrcp.pop %v3529
        %v3540 = vrcp.pop %v3532
        %v3541 = vrcp.pop %v3535
        %v3542 = vrcp.pop %v3538
        %v3543 = vmul.f32 %v3520, %v3539
        %v3544 = vmul.f32 %v3522, %v3540
        %v3545 = vmul.f32 %v3524, %v3541
        %v3546 = vmul.f32 %v3526, %v3542
        %v3547 = vpack.c.bf16 %v3543, %v3543
        %v3548 = vpack.c.bf16 %v3544, %v3544
        %v3549 = vpack.c.bf16 %v3545, %v3545
        %v3550 = vpack.c.bf16 %v3546, %v3546
        %v3552 = vsel %vm1265, %v3547, 0
        %v3555 = vsel %vm1269, %v3307, 0
        %3557 = vmatprep.subr.bf16.mxu0 0
        %3558 = vmatpush1.bf16.msra.mxu0 %v3555
        %3559 = vmatprep.subr.bf16.mxu0 0
        %3560 = vmatpush1.bf16.msra.mxu0 0
        %3561 = vmatprep.subr.bf16.mxu0 0
        %3562 = vmatpush1.bf16.msra.mxu0 0
        %3563 = vmatprep.subr.bf16.mxu0 0
        %3564 = vmatpush1.bf16.msra.mxu0 0
        %3565 = vmatprep.subr.bf16.mxu0 0
        %3566 = vmatpush1.bf16.msra.mxu0 0
        %3567 = vmatprep.subr.bf16.mxu0 0
        %3568 = vmatpush1.bf16.msra.mxu0 0
        %3569 = vmatprep.subr.bf16.mxu0 0
        %3570 = vmatpush1.bf16.msra.mxu0 0
        %3571 = vmatprep.subr.bf16.mxu0 0
        %3572 = vmatpush1.bf16.msra.mxu0 0
        %3573 = vmatprep.subr.bf16.mxu0 0
        %3574 = vmatpush1.bf16.msra.mxu0 0
        %3575 = vmatprep.subr.bf16.mxu0 0
        %3576 = vmatpush1.bf16.msra.mxu0 0
        %3577 = vmatprep.subr.bf16.mxu0 0
        %3578 = vmatpush1.bf16.msra.mxu0 0
        %3579 = vmatprep.subr.bf16.mxu0 0
        %3580 = vmatpush1.bf16.msra.mxu0 0
        %3581 = vmatprep.subr.bf16.mxu0 0
        %3582 = vmatpush1.bf16.msra.mxu0 0
        %3583 = vmatprep.subr.bf16.mxu0 0
        %3584 = vmatpush1.bf16.msra.mxu0 0
        %3585 = vmatprep.subr.bf16.mxu0 0
        %3586 = vmatpush1.bf16.msra.mxu0 0
        %3587 = vmatprep.subr.bf16.mxu0 0
        %3588 = vmatpush1.bf16.msra.mxu0 0
        %3589 = vmatprep.mubr.bf16.mxu0 0
        %3590 = vmatmul.mubr.bf16.gmra.mrb[0].mxu0 %v3552
        %v3591 = vpop.f32.mrb[0].mxu0
        %v3592 = vadd.f32 0.0, %v3591
        %v3593 = vpop.f32.mrb[0].mxu0
        %v3594 = vpop.f32.mrb[0].mxu0
        %v3595 = vpop.f32.mrb[0].mxu0
        %3596 = vdwg.mxu0
        %v3598 = vsel %vm1265, %v3548, 0
        %v3601 = vsel %vm1269, %v3308, 0
        %3603 = vmatprep.subr.bf16.mxu0 0
        %3604 = vmatpush1.bf16.msra.mxu0 %v3601
        %3605 = vmatprep.subr.bf16.mxu0 0
        %3606 = vmatpush1.bf16.msra.mxu0 0
        %3607 = vmatprep.subr.bf16.mxu0 0
        %3608 = vmatpush1.bf16.msra.mxu0 0
        %3609 = vmatprep.subr.bf16.mxu0 0
        %3610 = vmatpush1.bf16.msra.mxu0 0
        %3611 = vmatprep.subr.bf16.mxu0 0
        %3612 = vmatpush1.bf16.msra.mxu0 0
        %3613 = vmatprep.subr.bf16.mxu0 0
        %3614 = vmatpush1.bf16.msra.mxu0 0
        %3615 = vmatprep.subr.bf16.mxu0 0
        %3616 = vmatpush1.bf16.msra.mxu0 0
        %3617 = vmatprep.subr.bf16.mxu0 0
        %3618 = vmatpush1.bf16.msra.mxu0 0
        %3619 = vmatprep.subr.bf16.mxu0 0
        %3620 = vmatpush1.bf16.msra.mxu0 0
        %3621 = vmatprep.subr.bf16.mxu0 0
        %3622 = vmatpush1.bf16.msra.mxu0 0
        %3623 = vmatprep.subr.bf16.mxu0 0
        %3624 = vmatpush1.bf16.msra.mxu0 0
        %3625 = vmatprep.subr.bf16.mxu0 0
        %3626 = vmatpush1.bf16.msra.mxu0 0
        %3627 = vmatprep.subr.bf16.mxu0 0
        %3628 = vmatpush1.bf16.msra.mxu0 0
        %3629 = vmatprep.subr.bf16.mxu0 0
        %3630 = vmatpush1.bf16.msra.mxu0 0
        %3631 = vmatprep.subr.bf16.mxu0 0
        %3632 = vmatpush1.bf16.msra.mxu0 0
        %3633 = vmatprep.subr.bf16.mxu0 0
        %3634 = vmatpush1.bf16.msra.mxu0 0
        %3635 = vmatprep.mubr.bf16.mxu0 0
        %3636 = vmatmul.mubr.bf16.gmra.mrb[0].mxu0 %v3598
        %v3637 = vpop.f32.mrb[0].mxu0
        %v3638 = vadd.f32 0.0, %v3637
        %v3639 = vpop.f32.mrb[0].mxu0
        %v3640 = vpop.f32.mrb[0].mxu0
        %v3641 = vpop.f32.mrb[0].mxu0
        %3642 = vdwg.mxu0
        %v3644 = vsel %vm1265, %v3549, 0
        %v3647 = vsel %vm1269, %v3309, 0
        %3649 = vmatprep.subr.bf16.mxu0 0
        %3650 = vmatpush1.bf16.msra.mxu0 %v3647
        %3651 = vmatprep.subr.bf16.mxu0 0
        %3652 = vmatpush1.bf16.msra.mxu0 0
        %3653 = vmatprep.subr.bf16.mxu0 0
        %3654 = vmatpush1.bf16.msra.mxu0 0
        %3655 = vmatprep.subr.bf16.mxu0 0
        %3656 = vmatpush1.bf16.msra.mxu0 0
        %3657 = vmatprep.subr.bf16.mxu0 0
        %3658 = vmatpush1.bf16.msra.mxu0 0
        %3659 = vmatprep.subr.bf16.mxu0 0
        %3660 = vmatpush1.bf16.msra.mxu0 0
        %3661 = vmatprep.subr.bf16.mxu0 0
        %3662 = vmatpush1.bf16.msra.mxu0 0
        %3663 = vmatprep.subr.bf16.mxu0 0
        %3664 = vmatpush1.bf16.msra.mxu0 0
        %3665 = vmatprep.subr.bf16.mxu0 0
        %3666 = vmatpush1.bf16.msra.mxu0 0
        %3667 = vmatprep.subr.bf16.mxu0 0
        %3668 = vmatpush1.bf16.msra.mxu0 0
        %3669 = vmatprep.subr.bf16.mxu0 0
        %3670 = vmatpush1.bf16.msra.mxu0 0
        %3671 = vmatprep.subr.bf16.mxu0 0
        %3672 = vmatpush1.bf16.msra.mxu0 0
        %3673 = vmatprep.subr.bf16.mxu0 0
        %3674 = vmatpush1.bf16.msra.mxu0 0
        %3675 = vmatprep.subr.bf16.mxu0 0
        %3676 = vmatpush1.bf16.msra.mxu0 0
        %3677 = vmatprep.subr.bf16.mxu0 0
        %3678 = vmatpush1.bf16.msra.mxu0 0
        %3679 = vmatprep.subr.bf16.mxu0 0
        %3680 = vmatpush1.bf16.msra.mxu0 0
        %3681 = vmatprep.mubr.bf16.mxu0 0
        %3682 = vmatmul.mubr.bf16.gmra.mrb[0].mxu0 %v3644
        %v3683 = vpop.f32.mrb[0].mxu0
        %v3684 = vadd.f32 0.0, %v3683
        %v3685 = vpop.f32.mrb[0].mxu0
        %v3686 = vpop.f32.mrb[0].mxu0
        %v3687 = vpop.f32.mrb[0].mxu0
        %3688 = vdwg.mxu0
        %v3690 = vsel %vm1265, %v3550, 0
        %v3693 = vsel %vm1269, %v3310, 0
        %3695 = vmatprep.subr.bf16.mxu0 0
        %3696 = vmatpush1.bf16.msra.mxu0 %v3693
        %3697 = vmatprep.subr.bf16.mxu0 0
        %3698 = vmatpush1.bf16.msra.mxu0 0
        %3699 = vmatprep.subr.bf16.mxu0 0
        %3700 = vmatpush1.bf16.msra.mxu0 0
        %3701 = vmatprep.subr.bf16.mxu0 0
        %3702 = vmatpush1.bf16.msra.mxu0 0
        %3703 = vmatprep.subr.bf16.mxu0 0
        %3704 = vmatpush1.bf16.msra.mxu0 0
        %3705 = vmatprep.subr.bf16.mxu0 0
        %3706 = vmatpush1.bf16.msra.mxu0 0
        %3707 = vmatprep.subr.bf16.mxu0 0
        %3708 = vmatpush1.bf16.msra.mxu0 0
        %3709 = vmatprep.subr.bf16.mxu0 0
        %3710 = vmatpush1.bf16.msra.mxu0 0
        %3711 = vmatprep.subr.bf16.mxu0 0
        %3712 = vmatpush1.bf16.msra.mxu0 0
        %3713 = vmatprep.subr.bf16.mxu0 0
        %3714 = vmatpush1.bf16.msra.mxu0 0
        %3715 = vmatprep.subr.bf16.mxu0 0
        %3716 = vmatpush1.bf16.msra.mxu0 0
        %3717 = vmatprep.subr.bf16.mxu0 0
        %3718 = vmatpush1.bf16.msra.mxu0 0
        %3719 = vmatprep.subr.bf16.mxu0 0
        %3720 = vmatpush1.bf16.msra.mxu0 0
        %3721 = vmatprep.subr.bf16.mxu0 0
        %3722 = vmatpush1.bf16.msra.mxu0 0
        %3723 = vmatprep.subr.bf16.mxu0 0
        %3724 = vmatpush1.bf16.msra.mxu0 0
        %3725 = vmatprep.subr.bf16.mxu0 0
        %3726 = vmatpush1.bf16.msra.mxu0 0
        %3727 = vmatprep.mubr.bf16.mxu0 0
        %3728 = vmatmul.mubr.bf16.gmra.mrb[0].mxu0 %v3690
        %v3729 = vpop.f32.mrb[0].mxu0
        %v3730 = vadd.f32 0.0, %v3729
        %v3731 = vpop.f32.mrb[0].mxu0
        %v3732 = vpop.f32.mrb[0].mxu0
        %v3733 = vpop.f32.mrb[0].mxu0
        %3734 = vdwg.mxu0
        %3735 = vrot.lane.b32.xlu0 %v958, 32
        %v3736 = vpop.permute.xlu0 %3735
        %3737 = vrot.lane.b32.xlu0 %v966, 32
        %v3738 = vpop.permute.xlu0 %3737
        %3739 = vrot.lane.b32.xlu0 %v974, 32
        %v3740 = vpop.permute.xlu0 %3739
        %3741 = vrot.lane.b32.xlu0 %v982, 32
        %v3742 = vpop.permute.xlu0 %3741
        %v3747 = vpack.c.bf16 %v3736, %v3736
        %v3748 = vpack.c.bf16 %v3738, %v3738
        %v3749 = vpack.c.bf16 %v3740, %v3740
        %v3750 = vpack.c.bf16 %v3742, %v3742
        %3751 = vrot.lane.b32.xlu0 %v998, 32
        %v3752 = vpop.permute.xlu0 %3751
        %3753 = vrot.lane.b32.xlu0 %v1006, 32
        %v3754 = vpop.permute.xlu0 %3753
        %3755 = vrot.lane.b32.xlu0 %v1014, 32
        %v3756 = vpop.permute.xlu0 %3755
        %3757 = vrot.lane.b32.xlu0 %v1022, 32
        %v3758 = vpop.permute.xlu0 %3757
        %v3763 = vpack.c.bf16 %v3752, %v3752
        %v3764 = vpack.c.bf16 %v3754, %v3754
        %v3765 = vpack.c.bf16 %v3756, %v3756
        %v3766 = vpack.c.bf16 %v3758, %v3758
        %3767 = vrot.lane.b32.xlu0 %v947, 32
        %v3768 = vpop.permute.xlu0 %3767
        %v3770 = vsel %vm1031, %v3768, 0
        %v3773 = vsel %vm1031, %v3747, 0
        %3775 = vmatprep.subr.bf16.mxu0 0
        %3776 = vmatpush1.bf16.xpose.msra.mxu0 %v3773
        %3777 = vmatprep.subr.bf16.mxu0 0
        %3778 = vmatpush1.bf16.xpose.msra.mxu0 0
        %3779 = vmatprep.subr.bf16.mxu0 0
        %3780 = vmatpush1.bf16.xpose.msra.mxu0 0
        %3781 = vmatprep.subr.bf16.mxu0 0
        %3782 = vmatpush1.bf16.xpose.msra.mxu0 0
        %3783 = vmatprep.subr.bf16.mxu0 0
        %3784 = vmatpush1.bf16.xpose.msra.mxu0 0
        %3785 = vmatprep.subr.bf16.mxu0 0
        %3786 = vmatpush1.bf16.xpose.msra.mxu0 0
        %3787 = vmatprep.subr.bf16.mxu0 0
        %3788 = vmatpush1.bf16.xpose.msra.mxu0 0
        %3789 = vmatprep.subr.bf16.mxu0 0
        %3790 = vmatpush1.bf16.xpose.msra.mxu0 0
        %3791 = vmatprep.subr.bf16.mxu0 0
        %3792 = vmatpush1.bf16.xpose.msra.mxu0 0
        %3793 = vmatprep.subr.bf16.mxu0 0
        %3794 = vmatpush1.bf16.xpose.msra.mxu0 0
        %3795 = vmatprep.subr.bf16.mxu0 0
        %3796 = vmatpush1.bf16.xpose.msra.mxu0 0
        %3797 = vmatprep.subr.bf16.mxu0 0
        %3798 = vmatpush1.bf16.xpose.msra.mxu0 0
        %3799 = vmatprep.subr.bf16.mxu0 0
        %3800 = vmatpush1.bf16.xpose.msra.mxu0 0
        %3801 = vmatprep.subr.bf16.mxu0 0
        %3802 = vmatpush1.bf16.xpose.msra.mxu0 0
        %3803 = vmatprep.subr.bf16.mxu0 0
        %3804 = vmatpush1.bf16.xpose.msra.mxu0 0
        %3805 = vmatprep.subr.bf16.mxu0 0
        %3806 = vmatpush1.bf16.xpose.msra.mxu0 0
        %3807 = vmatprep.mubr.bf16.mxu0 0
        %3808 = vmatmul.mubr.bf16.gmra.mrb[0].mxu0 %v3770
        %v3809 = vpop.f32.mrb[0].mxu0
        %v3810 = vadd.f32 0.0, %v3809
        %v3811 = vpop.f32.mrb[0].mxu0
        %v3812 = vpop.f32.mrb[0].mxu0
        %v3813 = vpop.f32.mrb[0].mxu0
        %3814 = vdwg.mxu0
        %3815 = vrot.lane.b32.xlu0 %v948, 32
        %v3816 = vpop.permute.xlu0 %3815
        %v3818 = vsel %vm1031, %v3816, 0
        %v3821 = vsel %vm1031, %v3748, 0
        %3823 = vmatprep.subr.bf16.mxu0 0
        %3824 = vmatpush1.bf16.xpose.msra.mxu0 %v3821
        %3825 = vmatprep.subr.bf16.mxu0 0
        %3826 = vmatpush1.bf16.xpose.msra.mxu0 0
        %3827 = vmatprep.subr.bf16.mxu0 0
        %3828 = vmatpush1.bf16.xpose.msra.mxu0 0
        %3829 = vmatprep.subr.bf16.mxu0 0
        %3830 = vmatpush1.bf16.xpose.msra.mxu0 0
        %3831 = vmatprep.subr.bf16.mxu0 0
        %3832 = vmatpush1.bf16.xpose.msra.mxu0 0
        %3833 = vmatprep.subr.bf16.mxu0 0
        %3834 = vmatpush1.bf16.xpose.msra.mxu0 0
        %3835 = vmatprep.subr.bf16.mxu0 0
        %3836 = vmatpush1.bf16.xpose.msra.mxu0 0
        %3837 = vmatprep.subr.bf16.mxu0 0
        %3838 = vmatpush1.bf16.xpose.msra.mxu0 0
        %3839 = vmatprep.subr.bf16.mxu0 0
        %3840 = vmatpush1.bf16.xpose.msra.mxu0 0
        %3841 = vmatprep.subr.bf16.mxu0 0
        %3842 = vmatpush1.bf16.xpose.msra.mxu0 0
        %3843 = vmatprep.subr.bf16.mxu0 0
        %3844 = vmatpush1.bf16.xpose.msra.mxu0 0
        %3845 = vmatprep.subr.bf16.mxu0 0
        %3846 = vmatpush1.bf16.xpose.msra.mxu0 0
        %3847 = vmatprep.subr.bf16.mxu0 0
        %3848 = vmatpush1.bf16.xpose.msra.mxu0 0
        %3849 = vmatprep.subr.bf16.mxu0 0
        %3850 = vmatpush1.bf16.xpose.msra.mxu0 0
        %3851 = vmatprep.subr.bf16.mxu0 0
        %3852 = vmatpush1.bf16.xpose.msra.mxu0 0
        %3853 = vmatprep.subr.bf16.mxu0 0
        %3854 = vmatpush1.bf16.xpose.msra.mxu0 0
        %3855 = vmatprep.mubr.bf16.mxu0 0
        %3856 = vmatmul.mubr.bf16.gmra.mrb[0].mxu0 %v3818
        %v3857 = vpop.f32.mrb[0].mxu0
        %v3858 = vadd.f32 0.0, %v3857
        %v3859 = vpop.f32.mrb[0].mxu0
        %v3860 = vpop.f32.mrb[0].mxu0
        %v3861 = vpop.f32.mrb[0].mxu0
        %3862 = vdwg.mxu0
        %3863 = vrot.lane.b32.xlu0 %v949, 32
        %v3864 = vpop.permute.xlu0 %3863
        %v3866 = vsel %vm1031, %v3864, 0
        %v3869 = vsel %vm1031, %v3749, 0
        %3871 = vmatprep.subr.bf16.mxu0 0
        %3872 = vmatpush1.bf16.xpose.msra.mxu0 %v3869
        %3873 = vmatprep.subr.bf16.mxu0 0
        %3874 = vmatpush1.bf16.xpose.msra.mxu0 0
        %3875 = vmatprep.subr.bf16.mxu0 0
        %3876 = vmatpush1.bf16.xpose.msra.mxu0 0
        %3877 = vmatprep.subr.bf16.mxu0 0
        %3878 = vmatpush1.bf16.xpose.msra.mxu0 0
        %3879 = vmatprep.subr.bf16.mxu0 0
        %3880 = vmatpush1.bf16.xpose.msra.mxu0 0
        %3881 = vmatprep.subr.bf16.mxu0 0
        %3882 = vmatpush1.bf16.xpose.msra.mxu0 0
        %3883 = vmatprep.subr.bf16.mxu0 0
        %3884 = vmatpush1.bf16.xpose.msra.mxu0 0
        %3885 = vmatprep.subr.bf16.mxu0 0
        %3886 = vmatpush1.bf16.xpose.msra.mxu0 0
        %3887 = vmatprep.subr.bf16.mxu0 0
        %3888 = vmatpush1.bf16.xpose.msra.mxu0 0
        %3889 = vmatprep.subr.bf16.mxu0 0
        %3890 = vmatpush1.bf16.xpose.msra.mxu0 0
        %3891 = vmatprep.subr.bf16.mxu0 0
        %3892 = vmatpush1.bf16.xpose.msra.mxu0 0
        %3893 = vmatprep.subr.bf16.mxu0 0
        %3894 = vmatpush1.bf16.xpose.msra.mxu0 0
        %3895 = vmatprep.subr.bf16.mxu0 0
        %3896 = vmatpush1.bf16.xpose.msra.mxu0 0
        %3897 = vmatprep.subr.bf16.mxu0 0
        %3898 = vmatpush1.bf16.xpose.msra.mxu0 0
        %3899 = vmatprep.subr.bf16.mxu0 0
        %3900 = vmatpush1.bf16.xpose.msra.mxu0 0
        %3901 = vmatprep.subr.bf16.mxu0 0
        %3902 = vmatpush1.bf16.xpose.msra.mxu0 0
        %3903 = vmatprep.mubr.bf16.mxu0 0
        %3904 = vmatmul.mubr.bf16.gmra.mrb[0].mxu0 %v3866
        %v3905 = vpop.f32.mrb[0].mxu0
        %v3906 = vadd.f32 0.0, %v3905
        %v3907 = vpop.f32.mrb[0].mxu0
        %v3908 = vpop.f32.mrb[0].mxu0
        %v3909 = vpop.f32.mrb[0].mxu0
        %3910 = vdwg.mxu0
        %3911 = vrot.lane.b32.xlu0 %v950, 32
        %v3912 = vpop.permute.xlu0 %3911
        %v3914 = vsel %vm1031, %v3912, 0
        %v3917 = vsel %vm1031, %v3750, 0
        %3919 = vmatprep.subr.bf16.mxu0 0
        %3920 = vmatpush1.bf16.xpose.msra.mxu0 %v3917
        %3921 = vmatprep.subr.bf16.mxu0 0
        %3922 = vmatpush1.bf16.xpose.msra.mxu0 0
        %3923 = vmatprep.subr.bf16.mxu0 0
        %3924 = vmatpush1.bf16.xpose.msra.mxu0 0
        %3925 = vmatprep.subr.bf16.mxu0 0
        %3926 = vmatpush1.bf16.xpose.msra.mxu0 0
        %3927 = vmatprep.subr.bf16.mxu0 0
        %3928 = vmatpush1.bf16.xpose.msra.mxu0 0
        %3929 = vmatprep.subr.bf16.mxu0 0
        %3930 = vmatpush1.bf16.xpose.msra.mxu0 0
        %3931 = vmatprep.subr.bf16.mxu0 0
        %3932 = vmatpush1.bf16.xpose.msra.mxu0 0
        %3933 = vmatprep.subr.bf16.mxu0 0
        %3934 = vmatpush1.bf16.xpose.msra.mxu0 0
        %3935 = vmatprep.subr.bf16.mxu0 0
        %3936 = vmatpush1.bf16.xpose.msra.mxu0 0
        %3937 = vmatprep.subr.bf16.mxu0 0
        %3938 = vmatpush1.bf16.xpose.msra.mxu0 0
        %3939 = vmatprep.subr.bf16.mxu0 0
        %3940 = vmatpush1.bf16.xpose.msra.mxu0 0
        %3941 = vmatprep.subr.bf16.mxu0 0
        %3942 = vmatpush1.bf16.xpose.msra.mxu0 0
        %3943 = vmatprep.subr.bf16.mxu0 0
        %3944 = vmatpush1.bf16.xpose.msra.mxu0 0
        %3945 = vmatprep.subr.bf16.mxu0 0
        %3946 = vmatpush1.bf16.xpose.msra.mxu0 0
        %3947 = vmatprep.subr.bf16.mxu0 0
        %3948 = vmatpush1.bf16.xpose.msra.mxu0 0
        %3949 = vmatprep.subr.bf16.mxu0 0
        %3950 = vmatpush1.bf16.xpose.msra.mxu0 0
        %3951 = vmatprep.mubr.bf16.mxu0 0
        %3952 = vmatmul.mubr.bf16.gmra.mrb[0].mxu0 %v3914
        %v3953 = vpop.f32.mrb[0].mxu0
        %v3954 = vadd.f32 0.0, %v3953
        %v3955 = vpop.f32.mrb[0].mxu0
        %v3956 = vpop.f32.mrb[0].mxu0
        %v3957 = vpop.f32.mrb[0].mxu0
        %3958 = vdwg.mxu0
        %v3959 = vsel %vm1216, %v3810, -inf
        %3960 = vmax.xlane.f32.xlu0 %v3959
        %v3961 = vpop.xlane.xlu0 %3960
        %v3962 = vsel %vm1216, %v3858, -inf
        %3963 = vmax.xlane.f32.xlu0 %v3962
        %v3964 = vpop.xlane.xlu0 %3963
        %v3965 = vsel %vm1216, %v3906, -inf
        %3966 = vmax.xlane.f32.xlu0 %v3965
        %v3967 = vpop.xlane.xlu0 %3966
        %v3968 = vsel %vm1216, %v3954, -inf
        %3969 = vmax.xlane.f32.xlu0 %v3968
        %v3970 = vpop.xlane.xlu0 %3969
        %v3971 = vsub.f32 %v3810, %v3961
        %v3972 = vsub.f32 %v3858, %v3964
        %v3973 = vsub.f32 %v3906, %v3967
        %v3974 = vsub.f32 %v3954, %v3970
        %v3975 = vmul.f32 %v3971, 1.442695
        %v3976 = vpow.pop %v3975
        %v3977 = vmul.f32 %v3972, 1.442695
        %v3978 = vpow.pop %v3977
        %v3979 = vmul.f32 %v3973, 1.442695
        %v3980 = vpow.pop %v3979
        %v3981 = vmul.f32 %v3974, 1.442695
        %v3982 = vpow.pop %v3981
        %v3983 = vsel %vm1216, %v3976, 0.0
        %3984 = vadd.xlane.f32.xlu0 %v3983
        %v3985 = vpop.xlane.xlu0 %3984
        %v3986 = vsel %vm1216, %v3978, 0.0
        %3987 = vadd.xlane.f32.xlu0 %v3986
        %v3988 = vpop.xlane.xlu0 %3987
        %v3989 = vsel %vm1216, %v3980, 0.0
        %3990 = vadd.xlane.f32.xlu0 %v3989
        %v3991 = vpop.xlane.xlu0 %3990
        %v3992 = vsel %vm1216, %v3982, 0.0
        %3993 = vadd.xlane.f32.xlu0 %v3992
        %v3994 = vpop.xlane.xlu0 %3993
        %v3995 = vrcp.pop %v3985
        %v3996 = vrcp.pop %v3988
        %v3997 = vrcp.pop %v3991
        %v3998 = vrcp.pop %v3994
        %v3999 = vmul.f32 %v3976, %v3995
        %v4000 = vmul.f32 %v3978, %v3996
        %v4001 = vmul.f32 %v3980, %v3997
        %v4002 = vmul.f32 %v3982, %v3998
        %v4003 = vpack.c.bf16 %v3999, %v3999
        %v4004 = vpack.c.bf16 %v4000, %v4000
        %v4005 = vpack.c.bf16 %v4001, %v4001
        %v4006 = vpack.c.bf16 %v4002, %v4002
        %v4008 = vsel %vm1265, %v4003, 0
        %v4011 = vsel %vm1269, %v3763, 0
        %4013 = vmatprep.subr.bf16.mxu0 0
        %4014 = vmatpush1.bf16.msra.mxu0 %v4011
        %4015 = vmatprep.subr.bf16.mxu0 0
        %4016 = vmatpush1.bf16.msra.mxu0 0
        %4017 = vmatprep.subr.bf16.mxu0 0
        %4018 = vmatpush1.bf16.msra.mxu0 0
        %4019 = vmatprep.subr.bf16.mxu0 0
        %4020 = vmatpush1.bf16.msra.mxu0 0
        %4021 = vmatprep.subr.bf16.mxu0 0
        %4022 = vmatpush1.bf16.msra.mxu0 0
        %4023 = vmatprep.subr.bf16.mxu0 0
        %4024 = vmatpush1.bf16.msra.mxu0 0
        %4025 = vmatprep.subr.bf16.mxu0 0
        %4026 = vmatpush1.bf16.msra.mxu0 0
        %4027 = vmatprep.subr.bf16.mxu0 0
        %4028 = vmatpush1.bf16.msra.mxu0 0
        %4029 = vmatprep.subr.bf16.mxu0 0
        %4030 = vmatpush1.bf16.msra.mxu0 0
        %4031 = vmatprep.subr.bf16.mxu0 0
        %4032 = vmatpush1.bf16.msra.mxu0 0
        %4033 = vmatprep.subr.bf16.mxu0 0
        %4034 = vmatpush1.bf16.msra.mxu0 0
        %4035 = vmatprep.subr.bf16.mxu0 0
        %4036 = vmatpush1.bf16.msra.mxu0 0
        %4037 = vmatprep.subr.bf16.mxu0 0
        %4038 = vmatpush1.bf16.msra.mxu0 0
        %4039 = vmatprep.subr.bf16.mxu0 0
        %4040 = vmatpush1.bf16.msra.mxu0 0
        %4041 = vmatprep.subr.bf16.mxu0 0
        %4042 = vmatpush1.bf16.msra.mxu0 0
        %4043 = vmatprep.subr.bf16.mxu0 0
        %4044 = vmatpush1.bf16.msra.mxu0 0
        %4045 = vmatprep.mubr.bf16.mxu0 0
        %4046 = vmatmul.mubr.bf16.gmra.mrb[0].mxu0 %v4008
        %v4047 = vpop.f32.mrb[0].mxu0
        %v4048 = vadd.f32 0.0, %v4047
        %v4049 = vpop.f32.mrb[0].mxu0
        %v4050 = vpop.f32.mrb[0].mxu0
        %v4051 = vpop.f32.mrb[0].mxu0
        %4052 = vdwg.mxu0
        %v4054 = vsel %vm1265, %v4004, 0
        %v4057 = vsel %vm1269, %v3764, 0
        %4059 = vmatprep.subr.bf16.mxu0 0
        %4060 = vmatpush1.bf16.msra.mxu0 %v4057
        %4061 = vmatprep.subr.bf16.mxu0 0
        %4062 = vmatpush1.bf16.msra.mxu0 0
        %4063 = vmatprep.subr.bf16.mxu0 0
        %4064 = vmatpush1.bf16.msra.mxu0 0
        %4065 = vmatprep.subr.bf16.mxu0 0
        %4066 = vmatpush1.bf16.msra.mxu0 0
        %4067 = vmatprep.subr.bf16.mxu0 0
        %4068 = vmatpush1.bf16.msra.mxu0 0
        %4069 = vmatprep.subr.bf16.mxu0 0
        %4070 = vmatpush1.bf16.msra.mxu0 0
        %4071 = vmatprep.subr.bf16.mxu0 0
        %4072 = vmatpush1.bf16.msra.mxu0 0
        %4073 = vmatprep.subr.bf16.mxu0 0
        %4074 = vmatpush1.bf16.msra.mxu0 0
        %4075 = vmatprep.subr.bf16.mxu0 0
        %4076 = vmatpush1.bf16.msra.mxu0 0
        %4077 = vmatprep.subr.bf16.mxu0 0
        %4078 = vmatpush1.bf16.msra.mxu0 0
        %4079 = vmatprep.subr.bf16.mxu0 0
        %4080 = vmatpush1.bf16.msra.mxu0 0
        %4081 = vmatprep.subr.bf16.mxu0 0
        %4082 = vmatpush1.bf16.msra.mxu0 0
        %4083 = vmatprep.subr.bf16.mxu0 0
        %4084 = vmatpush1.bf16.msra.mxu0 0
        %4085 = vmatprep.subr.bf16.mxu0 0
        %4086 = vmatpush1.bf16.msra.mxu0 0
        %4087 = vmatprep.subr.bf16.mxu0 0
        %4088 = vmatpush1.bf16.msra.mxu0 0
        %4089 = vmatprep.subr.bf16.mxu0 0
        %4090 = vmatpush1.bf16.msra.mxu0 0
        %4091 = vmatprep.mubr.bf16.mxu0 0
        %4092 = vmatmul.mubr.bf16.gmra.mrb[0].mxu0 %v4054
        %v4093 = vpop.f32.mrb[0].mxu0
        %v4094 = vadd.f32 0.0, %v4093
        %v4095 = vpop.f32.mrb[0].mxu0
        %v4096 = vpop.f32.mrb[0].mxu0
        %v4097 = vpop.f32.mrb[0].mxu0
        %4098 = vdwg.mxu0
        %v4100 = vsel %vm1265, %v4005, 0
        %v4103 = vsel %vm1269, %v3765, 0
        %4105 = vmatprep.subr.bf16.mxu0 0
        %4106 = vmatpush1.bf16.msra.mxu0 %v4103
        %4107 = vmatprep.subr.bf16.mxu0 0
        %4108 = vmatpush1.bf16.msra.mxu0 0
        %4109 = vmatprep.subr.bf16.mxu0 0
        %4110 = vmatpush1.bf16.msra.mxu0 0
        %4111 = vmatprep.subr.bf16.mxu0 0
        %4112 = vmatpush1.bf16.msra.mxu0 0
        %4113 = vmatprep.subr.bf16.mxu0 0
        %4114 = vmatpush1.bf16.msra.mxu0 0
        %4115 = vmatprep.subr.bf16.mxu0 0
        %4116 = vmatpush1.bf16.msra.mxu0 0
        %4117 = vmatprep.subr.bf16.mxu0 0
        %4118 = vmatpush1.bf16.msra.mxu0 0
        %4119 = vmatprep.subr.bf16.mxu0 0
        %4120 = vmatpush1.bf16.msra.mxu0 0
        %4121 = vmatprep.subr.bf16.mxu0 0
        %4122 = vmatpush1.bf16.msra.mxu0 0
        %4123 = vmatprep.subr.bf16.mxu0 0
        %4124 = vmatpush1.bf16.msra.mxu0 0
        %4125 = vmatprep.subr.bf16.mxu0 0
        %4126 = vmatpush1.bf16.msra.mxu0 0
        %4127 = vmatprep.subr.bf16.mxu0 0
        %4128 = vmatpush1.bf16.msra.mxu0 0
        %4129 = vmatprep.subr.bf16.mxu0 0
        %4130 = vmatpush1.bf16.msra.mxu0 0
        %4131 = vmatprep.subr.bf16.mxu0 0
        %4132 = vmatpush1.bf16.msra.mxu0 0
        %4133 = vmatprep.subr.bf16.mxu0 0
        %4134 = vmatpush1.bf16.msra.mxu0 0
        %4135 = vmatprep.subr.bf16.mxu0 0
        %4136 = vmatpush1.bf16.msra.mxu0 0
        %4137 = vmatprep.mubr.bf16.mxu0 0
        %4138 = vmatmul.mubr.bf16.gmra.mrb[0].mxu0 %v4100
        %v4139 = vpop.f32.mrb[0].mxu0
        %v4140 = vadd.f32 0.0, %v4139
        %v4141 = vpop.f32.mrb[0].mxu0
        %v4142 = vpop.f32.mrb[0].mxu0
        %v4143 = vpop.f32.mrb[0].mxu0
        %4144 = vdwg.mxu0
        %v4146 = vsel %vm1265, %v4006, 0
        %v4149 = vsel %vm1269, %v3766, 0
        %4151 = vmatprep.subr.bf16.mxu0 0
        %4152 = vmatpush1.bf16.msra.mxu0 %v4149
        %4153 = vmatprep.subr.bf16.mxu0 0
        %4154 = vmatpush1.bf16.msra.mxu0 0
        %4155 = vmatprep.subr.bf16.mxu0 0
        %4156 = vmatpush1.bf16.msra.mxu0 0
        %4157 = vmatprep.subr.bf16.mxu0 0
        %4158 = vmatpush1.bf16.msra.mxu0 0
        %4159 = vmatprep.subr.bf16.mxu0 0
        %4160 = vmatpush1.bf16.msra.mxu0 0
        %4161 = vmatprep.subr.bf16.mxu0 0
        %4162 = vmatpush1.bf16.msra.mxu0 0
        %4163 = vmatprep.subr.bf16.mxu0 0
        %4164 = vmatpush1.bf16.msra.mxu0 0
        %4165 = vmatprep.subr.bf16.mxu0 0
        %4166 = vmatpush1.bf16.msra.mxu0 0
        %4167 = vmatprep.subr.bf16.mxu0 0
        %4168 = vmatpush1.bf16.msra.mxu0 0
        %4169 = vmatprep.subr.bf16.mxu0 0
        %4170 = vmatpush1.bf16.msra.mxu0 0
        %4171 = vmatprep.subr.bf16.mxu0 0
        %4172 = vmatpush1.bf16.msra.mxu0 0
        %4173 = vmatprep.subr.bf16.mxu0 0
        %4174 = vmatpush1.bf16.msra.mxu0 0
        %4175 = vmatprep.subr.bf16.mxu0 0
        %4176 = vmatpush1.bf16.msra.mxu0 0
        %4177 = vmatprep.subr.bf16.mxu0 0
        %4178 = vmatpush1.bf16.msra.mxu0 0
        %4179 = vmatprep.subr.bf16.mxu0 0
        %4180 = vmatpush1.bf16.msra.mxu0 0
        %4181 = vmatprep.subr.bf16.mxu0 0
        %4182 = vmatpush1.bf16.msra.mxu0 0
        %4183 = vmatprep.mubr.bf16.mxu0 0
        %4184 = vmatmul.mubr.bf16.gmra.mrb[0].mxu0 %v4146
        %v4185 = vpop.f32.mrb[0].mxu0
        %v4186 = vadd.f32 0.0, %v4185
        %v4187 = vpop.f32.mrb[0].mxu0
        %v4188 = vpop.f32.mrb[0].mxu0
        %v4189 = vpop.f32.mrb[0].mxu0
        %4190 = vdwg.mxu0
        %4191 = vrot.lane.b32.xlu0 %v958, 16
        %v4192 = vpop.permute.xlu0 %4191
        %4193 = vrot.lane.b32.xlu0 %v966, 16
        %v4194 = vpop.permute.xlu0 %4193
        %4195 = vrot.lane.b32.xlu0 %v974, 16
        %v4196 = vpop.permute.xlu0 %4195
        %4197 = vrot.lane.b32.xlu0 %v982, 16
        %v4198 = vpop.permute.xlu0 %4197
        %v4203 = vpack.c.bf16 %v4192, %v4192
        %v4204 = vpack.c.bf16 %v4194, %v4194
        %v4205 = vpack.c.bf16 %v4196, %v4196
        %v4206 = vpack.c.bf16 %v4198, %v4198
        %4207 = vrot.lane.b32.xlu0 %v998, 16
        %v4208 = vpop.permute.xlu0 %4207
        %4209 = vrot.lane.b32.xlu0 %v1006, 16
        %v4210 = vpop.permute.xlu0 %4209
        %4211 = vrot.lane.b32.xlu0 %v1014, 16
        %v4212 = vpop.permute.xlu0 %4211
        %4213 = vrot.lane.b32.xlu0 %v1022, 16
        %v4214 = vpop.permute.xlu0 %4213
        %v4219 = vpack.c.bf16 %v4208, %v4208
        %v4220 = vpack.c.bf16 %v4210, %v4210
        %v4221 = vpack.c.bf16 %v4212, %v4212
        %v4222 = vpack.c.bf16 %v4214, %v4214
        %4223 = vrot.lane.b32.xlu0 %v947, 16
        %v4224 = vpop.permute.xlu0 %4223
        %v4226 = vsel %vm1031, %v4224, 0
        %v4229 = vsel %vm1031, %v4203, 0
        %4231 = vmatprep.subr.bf16.mxu0 0
        %4232 = vmatpush1.bf16.xpose.msra.mxu0 %v4229
        %4233 = vmatprep.subr.bf16.mxu0 0
        %4234 = vmatpush1.bf16.xpose.msra.mxu0 0
        %4235 = vmatprep.subr.bf16.mxu0 0
        %4236 = vmatpush1.bf16.xpose.msra.mxu0 0
        %4237 = vmatprep.subr.bf16.mxu0 0
        %4238 = vmatpush1.bf16.xpose.msra.mxu0 0
        %4239 = vmatprep.subr.bf16.mxu0 0
        %4240 = vmatpush1.bf16.xpose.msra.mxu0 0
        %4241 = vmatprep.subr.bf16.mxu0 0
        %4242 = vmatpush1.bf16.xpose.msra.mxu0 0
        %4243 = vmatprep.subr.bf16.mxu0 0
        %4244 = vmatpush1.bf16.xpose.msra.mxu0 0
        %4245 = vmatprep.subr.bf16.mxu0 0
        %4246 = vmatpush1.bf16.xpose.msra.mxu0 0
        %4247 = vmatprep.subr.bf16.mxu0 0
        %4248 = vmatpush1.bf16.xpose.msra.mxu0 0
        %4249 = vmatprep.subr.bf16.mxu0 0
        %4250 = vmatpush1.bf16.xpose.msra.mxu0 0
        %4251 = vmatprep.subr.bf16.mxu0 0
        %4252 = vmatpush1.bf16.xpose.msra.mxu0 0
        %4253 = vmatprep.subr.bf16.mxu0 0
        %4254 = vmatpush1.bf16.xpose.msra.mxu0 0
        %4255 = vmatprep.subr.bf16.mxu0 0
        %4256 = vmatpush1.bf16.xpose.msra.mxu0 0
        %4257 = vmatprep.subr.bf16.mxu0 0
        %4258 = vmatpush1.bf16.xpose.msra.mxu0 0
        %4259 = vmatprep.subr.bf16.mxu0 0
        %4260 = vmatpush1.bf16.xpose.msra.mxu0 0
        %4261 = vmatprep.subr.bf16.mxu0 0
        %4262 = vmatpush1.bf16.xpose.msra.mxu0 0
        %4263 = vmatprep.mubr.bf16.mxu0 0
        %4264 = vmatmul.mubr.bf16.gmra.mrb[0].mxu0 %v4226
        %v4265 = vpop.f32.mrb[0].mxu0
        %v4266 = vadd.f32 0.0, %v4265
        %v4267 = vpop.f32.mrb[0].mxu0
        %v4268 = vpop.f32.mrb[0].mxu0
        %v4269 = vpop.f32.mrb[0].mxu0
        %4270 = vdwg.mxu0
        %4271 = vrot.lane.b32.xlu0 %v948, 16
        %v4272 = vpop.permute.xlu0 %4271
        %v4274 = vsel %vm1031, %v4272, 0
        %v4277 = vsel %vm1031, %v4204, 0
        %4279 = vmatprep.subr.bf16.mxu0 0
        %4280 = vmatpush1.bf16.xpose.msra.mxu0 %v4277
        %4281 = vmatprep.subr.bf16.mxu0 0
        %4282 = vmatpush1.bf16.xpose.msra.mxu0 0
        %4283 = vmatprep.subr.bf16.mxu0 0
        %4284 = vmatpush1.bf16.xpose.msra.mxu0 0
        %4285 = vmatprep.subr.bf16.mxu0 0
        %4286 = vmatpush1.bf16.xpose.msra.mxu0 0
        %4287 = vmatprep.subr.bf16.mxu0 0
        %4288 = vmatpush1.bf16.xpose.msra.mxu0 0
        %4289 = vmatprep.subr.bf16.mxu0 0
        %4290 = vmatpush1.bf16.xpose.msra.mxu0 0
        %4291 = vmatprep.subr.bf16.mxu0 0
        %4292 = vmatpush1.bf16.xpose.msra.mxu0 0
        %4293 = vmatprep.subr.bf16.mxu0 0
        %4294 = vmatpush1.bf16.xpose.msra.mxu0 0
        %4295 = vmatprep.subr.bf16.mxu0 0
        %4296 = vmatpush1.bf16.xpose.msra.mxu0 0
        %4297 = vmatprep.subr.bf16.mxu0 0
        %4298 = vmatpush1.bf16.xpose.msra.mxu0 0
        %4299 = vmatprep.subr.bf16.mxu0 0
        %4300 = vmatpush1.bf16.xpose.msra.mxu0 0
        %4301 = vmatprep.subr.bf16.mxu0 0
        %4302 = vmatpush1.bf16.xpose.msra.mxu0 0
        %4303 = vmatprep.subr.bf16.mxu0 0
        %4304 = vmatpush1.bf16.xpose.msra.mxu0 0
        %4305 = vmatprep.subr.bf16.mxu0 0
        %4306 = vmatpush1.bf16.xpose.msra.mxu0 0
        %4307 = vmatprep.subr.bf16.mxu0 0
        %4308 = vmatpush1.bf16.xpose.msra.mxu0 0
        %4309 = vmatprep.subr.bf16.mxu0 0
        %4310 = vmatpush1.bf16.xpose.msra.mxu0 0
        %4311 = vmatprep.mubr.bf16.mxu0 0
        %4312 = vmatmul.mubr.bf16.gmra.mrb[0].mxu0 %v4274
        %v4313 = vpop.f32.mrb[0].mxu0
        %v4314 = vadd.f32 0.0, %v4313
        %v4315 = vpop.f32.mrb[0].mxu0
        %v4316 = vpop.f32.mrb[0].mxu0
        %v4317 = vpop.f32.mrb[0].mxu0
        %4318 = vdwg.mxu0
        %4319 = vrot.lane.b32.xlu0 %v949, 16
        %v4320 = vpop.permute.xlu0 %4319
        %v4322 = vsel %vm1031, %v4320, 0
        %v4325 = vsel %vm1031, %v4205, 0
        %4327 = vmatprep.subr.bf16.mxu0 0
        %4328 = vmatpush1.bf16.xpose.msra.mxu0 %v4325
        %4329 = vmatprep.subr.bf16.mxu0 0
        %4330 = vmatpush1.bf16.xpose.msra.mxu0 0
        %4331 = vmatprep.subr.bf16.mxu0 0
        %4332 = vmatpush1.bf16.xpose.msra.mxu0 0
        %4333 = vmatprep.subr.bf16.mxu0 0
        %4334 = vmatpush1.bf16.xpose.msra.mxu0 0
        %4335 = vmatprep.subr.bf16.mxu0 0
        %4336 = vmatpush1.bf16.xpose.msra.mxu0 0
        %4337 = vmatprep.subr.bf16.mxu0 0
        %4338 = vmatpush1.bf16.xpose.msra.mxu0 0
        %4339 = vmatprep.subr.bf16.mxu0 0
        %4340 = vmatpush1.bf16.xpose.msra.mxu0 0
        %4341 = vmatprep.subr.bf16.mxu0 0
        %4342 = vmatpush1.bf16.xpose.msra.mxu0 0
        %4343 = vmatprep.subr.bf16.mxu0 0
        %4344 = vmatpush1.bf16.xpose.msra.mxu0 0
        %4345 = vmatprep.subr.bf16.mxu0 0
        %4346 = vmatpush1.bf16.xpose.msra.mxu0 0
        %4347 = vmatprep.subr.bf16.mxu0 0
        %4348 = vmatpush1.bf16.xpose.msra.mxu0 0
        %4349 = vmatprep.subr.bf16.mxu0 0
        %4350 = vmatpush1.bf16.xpose.msra.mxu0 0
        %4351 = vmatprep.subr.bf16.mxu0 0
        %4352 = vmatpush1.bf16.xpose.msra.mxu0 0
        %4353 = vmatprep.subr.bf16.mxu0 0
        %4354 = vmatpush1.bf16.xpose.msra.mxu0 0
        %4355 = vmatprep.subr.bf16.mxu0 0
        %4356 = vmatpush1.bf16.xpose.msra.mxu0 0
        %4357 = vmatprep.subr.bf16.mxu0 0
        %4358 = vmatpush1.bf16.xpose.msra.mxu0 0
        %4359 = vmatprep.mubr.bf16.mxu0 0
        %4360 = vmatmul.mubr.bf16.gmra.mrb[0].mxu0 %v4322
        %v4361 = vpop.f32.mrb[0].mxu0
        %v4362 = vadd.f32 0.0, %v4361
        %v4363 = vpop.f32.mrb[0].mxu0
        %v4364 = vpop.f32.mrb[0].mxu0
        %v4365 = vpop.f32.mrb[0].mxu0
        %4366 = vdwg.mxu0
        %4367 = vrot.lane.b32.xlu0 %v950, 16
        %v4368 = vpop.permute.xlu0 %4367
        %v4370 = vsel %vm1031, %v4368, 0
        %v4373 = vsel %vm1031, %v4206, 0
        %4375 = vmatprep.subr.bf16.mxu0 0
        %4376 = vmatpush1.bf16.xpose.msra.mxu0 %v4373
        %4377 = vmatprep.subr.bf16.mxu0 0
        %4378 = vmatpush1.bf16.xpose.msra.mxu0 0
        %4379 = vmatprep.subr.bf16.mxu0 0
        %4380 = vmatpush1.bf16.xpose.msra.mxu0 0
        %4381 = vmatprep.subr.bf16.mxu0 0
        %4382 = vmatpush1.bf16.xpose.msra.mxu0 0
        %4383 = vmatprep.subr.bf16.mxu0 0
        %4384 = vmatpush1.bf16.xpose.msra.mxu0 0
        %4385 = vmatprep.subr.bf16.mxu0 0
        %4386 = vmatpush1.bf16.xpose.msra.mxu0 0
        %4387 = vmatprep.subr.bf16.mxu0 0
        %4388 = vmatpush1.bf16.xpose.msra.mxu0 0
        %4389 = vmatprep.subr.bf16.mxu0 0
        %4390 = vmatpush1.bf16.xpose.msra.mxu0 0
        %4391 = vmatprep.subr.bf16.mxu0 0
        %4392 = vmatpush1.bf16.xpose.msra.mxu0 0
        %4393 = vmatprep.subr.bf16.mxu0 0
        %4394 = vmatpush1.bf16.xpose.msra.mxu0 0
        %4395 = vmatprep.subr.bf16.mxu0 0
        %4396 = vmatpush1.bf16.xpose.msra.mxu0 0
        %4397 = vmatprep.subr.bf16.mxu0 0
        %4398 = vmatpush1.bf16.xpose.msra.mxu0 0
        %4399 = vmatprep.subr.bf16.mxu0 0
        %4400 = vmatpush1.bf16.xpose.msra.mxu0 0
        %4401 = vmatprep.subr.bf16.mxu0 0
        %4402 = vmatpush1.bf16.xpose.msra.mxu0 0
        %4403 = vmatprep.subr.bf16.mxu0 0
        %4404 = vmatpush1.bf16.xpose.msra.mxu0 0
        %4405 = vmatprep.subr.bf16.mxu0 0
        %4406 = vmatpush1.bf16.xpose.msra.mxu0 0
        %4407 = vmatprep.mubr.bf16.mxu0 0
        %4408 = vmatmul.mubr.bf16.gmra.mrb[0].mxu0 %v4370
        %v4409 = vpop.f32.mrb[0].mxu0
        %v4410 = vadd.f32 0.0, %v4409
        %v4411 = vpop.f32.mrb[0].mxu0
        %v4412 = vpop.f32.mrb[0].mxu0
        %v4413 = vpop.f32.mrb[0].mxu0
        %4414 = vdwg.mxu0
        %v4415 = vsel %vm1216, %v4266, -inf
        %4416 = vmax.xlane.f32.xlu0 %v4415
        %v4417 = vpop.xlane.xlu0 %4416
        %v4418 = vsel %vm1216, %v4314, -inf
        %4419 = vmax.xlane.f32.xlu0 %v4418
        %v4420 = vpop.xlane.xlu0 %4419
        %v4421 = vsel %vm1216, %v4362, -inf
        %4422 = vmax.xlane.f32.xlu0 %v4421
        %v4423 = vpop.xlane.xlu0 %4422
        %v4424 = vsel %vm1216, %v4410, -inf
        %4425 = vmax.xlane.f32.xlu0 %v4424
        %v4426 = vpop.xlane.xlu0 %4425
        %v4427 = vsub.f32 %v4266, %v4417
        %v4428 = vsub.f32 %v4314, %v4420
        %v4429 = vsub.f32 %v4362, %v4423
        %v4430 = vsub.f32 %v4410, %v4426
        %v4431 = vmul.f32 %v4427, 1.442695
        %v4432 = vpow.pop %v4431
        %v4433 = vmul.f32 %v4428, 1.442695
        %v4434 = vpow.pop %v4433
        %v4435 = vmul.f32 %v4429, 1.442695
        %v4436 = vpow.pop %v4435
        %v4437 = vmul.f32 %v4430, 1.442695
        %v4438 = vpow.pop %v4437
        %v4439 = vsel %vm1216, %v4432, 0.0
        %4440 = vadd.xlane.f32.xlu0 %v4439
        %v4441 = vpop.xlane.xlu0 %4440
        %v4442 = vsel %vm1216, %v4434, 0.0
        %4443 = vadd.xlane.f32.xlu0 %v4442
        %v4444 = vpop.xlane.xlu0 %4443
        %v4445 = vsel %vm1216, %v4436, 0.0
        %4446 = vadd.xlane.f32.xlu0 %v4445
        %v4447 = vpop.xlane.xlu0 %4446
        %v4448 = vsel %vm1216, %v4438, 0.0
        %4449 = vadd.xlane.f32.xlu0 %v4448
        %v4450 = vpop.xlane.xlu0 %4449
        %v4451 = vrcp.pop %v4441
        %v4452 = vrcp.pop %v4444
        %v4453 = vrcp.pop %v4447
        %v4454 = vrcp.pop %v4450
        %v4455 = vmul.f32 %v4432, %v4451
        %v4456 = vmul.f32 %v4434, %v4452
        %v4457 = vmul.f32 %v4436, %v4453
        %v4458 = vmul.f32 %v4438, %v4454
        %v4459 = vpack.c.bf16 %v4455, %v4455
        %v4460 = vpack.c.bf16 %v4456, %v4456
        %v4461 = vpack.c.bf16 %v4457, %v4457
        %v4462 = vpack.c.bf16 %v4458, %v4458
        %v4464 = vsel %vm1265, %v4459, 0
        %v4467 = vsel %vm1269, %v4219, 0
        %4469 = vmatprep.subr.bf16.mxu0 0
        %4470 = vmatpush1.bf16.msra.mxu0 %v4467
        %4471 = vmatprep.subr.bf16.mxu0 0
        %4472 = vmatpush1.bf16.msra.mxu0 0
        %4473 = vmatprep.subr.bf16.mxu0 0
        %4474 = vmatpush1.bf16.msra.mxu0 0
        %4475 = vmatprep.subr.bf16.mxu0 0
        %4476 = vmatpush1.bf16.msra.mxu0 0
        %4477 = vmatprep.subr.bf16.mxu0 0
        %4478 = vmatpush1.bf16.msra.mxu0 0
        %4479 = vmatprep.subr.bf16.mxu0 0
        %4480 = vmatpush1.bf16.msra.mxu0 0
        %4481 = vmatprep.subr.bf16.mxu0 0
        %4482 = vmatpush1.bf16.msra.mxu0 0
        %4483 = vmatprep.subr.bf16.mxu0 0
        %4484 = vmatpush1.bf16.msra.mxu0 0
        %4485 = vmatprep.subr.bf16.mxu0 0
        %4486 = vmatpush1.bf16.msra.mxu0 0
        %4487 = vmatprep.subr.bf16.mxu0 0
        %4488 = vmatpush1.bf16.msra.mxu0 0
        %4489 = vmatprep.subr.bf16.mxu0 0
        %4490 = vmatpush1.bf16.msra.mxu0 0
        %4491 = vmatprep.subr.bf16.mxu0 0
        %4492 = vmatpush1.bf16.msra.mxu0 0
        %4493 = vmatprep.subr.bf16.mxu0 0
        %4494 = vmatpush1.bf16.msra.mxu0 0
        %4495 = vmatprep.subr.bf16.mxu0 0
        %4496 = vmatpush1.bf16.msra.mxu0 0
        %4497 = vmatprep.subr.bf16.mxu0 0
        %4498 = vmatpush1.bf16.msra.mxu0 0
        %4499 = vmatprep.subr.bf16.mxu0 0
        %4500 = vmatpush1.bf16.msra.mxu0 0
        %4501 = vmatprep.mubr.bf16.mxu0 0
        %4502 = vmatmul.mubr.bf16.gmra.mrb[0].mxu0 %v4464
        %v4503 = vpop.f32.mrb[0].mxu0
        %v4504 = vadd.f32 0.0, %v4503
        %v4505 = vpop.f32.mrb[0].mxu0
        %v4506 = vpop.f32.mrb[0].mxu0
        %v4507 = vpop.f32.mrb[0].mxu0
        %4508 = vdwg.mxu0
        %v4510 = vsel %vm1265, %v4460, 0
        %v4513 = vsel %vm1269, %v4220, 0
        %4515 = vmatprep.subr.bf16.mxu0 0
        %4516 = vmatpush1.bf16.msra.mxu0 %v4513
        %4517 = vmatprep.subr.bf16.mxu0 0
        %4518 = vmatpush1.bf16.msra.mxu0 0
        %4519 = vmatprep.subr.bf16.mxu0 0
        %4520 = vmatpush1.bf16.msra.mxu0 0
        %4521 = vmatprep.subr.bf16.mxu0 0
        %4522 = vmatpush1.bf16.msra.mxu0 0
        %4523 = vmatprep.subr.bf16.mxu0 0
        %4524 = vmatpush1.bf16.msra.mxu0 0
        %4525 = vmatprep.subr.bf16.mxu0 0
        %4526 = vmatpush1.bf16.msra.mxu0 0
        %4527 = vmatprep.subr.bf16.mxu0 0
        %4528 = vmatpush1.bf16.msra.mxu0 0
        %4529 = vmatprep.subr.bf16.mxu0 0
        %4530 = vmatpush1.bf16.msra.mxu0 0
        %4531 = vmatprep.subr.bf16.mxu0 0
        %4532 = vmatpush1.bf16.msra.mxu0 0
        %4533 = vmatprep.subr.bf16.mxu0 0
        %4534 = vmatpush1.bf16.msra.mxu0 0
        %4535 = vmatprep.subr.bf16.mxu0 0
        %4536 = vmatpush1.bf16.msra.mxu0 0
        %4537 = vmatprep.subr.bf16.mxu0 0
        %4538 = vmatpush1.bf16.msra.mxu0 0
        %4539 = vmatprep.subr.bf16.mxu0 0
        %4540 = vmatpush1.bf16.msra.mxu0 0
        %4541 = vmatprep.subr.bf16.mxu0 0
        %4542 = vmatpush1.bf16.msra.mxu0 0
        %4543 = vmatprep.subr.bf16.mxu0 0
        %4544 = vmatpush1.bf16.msra.mxu0 0
        %4545 = vmatprep.subr.bf16.mxu0 0
        %4546 = vmatpush1.bf16.msra.mxu0 0
        %4547 = vmatprep.mubr.bf16.mxu0 0
        %4548 = vmatmul.mubr.bf16.gmra.mrb[0].mxu0 %v4510
        %v4549 = vpop.f32.mrb[0].mxu0
        %v4550 = vadd.f32 0.0, %v4549
        %v4551 = vpop.f32.mrb[0].mxu0
        %v4552 = vpop.f32.mrb[0].mxu0
        %v4553 = vpop.f32.mrb[0].mxu0
        %4554 = vdwg.mxu0
        %v4556 = vsel %vm1265, %v4461, 0
        %v4559 = vsel %vm1269, %v4221, 0
        %4561 = vmatprep.subr.bf16.mxu0 0
        %4562 = vmatpush1.bf16.msra.mxu0 %v4559
        %4563 = vmatprep.subr.bf16.mxu0 0
        %4564 = vmatpush1.bf16.msra.mxu0 0
        %4565 = vmatprep.subr.bf16.mxu0 0
        %4566 = vmatpush1.bf16.msra.mxu0 0
        %4567 = vmatprep.subr.bf16.mxu0 0
        %4568 = vmatpush1.bf16.msra.mxu0 0
        %4569 = vmatprep.subr.bf16.mxu0 0
        %4570 = vmatpush1.bf16.msra.mxu0 0
        %4571 = vmatprep.subr.bf16.mxu0 0
        %4572 = vmatpush1.bf16.msra.mxu0 0
        %4573 = vmatprep.subr.bf16.mxu0 0
        %4574 = vmatpush1.bf16.msra.mxu0 0
        %4575 = vmatprep.subr.bf16.mxu0 0
        %4576 = vmatpush1.bf16.msra.mxu0 0
        %4577 = vmatprep.subr.bf16.mxu0 0
        %4578 = vmatpush1.bf16.msra.mxu0 0
        %4579 = vmatprep.subr.bf16.mxu0 0
        %4580 = vmatpush1.bf16.msra.mxu0 0
        %4581 = vmatprep.subr.bf16.mxu0 0
        %4582 = vmatpush1.bf16.msra.mxu0 0
        %4583 = vmatprep.subr.bf16.mxu0 0
        %4584 = vmatpush1.bf16.msra.mxu0 0
        %4585 = vmatprep.subr.bf16.mxu0 0
        %4586 = vmatpush1.bf16.msra.mxu0 0
        %4587 = vmatprep.subr.bf16.mxu0 0
        %4588 = vmatpush1.bf16.msra.mxu0 0
        %4589 = vmatprep.subr.bf16.mxu0 0
        %4590 = vmatpush1.bf16.msra.mxu0 0
        %4591 = vmatprep.subr.bf16.mxu0 0
        %4592 = vmatpush1.bf16.msra.mxu0 0
        %4593 = vmatprep.mubr.bf16.mxu0 0
        %4594 = vmatmul.mubr.bf16.gmra.mrb[0].mxu0 %v4556
        %v4595 = vpop.f32.mrb[0].mxu0
        %v4596 = vadd.f32 0.0, %v4595
        %v4597 = vpop.f32.mrb[0].mxu0
        %v4598 = vpop.f32.mrb[0].mxu0
        %v4599 = vpop.f32.mrb[0].mxu0
        %4600 = vdwg.mxu0
        %v4602 = vsel %vm1265, %v4462, 0
        %v4605 = vsel %vm1269, %v4222, 0
        %4607 = vmatprep.subr.bf16.mxu0 0
        %4608 = vmatpush1.bf16.msra.mxu0 %v4605
        %4609 = vmatprep.subr.bf16.mxu0 0
        %4610 = vmatpush1.bf16.msra.mxu0 0
        %4611 = vmatprep.subr.bf16.mxu0 0
        %4612 = vmatpush1.bf16.msra.mxu0 0
        %4613 = vmatprep.subr.bf16.mxu0 0
        %4614 = vmatpush1.bf16.msra.mxu0 0
        %4615 = vmatprep.subr.bf16.mxu0 0
        %4616 = vmatpush1.bf16.msra.mxu0 0
        %4617 = vmatprep.subr.bf16.mxu0 0
        %4618 = vmatpush1.bf16.msra.mxu0 0
        %4619 = vmatprep.subr.bf16.mxu0 0
        %4620 = vmatpush1.bf16.msra.mxu0 0
        %4621 = vmatprep.subr.bf16.mxu0 0
        %4622 = vmatpush1.bf16.msra.mxu0 0
        %4623 = vmatprep.subr.bf16.mxu0 0
        %4624 = vmatpush1.bf16.msra.mxu0 0
        %4625 = vmatprep.subr.bf16.mxu0 0
        %4626 = vmatpush1.bf16.msra.mxu0 0
        %4627 = vmatprep.subr.bf16.mxu0 0
        %4628 = vmatpush1.bf16.msra.mxu0 0
        %4629 = vmatprep.subr.bf16.mxu0 0
        %4630 = vmatpush1.bf16.msra.mxu0 0
        %4631 = vmatprep.subr.bf16.mxu0 0
        %4632 = vmatpush1.bf16.msra.mxu0 0
        %4633 = vmatprep.subr.bf16.mxu0 0
        %4634 = vmatpush1.bf16.msra.mxu0 0
        %4635 = vmatprep.subr.bf16.mxu0 0
        %4636 = vmatpush1.bf16.msra.mxu0 0
        %4637 = vmatprep.subr.bf16.mxu0 0
        %4638 = vmatpush1.bf16.msra.mxu0 0
        %4639 = vmatprep.mubr.bf16.mxu0 0
        %4640 = vmatmul.mubr.bf16.gmra.mrb[0].mxu0 %v4602
        %v4641 = vpop.f32.mrb[0].mxu0
        %v4642 = vadd.f32 0.0, %v4641
        %v4643 = vpop.f32.mrb[0].mxu0
        %v4644 = vpop.f32.mrb[0].mxu0
        %v4645 = vpop.f32.mrb[0].mxu0
        %4646 = vdwg.mxu0
        %4651 = vrot.lane.b32.xlu0 %v1768, 16
        %v4652 = vpop.permute.xlu0 %4651
        %4653 = vrot.lane.b32.xlu0 %v1814, 16
        %v4654 = vpop.permute.xlu0 %4653
        %4655 = vrot.lane.b32.xlu0 %v1860, 16
        %v4656 = vpop.permute.xlu0 %4655
        %4657 = vrot.lane.b32.xlu0 %v1906, 16
        %v4658 = vpop.permute.xlu0 %4657
        %4667 = vrot.lane.b32.xlu0 %v2224, 32
        %v4668 = vpop.permute.xlu0 %4667
        %4669 = vrot.lane.b32.xlu0 %v2270, 32
        %v4670 = vpop.permute.xlu0 %4669
        %4671 = vrot.lane.b32.xlu0 %v2316, 32
        %v4672 = vpop.permute.xlu0 %4671
        %4673 = vrot.lane.b32.xlu0 %v2362, 32
        %v4674 = vpop.permute.xlu0 %4673
        %4683 = vrot.lane.b32.xlu0 %v2680, 48
        %v4684 = vpop.permute.xlu0 %4683
        %4685 = vrot.lane.b32.xlu0 %v2726, 48
        %v4686 = vpop.permute.xlu0 %4685
        %4687 = vrot.lane.b32.xlu0 %v2772, 48
        %v4688 = vpop.permute.xlu0 %4687
        %4689 = vrot.lane.b32.xlu0 %v2818, 48
        %v4690 = vpop.permute.xlu0 %4689
        %4699 = vrot.lane.b32.xlu0 %v3136, 64
        %v4700 = vpop.permute.xlu0 %4699
        %4701 = vrot.lane.b32.xlu0 %v3182, 64
        %v4702 = vpop.permute.xlu0 %4701
        %4703 = vrot.lane.b32.xlu0 %v3228, 64
        %v4704 = vpop.permute.xlu0 %4703
        %4705 = vrot.lane.b32.xlu0 %v3274, 64
        %v4706 = vpop.permute.xlu0 %4705
        %4715 = vrot.lane.b32.xlu0 %v3592, 80
        %v4716 = vpop.permute.xlu0 %4715
        %4717 = vrot.lane.b32.xlu0 %v3638, 80
        %v4718 = vpop.permute.xlu0 %4717
        %4719 = vrot.lane.b32.xlu0 %v3684, 80
        %v4720 = vpop.permute.xlu0 %4719
        %4721 = vrot.lane.b32.xlu0 %v3730, 80
        %v4722 = vpop.permute.xlu0 %4721
        %4731 = vrot.lane.b32.xlu0 %v4048, 96
        %v4732 = vpop.permute.xlu0 %4731
        %4733 = vrot.lane.b32.xlu0 %v4094, 96
        %v4734 = vpop.permute.xlu0 %4733
        %4735 = vrot.lane.b32.xlu0 %v4140, 96
        %v4736 = vpop.permute.xlu0 %4735
        %4737 = vrot.lane.b32.xlu0 %v4186, 96
        %v4738 = vpop.permute.xlu0 %4737
        %4747 = vrot.lane.b32.xlu0 %v4504, 112
        %v4748 = vpop.permute.xlu0 %4747
        %4749 = vrot.lane.b32.xlu0 %v4550, 112
        %v4750 = vpop.permute.xlu0 %4749
        %4751 = vrot.lane.b32.xlu0 %v4596, 112
        %v4752 = vpop.permute.xlu0 %4751
        %4753 = vrot.lane.b32.xlu0 %v4642, 112
        %v4754 = vpop.permute.xlu0 %4753
        %v4759 = vsel %vm1031, %v1308, %v4652
        %v4760 = vsel %vm1031, %v1354, %v4654
        %v4761 = vsel %vm1031, %v1400, %v4656
        %v4762 = vsel %vm1031, %v1446, %v4658
        %vm4763 = vcmask 261120
        %v4764 = vsel %vm4763, %v4759, %v4668
        %v4765 = vsel %vm4763, %v4760, %v4670
        %v4766 = vsel %vm4763, %v4761, %v4672
        %v4767 = vsel %vm4763, %v4762, %v4674
        %vm4768 = vcmask 392192
        %v4769 = vsel %vm4768, %v4764, %v4684
        %v4770 = vsel %vm4768, %v4765, %v4686
        %v4771 = vsel %vm4768, %v4766, %v4688
        %v4772 = vsel %vm4768, %v4767, %v4690
        %vm4773 = vcmask 523264
        %v4774 = vsel %vm4773, %v4769, %v4700
        %v4775 = vsel %vm4773, %v4770, %v4702
        %v4776 = vsel %vm4773, %v4771, %v4704
        %v4777 = vsel %vm4773, %v4772, %v4706
        %vm4778 = vcmask 654336
        %v4779 = vsel %vm4778, %v4774, %v4716
        %v4780 = vsel %vm4778, %v4775, %v4718
        %v4781 = vsel %vm4778, %v4776, %v4720
        %v4782 = vsel %vm4778, %v4777, %v4722
        %vm4783 = vcmask 785408
        %v4784 = vsel %vm4783, %v4779, %v4732
        %v4785 = vsel %vm4783, %v4780, %v4734
        %v4786 = vsel %vm4783, %v4781, %v4736
        %v4787 = vsel %vm4783, %v4782, %v4738
        %vm4788 = vcmask 916480
        %v4789 = vsel %vm4788, %v4784, %v4748
        %v4790 = vsel %vm4788, %v4785, %v4750
        %v4791 = vsel %vm4788, %v4786, %v4752
        %v4792 = vsel %vm4788, %v4787, %v4754
        %v4797 = vcombine.low %v4789, %v4790
        %v4798 = vcombine.low %v4791, %v4792
        %v4800 = vunpack.c.l.s4 1983009808
        %v4801 = vunpack.c.0.s8 %v4800
        %v4802 = vlaneseq
        %v4803 = vshrl.u32 %v4802, 7
        %v4804 = vsub.s32 %v4801, %v4803
        %v4805 = vrot.slane %v4797, %v4804
        %v4807 = vunpack.c.l.s4 1983009808
        %v4808 = vunpack.c.0.s8 %v4807
        %v4809 = vlaneseq
        %v4810 = vshrl.u32 %v4809, 7
        %v4811 = vsub.s32 %v4808, %v4810
        %v4812 = vrot.slane %v4798, %v4811
        %v4813 = vcombine.low %v4805, %v4812
        %v4815 = vpack.c.bf16 %v4813, %v4813
        %v4816 = vld [vmem:[#allocation8] sm:$0xf]
        %v4817 = vld [vmem:[#allocation8 + $0x4] sm:$0xf]
        %v4818 = vld [vmem:[#allocation8 + $0x8] sm:$0xf]
        %v4819 = vld [vmem:[#allocation8 + $0xc] sm:$0xf]
        %v4820 = vld [vmem:[#allocation8 + $0x10] sm:$0xf]
        %v4821 = vld [vmem:[#allocation8 + $0x14] sm:$0xf]
        %v4822 = vld [vmem:[#allocation8 + $0x18] sm:$0xf]
        %v4823 = vld [vmem:[#allocation8 + $0x1c] sm:$0xf]
        %v4824 = vld [vmem:[#allocation8 + $0x20] sm:$0xf]
        %v4825 = vld [vmem:[#allocation8 + $0x24] sm:$0xf]
        %v4826 = vld [vmem:[#allocation8 + $0x28] sm:$0xf]
        %v4827 = vld [vmem:[#allocation8 + $0x2c] sm:$0xf]
        %v4828 = vld [vmem:[#allocation8 + $0x30] sm:$0xf]
        %v4829 = vld [vmem:[#allocation8 + $0x34] sm:$0xf]
        %v4830 = vld [vmem:[#allocation8 + $0x38] sm:$0xf]
        %v4831 = vld [vmem:[#allocation8 + $0x3c] sm:$0xf]
        %v4832 = vld [vmem:[#allocation10] sm:$0x1]
        %v4834 = vlaneseq
        %v4835 = vshrl.u32 %v4834, 7
        %v4836 = vsub.s32 0, %v4835
        %v4837 = vrot.slane %v4832, %v4836
        %v4855 = vunpack.c.l.b16 %v4816
        %v4856 = vunpack.c.l.b16 %v4817
        %v4857 = vunpack.c.l.b16 %v4818
        %v4858 = vunpack.c.l.b16 %v4819
        %v4859 = vunpack.c.l.b16 %v4820
        %v4860 = vunpack.c.l.b16 %v4821
        %v4861 = vunpack.c.l.b16 %v4822
        %v4862 = vunpack.c.l.b16 %v4823
        %v4863 = vunpack.c.l.b16 %v4824
        %v4864 = vunpack.c.l.b16 %v4825
        %v4865 = vunpack.c.l.b16 %v4826
        %v4866 = vunpack.c.l.b16 %v4827
        %v4867 = vunpack.c.l.b16 %v4828
        %v4868 = vunpack.c.l.b16 %v4829
        %v4869 = vunpack.c.l.b16 %v4830
        %v4870 = vunpack.c.l.b16 %v4831
        %v4871 = vpack.c.b16 %v4856, %v4855
        %v4872 = vpack.c.b16 %v4858, %v4857
        %v4873 = vpack.c.b16 %v4860, %v4859
        %v4874 = vpack.c.b16 %v4862, %v4861
        %v4875 = vpack.c.b16 %v4864, %v4863
        %v4876 = vpack.c.b16 %v4866, %v4865
        %v4877 = vpack.c.b16 %v4868, %v4867
        %v4878 = vpack.c.b16 %v4870, %v4869
        %4887 = vmatprep.subr.bf16.mxu0 0
        %4888 = vmatpush1.bf16.msra.mxu0 %v4871
        %4889 = vmatprep.subr.bf16.mxu0 0
        %4890 = vmatpush1.bf16.msra.mxu0 %v4872
        %4891 = vmatprep.subr.bf16.mxu0 0
        %4892 = vmatpush1.bf16.msra.mxu0 %v4873
        %4893 = vmatprep.subr.bf16.mxu0 0
        %4894 = vmatpush1.bf16.msra.mxu0 %v4874
        %4895 = vmatprep.subr.bf16.mxu0 0
        %4896 = vmatpush1.bf16.msra.mxu0 %v4875
        %4897 = vmatprep.subr.bf16.mxu0 0
        %4898 = vmatpush1.bf16.msra.mxu0 %v4876
        %4899 = vmatprep.subr.bf16.mxu0 0
        %4900 = vmatpush1.bf16.msra.mxu0 %v4877
        %4901 = vmatprep.subr.bf16.mxu0 0
        %4902 = vmatpush1.bf16.msra.mxu0 %v4878
        %4903 = vmatprep.subr.bf16.mxu0 0
        %4904 = vmatpush1.bf16.msra.mxu0 0
        %4905 = vmatprep.subr.bf16.mxu0 0
        %4906 = vmatpush1.bf16.msra.mxu0 0
        %4907 = vmatprep.subr.bf16.mxu0 0
        %4908 = vmatpush1.bf16.msra.mxu0 0
        %4909 = vmatprep.subr.bf16.mxu0 0
        %4910 = vmatpush1.bf16.msra.mxu0 0
        %4911 = vmatprep.subr.bf16.mxu0 0
        %4912 = vmatpush1.bf16.msra.mxu0 0
        %4913 = vmatprep.subr.bf16.mxu0 0
        %4914 = vmatpush1.bf16.msra.mxu0 0
        %4915 = vmatprep.subr.bf16.mxu0 0
        %4916 = vmatpush1.bf16.msra.mxu0 0
        %4917 = vmatprep.subr.bf16.mxu0 0
        %4918 = vmatpush1.bf16.msra.mxu0 0
        %4919 = vmatprep.mubr.bf16.mxu0 0
        %4920 = vmatmul.mubr.bf16.gmra.mrb[0].mxu0 %v4815
        %v4921 = vpop.f32.mrb[0].mxu0
        %v4922 = vadd.f32 %v4837, %v4921
        %v4923 = vpop.f32.mrb[0].mxu0
        %v4924 = vpop.f32.mrb[0].mxu0
        %v4925 = vpop.f32.mrb[0].mxu0
        %4926 = vdwg.mxu0
        %v4928 = vcombine.high %v4922, %v4922
        %v4930 = vunpack.c.l.s4 1983009808
        %v4931 = vunpack.c.0.s8 %v4930
        %v4932 = vlaneseq
        %v4933 = vshrl.u32 %v4932, 7
        %v4934 = vsub.s32 %v4931, %v4933
        %v4935 = vrot.slane %v4922, %v4934
        %v4937 = vunpack.c.l.s4 1983009808
        %v4938 = vunpack.c.0.s8 %v4937
        %v4939 = vlaneseq
        %v4940 = vshrl.u32 %v4939, 7
        %v4941 = vsub.s32 %v4938, %v4940
        %v4942 = vrot.slane %v4928, %v4941
        %v4943 = vcombine.high %v4935, %v4935
        %v4944 = vcombine.high %v4942, %v4942
        %v4949 = vadd.f32 %v620, %v4935
        %v4950 = vadd.f32 %v621, %v4943
        %v4951 = vadd.f32 %v622, %v4942
        %v4952 = vadd.f32 %v623, %v4944
        %v4953 = vld [vmem:[#allocation11] sm:$0x1]
        %v4954 = vld [vmem:[#allocation13] sm:$0x1]
        %v4959 = vcombine.low %v4949, %v4950
        %v4960 = vcombine.low %v4951, %v4952
        %v4962 = vunpack.c.l.s4 1983009808
        %v4963 = vunpack.c.0.s8 %v4962
        %v4964 = vlaneseq
        %v4965 = vshrl.u32 %v4964, 7
        %v4966 = vsub.s32 %v4963, %v4965
        %v4967 = vrot.slane %v4959, %v4966
        %v4969 = vunpack.c.l.s4 1983009808
        %v4970 = vunpack.c.0.s8 %v4969
        %v4971 = vlaneseq
        %v4972 = vshrl.u32 %v4971, 7
        %v4973 = vsub.s32 %v4970, %v4972
        %v4974 = vrot.slane %v4960, %v4973
        %v4975 = vcombine.low %v4967, %v4974
        %4977 = vadd.xlane.f32.xlu0 %v4975
        %v4978 = vpop.xlane.xlu0 %4977
        %v4979 = vrcp.pop 128.0
        %v4980 = vmul.f32 %v4978, %v4979
        %v4983 = vunpack.c.l.s4 269488144
        %v4984 = vunpack.c.0.s8 %v4983
        %v4985 = vlaneseq
        %v4986 = vshrl.u32 %v4985, 7
        %v4987 = vsub.s32 %v4984, %v4986
        %v4988 = vrot.slane %v4980, %v4987
        %v4990 = vunpack.c.l.s4 842150450
        %v4991 = vunpack.c.0.s8 %v4990
        %v4992 = vlaneseq
        %v4993 = vshrl.u32 %v4992, 7
        %v4994 = vsub.s32 %v4991, %v4993
        %v4995 = vrot.slane %v4980, %v4994
        %v4997 = vunpack.c.l.s4 1414812756
        %v4998 = vunpack.c.0.s8 %v4997
        %v4999 = vlaneseq
        %v5000 = vshrl.u32 %v4999, 7
        %v5001 = vsub.s32 %v4998, %v5000
        %v5002 = vrot.slane %v4980, %v5001
        %v5004 = vunpack.c.l.s4 1987475062
        %v5005 = vunpack.c.0.s8 %v5004
        %v5006 = vlaneseq
        %v5007 = vshrl.u32 %v5006, 7
        %v5008 = vsub.s32 %v5005, %v5007
        %v5009 = vrot.slane %v4980, %v5008
        %v5014 = vsub.f32 %v4949, %v4988
        %v5015 = vsub.f32 %v4950, %v4995
        %v5016 = vsub.f32 %v4951, %v5002
        %v5017 = vsub.f32 %v4952, %v5009
        %v5018 = vmul.f32 %v5014, %v5014
        %v5019 = vmul.f32 %v5015, %v5015
        %v5020 = vmul.f32 %v5016, %v5016
        %v5021 = vmul.f32 %v5017, %v5017
        %v5026 = vcombine.low %v5018, %v5019
        %v5027 = vcombine.low %v5020, %v5021
        %v5029 = vunpack.c.l.s4 1983009808
        %v5030 = vunpack.c.0.s8 %v5029
        %v5031 = vlaneseq
        %v5032 = vshrl.u32 %v5031, 7
        %v5033 = vsub.s32 %v5030, %v5032
        %v5034 = vrot.slane %v5026, %v5033
        %v5036 = vunpack.c.l.s4 1983009808
        %v5037 = vunpack.c.0.s8 %v5036
        %v5038 = vlaneseq
        %v5039 = vshrl.u32 %v5038, 7
        %v5040 = vsub.s32 %v5037, %v5039
        %v5041 = vrot.slane %v5027, %v5040
        %v5042 = vcombine.low %v5034, %v5041
        %5044 = vadd.xlane.f32.xlu0 %v5042
        %v5045 = vpop.xlane.xlu0 %5044
        %v5046 = vmul.f32 %v5045, %v4979
        %v5047 = vadd.f32 %v5046, 1e-05
        %v5048 = vrsqrt.pop %v5047
        %v5051 = vunpack.c.l.s4 269488144
        %v5052 = vunpack.c.0.s8 %v5051
        %v5053 = vlaneseq
        %v5054 = vshrl.u32 %v5053, 7
        %v5055 = vsub.s32 %v5052, %v5054
        %v5056 = vrot.slane %v5048, %v5055
        %v5058 = vunpack.c.l.s4 842150450
        %v5059 = vunpack.c.0.s8 %v5058
        %v5060 = vlaneseq
        %v5061 = vshrl.u32 %v5060, 7
        %v5062 = vsub.s32 %v5059, %v5061
        %v5063 = vrot.slane %v5048, %v5062
        %v5065 = vunpack.c.l.s4 1414812756
        %v5066 = vunpack.c.0.s8 %v5065
        %v5067 = vlaneseq
        %v5068 = vshrl.u32 %v5067, 7
        %v5069 = vsub.s32 %v5066, %v5068
        %v5070 = vrot.slane %v5048, %v5069
        %v5072 = vunpack.c.l.s4 1987475062
        %v5073 = vunpack.c.0.s8 %v5072
        %v5074 = vlaneseq
        %v5075 = vshrl.u32 %v5074, 7
        %v5076 = vsub.s32 %v5073, %v5075
        %v5077 = vrot.slane %v5048, %v5076
        %v5082 = vmul.f32 %v5014, %v5056
        %v5083 = vmul.f32 %v5015, %v5063
        %v5084 = vmul.f32 %v5016, %v5070
        %v5085 = vmul.f32 %v5017, %v5077
        %v5087 = vlaneseq
        %v5088 = vshrl.u32 %v5087, 7
        %v5089 = vsub.s32 0, %v5088
        %v5090 = vrot.slane %v4953, %v5089
        %v5091 = vcombine.high %v5090, %v5090
        %v5093 = vunpack.c.l.s4 1983009808
        %v5094 = vunpack.c.0.s8 %v5093
        %v5095 = vlaneseq
        %v5096 = vshrl.u32 %v5095, 7
        %v5097 = vsub.s32 %v5094, %v5096
        %v5098 = vrot.slane %v5090, %v5097
        %v5100 = vunpack.c.l.s4 1983009808
        %v5101 = vunpack.c.0.s8 %v5100
        %v5102 = vlaneseq
        %v5103 = vshrl.u32 %v5102, 7
        %v5104 = vsub.s32 %v5101, %v5103
        %v5105 = vrot.slane %v5091, %v5104
        %v5106 = vcombine.high %v5098, %v5098
        %v5107 = vcombine.high %v5105, %v5105
        %v5112 = vmul.f32 %v5082, %v5098
        %v5113 = vmul.f32 %v5083, %v5106
        %v5114 = vmul.f32 %v5084, %v5105
        %v5115 = vmul.f32 %v5085, %v5107
        %v5117 = vlaneseq
        %v5118 = vshrl.u32 %v5117, 7
        %v5119 = vsub.s32 0, %v5118
        %v5120 = vrot.slane %v4954, %v5119
        %v5121 = vcombine.high %v5120, %v5120
        %v5123 = vunpack.c.l.s4 1983009808
        %v5124 = vunpack.c.0.s8 %v5123
        %v5125 = vlaneseq
        %v5126 = vshrl.u32 %v5125, 7
        %v5127 = vsub.s32 %v5124, %v5126
        %v5128 = vrot.slane %v5120, %v5127
        %v5130 = vunpack.c.l.s4 1983009808
        %v5131 = vunpack.c.0.s8 %v5130
        %v5132 = vlaneseq
        %v5133 = vshrl.u32 %v5132, 7
        %v5134 = vsub.s32 %v5131, %v5133
        %v5135 = vrot.slane %v5121, %v5134
        %v5136 = vcombine.high %v5128, %v5128
        %v5137 = vcombine.high %v5135, %v5135
        %v5142 = vadd.f32 %v5112, %v5128
        %v5143 = vadd.f32 %v5113, %v5136
        %v5144 = vadd.f32 %v5114, %v5135
        %v5145 = vadd.f32 %v5115, %v5137
        %v5150 = vcombine.low %v5142, %v5143
        %v5151 = vcombine.low %v5144, %v5145
        %v5153 = vunpack.c.l.s4 1983009808
        %v5154 = vunpack.c.0.s8 %v5153
        %v5155 = vlaneseq
        %v5156 = vshrl.u32 %v5155, 7
        %v5157 = vsub.s32 %v5154, %v5156
        %v5158 = vrot.slane %v5150, %v5157
        %v5160 = vunpack.c.l.s4 1983009808
        %v5161 = vunpack.c.0.s8 %v5160
        %v5162 = vlaneseq
        %v5163 = vshrl.u32 %v5162, 7
        %v5164 = vsub.s32 %v5161, %v5163
        %v5165 = vrot.slane %v5151, %v5164
        %v5166 = vcombine.low %v5158, %v5165
        %v5168 = vpack.c.bf16 %v5166, %v5166
        %v5169 = vld [vmem:[#allocation14] sm:$0xff]
        %v5170 = vld [vmem:[#allocation14 + $0x8] sm:$0xff]
        %v5171 = vld [vmem:[#allocation14 + $0x10] sm:$0xff]
        %v5172 = vld [vmem:[#allocation14 + $0x18] sm:$0xff]
        %v5173 = vld [vmem:[#allocation14 + $0x20] sm:$0xff]
        %v5174 = vld [vmem:[#allocation14 + $0x28] sm:$0xff]
        %v5175 = vld [vmem:[#allocation14 + $0x30] sm:$0xff]
        %v5176 = vld [vmem:[#allocation14 + $0x38] sm:$0xff]
        %v5177 = vld [vmem:[#allocation14 + $0x40] sm:$0xff]
        %v5178 = vld [vmem:[#allocation14 + $0x48] sm:$0xff]
        %v5179 = vld [vmem:[#allocation14 + $0x50] sm:$0xff]
        %v5180 = vld [vmem:[#allocation14 + $0x58] sm:$0xff]
        %v5181 = vld [vmem:[#allocation14 + $0x60] sm:$0xff]
        %v5182 = vld [vmem:[#allocation14 + $0x68] sm:$0xff]
        %v5183 = vld [vmem:[#allocation14 + $0x70] sm:$0xff]
        %v5184 = vld [vmem:[#allocation14 + $0x78] sm:$0xff]
        %v5185 = vld [vmem:[#allocation14 + $0x80] sm:$0xff]
        %v5186 = vld [vmem:[#allocation14 + $0x88] sm:$0xff]
        %v5187 = vld [vmem:[#allocation14 + $0x90] sm:$0xff]
        %v5188 = vld [vmem:[#allocation14 + $0x98] sm:$0xff]
        %v5189 = vld [vmem:[#allocation14 + $0xa0] sm:$0xff]
        %v5190 = vld [vmem:[#allocation14 + $0xa8] sm:$0xff]
        %v5191 = vld [vmem:[#allocation14 + $0xb0] sm:$0xff]
        %v5192 = vld [vmem:[#allocation14 + $0xb8] sm:$0xff]
        %v5193 = vld [vmem:[#allocation14 + $0xc0] sm:$0xff]
        %v5194 = vld [vmem:[#allocation14 + $0xc8] sm:$0xff]
        %v5195 = vld [vmem:[#allocation14 + $0xd0] sm:$0xff]
        %v5196 = vld [vmem:[#allocation14 + $0xd8] sm:$0xff]
        %v5197 = vld [vmem:[#allocation14 + $0xe0] sm:$0xff]
        %v5198 = vld [vmem:[#allocation14 + $0xe8] sm:$0xff]
        %v5199 = vld [vmem:[#allocation14 + $0xf0] sm:$0xff]
        %v5200 = vld [vmem:[#allocation14 + $0xf8] sm:$0xff]
        %v5201 = vld [vmem:[#allocation16] sm:$0xf]
        %v5203 = vlaneseq
        %v5204 = vshrl.u32 %v5203, 7
        %v5205 = vsub.s32 0, %v5204
        %v5206 = vrot.slane %v5201, %v5205
        %v5207 = vlaneseq
        %v5208 = vshrl.u32 %v5207, 7
        %v5209 = vsub.s32 1, %v5208
        %v5210 = vrot.slane %v5201, %v5209
        %v5211 = vlaneseq
        %v5212 = vshrl.u32 %v5211, 7
        %v5213 = vsub.s32 2, %v5212
        %v5214 = vrot.slane %v5201, %v5213
        %v5215 = vlaneseq
        %v5216 = vshrl.u32 %v5215, 7
        %v5217 = vsub.s32 3, %v5216
        %v5218 = vrot.slane %v5201, %v5217
        %v5255 = vunpack.c.l.b16 %v5169
        %v5256 = vunpack.c.h.b16 %v5169
        %v5257 = vunpack.c.l.b16 %v5170
        %v5258 = vunpack.c.h.b16 %v5170
        %v5259 = vunpack.c.l.b16 %v5171
        %v5260 = vunpack.c.h.b16 %v5171
        %v5261 = vunpack.c.l.b16 %v5172
        %v5262 = vunpack.c.h.b16 %v5172
        %v5263 = vunpack.c.l.b16 %v5173
        %v5264 = vunpack.c.h.b16 %v5173
        %v5265 = vunpack.c.l.b16 %v5174
        %v5266 = vunpack.c.h.b16 %v5174
        %v5267 = vunpack.c.l.b16 %v5175
        %v5268 = vunpack.c.h.b16 %v5175
        %v5269 = vunpack.c.l.b16 %v5176
        %v5270 = vunpack.c.h.b16 %v5176
        %v5271 = vunpack.c.l.b16 %v5177
        %v5272 = vunpack.c.h.b16 %v5177
        %v5273 = vunpack.c.l.b16 %v5178
        %v5274 = vunpack.c.h.b16 %v5178
        %v5275 = vunpack.c.l.b16 %v5179
        %v5276 = vunpack.c.h.b16 %v5179
        %v5277 = vunpack.c.l.b16 %v5180
        %v5278 = vunpack.c.h.b16 %v5180
        %v5279 = vunpack.c.l.b16 %v5181
        %v5280 = vunpack.c.h.b16 %v5181
        %v5281 = vunpack.c.l.b16 %v5182
        %v5282 = vunpack.c.h.b16 %v5182
        %v5283 = vunpack.c.l.b16 %v5183
        %v5284 = vunpack.c.h.b16 %v5183
        %v5285 = vunpack.c.l.b16 %v5184
        %v5286 = vunpack.c.h.b16 %v5184
        %v5287 = vunpack.c.l.b16 %v5185
        %v5288 = vunpack.c.h.b16 %v5185
        %v5289 = vunpack.c.l.b16 %v5186
        %v5290 = vunpack.c.h.b16 %v5186
        %v5291 = vunpack.c.l.b16 %v5187
        %v5292 = vunpack.c.h.b16 %v5187
        %v5293 = vunpack.c.l.b16 %v5188
        %v5294 = vunpack.c.h.b16 %v5188
        %v5295 = vunpack.c.l.b16 %v5189
        %v5296 = vunpack.c.h.b16 %v5189
        %v5297 = vunpack.c.l.b16 %v5190
        %v5298 = vunpack.c.h.b16 %v5190
        %v5299 = vunpack.c.l.b16 %v5191
        %v5300 = vunpack.c.h.b16 %v5191
        %v5301 = vunpack.c.l.b16 %v5192
        %v5302 = vunpack.c.h.b16 %v5192
        %v5303 = vunpack.c.l.b16 %v5193
        %v5304 = vunpack.c.h.b16 %v5193
        %v5305 = vunpack.c.l.b16 %v5194
        %v5306 = vunpack.c.h.b16 %v5194
        %v5307 = vunpack.c.l.b16 %v5195
        %v5308 = vunpack.c.h.b16 %v5195
        %v5309 = vunpack.c.l.b16 %v5196
        %v5310 = vunpack.c.h.b16 %v5196
        %v5311 = vunpack.c.l.b16 %v5197
        %v5312 = vunpack.c.h.b16 %v5197
        %v5313 = vunpack.c.l.b16 %v5198
        %v5314 = vunpack.c.h.b16 %v5198
        %v5315 = vunpack.c.l.b16 %v5199
        %v5316 = vunpack.c.h.b16 %v5199
        %v5317 = vunpack.c.l.b16 %v5200
        %v5318 = vunpack.c.h.b16 %v5200
        %v5319 = vpack.c.b16 %v5259, %v5255
        %v5320 = vpack.c.b16 %v5260, %v5256
        %v5321 = vpack.c.b16 %v5261, %v5257
        %v5322 = vpack.c.b16 %v5262, %v5258
        %v5323 = vpack.c.b16 %v5267, %v5263
        %v5324 = vpack.c.b16 %v5268, %v5264
        %v5325 = vpack.c.b16 %v5269, %v5265
        %v5326 = vpack.c.b16 %v5270, %v5266
        %v5327 = vpack.c.b16 %v5275, %v5271
        %v5328 = vpack.c.b16 %v5276, %v5272
        %v5329 = vpack.c.b16 %v5277, %v5273
        %v5330 = vpack.c.b16 %v5278, %v5274
        %v5331 = vpack.c.b16 %v5283, %v5279
        %v5332 = vpack.c.b16 %v5284, %v5280
        %v5333 = vpack.c.b16 %v5285, %v5281
        %v5334 = vpack.c.b16 %v5286, %v5282
        %v5335 = vpack.c.b16 %v5291, %v5287
        %v5336 = vpack.c.b16 %v5292, %v5288
        %v5337 = vpack.c.b16 %v5293, %v5289
        %v5338 = vpack.c.b16 %v5294, %v5290
        %v5339 = vpack.c.b16 %v5299, %v5295
        %v5340 = vpack.c.b16 %v5300, %v5296
        %v5341 = vpack.c.b16 %v5301, %v5297
        %v5342 = vpack.c.b16 %v5302, %v5298
        %v5343 = vpack.c.b16 %v5307, %v5303
        %v5344 = vpack.c.b16 %v5308, %v5304
        %v5345 = vpack.c.b16 %v5309, %v5305
        %v5346 = vpack.c.b16 %v5310, %v5306
        %v5347 = vpack.c.b16 %v5315, %v5311
        %v5348 = vpack.c.b16 %v5316, %v5312
        %v5349 = vpack.c.b16 %v5317, %v5313
        %v5350 = vpack.c.b16 %v5318, %v5314
        %5383 = vmatprep.subr.bf16.mxu0 %v5320
        %5384 = vmatpush1.bf16.msra.mxu0 %v5319
        %5385 = vmatprep.subr.bf16.mxu0 %v5324
        %5386 = vmatpush1.bf16.msra.mxu0 %v5323
        %5387 = vmatprep.subr.bf16.mxu0 %v5328
        %5388 = vmatpush1.bf16.msra.mxu0 %v5327
        %5389 = vmatprep.subr.bf16.mxu0 %v5332
        %5390 = vmatpush1.bf16.msra.mxu0 %v5331
        %5391 = vmatprep.subr.bf16.mxu0 %v5336
        %5392 = vmatpush1.bf16.msra.mxu0 %v5335
        %5393 = vmatprep.subr.bf16.mxu0 %v5340
        %5394 = vmatpush1.bf16.msra.mxu0 %v5339
        %5395 = vmatprep.subr.bf16.mxu0 %v5344
        %5396 = vmatpush1.bf16.msra.mxu0 %v5343
        %5397 = vmatprep.subr.bf16.mxu0 %v5348
        %5398 = vmatpush1.bf16.msra.mxu0 %v5347
        %5399 = vmatprep.subr.bf16.mxu0 0
        %5400 = vmatpush1.bf16.msra.mxu0 0
        %5401 = vmatprep.subr.bf16.mxu0 0
        %5402 = vmatpush1.bf16.msra.mxu0 0
        %5403 = vmatprep.subr.bf16.mxu0 0
        %5404 = vmatpush1.bf16.msra.mxu0 0
        %5405 = vmatprep.subr.bf16.mxu0 0
        %5406 = vmatpush1.bf16.msra.mxu0 0
        %5407 = vmatprep.subr.bf16.mxu0 0
        %5408 = vmatpush1.bf16.msra.mxu0 0
        %5409 = vmatprep.subr.bf16.mxu0 0
        %5410 = vmatpush1.bf16.msra.mxu0 0
        %5411 = vmatprep.subr.bf16.mxu0 0
        %5412 = vmatpush1.bf16.msra.mxu0 0
        %5413 = vmatprep.subr.bf16.mxu0 0
        %5414 = vmatpush1.bf16.msra.mxu0 0
        %5415 = vmatprep.mubr.bf16.mxu0 0
        %5416 = vmatmul.mubr.bf16.gmra.mrb[0].mxu0 %v5168
        %v5417 = vpop.f32.mrb[0].mxu0
        %v5418 = vadd.f32 %v5206, %v5417
        %v5419 = vpop.f32.mrb[0].mxu0
        %v5420 = vadd.f32 %v5210, %v5419
        %v5421 = vpop.f32.mrb[0].mxu0
        %v5422 = vpop.f32.mrb[0].mxu0
        %5423 = vdwg.mxu0
        %5424 = vmatprep.subr.bf16.mxu0 %v5322
        %5425 = vmatpush1.bf16.msra.mxu0 %v5321
        %5426 = vmatprep.subr.bf16.mxu0 %v5326
        %5427 = vmatpush1.bf16.msra.mxu0 %v5325
        %5428 = vmatprep.subr.bf16.mxu0 %v5330
        %5429 = vmatpush1.bf16.msra.mxu0 %v5329
        %5430 = vmatprep.subr.bf16.mxu0 %v5334
        %5431 = vmatpush1.bf16.msra.mxu0 %v5333
        %5432 = vmatprep.subr.bf16.mxu0 %v5338
        %5433 = vmatpush1.bf16.msra.mxu0 %v5337
        %5434 = vmatprep.subr.bf16.mxu0 %v5342
        %5435 = vmatpush1.bf16.msra.mxu0 %v5341
        %5436 = vmatprep.subr.bf16.mxu0 %v5346
        %5437 = vmatpush1.bf16.msra.mxu0 %v5345
        %5438 = vmatprep.subr.bf16.mxu0 %v5350
        %5439 = vmatpush1.bf16.msra.mxu0 %v5349
        %5440 = vmatprep.subr.bf16.mxu0 0
        %5441 = vmatpush1.bf16.msra.mxu0 0
        %5442 = vmatprep.subr.bf16.mxu0 0
        %5443 = vmatpush1.bf16.msra.mxu0 0
        %5444 = vmatprep.subr.bf16.mxu0 0
        %5445 = vmatpush1.bf16.msra.mxu0 0
        %5446 = vmatprep.subr.bf16.mxu0 0
        %5447 = vmatpush1.bf16.msra.mxu0 0
        %5448 = vmatprep.subr.bf16.mxu0 0
        %5449 = vmatpush1.bf16.msra.mxu0 0
        %5450 = vmatprep.subr.bf16.mxu0 0
        %5451 = vmatpush1.bf16.msra.mxu0 0
        %5452 = vmatprep.subr.bf16.mxu0 0
        %5453 = vmatpush1.bf16.msra.mxu0 0
        %5454 = vmatprep.subr.bf16.mxu0 0
        %5455 = vmatpush1.bf16.msra.mxu0 0
        %5456 = vmatprep.mubr.bf16.mxu0 0
        %5457 = vmatmul.mubr.bf16.gmra.mrb[0].mxu0 %v5168
        %v5458 = vpop.f32.mrb[0].mxu0
        %v5459 = vadd.f32 %v5214, %v5458
        %v5460 = vpop.f32.mrb[0].mxu0
        %v5461 = vadd.f32 %v5218, %v5460
        %v5462 = vpop.f32.mrb[0].mxu0
        %v5463 = vpop.f32.mrb[0].mxu0
        %5464 = vdwg.mxu0
        %v5465 = vmax.f32 %v5418, 0.0
        %v5466 = vmax.f32 %v5420, 0.0
        %v5467 = vmax.f32 %v5459, 0.0
        %v5468 = vmax.f32 %v5461, 0.0
        %v5469 = vpack.c.bf16 %v5465, %v5465
        %v5470 = vpack.c.bf16 %v5466, %v5466
        %v5471 = vpack.c.bf16 %v5467, %v5467
        %v5472 = vpack.c.bf16 %v5468, %v5468
        %v5473 = vld [vmem:[#allocation17] sm:$0xf]
        %v5474 = vld [vmem:[#allocation17 + $0x4] sm:$0xf]
        %v5475 = vld [vmem:[#allocation17 + $0x8] sm:$0xf]
        %v5476 = vld [vmem:[#allocation17 + $0xc] sm:$0xf]
        %v5477 = vld [vmem:[#allocation17 + $0x10] sm:$0xf]
        %v5478 = vld [vmem:[#allocation17 + $0x14] sm:$0xf]
        %v5479 = vld [vmem:[#allocation17 + $0x18] sm:$0xf]
        %v5480 = vld [vmem:[#allocation17 + $0x1c] sm:$0xf]
        %v5481 = vld [vmem:[#allocation17 + $0x20] sm:$0xf]
        %v5482 = vld [vmem:[#allocation17 + $0x24] sm:$0xf]
        %v5483 = vld [vmem:[#allocation17 + $0x28] sm:$0xf]
        %v5484 = vld [vmem:[#allocation17 + $0x2c] sm:$0xf]
        %v5485 = vld [vmem:[#allocation17 + $0x30] sm:$0xf]
        %v5486 = vld [vmem:[#allocation17 + $0x34] sm:$0xf]
        %v5487 = vld [vmem:[#allocation17 + $0x38] sm:$0xf]
        %v5488 = vld [vmem:[#allocation17 + $0x3c] sm:$0xf]
        %v5489 = vld [vmem:[#allocation17 + $0x40] sm:$0xf]
        %v5490 = vld [vmem:[#allocation17 + $0x44] sm:$0xf]
        %v5491 = vld [vmem:[#allocation17 + $0x48] sm:$0xf]
        %v5492 = vld [vmem:[#allocation17 + $0x4c] sm:$0xf]
        %v5493 = vld [vmem:[#allocation17 + $0x50] sm:$0xf]
        %v5494 = vld [vmem:[#allocation17 + $0x54] sm:$0xf]
        %v5495 = vld [vmem:[#allocation17 + $0x58] sm:$0xf]
        %v5496 = vld [vmem:[#allocation17 + $0x5c] sm:$0xf]
        %v5497 = vld [vmem:[#allocation17 + $0x60] sm:$0xf]
        %v5498 = vld [vmem:[#allocation17 + $0x64] sm:$0xf]
        %v5499 = vld [vmem:[#allocation17 + $0x68] sm:$0xf]
        %v5500 = vld [vmem:[#allocation17 + $0x6c] sm:$0xf]
        %v5501 = vld [vmem:[#allocation17 + $0x70] sm:$0xf]
        %v5502 = vld [vmem:[#allocation17 + $0x74] sm:$0xf]
        %v5503 = vld [vmem:[#allocation17 + $0x78] sm:$0xf]
        %v5504 = vld [vmem:[#allocation17 + $0x7c] sm:$0xf]
        %v5505 = vld [vmem:[#allocation17 + $0x80] sm:$0xf]
        %v5506 = vld [vmem:[#allocation17 + $0x84] sm:$0xf]
        %v5507 = vld [vmem:[#allocation17 + $0x88] sm:$0xf]
        %v5508 = vld [vmem:[#allocation17 + $0x8c] sm:$0xf]
        %v5509 = vld [vmem:[#allocation17 + $0x90] sm:$0xf]
        %v5510 = vld [vmem:[#allocation17 + $0x94] sm:$0xf]
        %v5511 = vld [vmem:[#allocation17 + $0x98] sm:$0xf]
        %v5512 = vld [vmem:[#allocation17 + $0x9c] sm:$0xf]
        %v5513 = vld [vmem:[#allocation17 + $0xa0] sm:$0xf]
        %v5514 = vld [vmem:[#allocation17 + $0xa4] sm:$0xf]
        %v5515 = vld [vmem:[#allocation17 + $0xa8] sm:$0xf]
        %v5516 = vld [vmem:[#allocation17 + $0xac] sm:$0xf]
        %v5517 = vld [vmem:[#allocation17 + $0xb0] sm:$0xf]
        %v5518 = vld [vmem:[#allocation17 + $0xb4] sm:$0xf]
        %v5519 = vld [vmem:[#allocation17 + $0xb8] sm:$0xf]
        %v5520 = vld [vmem:[#allocation17 + $0xbc] sm:$0xf]
        %v5521 = vld [vmem:[#allocation17 + $0xc0] sm:$0xf]
        %v5522 = vld [vmem:[#allocation17 + $0xc4] sm:$0xf]
        %v5523 = vld [vmem:[#allocation17 + $0xc8] sm:$0xf]
        %v5524 = vld [vmem:[#allocation17 + $0xcc] sm:$0xf]
        %v5525 = vld [vmem:[#allocation17 + $0xd0] sm:$0xf]
        %v5526 = vld [vmem:[#allocation17 + $0xd4] sm:$0xf]
        %v5527 = vld [vmem:[#allocation17 + $0xd8] sm:$0xf]
        %v5528 = vld [vmem:[#allocation17 + $0xdc] sm:$0xf]
        %v5529 = vld [vmem:[#allocation17 + $0xe0] sm:$0xf]
        %v5530 = vld [vmem:[#allocation17 + $0xe4] sm:$0xf]
        %v5531 = vld [vmem:[#allocation17 + $0xe8] sm:$0xf]
        %v5532 = vld [vmem:[#allocation17 + $0xec] sm:$0xf]
        %v5533 = vld [vmem:[#allocation17 + $0xf0] sm:$0xf]
        %v5534 = vld [vmem:[#allocation17 + $0xf4] sm:$0xf]
        %v5535 = vld [vmem:[#allocation17 + $0xf8] sm:$0xf]
        %v5536 = vld [vmem:[#allocation17 + $0xfc] sm:$0xf]
        %v5537 = vld [vmem:[#allocation19] sm:$0x1]
        %v5539 = vlaneseq
        %v5540 = vshrl.u32 %v5539, 7
        %v5541 = vsub.s32 0, %v5540
        %v5542 = vrot.slane %v5537, %v5541
        %v5608 = vunpack.c.l.b16 %v5473
        %v5609 = vunpack.c.l.b16 %v5474
        %v5610 = vunpack.c.l.b16 %v5475
        %v5611 = vunpack.c.l.b16 %v5476
        %v5612 = vunpack.c.l.b16 %v5477
        %v5613 = vunpack.c.l.b16 %v5478
        %v5614 = vunpack.c.l.b16 %v5479
        %v5615 = vunpack.c.l.b16 %v5480
        %v5616 = vunpack.c.l.b16 %v5481
        %v5617 = vunpack.c.l.b16 %v5482
        %v5618 = vunpack.c.l.b16 %v5483
        %v5619 = vunpack.c.l.b16 %v5484
        %v5620 = vunpack.c.l.b16 %v5485
        %v5621 = vunpack.c.l.b16 %v5486
        %v5622 = vunpack.c.l.b16 %v5487
        %v5623 = vunpack.c.l.b16 %v5488
        %v5624 = vunpack.c.l.b16 %v5489
        %v5625 = vunpack.c.l.b16 %v5490
        %v5626 = vunpack.c.l.b16 %v5491
        %v5627 = vunpack.c.l.b16 %v5492
        %v5628 = vunpack.c.l.b16 %v5493
        %v5629 = vunpack.c.l.b16 %v5494
        %v5630 = vunpack.c.l.b16 %v5495
        %v5631 = vunpack.c.l.b16 %v5496
        %v5632 = vunpack.c.l.b16 %v5497
        %v5633 = vunpack.c.l.b16 %v5498
        %v5634 = vunpack.c.l.b16 %v5499
        %v5635 = vunpack.c.l.b16 %v5500
        %v5636 = vunpack.c.l.b16 %v5501
        %v5637 = vunpack.c.l.b16 %v5502
        %v5638 = vunpack.c.l.b16 %v5503
        %v5639 = vunpack.c.l.b16 %v5504
        %v5640 = vunpack.c.l.b16 %v5505
        %v5641 = vunpack.c.l.b16 %v5506
        %v5642 = vunpack.c.l.b16 %v5507
        %v5643 = vunpack.c.l.b16 %v5508
        %v5644 = vunpack.c.l.b16 %v5509
        %v5645 = vunpack.c.l.b16 %v5510
        %v5646 = vunpack.c.l.b16 %v5511
        %v5647 = vunpack.c.l.b16 %v5512
        %v5648 = vunpack.c.l.b16 %v5513
        %v5649 = vunpack.c.l.b16 %v5514
        %v5650 = vunpack.c.l.b16 %v5515
        %v5651 = vunpack.c.l.b16 %v5516
        %v5652 = vunpack.c.l.b16 %v5517
        %v5653 = vunpack.c.l.b16 %v5518
        %v5654 = vunpack.c.l.b16 %v5519
        %v5655 = vunpack.c.l.b16 %v5520
        %v5656 = vunpack.c.l.b16 %v5521
        %v5657 = vunpack.c.l.b16 %v5522
        %v5658 = vunpack.c.l.b16 %v5523
        %v5659 = vunpack.c.l.b16 %v5524
        %v5660 = vunpack.c.l.b16 %v5525
        %v5661 = vunpack.c.l.b16 %v5526
        %v5662 = vunpack.c.l.b16 %v5527
        %v5663 = vunpack.c.l.b16 %v5528
        %v5664 = vunpack.c.l.b16 %v5529
        %v5665 = vunpack.c.l.b16 %v5530
        %v5666 = vunpack.c.l.b16 %v5531
        %v5667 = vunpack.c.l.b16 %v5532
        %v5668 = vunpack.c.l.b16 %v5533
        %v5669 = vunpack.c.l.b16 %v5534
        %v5670 = vunpack.c.l.b16 %v5535
        %v5671 = vunpack.c.l.b16 %v5536
        %v5672 = vpack.c.b16 %v5609, %v5608
        %v5673 = vpack.c.b16 %v5611, %v5610
        %v5674 = vpack.c.b16 %v5613, %v5612
        %v5675 = vpack.c.b16 %v5615, %v5614
        %v5676 = vpack.c.b16 %v5617, %v5616
        %v5677 = vpack.c.b16 %v5619, %v5618
        %v5678 = vpack.c.b16 %v5621, %v5620
        %v5679 = vpack.c.b16 %v5623, %v5622
        %v5680 = vpack.c.b16 %v5625, %v5624
        %v5681 = vpack.c.b16 %v5627, %v5626
        %v5682 = vpack.c.b16 %v5629, %v5628
        %v5683 = vpack.c.b16 %v5631, %v5630
        %v5684 = vpack.c.b16 %v5633, %v5632
        %v5685 = vpack.c.b16 %v5635, %v5634
        %v5686 = vpack.c.b16 %v5637, %v5636
        %v5687 = vpack.c.b16 %v5639, %v5638
        %v5688 = vpack.c.b16 %v5641, %v5640
        %v5689 = vpack.c.b16 %v5643, %v5642
        %v5690 = vpack.c.b16 %v5645, %v5644
        %v5691 = vpack.c.b16 %v5647, %v5646
        %v5692 = vpack.c.b16 %v5649, %v5648
        %v5693 = vpack.c.b16 %v5651, %v5650
        %v5694 = vpack.c.b16 %v5653, %v5652
        %v5695 = vpack.c.b16 %v5655, %v5654
        %v5696 = vpack.c.b16 %v5657, %v5656
        %v5697 = vpack.c.b16 %v5659, %v5658
        %v5698 = vpack.c.b16 %v5661, %v5660
        %v5699 = vpack.c.b16 %v5663, %v5662
        %v5700 = vpack.c.b16 %v5665, %v5664
        %v5701 = vpack.c.b16 %v5667, %v5666
        %v5702 = vpack.c.b16 %v5669, %v5668
        %v5703 = vpack.c.b16 %v5671, %v5670
        %5736 = vmatprep.subr.bf16.mxu0 0
        %5737 = vmatpush1.bf16.msra.mxu0 %v5672
        %5738 = vmatprep.subr.bf16.mxu0 0
        %5739 = vmatpush1.bf16.msra.mxu0 %v5673
        %5740 = vmatprep.subr.bf16.mxu0 0
        %5741 = vmatpush1.bf16.msra.mxu0 %v5674
        %5742 = vmatprep.subr.bf16.mxu0 0
        %5743 = vmatpush1.bf16.msra.mxu0 %v5675
        %5744 = vmatprep.subr.bf16.mxu0 0
        %5745 = vmatpush1.bf16.msra.mxu0 %v5676
        %5746 = vmatprep.subr.bf16.mxu0 0
        %5747 = vmatpush1.bf16.msra.mxu0 %v5677
        %5748 = vmatprep.subr.bf16.mxu0 0
        %5749 = vmatpush1.bf16.msra.mxu0 %v5678
        %5750 = vmatprep.subr.bf16.mxu0 0
        %5751 = vmatpush1.bf16.msra.mxu0 %v5679
        %5752 = vmatprep.subr.bf16.mxu0 0
        %5753 = vmatpush1.bf16.msra.mxu0 %v5680
        %5754 = vmatprep.subr.bf16.mxu0 0
        %5755 = vmatpush1.bf16.msra.mxu0 %v5681
        %5756 = vmatprep.subr.bf16.mxu0 0
        %5757 = vmatpush1.bf16.msra.mxu0 %v5682
        %5758 = vmatprep.subr.bf16.mxu0 0
        %5759 = vmatpush1.bf16.msra.mxu0 %v5683
        %5760 = vmatprep.subr.bf16.mxu0 0
        %5761 = vmatpush1.bf16.msra.mxu0 %v5684
        %5762 = vmatprep.subr.bf16.mxu0 0
        %5763 = vmatpush1.bf16.msra.mxu0 %v5685
        %5764 = vmatprep.subr.bf16.mxu0 0
        %5765 = vmatpush1.bf16.msra.mxu0 %v5686
        %5766 = vmatprep.subr.bf16.mxu0 0
        %5767 = vmatpush1.bf16.msra.mxu0 %v5687
        %5768 = vmatprep.mubr.bf16.mxu0 %v5470
        %5769 = vmatmul.mubr.bf16.gmra.mrb[0].mxu0 %v5469
        %v5770 = vpop.f32.mrb[0].mxu0
        %v5771 = vadd.f32 %v5542, %v5770
        %v5772 = vpop.f32.mrb[0].mxu0
        %v5773 = vpop.f32.mrb[0].mxu0
        %v5774 = vpop.f32.mrb[0].mxu0
        %5775 = vdwg.mxu0
        %5776 = vmatprep.subr.bf16.mxu0 0
        %5777 = vmatpush1.bf16.msra.mxu0 %v5688
        %5778 = vmatprep.subr.bf16.mxu0 0
        %5779 = vmatpush1.bf16.msra.mxu0 %v5689
        %5780 = vmatprep.subr.bf16.mxu0 0
        %5781 = vmatpush1.bf16.msra.mxu0 %v5690
        %5782 = vmatprep.subr.bf16.mxu0 0
        %5783 = vmatpush1.bf16.msra.mxu0 %v5691
        %5784 = vmatprep.subr.bf16.mxu0 0
        %5785 = vmatpush1.bf16.msra.mxu0 %v5692
        %5786 = vmatprep.subr.bf16.mxu0 0
        %5787 = vmatpush1.bf16.msra.mxu0 %v5693
        %5788 = vmatprep.subr.bf16.mxu0 0
        %5789 = vmatpush1.bf16.msra.mxu0 %v5694
        %5790 = vmatprep.subr.bf16.mxu0 0
        %5791 = vmatpush1.bf16.msra.mxu0 %v5695
        %5792 = vmatprep.subr.bf16.mxu0 0
        %5793 = vmatpush1.bf16.msra.mxu0 %v5696
        %5794 = vmatprep.subr.bf16.mxu0 0
        %5795 = vmatpush1.bf16.msra.mxu0 %v5697
        %5796 = vmatprep.subr.bf16.mxu0 0
        %5797 = vmatpush1.bf16.msra.mxu0 %v5698
        %5798 = vmatprep.subr.bf16.mxu0 0
        %5799 = vmatpush1.bf16.msra.mxu0 %v5699
        %5800 = vmatprep.subr.bf16.mxu0 0
        %5801 = vmatpush1.bf16.msra.mxu0 %v5700
        %5802 = vmatprep.subr.bf16.mxu0 0
        %5803 = vmatpush1.bf16.msra.mxu0 %v5701
        %5804 = vmatprep.subr.bf16.mxu0 0
        %5805 = vmatpush1.bf16.msra.mxu0 %v5702
        %5806 = vmatprep.subr.bf16.mxu0 0
        %5807 = vmatpush1.bf16.msra.mxu0 %v5703
        %5808 = vmatprep.mubr.bf16.mxu0 %v5472
        %5809 = vmatmul.mubr.bf16.gmra.mrb[0].mxu0 %v5471
        %v5810 = vpop.f32.mrb[0].mxu0
        %v5811 = vadd.f32 %v5771, %v5810
        %v5812 = vpop.f32.mrb[0].mxu0
        %v5813 = vpop.f32.mrb[0].mxu0
        %v5814 = vpop.f32.mrb[0].mxu0
        %5815 = vdwg.mxu0
        %v5817 = vcombine.high %v5811, %v5811
        %v5819 = vunpack.c.l.s4 1983009808
        %v5820 = vunpack.c.0.s8 %v5819
        %v5821 = vlaneseq
        %v5822 = vshrl.u32 %v5821, 7
        %v5823 = vsub.s32 %v5820, %v5822
        %v5824 = vrot.slane %v5811, %v5823
        %v5826 = vunpack.c.l.s4 1983009808
        %v5827 = vunpack.c.0.s8 %v5826
        %v5828 = vlaneseq
        %v5829 = vshrl.u32 %v5828, 7
        %v5830 = vsub.s32 %v5827, %v5829
        %v5831 = vrot.slane %v5817, %v5830
        %v5832 = vcombine.high %v5824, %v5824
        %v5833 = vcombine.high %v5831, %v5831
        %v5838 = vadd.f32 %v5142, %v5824
        %v5839 = vadd.f32 %v5143, %v5832
        %v5840 = vadd.f32 %v5144, %v5831
        %v5841 = vadd.f32 %v5145, %v5833
        %v5842 = vld [vmem:[#allocation20] sm:$0x1]
        %v5843 = vld [vmem:[#allocation22] sm:$0x1]
        %v5848 = vcombine.low %v5838, %v5839
        %v5849 = vcombine.low %v5840, %v5841
        %v5851 = vunpack.c.l.s4 1983009808
        %v5852 = vunpack.c.0.s8 %v5851
        %v5853 = vlaneseq
        %v5854 = vshrl.u32 %v5853, 7
        %v5855 = vsub.s32 %v5852, %v5854
        %v5856 = vrot.slane %v5848, %v5855
        %v5858 = vunpack.c.l.s4 1983009808
        %v5859 = vunpack.c.0.s8 %v5858
        %v5860 = vlaneseq
        %v5861 = vshrl.u32 %v5860, 7
        %v5862 = vsub.s32 %v5859, %v5861
        %v5863 = vrot.slane %v5849, %v5862
        %v5864 = vcombine.low %v5856, %v5863
        %5866 = vadd.xlane.f32.xlu0 %v5864
        %v5867 = vpop.xlane.xlu0 %5866
        %v5868 = vmul.f32 %v5867, %v4979
        %v5871 = vunpack.c.l.s4 269488144
        %v5872 = vunpack.c.0.s8 %v5871
        %v5873 = vlaneseq
        %v5874 = vshrl.u32 %v5873, 7
        %v5875 = vsub.s32 %v5872, %v5874
        %v5876 = vrot.slane %v5868, %v5875
        %v5878 = vunpack.c.l.s4 842150450
        %v5879 = vunpack.c.0.s8 %v5878
        %v5880 = vlaneseq
        %v5881 = vshrl.u32 %v5880, 7
        %v5882 = vsub.s32 %v5879, %v5881
        %v5883 = vrot.slane %v5868, %v5882
        %v5885 = vunpack.c.l.s4 1414812756
        %v5886 = vunpack.c.0.s8 %v5885
        %v5887 = vlaneseq
        %v5888 = vshrl.u32 %v5887, 7
        %v5889 = vsub.s32 %v5886, %v5888
        %v5890 = vrot.slane %v5868, %v5889
        %v5892 = vunpack.c.l.s4 1987475062
        %v5893 = vunpack.c.0.s8 %v5892
        %v5894 = vlaneseq
        %v5895 = vshrl.u32 %v5894, 7
        %v5896 = vsub.s32 %v5893, %v5895
        %v5897 = vrot.slane %v5868, %v5896
        %v5902 = vsub.f32 %v5838, %v5876
        %v5903 = vsub.f32 %v5839, %v5883
        %v5904 = vsub.f32 %v5840, %v5890
        %v5905 = vsub.f32 %v5841, %v5897
        %v5906 = vmul.f32 %v5902, %v5902
        %v5907 = vmul.f32 %v5903, %v5903
        %v5908 = vmul.f32 %v5904, %v5904
        %v5909 = vmul.f32 %v5905, %v5905
        %v5914 = vcombine.low %v5906, %v5907
        %v5915 = vcombine.low %v5908, %v5909
        %v5917 = vunpack.c.l.s4 1983009808
        %v5918 = vunpack.c.0.s8 %v5917
        %v5919 = vlaneseq
        %v5920 = vshrl.u32 %v5919, 7
        %v5921 = vsub.s32 %v5918, %v5920
        %v5922 = vrot.slane %v5914, %v5921
        %v5924 = vunpack.c.l.s4 1983009808
        %v5925 = vunpack.c.0.s8 %v5924
        %v5926 = vlaneseq
        %v5927 = vshrl.u32 %v5926, 7
        %v5928 = vsub.s32 %v5925, %v5927
        %v5929 = vrot.slane %v5915, %v5928
        %v5930 = vcombine.low %v5922, %v5929
        %5932 = vadd.xlane.f32.xlu0 %v5930
        %v5933 = vpop.xlane.xlu0 %5932
        %v5934 = vmul.f32 %v5933, %v4979
        %v5935 = vadd.f32 %v5934, 1e-05
        %v5936 = vrsqrt.pop %v5935
        %v5939 = vunpack.c.l.s4 269488144
        %v5940 = vunpack.c.0.s8 %v5939
        %v5941 = vlaneseq
        %v5942 = vshrl.u32 %v5941, 7
        %v5943 = vsub.s32 %v5940, %v5942
        %v5944 = vrot.slane %v5936, %v5943
        %v5946 = vunpack.c.l.s4 842150450
        %v5947 = vunpack.c.0.s8 %v5946
        %v5948 = vlaneseq
        %v5949 = vshrl.u32 %v5948, 7
        %v5950 = vsub.s32 %v5947, %v5949
        %v5951 = vrot.slane %v5936, %v5950
        %v5953 = vunpack.c.l.s4 1414812756
        %v5954 = vunpack.c.0.s8 %v5953
        %v5955 = vlaneseq
        %v5956 = vshrl.u32 %v5955, 7
        %v5957 = vsub.s32 %v5954, %v5956
        %v5958 = vrot.slane %v5936, %v5957
        %v5960 = vunpack.c.l.s4 1987475062
        %v5961 = vunpack.c.0.s8 %v5960
        %v5962 = vlaneseq
        %v5963 = vshrl.u32 %v5962, 7
        %v5964 = vsub.s32 %v5961, %v5963
        %v5965 = vrot.slane %v5936, %v5964
        %v5970 = vmul.f32 %v5902, %v5944
        %v5971 = vmul.f32 %v5903, %v5951
        %v5972 = vmul.f32 %v5904, %v5958
        %v5973 = vmul.f32 %v5905, %v5965
        %v5975 = vlaneseq
        %v5976 = vshrl.u32 %v5975, 7
        %v5977 = vsub.s32 0, %v5976
        %v5978 = vrot.slane %v5842, %v5977
        %v5979 = vcombine.high %v5978, %v5978
        %v5981 = vunpack.c.l.s4 1983009808
        %v5982 = vunpack.c.0.s8 %v5981
        %v5983 = vlaneseq
        %v5984 = vshrl.u32 %v5983, 7
        %v5985 = vsub.s32 %v5982, %v5984
        %v5986 = vrot.slane %v5978, %v5985
        %v5988 = vunpack.c.l.s4 1983009808
        %v5989 = vunpack.c.0.s8 %v5988
        %v5990 = vlaneseq
        %v5991 = vshrl.u32 %v5990, 7
        %v5992 = vsub.s32 %v5989, %v5991
        %v5993 = vrot.slane %v5979, %v5992
        %v5994 = vcombine.high %v5986, %v5986
        %v5995 = vcombine.high %v5993, %v5993
        %v6000 = vmul.f32 %v5970, %v5986
        %v6001 = vmul.f32 %v5971, %v5994
        %v6002 = vmul.f32 %v5972, %v5993
        %v6003 = vmul.f32 %v5973, %v5995
        %v6005 = vlaneseq
        %v6006 = vshrl.u32 %v6005, 7
        %v6007 = vsub.s32 0, %v6006
        %v6008 = vrot.slane %v5843, %v6007
        %v6009 = vcombine.high %v6008, %v6008
        %v6011 = vunpack.c.l.s4 1983009808
        %v6012 = vunpack.c.0.s8 %v6011
        %v6013 = vlaneseq
        %v6014 = vshrl.u32 %v6013, 7
        %v6015 = vsub.s32 %v6012, %v6014
        %v6016 = vrot.slane %v6008, %v6015
        %v6018 = vunpack.c.l.s4 1983009808
        %v6019 = vunpack.c.0.s8 %v6018
        %v6020 = vlaneseq
        %v6021 = vshrl.u32 %v6020, 7
        %v6022 = vsub.s32 %v6019, %v6021
        %v6023 = vrot.slane %v6009, %v6022
        %v6024 = vcombine.high %v6016, %v6016
        %v6025 = vcombine.high %v6023, %v6023
        %v6030 = vadd.f32 %v6000, %v6016
        %v6031 = vadd.f32 %v6001, %v6024
        %v6032 = vadd.f32 %v6002, %v6023
        %v6033 = vadd.f32 %v6003, %v6025
        %6034 = vst [vmem:[%s616] sm:$0x3] %v6030
        %6035 = vst [vmem:[%s616 + $0x2] sm:$0x3] %v6031
        %6036 = vst [vmem:[%s616 + $0x4] sm:$0x3] %v6032
        %6037 = vst [vmem:[%s616 + $0x6] sm:$0x3] %v6033
        %s6038 = sand.u32 %s322, 1
        %s6039 = scalar_lea.sflag [#allocation4], %s6038
        %s6040 = sand.u32 %s322, 1
        %s6041 = smul.addr %s6040, 8
        %s6042 = scalar_lea.vmem [#allocation23], %s6041
        // Predicated region
        $region125: #{transformer_forward.5} parent=71 // pred_check
          %p6043 = pneg %p332
        $region126: #{transformer_forward.5} parent=71 // pred_check_branch
          %6045 = sbr.rel (%p6043) target = $region128
        $region127: #{transformer_forward.5} parent=71 // pred_region
          %s6046 = smul.u32 4, %s36
          %s6048 = ssub.s32 128, 128
          %6049 = vsyncadd %s6039, %s6048
          %s6050 = smul.addr %s6046, 32
          %s6051 = scalar_lea.hbm %s13, %s6050
          %s6052 = sshll.u32 %s6042, 4
          %s6053 = int_to_ptr.vmem [resolvable:$true] %s6052
          %6058 = dma.vmem_to_hbm [thread:$0]  %s6053, 128, %s6051, %s6039, 32, 32, 2
        $region128: #{transformer_forward.5} parent=71 // pred_fallthru
          _
      $region72: #{transformer_forward.5} parent=5 // pred_fallthru
        _
      %p6059 = scmp.le.s32.totalorder 2, %s31
      // Predicated region
      $region129: #{transformer_forward.5} parent=5 // pred_check
        %p6060 = pneg %p6059
      $region130: #{transformer_forward.5} parent=5 // pred_check_branch
        %6062 = sbr.rel (%p6060) target = $region132
      $region131: #{transformer_forward.5} parent=5 // pred_region
        %s6063 = ssub.s32 %s31, 2
        // Predicated region
        $region133: #{transformer_forward.5} parent=131 // pred_check
          %p6064 = pneg %p338
        $region134: #{transformer_forward.5} parent=131 // pred_check_branch
          %6066 = sbr.rel (%p6064) target = $region136
        $region135: #{transformer_forward.5} parent=131 // pred_region
          %s6067 = sand.u32 %s323, 1
          %s6068 = scalar_lea.sflag [#allocation4], %s6067
          %s6069 = sand.u32 %s323, 1
          %s6070 = smul.addr %s6069, 8
          %s6071 = scalar_lea.vmem [#allocation23], %s6070
          %6072 = dma.done %s6068, 128
        $region136: #{transformer_forward.5} parent=131 // pred_fallthru
          _
      $region132: #{transformer_forward.5} parent=5 // pred_fallthru
        _
    $region6: #{transformer_forward.5} parent=1 // loop_footer
      %s35 = sadd.s32 1, %s31
    $region7: #{transformer_forward.5} parent=1 // loop_footer_branch
      %30 = sbr.rel target = $region3
    $region8: #{transformer_forward.5} parent=1 // loop_exit
      _
    %6073 = vsyncpa [#allocation3], 1
    %s6074 = scalar_lea.sflag [#allocation3], 1
    %6075 = vsyncpa %s6074, 1
    %6076 = vsyncpa [#allocation6], 1
    %6077 = vsyncpa [#allocation9], 1
    %6078 = vsyncpa [#allocation12], 1
    %6079 = vsyncpa [#allocation15], 1
    %6080 = vsyncpa [#allocation18], 1
    %6081 = vsyncpa [#allocation21], 1
    %6082 = vsyncpa [#allocation4], 1
    %s6083 = scalar_lea.sflag [#allocation4], 1
    %6084 = vsyncpa %s6083, 1

</llo_original>
